<compile_context>
chip_gen: v6e
topology: v6e:2x2x1
jax: 0.10.0
libtpu: 0.0.40
codegen_flags: <defaults>
</compile_context>

<pallas_src>
import jax
import jax.numpy as jnp
from jax.experimental import pallas as pl
from jax.experimental.pallas import tpu as pltpu


# ----------------------------------------------------------------------------
# Pallas kernel factory: fused conv
#   in-kernel tap gather (padded tile in VMEM) -> tap-wise MXU matmuls
#   (bf16 in, f32 accumulate) -> bias -> ReLU -> optional fused 1x1 conv
#   written lane-dense as (Cout2, H*W).
# ----------------------------------------------------------------------------
def _make_conv_kernel(Hs, Ws, Cin, Cout, kh, kw, relu, fused):
    Ho, Wo = Hs, Ws                       # spatial size preserved (see conv_pallas)
    taps = [(u, v) for u in range(kh) for v in range(kw)]
    # (Ho, Wo, Cin) -> (Ho*Wo, Cin) is a layout-preserving collapse when Wo is a
    # multiple of the f32 sublane granule (8); otherwise accumulate row by row.
    flatten = (Wo % 8 == 0)

    def kernel(*refs):
        if fused:
            x_ref, w_ref, b_ref, wo_ref, bo_ref, o_ref, pad_ref, acc_ref = refs
        else:
            x_ref, w_ref, b_ref, o_ref, pad_ref, acc_ref = refs

        # ---- zero-padded activation tile in VMEM (the in-kernel im2col source)
        pad_ref[...] = jnp.zeros((Ho + kh - 1, Wo + kw - 1, Cin), jnp.float32)
        pad_ref[1:1 + Hs, 1:1 + Ws, :] = x_ref[0].astype(jnp.float32)

        # ---- tap-wise accumulation on the MXU (bf16 operands, f32 accumulator)
        if flatten:
            acc = jnp.zeros((Ho * Wo, Cout), jnp.float32)
            for t, (u, v) in enumerate(taps):
                patch = pad_ref[u:u + Ho, v:v + Wo, :]
                patch = patch.reshape(Ho * Wo, Cin).astype(jnp.bfloat16)
                acc = acc + jnp.dot(patch, w_ref[t],
                                    preferred_element_type=jnp.float32)
        else:
            for r in range(Ho):
                row = jnp.zeros((Wo, Cout), jnp.float32)
                for t, (u, v) in enumerate(taps):
                    patch = pad_ref[u + r, v:v + Wo, :].astype(jnp.bfloat16)
                    row = row + jnp.dot(patch, w_ref[t],
                                        preferred_element_type=jnp.float32)
                acc_ref[r * Wo:(r + 1) * Wo, :] = row
            acc = acc_ref[...]

        # ---- epilogue: bias, ReLU, optional fused 1x1 output conv, store -----
        acc = acc + b_ref[...]
        if relu:
            acc = jnp.maximum(acc, 0.0)
        if fused:
            # (Cout2, Cout) @ (Cout, Ho*Wo): last dim is a multiple of 128, so
            # the 4-channel result is stored with dense (unmasked) vector stores.
            y = jnp.dot(wo_ref[...], acc.astype(jnp.bfloat16).T,
                        preferred_element_type=jnp.float32)
            y = y + bo_ref[...]
            o_ref[0] = y.astype(o_ref.dtype)
        else:
            o_ref[0] = acc.astype(o_ref.dtype)

    return kernel


def conv_pallas(x_nhwc, w_taps, bias, *, kh, kw, relu, fuse=None):
    """Conv with in-kernel tap gathering (no HBM im2col).

    x_nhwc : (N, H, W, Cin) bf16.  Taps are gathered from a zero-padded VMEM
             copy with the interior at offset (1, 1); with kh = kw = 3 this is
             the standard pad-1 "same" conv, with kh = kw = 2 it is the
             top/left-padded 2x2 conv that a stride-2 3x3 conv becomes after
             space-to-depth (see _pack_stride2_taps).
    w_taps : (kh*kw, Cin, Cout) bf16 tap-major weights.
    bias   : (1, Cout) f32.
    fuse   : optional (w_out (Cout2, Cout) bf16, b_out (Cout2, 1) f32): a 1x1
             conv fused after the ReLU; result is written transposed as
             (N, Cout2, H*W) f32 (lane-dense).  Otherwise output is
             (N, H*W, Cout) bf16.
    """
    N, Hs, Ws, Cin = x_nhwc.shape
    Cout = w_taps.shape[-1]
    kernel = _make_conv_kernel(Hs, Ws, Cin, Cout, kh, kw, relu, fuse is not None)

    in_specs = [
        pl.BlockSpec((1, Hs, Ws, Cin), lambda n: (n, 0, 0, 0)),
        # Resident weight / bias blocks (constant index_map).
        pl.BlockSpec((kh * kw, Cin, Cout), lambda n: (0, 0, 0)),
        pl.BlockSpec((1, Cout), lambda n: (0, 0)),
    ]
    args = [x_nhwc, w_taps, bias]
    if fuse is None:
        out_shape = jax.ShapeDtypeStruct((N, Hs * Ws, Cout), jnp.bfloat16)
        out_specs = pl.BlockSpec((1, Hs * Ws, Cout), lambda n: (n, 0, 0))
    else:
        wo_t, bo = fuse
        C2 = wo_t.shape[0]
        in_specs += [
            pl.BlockSpec((C2, Cout), lambda n: (0, 0)),
            pl.BlockSpec((C2, 1), lambda n: (0, 0)),
        ]
        args += [wo_t, bo]
        out_shape = jax.ShapeDtypeStruct((N, C2, Hs * Ws), jnp.float32)
        out_specs = pl.BlockSpec((1, C2, Hs * Ws), lambda n: (n, 0, 0))

    # TODO(synk): at real CDPN resolutions, tile H/W here (halo tiles) and set
    # vmem_limit_bytes explicitly -- v7x only has 64 MiB of VMEM per TensorCore.
    scratch_shapes = [
        pltpu.VMEM((Hs + kh - 1, Ws + kw - 1, Cin), jnp.float32),  # padded tile
        pltpu.VMEM((Hs * Ws, Cout), jnp.float32),                  # row accumulator
    ]

    return pl.pallas_call(
        kernel,
        out_shape=out_shape,
        grid=(N,),                        # batch axis: 2 steps -> both v7x cores
        in_specs=in_specs,
        out_specs=out_specs,
        scratch_shapes=scratch_shapes,
        compiler_params=pltpu.CompilerParams(dimension_semantics=("parallel",)),
    )(*args)


# ----------------------------------------------------------------------------
# Layout glue (plain XLA, small arrays)
# ----------------------------------------------------------------------------
def _space_to_depth2(x):
    """(N, H, W, C) -> (N, H//2, W//2, 4*C); channel order (row phase, col phase, C)."""
    N, H, W, C = x.shape
    assert H % 2 == 0 and W % 2 == 0
    x = x.reshape(N, H // 2, 2, W // 2, 2, C)
    x = jnp.transpose(x, (0, 1, 3, 2, 4, 5))
    return x.reshape(N, H // 2, W // 2, 4 * C)


def _upsample2x_nearest(x):
    # TODO(synk): fold the nearest 2x upsample into the following conv's tap
    # gathering (parity-decomposed 2x2 kernels) so the 4x-inflated activation
    # never hits HBM.
    return jnp.repeat(jnp.repeat(x, 2, axis=1), 2, axis=2)


# ----------------------------------------------------------------------------
# Parameters (synthetic, deterministic) and one-time packing
# ----------------------------------------------------------------------------
def init_params(key):
    ks = jax.random.split(key, 10)

    def conv_w(k, cout, cin, kh, kw):
        return 0.1 * jax.random.normal(k, (cout, cin, kh, kw), jnp.float32)

    def conv_b(k, cout):
        return 0.05 * jax.random.normal(k, (cout,), jnp.float32)

    return {
        # backbone: two stride-2 3x3 convs + ReLU
        "bb_w1": conv_w(ks[0], 16, 3, 3, 3),   "bb_b1": conv_b(ks[5], 16),
        "bb_w2": conv_w(ks[1], 32, 16, 3, 3),  "bb_b2": conv_b(ks[6], 32),
        # rot head: (upsample + 3x3 conv + ReLU) x2, then 1x1 conv -> 4 channels
        "rh_w1": conv_w(ks[2], 32, 32, 3, 3),  "rh_b1": conv_b(ks[7], 32),
        "rh_w2": conv_w(ks[3], 32, 32, 3, 3),  "rh_b2": conv_b(ks[8], 32),
        "rh_wout": conv_w(ks[4], 4, 32, 1, 1), "rh_bout": conv_b(ks[9], 4),
    }


def _pack_taps(w_pt):
    """(Cout, Cin, kh, kw) PyTorch weight -> (kh*kw, Cin, Cout) bf16 tap-major."""
    Cout, Cin, kh, kw = w_pt.shape
    w = jnp.transpose(w_pt, (2, 3, 1, 0)).reshape(kh * kw, Cin, Cout)
    return w.astype(jnp.bfloat16)


def _pack_stride2_taps(w_pt):
    """Repack a stride-2 pad-1 3x3 conv as a 2x2 conv over the space-to-depth input.

    out[h, w] = sum_{i,j} W[:, :, i, j] . x[2h+i-1, 2w+j-1].  With x in
    space-to-depth form (row phase a, col phase b) padded by one zero row/column
    at top/left, original tap i maps to (2x2 tap u, phase a) = ((i+1)//2, (i+1)%2)
    (same for j -> (v, b)); all other (u, a) combinations are zero.
    """
    Cout, Cin, _, _ = w_pt.shape
    w2 = jnp.zeros((2, 2, 2, 2, Cin, Cout), jnp.float32)   # (u, v, a, b, Cin, Cout)
    tap_map = {0: (0, 1), 1: (1, 0), 2: (1, 1)}            # i -> (u, a)
    for i in range(3):
        u, a = tap_map[i]
        for j in range(3):
            v, b = tap_map[j]
            w2 = w2.at[u, v, a, b].set(jnp.transpose(w_pt[:, :, i, j]))
    return w2.reshape(4, 4 * Cin, Cout).astype(jnp.bfloat16)


def pack_params(p):
    """One-time weight packing (tap-major, space-to-depth repack, bf16)."""
    return {
        "bb_w1": _pack_stride2_taps(p["bb_w1"]),
        "bb_b1": p["bb_b1"].reshape(1, -1).astype(jnp.float32),
        "bb_w2": _pack_stride2_taps(p["bb_w2"]),
        "bb_b2": p["bb_b2"].reshape(1, -1).astype(jnp.float32),
        "rh_w1": _pack_taps(p["rh_w1"]),
        "rh_b1": p["rh_b1"].reshape(1, -1).astype(jnp.float32),
        "rh_w2": _pack_taps(p["rh_w2"]),
        "rh_b2": p["rh_b2"].reshape(1, -1).astype(jnp.float32),
        "rh_wout": p["rh_wout"][:, :, 0, 0].astype(jnp.bfloat16),    # (4, 32)
        "rh_bout": p["rh_bout"].reshape(-1, 1).astype(jnp.float32),  # (4, 1)
    }


# ----------------------------------------------------------------------------
# Forward pass (Pallas) and pure-JAX reference
# ----------------------------------------------------------------------------
def cdpn_forward(x_nchw, pp):
    """features = backbone(x); conf, coor_x, coor_y, coor_z = rot_head(features)."""
    N, _, H, W = x_nchw.shape
    x = jnp.transpose(x_nchw, (0, 2, 3, 1)).astype(jnp.bfloat16)        # NHWC

    # backbone: stride-2 3x3 convs as (space-to-depth + 2x2 tap conv) + ReLU
    x = _space_to_depth2(x)                                             # (N,H/2,W/2,12)
    x = conv_pallas(x, pp["bb_w1"], pp["bb_b1"], kh=2, kw=2, relu=True)
    x = x.reshape(N, H // 2, W // 2, x.shape[-1])
    x = _space_to_depth2(x)                                             # (N,H/4,W/4,64)
    x = conv_pallas(x, pp["bb_w2"], pp["bb_b2"], kh=2, kw=2, relu=True)
    x = x.reshape(N, H // 4, W // 4, x.shape[-1])

    # rot head: (upsample + 3x3 conv + ReLU) x2; final 1x1 conv fused into the
    # second conv's epilogue (lane-dense (4, H*W) store, directly NCHW).
    x = _upsample2x_nearest(x)                                          # (N,H/2,W/2,32)
    x = conv_pallas(x, pp["rh_w1"], pp["rh_b1"], kh=3, kw=3, relu=True)
    x = x.reshape(N, H // 2, W // 2, x.shape[-1])
    x = _upsample2x_nearest(x)                                          # (N,H,W,32)
    out = conv_pallas(x, pp["rh_w2"], pp["rh_b2"], kh=3, kw=3, relu=True,
                      fuse=(pp["rh_wout"], pp["rh_bout"]))              # (N,4,H*W) f32

    out = out.reshape(N, 4, H, W)                                       # NCHW
    return out[:, 0:1], out[:, 1:2], out[:, 2:3], out[:, 3:4]


def _conv_ref(x, w, b, stride, pad):
    y = jax.lax.conv_general_dilated(
        x, w, window_strides=(stride, stride),
        padding=((pad, pad), (pad, pad)),
        dimension_numbers=("NCHW", "OIHW", "NCHW"))
    return y + b.reshape(1, -1, 1, 1)


def cdpn_reference(x, p):
    """Pure-JAX f32 reference of the same synthetic CDPN forward."""
    h = jnp.maximum(_conv_ref(x, p["bb_w1"], p["bb_b1"], 2, 1), 0.0)
    h = jnp.maximum(_conv_ref(h, p["bb_w2"], p["bb_b2"], 2, 1), 0.0)
    h = jnp.repeat(jnp.repeat(h, 2, axis=2), 2, axis=3)
    h = jnp.maximum(_conv_ref(h, p["rh_w1"], p["rh_b1"], 1, 1), 0.0)
    h = jnp.repeat(jnp.repeat(h, 2, axis=2), 2, axis=3)
    h = jnp.maximum(_conv_ref(h, p["rh_w2"], p["rh_b2"], 1, 1), 0.0)
    h = _conv_ref(h, p["rh_wout"], p["rh_bout"], 1, 0)
    return h[:, 0:1], h[:, 1:2], h[:, 2:3], h[:, 3:4]


if __name__ == "__main__":
    key = jax.random.PRNGKey(0)
    kx, kp = jax.random.split(key)

    x = jax.random.normal(kx, (2, 3, 16, 16), jnp.float32)   # NCHW input
    params = init_params(kp)
    packed = pack_params(params)                              # one-time weight prep

    fwd = jax.jit(cdpn_forward)
    conf, coor_x, coor_y, coor_z = fwd(x, packed)
    jax.block_until_ready((conf, coor_x, coor_y, coor_z))

    assert conf.shape == (2, 1, 16, 16)
    assert coor_x.shape == (2, 1, 16, 16)
    assert coor_y.shape == (2, 1, 16, 16)
    assert coor_z.shape == (2, 1, 16, 16)

    # Correctness vs. a pure-JAX f32 reference (loose tolerance: bf16 MXU path).
    ref = cdpn_reference(x, params)
    for got, want in zip((conf, coor_x, coor_y, coor_z), ref):
        err = float(jnp.max(jnp.abs(got - want)))
        assert err < 0.1, f"max abs error vs reference too large: {err}"

    print("KERNEL_OK")
</pallas_src>

<mosaic_0001>
module attributes {stable_mosaic.version = 11 : i64} {
  func.func @kernel(%arg0: i32, %arg1: memref<1x8x8x12xbf16, #tpu.memory_space<vmem>>, %arg2: memref<4x12x16xbf16, #tpu.memory_space<vmem>>, %arg3: memref<1x16xf32, #tpu.memory_space<vmem>>, %arg4: memref<1x64x16xbf16, #tpu.memory_space<vmem>>, %arg5: memref<9x9x12xf32, #tpu.memory_space<vmem>>, %arg6: memref<64x16xf32, #tpu.memory_space<vmem>>) attributes {dimension_semantics = [#tpu.dimension_semantics<parallel>], iteration_bounds = array<i64: 2>, scalar_prefetch = 0 : i64, scratch_operands = 2 : i64, tpu.core_type = #tpu.core_type<tc>, window_params = [{transform_indices = @transform_0, window_bounds = array<i64: 1, 8, 8, 12>}, {pipeline_mode = #tpu.pipeline_mode<synchronous>, transform_indices = @transform_1, window_bounds = array<i64: 4, 12, 16>}, {pipeline_mode = #tpu.pipeline_mode<synchronous>, transform_indices = @transform_2, window_bounds = array<i64: 1, 16>}, {transform_indices = @transform_3, window_bounds = array<i64: 1, 64, 16>}]} {
    %cst = arith.constant 0.000000e+00 : f32
    %0 = vector.broadcast %cst : f32 to vector<9x9x12xf32>
    %c0 = arith.constant 0 : index
    %c0_0 = arith.constant 0 : index
    %c0_1 = arith.constant 0 : index
    %1 = vector.load %arg5[%c0, %c0_0, %c0_1] : memref<9x9x12xf32, #tpu.memory_space<vmem>>, vector<9x9x12xf32>
    tpu.vector_store %arg5[%c0, %c0_0, %c0_1], %0 {strides = array<i32>} : memref<9x9x12xf32, #tpu.memory_space<vmem>>, vector<9x9x12xf32>,
    %c0_2 = arith.constant 0 : index
    %c0_3 = arith.constant 0 : index
    %c0_4 = arith.constant 0 : index
    %c0_5 = arith.constant 0 : index
    %2 = vector.load %arg1[%c0_2, %c0_3, %c0_4, %c0_5] : memref<1x8x8x12xbf16, #tpu.memory_space<vmem>>, vector<1x8x8x12xbf16>
    %3 = vector.shape_cast %2 : vector<1x8x8x12xbf16> to vector<8x8x12xbf16>
    %4 = arith.extf %3 : vector<8x8x12xbf16> to vector<8x8x12xf32>
    %c1 = arith.constant 1 : index
    %c1_6 = arith.constant 1 : index
    %c0_7 = arith.constant 0 : index
    %5 = vector.load %arg5[%c1, %c1_6, %c0_7] : memref<9x9x12xf32, #tpu.memory_space<vmem>>, vector<8x8x12xf32>
    tpu.vector_store %arg5[%c1, %c1_6, %c0_7], %4 {strides = array<i32>} : memref<9x9x12xf32, #tpu.memory_space<vmem>>, vector<8x8x12xf32>,
    %cst_8 = arith.constant 0.000000e+00 : f32
    %6 = vector.broadcast %cst_8 : f32 to vector<64x16xf32>
    %c0_9 = arith.constant 0 : index
    %c0_10 = arith.constant 0 : index
    %c0_11 = arith.constant 0 : index
    %7 = vector.load %arg5[%c0_9, %c0_10, %c0_11] : memref<9x9x12xf32, #tpu.memory_space<vmem>>, vector<8x8x12xf32>
    %8 = vector.shape_cast %7 : vector<8x8x12xf32> to vector<64x12xf32>
    %9 = arith.truncf %8 : vector<64x12xf32> to vector<64x12xbf16>
    %c0_12 = arith.constant 0 : index
    %c0_13 = arith.constant 0 : index
    %c0_14 = arith.constant 0 : index
    %10 = vector.load %arg2[%c0_12, %c0_13, %c0_14] : memref<4x12x16xbf16, #tpu.memory_space<vmem>>, vector<1x12x16xbf16>
    %11 = vector.shape_cast %10 : vector<1x12x16xbf16> to vector<12x16xbf16>
    %cst_15 = arith.constant dense<0.000000e+00> : vector<64x16xf32>
    %12 = tpu.matmul %9, %11, %cst_15 {dimension_numbers = #tpu.dot_dimension_numbers<[1], [0], [0], [1], [0, 0, 1, 1], [], []>} : vector<64x12xbf16>, vector<12x16xbf16>, vector<64x16xf32> -> vector<64x16xf32>
    %13 = arith.addf %6, %12 : vector<64x16xf32>
    %c0_16 = arith.constant 0 : index
    %c1_17 = arith.constant 1 : index
    %c0_18 = arith.constant 0 : index
    %14 = vector.load %arg5[%c0_16, %c1_17, %c0_18] : memref<9x9x12xf32, #tpu.memory_space<vmem>>, vector<8x8x12xf32>
    %15 = vector.shape_cast %14 : vector<8x8x12xf32> to vector<64x12xf32>
    %16 = arith.truncf %15 : vector<64x12xf32> to vector<64x12xbf16>
    %c1_19 = arith.constant 1 : index
    %c0_20 = arith.constant 0 : index
    %c0_21 = arith.constant 0 : index
    %17 = vector.load %arg2[%c1_19, %c0_20, %c0_21] : memref<4x12x16xbf16, #tpu.memory_space<vmem>>, vector<1x12x16xbf16>
    %18 = vector.shape_cast %17 : vector<1x12x16xbf16> to vector<12x16xbf16>
    %cst_22 = arith.constant dense<0.000000e+00> : vector<64x16xf32>
    %19 = tpu.matmul %16, %18, %cst_22 {dimension_numbers = #tpu.dot_dimension_numbers<[1], [0], [0], [1], [0, 0, 1, 1], [], []>} : vector<64x12xbf16>, vector<12x16xbf16>, vector<64x16xf32> -> vector<64x16xf32>
    %20 = arith.addf %13, %19 : vector<64x16xf32>
    %c1_23 = arith.constant 1 : index
    %c0_24 = arith.constant 0 : index
    %c0_25 = arith.constant 0 : index
    %21 = vector.load %arg5[%c1_23, %c0_24, %c0_25] : memref<9x9x12xf32, #tpu.memory_space<vmem>>, vector<8x8x12xf32>
    %22 = vector.shape_cast %21 : vector<8x8x12xf32> to vector<64x12xf32>
    %23 = arith.truncf %22 : vector<64x12xf32> to vector<64x12xbf16>
    %c2 = arith.constant 2 : index
    %c0_26 = arith.constant 0 : index
    %c0_27 = arith.constant 0 : index
    %24 = vector.load %arg2[%c2, %c0_26, %c0_27] : memref<4x12x16xbf16, #tpu.memory_space<vmem>>, vector<1x12x16xbf16>
    %25 = vector.shape_cast %24 : vector<1x12x16xbf16> to vector<12x16xbf16>
    %cst_28 = arith.constant dense<0.000000e+00> : vector<64x16xf32>
    %26 = tpu.matmul %23, %25, %cst_28 {dimension_numbers = #tpu.dot_dimension_numbers<[1], [0], [0], [1], [0, 0, 1, 1], [], []>} : vector<64x12xbf16>, vector<12x16xbf16>, vector<64x16xf32> -> vector<64x16xf32>
    %27 = arith.addf %20, %26 : vector<64x16xf32>
    %c1_29 = arith.constant 1 : index
    %c1_30 = arith.constant 1 : index
    %c0_31 = arith.constant 0 : index
    %28 = vector.load %arg5[%c1_29, %c1_30, %c0_31] : memref<9x9x12xf32, #tpu.memory_space<vmem>>, vector<8x8x12xf32>
    %29 = vector.shape_cast %28 : vector<8x8x12xf32> to vector<64x12xf32>
    %30 = arith.truncf %29 : vector<64x12xf32> to vector<64x12xbf16>
    %c3 = arith.constant 3 : index
    %c0_32 = arith.constant 0 : index
    %c0_33 = arith.constant 0 : index
    %31 = vector.load %arg2[%c3, %c0_32, %c0_33] : memref<4x12x16xbf16, #tpu.memory_space<vmem>>, vector<1x12x16xbf16>
    %32 = vector.shape_cast %31 : vector<1x12x16xbf16> to vector<12x16xbf16>
    %cst_34 = arith.constant dense<0.000000e+00> : vector<64x16xf32>
    %33 = tpu.matmul %30, %32, %cst_34 {dimension_numbers = #tpu.dot_dimension_numbers<[1], [0], [0], [1], [0, 0, 1, 1], [], []>} : vector<64x12xbf16>, vector<12x16xbf16>, vector<64x16xf32> -> vector<64x16xf32>
    %34 = arith.addf %27, %33 : vector<64x16xf32>
    %c0_35 = arith.constant 0 : index
    %c0_36 = arith.constant 0 : index
    %35 = vector.load %arg3[%c0_35, %c0_36] : memref<1x16xf32, #tpu.memory_space<vmem>>, vector<1x16xf32>
    %36 = vector.broadcast %35 : vector<1x16xf32> to vector<64x16xf32>
    %37 = arith.addf %34, %36 : vector<64x16xf32>
    %cst_37 = arith.constant 0.000000e+00 : f32
    %38 = vector.broadcast %cst_37 : f32 to vector<64x16xf32>
    %39 = arith.maximumf %37, %38 : vector<64x16xf32>
    %40 = arith.truncf %39 : vector<64x16xf32> to vector<64x16xbf16>
    %c0_38 = arith.constant 0 : index
    %c0_39 = arith.constant 0 : index
    %c0_40 = arith.constant 0 : index
    %41 = vector.load %arg4[%c0_38, %c0_39, %c0_40] : memref<1x64x16xbf16, #tpu.memory_space<vmem>>, vector<1x64x16xbf16>
    %42 = vector.shape_cast %41 : vector<1x64x16xbf16> to vector<64x16xbf16>
    %43 = vector.shape_cast %40 : vector<64x16xbf16> to vector<1x64x16xbf16>
    tpu.vector_store %arg4[%c0_38, %c0_39, %c0_40], %43 {strides = array<i32>} : memref<1x64x16xbf16, #tpu.memory_space<vmem>>, vector<1x64x16xbf16>,
    return
  }
  func.func @transform_0(%arg0: i32) -> (i32, i32, i32, i32) {
    %c0_i32 = arith.constant 0 : i32
    %c0_i32_0 = arith.constant 0 : i32
    %c0_i32_1 = arith.constant 0 : i32
    %c0_i32_2 = arith.constant 0 : i32
    return %arg0, %c0_i32, %c0_i32_0, %c0_i32_1 : i32, i32, i32, i32
  }
  func.func @transform_1(%arg0: i32) -> (i32, i32, i32) {
    %c0_i32 = arith.constant 0 : i32
    %c0_i32_0 = arith.constant 0 : i32
    %c0_i32_1 = arith.constant 0 : i32
    %c0_i32_2 = arith.constant 0 : i32
    return %c0_i32, %c0_i32_0, %c0_i32_1 : i32, i32, i32
  }
  func.func @transform_2(%arg0: i32) -> (i32, i32) {
    %c0_i32 = arith.constant 0 : i32
    %c0_i32_0 = arith.constant 0 : i32
    %c0_i32_1 = arith.constant 0 : i32
    return %c0_i32, %c0_i32_0 : i32, i32
  }
  func.func @transform_3(%arg0: i32) -> (i32, i32, i32) {
    %c0_i32 = arith.constant 0 : i32
    %c0_i32_0 = arith.constant 0 : i32
    %c0_i32_1 = arith.constant 0 : i32
    return %arg0, %c0_i32, %c0_i32_0 : i32, i32, i32
  }
}

module attributes {stable_mosaic.version = 11 : i64} {
  func.func @kernel(%arg0: i32, %arg1: memref<1x4x4x64xbf16, #tpu.memory_space<vmem>>, %arg2: memref<4x64x32xbf16, #tpu.memory_space<vmem>>, %arg3: memref<1x32xf32, #tpu.memory_space<vmem>>, %arg4: memref<1x16x32xbf16, #tpu.memory_space<vmem>>, %arg5: memref<5x5x64xf32, #tpu.memory_space<vmem>>, %arg6: memref<16x32xf32, #tpu.memory_space<vmem>>) attributes {dimension_semantics = [#tpu.dimension_semantics<parallel>], iteration_bounds = array<i64: 2>, scalar_prefetch = 0 : i64, scratch_operands = 2 : i64, tpu.core_type = #tpu.core_type<tc>, window_params = [{transform_indices = @transform_0, window_bounds = array<i64: 1, 4, 4, 64>}, {pipeline_mode = #tpu.pipeline_mode<synchronous>, transform_indices = @transform_1, window_bounds = array<i64: 4, 64, 32>}, {pipeline_mode = #tpu.pipeline_mode<synchronous>, transform_indices = @transform_2, window_bounds = array<i64: 1, 32>}, {transform_indices = @transform_3, window_bounds = array<i64: 1, 16, 32>}]} {
    %cst = arith.constant 0.000000e+00 : f32
    %0 = vector.broadcast %cst : f32 to vector<5x5x64xf32>
    %c0 = arith.constant 0 : index
    %c0_0 = arith.constant 0 : index
    %c0_1 = arith.constant 0 : index
    %1 = vector.load %arg5[%c0, %c0_0, %c0_1] : memref<5x5x64xf32, #tpu.memory_space<vmem>>, vector<5x5x64xf32>
    tpu.vector_store %arg5[%c0, %c0_0, %c0_1], %0 {strides = array<i32>} : memref<5x5x64xf32, #tpu.memory_space<vmem>>, vector<5x5x64xf32>,
    %c0_2 = arith.constant 0 : index
    %c0_3 = arith.constant 0 : index
    %c0_4 = arith.constant 0 : index
    %c0_5 = arith.constant 0 : index
    %2 = vector.load %arg1[%c0_2, %c0_3, %c0_4, %c0_5] : memref<1x4x4x64xbf16, #tpu.memory_space<vmem>>, vector<1x4x4x64xbf16>
    %3 = vector.shape_cast %2 : vector<1x4x4x64xbf16> to vector<4x4x64xbf16>
    %4 = arith.extf %3 : vector<4x4x64xbf16> to vector<4x4x64xf32>
    %c1 = arith.constant 1 : index
    %c1_6 = arith.constant 1 : index
    %c0_7 = arith.constant 0 : index
    %5 = vector.load %arg5[%c1, %c1_6, %c0_7] : memref<5x5x64xf32, #tpu.memory_space<vmem>>, vector<4x4x64xf32>
    tpu.vector_store %arg5[%c1, %c1_6, %c0_7], %4 {strides = array<i32>} : memref<5x5x64xf32, #tpu.memory_space<vmem>>, vector<4x4x64xf32>,
    %cst_8 = arith.constant 0.000000e+00 : f32
    %6 = vector.broadcast %cst_8 : f32 to vector<4x32xf32>
    %c0_9 = arith.constant 0 : index
    %c0_10 = arith.constant 0 : index
    %c0_11 = arith.constant 0 : index
    %7 = vector.load %arg5[%c0_9, %c0_10, %c0_11] : memref<5x5x64xf32, #tpu.memory_space<vmem>>, vector<1x4x64xf32>
    %8 = vector.shape_cast %7 : vector<1x4x64xf32> to vector<4x64xf32>
    %9 = arith.truncf %8 : vector<4x64xf32> to vector<4x64xbf16>
    %c0_12 = arith.constant 0 : index
    %c0_13 = arith.constant 0 : index
    %c0_14 = arith.constant 0 : index
    %10 = vector.load %arg2[%c0_12, %c0_13, %c0_14] : memref<4x64x32xbf16, #tpu.memory_space<vmem>>, vector<1x64x32xbf16>
    %11 = vector.shape_cast %10 : vector<1x64x32xbf16> to vector<64x32xbf16>
    %cst_15 = arith.constant dense<0.000000e+00> : vector<4x32xf32>
    %12 = tpu.matmul %9, %11, %cst_15 {dimension_numbers = #tpu.dot_dimension_numbers<[1], [0], [0], [1], [0, 0, 1, 1], [], []>} : vector<4x64xbf16>, vector<64x32xbf16>, vector<4x32xf32> -> vector<4x32xf32>
    %13 = arith.addf %6, %12 : vector<4x32xf32>
    %c0_16 = arith.constant 0 : index
    %c1_17 = arith.constant 1 : index
    %c0_18 = arith.constant 0 : index
    %14 = vector.load %arg5[%c0_16, %c1_17, %c0_18] : memref<5x5x64xf32, #tpu.memory_space<vmem>>, vector<1x4x64xf32>
    %15 = vector.shape_cast %14 : vector<1x4x64xf32> to vector<4x64xf32>
    %16 = arith.truncf %15 : vector<4x64xf32> to vector<4x64xbf16>
    %c1_19 = arith.constant 1 : index
    %c0_20 = arith.constant 0 : index
    %c0_21 = arith.constant 0 : index
    %17 = vector.load %arg2[%c1_19, %c0_20, %c0_21] : memref<4x64x32xbf16, #tpu.memory_space<vmem>>, vector<1x64x32xbf16>
    %18 = vector.shape_cast %17 : vector<1x64x32xbf16> to vector<64x32xbf16>
    %cst_22 = arith.constant dense<0.000000e+00> : vector<4x32xf32>
    %19 = tpu.matmul %16, %18, %cst_22 {dimension_numbers = #tpu.dot_dimension_numbers<[1], [0], [0], [1], [0, 0, 1, 1], [], []>} : vector<4x64xbf16>, vector<64x32xbf16>, vector<4x32xf32> -> vector<4x32xf32>
    %20 = arith.addf %13, %19 : vector<4x32xf32>
    %c1_23 = arith.constant 1 : index
    %c0_24 = arith.constant 0 : index
    %c0_25 = arith.constant 0 : index
    %21 = vector.load %arg5[%c1_23, %c0_24, %c0_25] : memref<5x5x64xf32, #tpu.memory_space<vmem>>, vector<1x4x64xf32>
    %22 = vector.shape_cast %21 : vector<1x4x64xf32> to vector<4x64xf32>
    %23 = arith.truncf %22 : vector<4x64xf32> to vector<4x64xbf16>
    %c2 = arith.constant 2 : index
    %c0_26 = arith.constant 0 : index
    %c0_27 = arith.constant 0 : index
    %24 = vector.load %arg2[%c2, %c0_26, %c0_27] : memref<4x64x32xbf16, #tpu.memory_space<vmem>>, vector<1x64x32xbf16>
    %25 = vector.shape_cast %24 : vector<1x64x32xbf16> to vector<64x32xbf16>
    %cst_28 = arith.constant dense<0.000000e+00> : vector<4x32xf32>
    %26 = tpu.matmul %23, %25, %cst_28 {dimension_numbers = #tpu.dot_dimension_numbers<[1], [0], [0], [1], [0, 0, 1, 1], [], []>} : vector<4x64xbf16>, vector<64x32xbf16>, vector<4x32xf32> -> vector<4x32xf32>
    %27 = arith.addf %20, %26 : vector<4x32xf32>
    %c1_29 = arith.constant 1 : index
    %c1_30 = arith.constant 1 : index
    %c0_31 = arith.constant 0 : index
    %28 = vector.load %arg5[%c1_29, %c1_30, %c0_31] : memref<5x5x64xf32, #tpu.memory_space<vmem>>, vector<1x4x64xf32>
    %29 = vector.shape_cast %28 : vector<1x4x64xf32> to vector<4x64xf32>
    %30 = arith.truncf %29 : vector<4x64xf32> to vector<4x64xbf16>
    %c3 = arith.constant 3 : index
    %c0_32 = arith.constant 0 : index
    %c0_33 = arith.constant 0 : index
    %31 = vector.load %arg2[%c3, %c0_32, %c0_33] : memref<4x64x32xbf16, #tpu.memory_space<vmem>>, vector<1x64x32xbf16>
    %32 = vector.shape_cast %31 : vector<1x64x32xbf16> to vector<64x32xbf16>
    %cst_34 = arith.constant dense<0.000000e+00> : vector<4x32xf32>
    %33 = tpu.matmul %30, %32, %cst_34 {dimension_numbers = #tpu.dot_dimension_numbers<[1], [0], [0], [1], [0, 0, 1, 1], [], []>} : vector<4x64xbf16>, vector<64x32xbf16>, vector<4x32xf32> -> vector<4x32xf32>
    %34 = arith.addf %27, %33 : vector<4x32xf32>
    %c0_35 = arith.constant 0 : index
    %c0_36 = arith.constant 0 : index
    %35 = vector.load %arg6[%c0_35, %c0_36] : memref<16x32xf32, #tpu.memory_space<vmem>>, vector<4x32xf32>
    tpu.vector_store %arg6[%c0_35, %c0_36], %34 {strides = array<i32>} : memref<16x32xf32, #tpu.memory_space<vmem>>, vector<4x32xf32>,
    %cst_37 = arith.constant 0.000000e+00 : f32
    %36 = vector.broadcast %cst_37 : f32 to vector<4x32xf32>
    %c1_38 = arith.constant 1 : index
    %c0_39 = arith.constant 0 : index
    %c0_40 = arith.constant 0 : index
    %37 = vector.load %arg5[%c1_38, %c0_39, %c0_40] : memref<5x5x64xf32, #tpu.memory_space<vmem>>, vector<1x4x64xf32>
    %38 = vector.shape_cast %37 : vector<1x4x64xf32> to vector<4x64xf32>
    %39 = arith.truncf %38 : vector<4x64xf32> to vector<4x64xbf16>
    %c0_41 = arith.constant 0 : index
    %c0_42 = arith.constant 0 : index
    %c0_43 = arith.constant 0 : index
    %40 = vector.load %arg2[%c0_41, %c0_42, %c0_43] : memref<4x64x32xbf16, #tpu.memory_space<vmem>>, vector<1x64x32xbf16>
    %41 = vector.shape_cast %40 : vector<1x64x32xbf16> to vector<64x32xbf16>
    %cst_44 = arith.constant dense<0.000000e+00> : vector<4x32xf32>
    %42 = tpu.matmul %39, %41, %cst_44 {dimension_numbers = #tpu.dot_dimension_numbers<[1], [0], [0], [1], [0, 0, 1, 1], [], []>} : vector<4x64xbf16>, vector<64x32xbf16>, vector<4x32xf32> -> vector<4x32xf32>
    %43 = arith.addf %36, %42 : vector<4x32xf32>
    %c1_45 = arith.constant 1 : index
    %c1_46 = arith.constant 1 : index
    %c0_47 = arith.constant 0 : index
    %44 = vector.load %arg5[%c1_45, %c1_46, %c0_47] : memref<5x5x64xf32, #tpu.memory_space<vmem>>, vector<1x4x64xf32>
    %45 = vector.shape_cast %44 : vector<1x4x64xf32> to vector<4x64xf32>
    %46 = arith.truncf %45 : vector<4x64xf32> to vector<4x64xbf16>
    %c1_48 = arith.constant 1 : index
    %c0_49 = arith.constant 0 : index
    %c0_50 = arith.constant 0 : index
    %47 = vector.load %arg2[%c1_48, %c0_49, %c0_50] : memref<4x64x32xbf16, #tpu.memory_space<vmem>>, vector<1x64x32xbf16>
    %48 = vector.shape_cast %47 : vector<1x64x32xbf16> to vector<64x32xbf16>
    %cst_51 = arith.constant dense<0.000000e+00> : vector<4x32xf32>
    %49 = tpu.matmul %46, %48, %cst_51 {dimension_numbers = #tpu.dot_dimension_numbers<[1], [0], [0], [1], [0, 0, 1, 1], [], []>} : vector<4x64xbf16>, vector<64x32xbf16>, vector<4x32xf32> -> vector<4x32xf32>
    %50 = arith.addf %43, %49 : vector<4x32xf32>
    %c2_52 = arith.constant 2 : index
    %c0_53 = arith.constant 0 : index
    %c0_54 = arith.constant 0 : index
    %51 = vector.load %arg5[%c2_52, %c0_53, %c0_54] : memref<5x5x64xf32, #tpu.memory_space<vmem>>, vector<1x4x64xf32>
    %52 = vector.shape_cast %51 : vector<1x4x64xf32> to vector<4x64xf32>
    %53 = arith.truncf %52 : vector<4x64xf32> to vector<4x64xbf16>
    %c2_55 = arith.constant 2 : index
    %c0_56 = arith.constant 0 : index
    %c0_57 = arith.constant 0 : index
    %54 = vector.load %arg2[%c2_55, %c0_56, %c0_57] : memref<4x64x32xbf16, #tpu.memory_space<vmem>>, vector<1x64x32xbf16>
    %55 = vector.shape_cast %54 : vector<1x64x32xbf16> to vector<64x32xbf16>
    %cst_58 = arith.constant dense<0.000000e+00> : vector<4x32xf32>
    %56 = tpu.matmul %53, %55, %cst_58 {dimension_numbers = #tpu.dot_dimension_numbers<[1], [0], [0], [1], [0, 0, 1, 1], [], []>} : vector<4x64xbf16>, vector<64x32xbf16>, vector<4x32xf32> -> vector<4x32xf32>
    %57 = arith.addf %50, %56 : vector<4x32xf32>
    %c2_59 = arith.constant 2 : index
    %c1_60 = arith.constant 1 : index
    %c0_61 = arith.constant 0 : index
    %58 = vector.load %arg5[%c2_59, %c1_60, %c0_61] : memref<5x5x64xf32, #tpu.memory_space<vmem>>, vector<1x4x64xf32>
    %59 = vector.shape_cast %58 : vector<1x4x64xf32> to vector<4x64xf32>
    %60 = arith.truncf %59 : vector<4x64xf32> to vector<4x64xbf16>
    %c3_62 = arith.constant 3 : index
    %c0_63 = arith.constant 0 : index
    %c0_64 = arith.constant 0 : index
    %61 = vector.load %arg2[%c3_62, %c0_63, %c0_64] : memref<4x64x32xbf16, #tpu.memory_space<vmem>>, vector<1x64x32xbf16>
    %62 = vector.shape_cast %61 : vector<1x64x32xbf16> to vector<64x32xbf16>
    %cst_65 = arith.constant dense<0.000000e+00> : vector<4x32xf32>
    %63 = tpu.matmul %60, %62, %cst_65 {dimension_numbers = #tpu.dot_dimension_numbers<[1], [0], [0], [1], [0, 0, 1, 1], [], []>} : vector<4x64xbf16>, vector<64x32xbf16>, vector<4x32xf32> -> vector<4x32xf32>
    %64 = arith.addf %57, %63 : vector<4x32xf32>
    %c4 = arith.constant 4 : index
    %c0_66 = arith.constant 0 : index
    %65 = vector.load %arg6[%c4, %c0_66] : memref<16x32xf32, #tpu.memory_space<vmem>>, vector<4x32xf32>
    tpu.vector_store %arg6[%c4, %c0_66], %64 {strides = array<i32>} : memref<16x32xf32, #tpu.memory_space<vmem>>, vector<4x32xf32>,
    %cst_67 = arith.constant 0.000000e+00 : f32
    %66 = vector.broadcast %cst_67 : f32 to vector<4x32xf32>
    %c2_68 = arith.constant 2 : index
    %c0_69 = arith.constant 0 : index
    %c0_70 = arith.constant 0 : index
    %67 = vector.load %arg5[%c2_68, %c0_69, %c0_70] : memref<5x5x64xf32, #tpu.memory_space<vmem>>, vector<1x4x64xf32>
    %68 = vector.shape_cast %67 : vector<1x4x64xf32> to vector<4x64xf32>
    %69 = arith.truncf %68 : vector<4x64xf32> to vector<4x64xbf16>
    %c0_71 = arith.constant 0 : index
    %c0_72 = arith.constant 0 : index
    %c0_73 = arith.constant 0 : index
    %70 = vector.load %arg2[%c0_71, %c0_72, %c0_73] : memref<4x64x32xbf16, #tpu.memory_space<vmem>>, vector<1x64x32xbf16>
    %71 = vector.shape_cast %70 : vector<1x64x32xbf16> to vector<64x32xbf16>
    %cst_74 = arith.constant dense<0.000000e+00> : vector<4x32xf32>
    %72 = tpu.matmul %69, %71, %cst_74 {dimension_numbers = #tpu.dot_dimension_numbers<[1], [0], [0], [1], [0, 0, 1, 1], [], []>} : vector<4x64xbf16>, vector<64x32xbf16>, vector<4x32xf32> -> vector<4x32xf32>
    %73 = arith.addf %66, %72 : vector<4x32xf32>
    %c2_75 = arith.constant 2 : index
    %c1_76 = arith.constant 1 : index
    %c0_77 = arith.constant 0 : index
    %74 = vector.load %arg5[%c2_75, %c1_76, %c0_77] : memref<5x5x64xf32, #tpu.memory_space<vmem>>, vector<1x4x64xf32>
    %75 = vector.shape_cast %74 : vector<1x4x64xf32> to vector<4x64xf32>
    %76 = arith.truncf %75 : vector<4x64xf32> to vector<4x64xbf16>
    %c1_78 = arith.constant 1 : index
    %c0_79 = arith.constant 0 : index
    %c0_80 = arith.constant 0 : index
    %77 = vector.load %arg2[%c1_78, %c0_79, %c0_80] : memref<4x64x32xbf16, #tpu.memory_space<vmem>>, vector<1x64x32xbf16>
    %78 = vector.shape_cast %77 : vector<1x64x32xbf16> to vector<64x32xbf16>
    %cst_81 = arith.constant dense<0.000000e+00> : vector<4x32xf32>
    %79 = tpu.matmul %76, %78, %cst_81 {dimension_numbers = #tpu.dot_dimension_numbers<[1], [0], [0], [1], [0, 0, 1, 1], [], []>} : vector<4x64xbf16>, vector<64x32xbf16>, vector<4x32xf32> -> vector<4x32xf32>
    %80 = arith.addf %73, %79 : vector<4x32xf32>
    %c3_82 = arith.constant 3 : index
    %c0_83 = arith.constant 0 : index
    %c0_84 = arith.constant 0 : index
    %81 = vector.load %arg5[%c3_82, %c0_83, %c0_84] : memref<5x5x64xf32, #tpu.memory_space<vmem>>, vector<1x4x64xf32>
    %82 = vector.shape_cast %81 : vector<1x4x64xf32> to vector<4x64xf32>
    %83 = arith.truncf %82 : vector<4x64xf32> to vector<4x64xbf16>
    %c2_85 = arith.constant 2 : index
    %c0_86 = arith.constant 0 : index
    %c0_87 = arith.constant 0 : index
    %84 = vector.load %arg2[%c2_85, %c0_86, %c0_87] : memref<4x64x32xbf16, #tpu.memory_space<vmem>>, vector<1x64x32xbf16>
    %85 = vector.shape_cast %84 : vector<1x64x32xbf16> to vector<64x32xbf16>
    %cst_88 = arith.constant dense<0.000000e+00> : vector<4x32xf32>
    %86 = tpu.matmul %83, %85, %cst_88 {dimension_numbers = #tpu.dot_dimension_numbers<[1], [0], [0], [1], [0, 0, 1, 1], [], []>} : vector<4x64xbf16>, vector<64x32xbf16>, vector<4x32xf32> -> vector<4x32xf32>
    %87 = arith.addf %80, %86 : vector<4x32xf32>
    %c3_89 = arith.constant 3 : index
    %c1_90 = arith.constant 1 : index
    %c0_91 = arith.constant 0 : index
    %88 = vector.load %arg5[%c3_89, %c1_90, %c0_91] : memref<5x5x64xf32, #tpu.memory_space<vmem>>, vector<1x4x64xf32>
    %89 = vector.shape_cast %88 : vector<1x4x64xf32> to vector<4x64xf32>
    %90 = arith.truncf %89 : vector<4x64xf32> to vector<4x64xbf16>
    %c3_92 = arith.constant 3 : index
    %c0_93 = arith.constant 0 : index
    %c0_94 = arith.constant 0 : index
    %91 = vector.load %arg2[%c3_92, %c0_93, %c0_94] : memref<4x64x32xbf16, #tpu.memory_space<vmem>>, vector<1x64x32xbf16>
    %92 = vector.shape_cast %91 : vector<1x64x32xbf16> to vector<64x32xbf16>
    %cst_95 = arith.constant dense<0.000000e+00> : vector<4x32xf32>
    %93 = tpu.matmul %90, %92, %cst_95 {dimension_numbers = #tpu.dot_dimension_numbers<[1], [0], [0], [1], [0, 0, 1, 1], [], []>} : vector<4x64xbf16>, vector<64x32xbf16>, vector<4x32xf32> -> vector<4x32xf32>
    %94 = arith.addf %87, %93 : vector<4x32xf32>
    %c8 = arith.constant 8 : index
    %c0_96 = arith.constant 0 : index
    %95 = vector.load %arg6[%c8, %c0_96] : memref<16x32xf32, #tpu.memory_space<vmem>>, vector<4x32xf32>
    tpu.vector_store %arg6[%c8, %c0_96], %94 {strides = array<i32>} : memref<16x32xf32, #tpu.memory_space<vmem>>, vector<4x32xf32>,
    %cst_97 = arith.constant 0.000000e+00 : f32
    %96 = vector.broadcast %cst_97 : f32 to vector<4x32xf32>
    %c3_98 = arith.constant 3 : index
    %c0_99 = arith.constant 0 : index
    %c0_100 = arith.constant 0 : index
    %97 = vector.load %arg5[%c3_98, %c0_99, %c0_100] : memref<5x5x64xf32, #tpu.memory_space<vmem>>, vector<1x4x64xf32>
    %98 = vector.shape_cast %97 : vector<1x4x64xf32> to vector<4x64xf32>
    %99 = arith.truncf %98 : vector<4x64xf32> to vector<4x64xbf16>
    %c0_101 = arith.constant 0 : index
    %c0_102 = arith.constant 0 : index
    %c0_103 = arith.constant 0 : index
    %100 = vector.load %arg2[%c0_101, %c0_102, %c0_103] : memref<4x64x32xbf16, #tpu.memory_space<vmem>>, vector<1x64x32xbf16>
    %101 = vector.shape_cast %100 : vector<1x64x32xbf16> to vector<64x32xbf16>
    %cst_104 = arith.constant dense<0.000000e+00> : vector<4x32xf32>
    %102 = tpu.matmul %99, %101, %cst_104 {dimension_numbers = #tpu.dot_dimension_numbers<[1], [0], [0], [1], [0, 0, 1, 1], [], []>} : vector<4x64xbf16>, vector<64x32xbf16>, vector<4x32xf32> -> vector<4x32xf32>
    %103 = arith.addf %96, %102 : vector<4x32xf32>
    %c3_105 = arith.constant 3 : index
    %c1_106 = arith.constant 1 : index
    %c0_107 = arith.constant 0 : index
    %104 = vector.load %arg5[%c3_105, %c1_106, %c0_107] : memref<5x5x64xf32, #tpu.memory_space<vmem>>, vector<1x4x64xf32>
    %105 = vector.shape_cast %104 : vector<1x4x64xf32> to vector<4x64xf32>
    %106 = arith.truncf %105 : vector<4x64xf32> to vector<4x64xbf16>
    %c1_108 = arith.constant 1 : index
    %c0_109 = arith.constant 0 : index
    %c0_110 = arith.constant 0 : index
    %107 = vector.load %arg2[%c1_108, %c0_109, %c0_110] : memref<4x64x32xbf16, #tpu.memory_space<vmem>>, vector<1x64x32xbf16>
    %108 = vector.shape_cast %107 : vector<1x64x32xbf16> to vector<64x32xbf16>
    %cst_111 = arith.constant dense<0.000000e+00> : vector<4x32xf32>
    %109 = tpu.matmul %106, %108, %cst_111 {dimension_numbers = #tpu.dot_dimension_numbers<[1], [0], [0], [1], [0, 0, 1, 1], [], []>} : vector<4x64xbf16>, vector<64x32xbf16>, vector<4x32xf32> -> vector<4x32xf32>
    %110 = arith.addf %103, %109 : vector<4x32xf32>
    %c4_112 = arith.constant 4 : index
    %c0_113 = arith.constant 0 : index
    %c0_114 = arith.constant 0 : index
    %111 = vector.load %arg5[%c4_112, %c0_113, %c0_114] : memref<5x5x64xf32, #tpu.memory_space<vmem>>, vector<1x4x64xf32>
    %112 = vector.shape_cast %111 : vector<1x4x64xf32> to vector<4x64xf32>
    %113 = arith.truncf %112 : vector<4x64xf32> to vector<4x64xbf16>
    %c2_115 = arith.constant 2 : index
    %c0_116 = arith.constant 0 : index
    %c0_117 = arith.constant 0 : index
    %114 = vector.load %arg2[%c2_115, %c0_116, %c0_117] : memref<4x64x32xbf16, #tpu.memory_space<vmem>>, vector<1x64x32xbf16>
    %115 = vector.shape_cast %114 : vector<1x64x32xbf16> to vector<64x32xbf16>
    %cst_118 = arith.constant dense<0.000000e+00> : vector<4x32xf32>
    %116 = tpu.matmul %113, %115, %cst_118 {dimension_numbers = #tpu.dot_dimension_numbers<[1], [0], [0], [1], [0, 0, 1, 1], [], []>} : vector<4x64xbf16>, vector<64x32xbf16>, vector<4x32xf32> -> vector<4x32xf32>
    %117 = arith.addf %110, %116 : vector<4x32xf32>
    %c4_119 = arith.constant 4 : index
    %c1_120 = arith.constant 1 : index
    %c0_121 = arith.constant 0 : index
    %118 = vector.load %arg5[%c4_119, %c1_120, %c0_121] : memref<5x5x64xf32, #tpu.memory_space<vmem>>, vector<1x4x64xf32>
    %119 = vector.shape_cast %118 : vector<1x4x64xf32> to vector<4x64xf32>
    %120 = arith.truncf %119 : vector<4x64xf32> to vector<4x64xbf16>
    %c3_122 = arith.constant 3 : index
    %c0_123 = arith.constant 0 : index
    %c0_124 = arith.constant 0 : index
    %121 = vector.load %arg2[%c3_122, %c0_123, %c0_124] : memref<4x64x32xbf16, #tpu.memory_space<vmem>>, vector<1x64x32xbf16>
    %122 = vector.shape_cast %121 : vector<1x64x32xbf16> to vector<64x32xbf16>
    %cst_125 = arith.constant dense<0.000000e+00> : vector<4x32xf32>
    %123 = tpu.matmul %120, %122, %cst_125 {dimension_numbers = #tpu.dot_dimension_numbers<[1], [0], [0], [1], [0, 0, 1, 1], [], []>} : vector<4x64xbf16>, vector<64x32xbf16>, vector<4x32xf32> -> vector<4x32xf32>
    %124 = arith.addf %117, %123 : vector<4x32xf32>
    %c12 = arith.constant 12 : index
    %c0_126 = arith.constant 0 : index
    %125 = vector.load %arg6[%c12, %c0_126] : memref<16x32xf32, #tpu.memory_space<vmem>>, vector<4x32xf32>
    tpu.vector_store %arg6[%c12, %c0_126], %124 {strides = array<i32>} : memref<16x32xf32, #tpu.memory_space<vmem>>, vector<4x32xf32>,
    %c0_127 = arith.constant 0 : index
    %c0_128 = arith.constant 0 : index
    %126 = vector.load %arg6[%c0_127, %c0_128] : memref<16x32xf32, #tpu.memory_space<vmem>>, vector<16x32xf32>
    %c0_129 = arith.constant 0 : index
    %c0_130 = arith.constant 0 : index
    %127 = vector.load %arg3[%c0_129, %c0_130] : memref<1x32xf32, #tpu.memory_space<vmem>>, vector<1x32xf32>
    %128 = vector.broadcast %127 : vector<1x32xf32> to vector<16x32xf32>
    %129 = arith.addf %126, %128 : vector<16x32xf32>
    %cst_131 = arith.constant 0.000000e+00 : f32
    %130 = vector.broadcast %cst_131 : f32 to vector<16x32xf32>
    %131 = arith.maximumf %129, %130 : vector<16x32xf32>
    %132 = arith.truncf %131 : vector<16x32xf32> to vector<16x32xbf16>
    %c0_132 = arith.constant 0 : index
    %c0_133 = arith.constant 0 : index
    %c0_134 = arith.constant 0 : index
    %133 = vector.load %arg4[%c0_132, %c0_133, %c0_134] : memref<1x16x32xbf16, #tpu.memory_space<vmem>>, vector<1x16x32xbf16>
    %134 = vector.shape_cast %133 : vector<1x16x32xbf16> to vector<16x32xbf16>
    %135 = vector.shape_cast %132 : vector<16x32xbf16> to vector<1x16x32xbf16>
    tpu.vector_store %arg4[%c0_132, %c0_133, %c0_134], %135 {strides = array<i32>} : memref<1x16x32xbf16, #tpu.memory_space<vmem>>, vector<1x16x32xbf16>,
    return
  }
  func.func @transform_0(%arg0: i32) -> (i32, i32, i32, i32) {
    %c0_i32 = arith.constant 0 : i32
    %c0_i32_0 = arith.constant 0 : i32
    %c0_i32_1 = arith.constant 0 : i32
    %c0_i32_2 = arith.constant 0 : i32
    return %arg0, %c0_i32, %c0_i32_0, %c0_i32_1 : i32, i32, i32, i32
  }
  func.func @transform_1(%arg0: i32) -> (i32, i32, i32) {
    %c0_i32 = arith.constant 0 : i32
    %c0_i32_0 = arith.constant 0 : i32
    %c0_i32_1 = arith.constant 0 : i32
    %c0_i32_2 = arith.constant 0 : i32
    return %c0_i32, %c0_i32_0, %c0_i32_1 : i32, i32, i32
  }
  func.func @transform_2(%arg0: i32) -> (i32, i32) {
    %c0_i32 = arith.constant 0 : i32
    %c0_i32_0 = arith.constant 0 : i32
    %c0_i32_1 = arith.constant 0 : i32
    return %c0_i32, %c0_i32_0 : i32, i32
  }
  func.func @transform_3(%arg0: i32) -> (i32, i32, i32) {
    %c0_i32 = arith.constant 0 : i32
    %c0_i32_0 = arith.constant 0 : i32
    %c0_i32_1 = arith.constant 0 : i32
    return %arg0, %c0_i32, %c0_i32_0 : i32, i32, i32
  }
}

module attributes {stable_mosaic.version = 11 : i64} {
  func.func @kernel(%arg0: i32, %arg1: memref<1x8x8x32xbf16, #tpu.memory_space<vmem>>, %arg2: memref<9x32x32xbf16, #tpu.memory_space<vmem>>, %arg3: memref<1x32xf32, #tpu.memory_space<vmem>>, %arg4: memref<1x64x32xbf16, #tpu.memory_space<vmem>>, %arg5: memref<10x10x32xf32, #tpu.memory_space<vmem>>, %arg6: memref<64x32xf32, #tpu.memory_space<vmem>>) attributes {dimension_semantics = [#tpu.dimension_semantics<parallel>], iteration_bounds = array<i64: 2>, scalar_prefetch = 0 : i64, scratch_operands = 2 : i64, tpu.core_type = #tpu.core_type<tc>, window_params = [{transform_indices = @transform_0, window_bounds = array<i64: 1, 8, 8, 32>}, {pipeline_mode = #tpu.pipeline_mode<synchronous>, transform_indices = @transform_1, window_bounds = array<i64: 9, 32, 32>}, {pipeline_mode = #tpu.pipeline_mode<synchronous>, transform_indices = @transform_2, window_bounds = array<i64: 1, 32>}, {transform_indices = @transform_3, window_bounds = array<i64: 1, 64, 32>}]} {
    %cst = arith.constant 0.000000e+00 : f32
    %0 = vector.broadcast %cst : f32 to vector<10x10x32xf32>
    %c0 = arith.constant 0 : index
    %c0_0 = arith.constant 0 : index
    %c0_1 = arith.constant 0 : index
    %1 = vector.load %arg5[%c0, %c0_0, %c0_1] : memref<10x10x32xf32, #tpu.memory_space<vmem>>, vector<10x10x32xf32>
    tpu.vector_store %arg5[%c0, %c0_0, %c0_1], %0 {strides = array<i32>} : memref<10x10x32xf32, #tpu.memory_space<vmem>>, vector<10x10x32xf32>,
    %c0_2 = arith.constant 0 : index
    %c0_3 = arith.constant 0 : index
    %c0_4 = arith.constant 0 : index
    %c0_5 = arith.constant 0 : index
    %2 = vector.load %arg1[%c0_2, %c0_3, %c0_4, %c0_5] : memref<1x8x8x32xbf16, #tpu.memory_space<vmem>>, vector<1x8x8x32xbf16>
    %3 = vector.shape_cast %2 : vector<1x8x8x32xbf16> to vector<8x8x32xbf16>
    %4 = arith.extf %3 : vector<8x8x32xbf16> to vector<8x8x32xf32>
    %c1 = arith.constant 1 : index
    %c1_6 = arith.constant 1 : index
    %c0_7 = arith.constant 0 : index
    %5 = vector.load %arg5[%c1, %c1_6, %c0_7] : memref<10x10x32xf32, #tpu.memory_space<vmem>>, vector<8x8x32xf32>
    tpu.vector_store %arg5[%c1, %c1_6, %c0_7], %4 {strides = array<i32>} : memref<10x10x32xf32, #tpu.memory_space<vmem>>, vector<8x8x32xf32>,
    %cst_8 = arith.constant 0.000000e+00 : f32
    %6 = vector.broadcast %cst_8 : f32 to vector<64x32xf32>
    %c0_9 = arith.constant 0 : index
    %c0_10 = arith.constant 0 : index
    %c0_11 = arith.constant 0 : index
    %7 = vector.load %arg5[%c0_9, %c0_10, %c0_11] : memref<10x10x32xf32, #tpu.memory_space<vmem>>, vector<8x8x32xf32>
    %8 = vector.shape_cast %7 : vector<8x8x32xf32> to vector<64x32xf32>
    %9 = arith.truncf %8 : vector<64x32xf32> to vector<64x32xbf16>
    %c0_12 = arith.constant 0 : index
    %c0_13 = arith.constant 0 : index
    %c0_14 = arith.constant 0 : index
    %10 = vector.load %arg2[%c0_12, %c0_13, %c0_14] : memref<9x32x32xbf16, #tpu.memory_space<vmem>>, vector<1x32x32xbf16>
    %11 = vector.shape_cast %10 : vector<1x32x32xbf16> to vector<32x32xbf16>
    %cst_15 = arith.constant dense<0.000000e+00> : vector<64x32xf32>
    %12 = tpu.matmul %9, %11, %cst_15 {dimension_numbers = #tpu.dot_dimension_numbers<[1], [0], [0], [1], [0, 0, 1, 1], [], []>} : vector<64x32xbf16>, vector<32x32xbf16>, vector<64x32xf32> -> vector<64x32xf32>
    %13 = arith.addf %6, %12 : vector<64x32xf32>
    %c0_16 = arith.constant 0 : index
    %c1_17 = arith.constant 1 : index
    %c0_18 = arith.constant 0 : index
    %14 = vector.load %arg5[%c0_16, %c1_17, %c0_18] : memref<10x10x32xf32, #tpu.memory_space<vmem>>, vector<8x8x32xf32>
    %15 = vector.shape_cast %14 : vector<8x8x32xf32> to vector<64x32xf32>
    %16 = arith.truncf %15 : vector<64x32xf32> to vector<64x32xbf16>
    %c1_19 = arith.constant 1 : index
    %c0_20 = arith.constant 0 : index
    %c0_21 = arith.constant 0 : index
    %17 = vector.load %arg2[%c1_19, %c0_20, %c0_21] : memref<9x32x32xbf16, #tpu.memory_space<vmem>>, vector<1x32x32xbf16>
    %18 = vector.shape_cast %17 : vector<1x32x32xbf16> to vector<32x32xbf16>
    %cst_22 = arith.constant dense<0.000000e+00> : vector<64x32xf32>
    %19 = tpu.matmul %16, %18, %cst_22 {dimension_numbers = #tpu.dot_dimension_numbers<[1], [0], [0], [1], [0, 0, 1, 1], [], []>} : vector<64x32xbf16>, vector<32x32xbf16>, vector<64x32xf32> -> vector<64x32xf32>
    %20 = arith.addf %13, %19 : vector<64x32xf32>
    %c0_23 = arith.constant 0 : index
    %c2 = arith.constant 2 : index
    %c0_24 = arith.constant 0 : index
    %21 = vector.load %arg5[%c0_23, %c2, %c0_24] : memref<10x10x32xf32, #tpu.memory_space<vmem>>, vector<8x8x32xf32>
    %22 = vector.shape_cast %21 : vector<8x8x32xf32> to vector<64x32xf32>
    %23 = arith.truncf %22 : vector<64x32xf32> to vector<64x32xbf16>
    %c2_25 = arith.constant 2 : index
    %c0_26 = arith.constant 0 : index
    %c0_27 = arith.constant 0 : index
    %24 = vector.load %arg2[%c2_25, %c0_26, %c0_27] : memref<9x32x32xbf16, #tpu.memory_space<vmem>>, vector<1x32x32xbf16>
    %25 = vector.shape_cast %24 : vector<1x32x32xbf16> to vector<32x32xbf16>
    %cst_28 = arith.constant dense<0.000000e+00> : vector<64x32xf32>
    %26 = tpu.matmul %23, %25, %cst_28 {dimension_numbers = #tpu.dot_dimension_numbers<[1], [0], [0], [1], [0, 0, 1, 1], [], []>} : vector<64x32xbf16>, vector<32x32xbf16>, vector<64x32xf32> -> vector<64x32xf32>
    %27 = arith.addf %20, %26 : vector<64x32xf32>
    %c1_29 = arith.constant 1 : index
    %c0_30 = arith.constant 0 : index
    %c0_31 = arith.constant 0 : index
    %28 = vector.load %arg5[%c1_29, %c0_30, %c0_31] : memref<10x10x32xf32, #tpu.memory_space<vmem>>, vector<8x8x32xf32>
    %29 = vector.shape_cast %28 : vector<8x8x32xf32> to vector<64x32xf32>
    %30 = arith.truncf %29 : vector<64x32xf32> to vector<64x32xbf16>
    %c3 = arith.constant 3 : index
    %c0_32 = arith.constant 0 : index
    %c0_33 = arith.constant 0 : index
    %31 = vector.load %arg2[%c3, %c0_32, %c0_33] : memref<9x32x32xbf16, #tpu.memory_space<vmem>>, vector<1x32x32xbf16>
    %32 = vector.shape_cast %31 : vector<1x32x32xbf16> to vector<32x32xbf16>
    %cst_34 = arith.constant dense<0.000000e+00> : vector<64x32xf32>
    %33 = tpu.matmul %30, %32, %cst_34 {dimension_numbers = #tpu.dot_dimension_numbers<[1], [0], [0], [1], [0, 0, 1, 1], [], []>} : vector<64x32xbf16>, vector<32x32xbf16>, vector<64x32xf32> -> vector<64x32xf32>
    %34 = arith.addf %27, %33 : vector<64x32xf32>
    %c1_35 = arith.constant 1 : index
    %c1_36 = arith.constant 1 : index
    %c0_37 = arith.constant 0 : index
    %35 = vector.load %arg5[%c1_35, %c1_36, %c0_37] : memref<10x10x32xf32, #tpu.memory_space<vmem>>, vector<8x8x32xf32>
    %36 = vector.shape_cast %35 : vector<8x8x32xf32> to vector<64x32xf32>
    %37 = arith.truncf %36 : vector<64x32xf32> to vector<64x32xbf16>
    %c4 = arith.constant 4 : index
    %c0_38 = arith.constant 0 : index
    %c0_39 = arith.constant 0 : index
    %38 = vector.load %arg2[%c4, %c0_38, %c0_39] : memref<9x32x32xbf16, #tpu.memory_space<vmem>>, vector<1x32x32xbf16>
    %39 = vector.shape_cast %38 : vector<1x32x32xbf16> to vector<32x32xbf16>
    %cst_40 = arith.constant dense<0.000000e+00> : vector<64x32xf32>
    %40 = tpu.matmul %37, %39, %cst_40 {dimension_numbers = #tpu.dot_dimension_numbers<[1], [0], [0], [1], [0, 0, 1, 1], [], []>} : vector<64x32xbf16>, vector<32x32xbf16>, vector<64x32xf32> -> vector<64x32xf32>
    %41 = arith.addf %34, %40 : vector<64x32xf32>
    %c1_41 = arith.constant 1 : index
    %c2_42 = arith.constant 2 : index
    %c0_43 = arith.constant 0 : index
    %42 = vector.load %arg5[%c1_41, %c2_42, %c0_43] : memref<10x10x32xf32, #tpu.memory_space<vmem>>, vector<8x8x32xf32>
    %43 = vector.shape_cast %42 : vector<8x8x32xf32> to vector<64x32xf32>
    %44 = arith.truncf %43 : vector<64x32xf32> to vector<64x32xbf16>
    %c5 = arith.constant 5 : index
    %c0_44 = arith.constant 0 : index
    %c0_45 = arith.constant 0 : index
    %45 = vector.load %arg2[%c5, %c0_44, %c0_45] : memref<9x32x32xbf16, #tpu.memory_space<vmem>>, vector<1x32x32xbf16>
    %46 = vector.shape_cast %45 : vector<1x32x32xbf16> to vector<32x32xbf16>
    %cst_46 = arith.constant dense<0.000000e+00> : vector<64x32xf32>
    %47 = tpu.matmul %44, %46, %cst_46 {dimension_numbers = #tpu.dot_dimension_numbers<[1], [0], [0], [1], [0, 0, 1, 1], [], []>} : vector<64x32xbf16>, vector<32x32xbf16>, vector<64x32xf32> -> vector<64x32xf32>
    %48 = arith.addf %41, %47 : vector<64x32xf32>
    %c2_47 = arith.constant 2 : index
    %c0_48 = arith.constant 0 : index
    %c0_49 = arith.constant 0 : index
    %49 = vector.load %arg5[%c2_47, %c0_48, %c0_49] : memref<10x10x32xf32, #tpu.memory_space<vmem>>, vector<8x8x32xf32>
    %50 = vector.shape_cast %49 : vector<8x8x32xf32> to vector<64x32xf32>
    %51 = arith.truncf %50 : vector<64x32xf32> to vector<64x32xbf16>
    %c6 = arith.constant 6 : index
    %c0_50 = arith.constant 0 : index
    %c0_51 = arith.constant 0 : index
    %52 = vector.load %arg2[%c6, %c0_50, %c0_51] : memref<9x32x32xbf16, #tpu.memory_space<vmem>>, vector<1x32x32xbf16>
    %53 = vector.shape_cast %52 : vector<1x32x32xbf16> to vector<32x32xbf16>
    %cst_52 = arith.constant dense<0.000000e+00> : vector<64x32xf32>
    %54 = tpu.matmul %51, %53, %cst_52 {dimension_numbers = #tpu.dot_dimension_numbers<[1], [0], [0], [1], [0, 0, 1, 1], [], []>} : vector<64x32xbf16>, vector<32x32xbf16>, vector<64x32xf32> -> vector<64x32xf32>
    %55 = arith.addf %48, %54 : vector<64x32xf32>
    %c2_53 = arith.constant 2 : index
    %c1_54 = arith.constant 1 : index
    %c0_55 = arith.constant 0 : index
    %56 = vector.load %arg5[%c2_53, %c1_54, %c0_55] : memref<10x10x32xf32, #tpu.memory_space<vmem>>, vector<8x8x32xf32>
    %57 = vector.shape_cast %56 : vector<8x8x32xf32> to vector<64x32xf32>
    %58 = arith.truncf %57 : vector<64x32xf32> to vector<64x32xbf16>
    %c7 = arith.constant 7 : index
    %c0_56 = arith.constant 0 : index
    %c0_57 = arith.constant 0 : index
    %59 = vector.load %arg2[%c7, %c0_56, %c0_57] : memref<9x32x32xbf16, #tpu.memory_space<vmem>>, vector<1x32x32xbf16>
    %60 = vector.shape_cast %59 : vector<1x32x32xbf16> to vector<32x32xbf16>
    %cst_58 = arith.constant dense<0.000000e+00> : vector<64x32xf32>
    %61 = tpu.matmul %58, %60, %cst_58 {dimension_numbers = #tpu.dot_dimension_numbers<[1], [0], [0], [1], [0, 0, 1, 1], [], []>} : vector<64x32xbf16>, vector<32x32xbf16>, vector<64x32xf32> -> vector<64x32xf32>
    %62 = arith.addf %55, %61 : vector<64x32xf32>
    %c2_59 = arith.constant 2 : index
    %c2_60 = arith.constant 2 : index
    %c0_61 = arith.constant 0 : index
    %63 = vector.load %arg5[%c2_59, %c2_60, %c0_61] : memref<10x10x32xf32, #tpu.memory_space<vmem>>, vector<8x8x32xf32>
    %64 = vector.shape_cast %63 : vector<8x8x32xf32> to vector<64x32xf32>
    %65 = arith.truncf %64 : vector<64x32xf32> to vector<64x32xbf16>
    %c8 = arith.constant 8 : index
    %c0_62 = arith.constant 0 : index
    %c0_63 = arith.constant 0 : index
    %66 = vector.load %arg2[%c8, %c0_62, %c0_63] : memref<9x32x32xbf16, #tpu.memory_space<vmem>>, vector<1x32x32xbf16>
    %67 = vector.shape_cast %66 : vector<1x32x32xbf16> to vector<32x32xbf16>
    %cst_64 = arith.constant dense<0.000000e+00> : vector<64x32xf32>
    %68 = tpu.matmul %65, %67, %cst_64 {dimension_numbers = #tpu.dot_dimension_numbers<[1], [0], [0], [1], [0, 0, 1, 1], [], []>} : vector<64x32xbf16>, vector<32x32xbf16>, vector<64x32xf32> -> vector<64x32xf32>
    %69 = arith.addf %62, %68 : vector<64x32xf32>
    %c0_65 = arith.constant 0 : index
    %c0_66 = arith.constant 0 : index
    %70 = vector.load %arg3[%c0_65, %c0_66] : memref<1x32xf32, #tpu.memory_space<vmem>>, vector<1x32xf32>
    %71 = vector.broadcast %70 : vector<1x32xf32> to vector<64x32xf32>
    %72 = arith.addf %69, %71 : vector<64x32xf32>
    %cst_67 = arith.constant 0.000000e+00 : f32
    %73 = vector.broadcast %cst_67 : f32 to vector<64x32xf32>
    %74 = arith.maximumf %72, %73 : vector<64x32xf32>
    %75 = arith.truncf %74 : vector<64x32xf32> to vector<64x32xbf16>
    %c0_68 = arith.constant 0 : index
    %c0_69 = arith.constant 0 : index
    %c0_70 = arith.constant 0 : index
    %76 = vector.load %arg4[%c0_68, %c0_69, %c0_70] : memref<1x64x32xbf16, #tpu.memory_space<vmem>>, vector<1x64x32xbf16>
    %77 = vector.shape_cast %76 : vector<1x64x32xbf16> to vector<64x32xbf16>
    %78 = vector.shape_cast %75 : vector<64x32xbf16> to vector<1x64x32xbf16>
    tpu.vector_store %arg4[%c0_68, %c0_69, %c0_70], %78 {strides = array<i32>} : memref<1x64x32xbf16, #tpu.memory_space<vmem>>, vector<1x64x32xbf16>,
    return
  }
  func.func @transform_0(%arg0: i32) -> (i32, i32, i32, i32) {
    %c0_i32 = arith.constant 0 : i32
    %c0_i32_0 = arith.constant 0 : i32
    %c0_i32_1 = arith.constant 0 : i32
    %c0_i32_2 = arith.constant 0 : i32
    return %arg0, %c0_i32, %c0_i32_0, %c0_i32_1 : i32, i32, i32, i32
  }
  func.func @transform_1(%arg0: i32) -> (i32, i32, i32) {
    %c0_i32 = arith.constant 0 : i32
    %c0_i32_0 = arith.constant 0 : i32
    %c0_i32_1 = arith.constant 0 : i32
    %c0_i32_2 = arith.constant 0 : i32
    return %c0_i32, %c0_i32_0, %c0_i32_1 : i32, i32, i32
  }
  func.func @transform_2(%arg0: i32) -> (i32, i32) {
    %c0_i32 = arith.constant 0 : i32
    %c0_i32_0 = arith.constant 0 : i32
    %c0_i32_1 = arith.constant 0 : i32
    return %c0_i32, %c0_i32_0 : i32, i32
  }
  func.func @transform_3(%arg0: i32) -> (i32, i32, i32) {
    %c0_i32 = arith.constant 0 : i32
    %c0_i32_0 = arith.constant 0 : i32
    %c0_i32_1 = arith.constant 0 : i32
    return %arg0, %c0_i32, %c0_i32_0 : i32, i32, i32
  }
}

module attributes {stable_mosaic.version = 11 : i64} {
  func.func @kernel(%arg0: i32, %arg1: memref<1x16x16x32xbf16, #tpu.memory_space<vmem>>, %arg2: memref<9x32x32xbf16, #tpu.memory_space<vmem>>, %arg3: memref<1x32xf32, #tpu.memory_space<vmem>>, %arg4: memref<4x32xbf16, #tpu.memory_space<vmem>>, %arg5: memref<4x1xf32, #tpu.memory_space<vmem>>, %arg6: memref<1x4x256xf32, #tpu.memory_space<vmem>>, %arg7: memref<18x18x32xf32, #tpu.memory_space<vmem>>, %arg8: memref<256x32xf32, #tpu.memory_space<vmem>>) attributes {dimension_semantics = [#tpu.dimension_semantics<parallel>], iteration_bounds = array<i64: 2>, scalar_prefetch = 0 : i64, scratch_operands = 2 : i64, tpu.core_type = #tpu.core_type<tc>, window_params = [{transform_indices = @transform_0, window_bounds = array<i64: 1, 16, 16, 32>}, {pipeline_mode = #tpu.pipeline_mode<synchronous>, transform_indices = @transform_1, window_bounds = array<i64: 9, 32, 32>}, {pipeline_mode = #tpu.pipeline_mode<synchronous>, transform_indices = @transform_2, window_bounds = array<i64: 1, 32>}, {pipeline_mode = #tpu.pipeline_mode<synchronous>, transform_indices = @transform_3, window_bounds = array<i64: 4, 32>}, {pipeline_mode = #tpu.pipeline_mode<synchronous>, transform_indices = @transform_4, window_bounds = array<i64: 4, 1>}, {transform_indices = @transform_5, window_bounds = array<i64: 1, 4, 256>}]} {
    %cst = arith.constant 0.000000e+00 : f32
    %0 = vector.broadcast %cst : f32 to vector<18x18x32xf32>
    %c0 = arith.constant 0 : index
    %c0_0 = arith.constant 0 : index
    %c0_1 = arith.constant 0 : index
    %1 = vector.load %arg7[%c0, %c0_0, %c0_1] : memref<18x18x32xf32, #tpu.memory_space<vmem>>, vector<18x18x32xf32>
    tpu.vector_store %arg7[%c0, %c0_0, %c0_1], %0 {strides = array<i32>} : memref<18x18x32xf32, #tpu.memory_space<vmem>>, vector<18x18x32xf32>,
    %c0_2 = arith.constant 0 : index
    %c0_3 = arith.constant 0 : index
    %c0_4 = arith.constant 0 : index
    %c0_5 = arith.constant 0 : index
    %2 = vector.load %arg1[%c0_2, %c0_3, %c0_4, %c0_5] : memref<1x16x16x32xbf16, #tpu.memory_space<vmem>>, vector<1x16x16x32xbf16>
    %3 = vector.shape_cast %2 : vector<1x16x16x32xbf16> to vector<16x16x32xbf16>
    %4 = arith.extf %3 : vector<16x16x32xbf16> to vector<16x16x32xf32>
    %c1 = arith.constant 1 : index
    %c1_6 = arith.constant 1 : index
    %c0_7 = arith.constant 0 : index
    %5 = vector.load %arg7[%c1, %c1_6, %c0_7] : memref<18x18x32xf32, #tpu.memory_space<vmem>>, vector<16x16x32xf32>
    tpu.vector_store %arg7[%c1, %c1_6, %c0_7], %4 {strides = array<i32>} : memref<18x18x32xf32, #tpu.memory_space<vmem>>, vector<16x16x32xf32>,
    %cst_8 = arith.constant 0.000000e+00 : f32
    %6 = vector.broadcast %cst_8 : f32 to vector<256x32xf32>
    %c0_9 = arith.constant 0 : index
    %c0_10 = arith.constant 0 : index
    %c0_11 = arith.constant 0 : index
    %7 = vector.load %arg7[%c0_9, %c0_10, %c0_11] : memref<18x18x32xf32, #tpu.memory_space<vmem>>, vector<16x16x32xf32>
    %8 = vector.shape_cast %7 : vector<16x16x32xf32> to vector<256x32xf32>
    %9 = arith.truncf %8 : vector<256x32xf32> to vector<256x32xbf16>
    %c0_12 = arith.constant 0 : index
    %c0_13 = arith.constant 0 : index
    %c0_14 = arith.constant 0 : index
    %10 = vector.load %arg2[%c0_12, %c0_13, %c0_14] : memref<9x32x32xbf16, #tpu.memory_space<vmem>>, vector<1x32x32xbf16>
    %11 = vector.shape_cast %10 : vector<1x32x32xbf16> to vector<32x32xbf16>
    %cst_15 = arith.constant dense<0.000000e+00> : vector<256x32xf32>
    %12 = tpu.matmul %9, %11, %cst_15 {dimension_numbers = #tpu.dot_dimension_numbers<[1], [0], [0], [1], [0, 0, 1, 1], [], []>} : vector<256x32xbf16>, vector<32x32xbf16>, vector<256x32xf32> -> vector<256x32xf32>
    %13 = arith.addf %6, %12 : vector<256x32xf32>
    %c0_16 = arith.constant 0 : index
    %c1_17 = arith.constant 1 : index
    %c0_18 = arith.constant 0 : index
    %14 = vector.load %arg7[%c0_16, %c1_17, %c0_18] : memref<18x18x32xf32, #tpu.memory_space<vmem>>, vector<16x16x32xf32>
    %15 = vector.shape_cast %14 : vector<16x16x32xf32> to vector<256x32xf32>
    %16 = arith.truncf %15 : vector<256x32xf32> to vector<256x32xbf16>
    %c1_19 = arith.constant 1 : index
    %c0_20 = arith.constant 0 : index
    %c0_21 = arith.constant 0 : index
    %17 = vector.load %arg2[%c1_19, %c0_20, %c0_21] : memref<9x32x32xbf16, #tpu.memory_space<vmem>>, vector<1x32x32xbf16>
    %18 = vector.shape_cast %17 : vector<1x32x32xbf16> to vector<32x32xbf16>
    %cst_22 = arith.constant dense<0.000000e+00> : vector<256x32xf32>
    %19 = tpu.matmul %16, %18, %cst_22 {dimension_numbers = #tpu.dot_dimension_numbers<[1], [0], [0], [1], [0, 0, 1, 1], [], []>} : vector<256x32xbf16>, vector<32x32xbf16>, vector<256x32xf32> -> vector<256x32xf32>
    %20 = arith.addf %13, %19 : vector<256x32xf32>
    %c0_23 = arith.constant 0 : index
    %c2 = arith.constant 2 : index
    %c0_24 = arith.constant 0 : index
    %21 = vector.load %arg7[%c0_23, %c2, %c0_24] : memref<18x18x32xf32, #tpu.memory_space<vmem>>, vector<16x16x32xf32>
    %22 = vector.shape_cast %21 : vector<16x16x32xf32> to vector<256x32xf32>
    %23 = arith.truncf %22 : vector<256x32xf32> to vector<256x32xbf16>
    %c2_25 = arith.constant 2 : index
    %c0_26 = arith.constant 0 : index
    %c0_27 = arith.constant 0 : index
    %24 = vector.load %arg2[%c2_25, %c0_26, %c0_27] : memref<9x32x32xbf16, #tpu.memory_space<vmem>>, vector<1x32x32xbf16>
    %25 = vector.shape_cast %24 : vector<1x32x32xbf16> to vector<32x32xbf16>
    %cst_28 = arith.constant dense<0.000000e+00> : vector<256x32xf32>
    %26 = tpu.matmul %23, %25, %cst_28 {dimension_numbers = #tpu.dot_dimension_numbers<[1], [0], [0], [1], [0, 0, 1, 1], [], []>} : vector<256x32xbf16>, vector<32x32xbf16>, vector<256x32xf32> -> vector<256x32xf32>
    %27 = arith.addf %20, %26 : vector<256x32xf32>
    %c1_29 = arith.constant 1 : index
    %c0_30 = arith.constant 0 : index
    %c0_31 = arith.constant 0 : index
    %28 = vector.load %arg7[%c1_29, %c0_30, %c0_31] : memref<18x18x32xf32, #tpu.memory_space<vmem>>, vector<16x16x32xf32>
    %29 = vector.shape_cast %28 : vector<16x16x32xf32> to vector<256x32xf32>
    %30 = arith.truncf %29 : vector<256x32xf32> to vector<256x32xbf16>
    %c3 = arith.constant 3 : index
    %c0_32 = arith.constant 0 : index
    %c0_33 = arith.constant 0 : index
    %31 = vector.load %arg2[%c3, %c0_32, %c0_33] : memref<9x32x32xbf16, #tpu.memory_space<vmem>>, vector<1x32x32xbf16>
    %32 = vector.shape_cast %31 : vector<1x32x32xbf16> to vector<32x32xbf16>
    %cst_34 = arith.constant dense<0.000000e+00> : vector<256x32xf32>
    %33 = tpu.matmul %30, %32, %cst_34 {dimension_numbers = #tpu.dot_dimension_numbers<[1], [0], [0], [1], [0, 0, 1, 1], [], []>} : vector<256x32xbf16>, vector<32x32xbf16>, vector<256x32xf32> -> vector<256x32xf32>
    %34 = arith.addf %27, %33 : vector<256x32xf32>
    %c1_35 = arith.constant 1 : index
    %c1_36 = arith.constant 1 : index
    %c0_37 = arith.constant 0 : index
    %35 = vector.load %arg7[%c1_35, %c1_36, %c0_37] : memref<18x18x32xf32, #tpu.memory_space<vmem>>, vector<16x16x32xf32>
    %36 = vector.shape_cast %35 : vector<16x16x32xf32> to vector<256x32xf32>
    %37 = arith.truncf %36 : vector<256x32xf32> to vector<256x32xbf16>
    %c4 = arith.constant 4 : index
    %c0_38 = arith.constant 0 : index
    %c0_39 = arith.constant 0 : index
    %38 = vector.load %arg2[%c4, %c0_38, %c0_39] : memref<9x32x32xbf16, #tpu.memory_space<vmem>>, vector<1x32x32xbf16>
    %39 = vector.shape_cast %38 : vector<1x32x32xbf16> to vector<32x32xbf16>
    %cst_40 = arith.constant dense<0.000000e+00> : vector<256x32xf32>
    %40 = tpu.matmul %37, %39, %cst_40 {dimension_numbers = #tpu.dot_dimension_numbers<[1], [0], [0], [1], [0, 0, 1, 1], [], []>} : vector<256x32xbf16>, vector<32x32xbf16>, vector<256x32xf32> -> vector<256x32xf32>
    %41 = arith.addf %34, %40 : vector<256x32xf32>
    %c1_41 = arith.constant 1 : index
    %c2_42 = arith.constant 2 : index
    %c0_43 = arith.constant 0 : index
    %42 = vector.load %arg7[%c1_41, %c2_42, %c0_43] : memref<18x18x32xf32, #tpu.memory_space<vmem>>, vector<16x16x32xf32>
    %43 = vector.shape_cast %42 : vector<16x16x32xf32> to vector<256x32xf32>
    %44 = arith.truncf %43 : vector<256x32xf32> to vector<256x32xbf16>
    %c5 = arith.constant 5 : index
    %c0_44 = arith.constant 0 : index
    %c0_45 = arith.constant 0 : index
    %45 = vector.load %arg2[%c5, %c0_44, %c0_45] : memref<9x32x32xbf16, #tpu.memory_space<vmem>>, vector<1x32x32xbf16>
    %46 = vector.shape_cast %45 : vector<1x32x32xbf16> to vector<32x32xbf16>
    %cst_46 = arith.constant dense<0.000000e+00> : vector<256x32xf32>
    %47 = tpu.matmul %44, %46, %cst_46 {dimension_numbers = #tpu.dot_dimension_numbers<[1], [0], [0], [1], [0, 0, 1, 1], [], []>} : vector<256x32xbf16>, vector<32x32xbf16>, vector<256x32xf32> -> vector<256x32xf32>
    %48 = arith.addf %41, %47 : vector<256x32xf32>
    %c2_47 = arith.constant 2 : index
    %c0_48 = arith.constant 0 : index
    %c0_49 = arith.constant 0 : index
    %49 = vector.load %arg7[%c2_47, %c0_48, %c0_49] : memref<18x18x32xf32, #tpu.memory_space<vmem>>, vector<16x16x32xf32>
    %50 = vector.shape_cast %49 : vector<16x16x32xf32> to vector<256x32xf32>
    %51 = arith.truncf %50 : vector<256x32xf32> to vector<256x32xbf16>
    %c6 = arith.constant 6 : index
    %c0_50 = arith.constant 0 : index
    %c0_51 = arith.constant 0 : index
    %52 = vector.load %arg2[%c6, %c0_50, %c0_51] : memref<9x32x32xbf16, #tpu.memory_space<vmem>>, vector<1x32x32xbf16>
    %53 = vector.shape_cast %52 : vector<1x32x32xbf16> to vector<32x32xbf16>
    %cst_52 = arith.constant dense<0.000000e+00> : vector<256x32xf32>
    %54 = tpu.matmul %51, %53, %cst_52 {dimension_numbers = #tpu.dot_dimension_numbers<[1], [0], [0], [1], [0, 0, 1, 1], [], []>} : vector<256x32xbf16>, vector<32x32xbf16>, vector<256x32xf32> -> vector<256x32xf32>
    %55 = arith.addf %48, %54 : vector<256x32xf32>
    %c2_53 = arith.constant 2 : index
    %c1_54 = arith.constant 1 : index
    %c0_55 = arith.constant 0 : index
    %56 = vector.load %arg7[%c2_53, %c1_54, %c0_55] : memref<18x18x32xf32, #tpu.memory_space<vmem>>, vector<16x16x32xf32>
    %57 = vector.shape_cast %56 : vector<16x16x32xf32> to vector<256x32xf32>
    %58 = arith.truncf %57 : vector<256x32xf32> to vector<256x32xbf16>
    %c7 = arith.constant 7 : index
    %c0_56 = arith.constant 0 : index
    %c0_57 = arith.constant 0 : index
    %59 = vector.load %arg2[%c7, %c0_56, %c0_57] : memref<9x32x32xbf16, #tpu.memory_space<vmem>>, vector<1x32x32xbf16>
    %60 = vector.shape_cast %59 : vector<1x32x32xbf16> to vector<32x32xbf16>
    %cst_58 = arith.constant dense<0.000000e+00> : vector<256x32xf32>
    %61 = tpu.matmul %58, %60, %cst_58 {dimension_numbers = #tpu.dot_dimension_numbers<[1], [0], [0], [1], [0, 0, 1, 1], [], []>} : vector<256x32xbf16>, vector<32x32xbf16>, vector<256x32xf32> -> vector<256x32xf32>
    %62 = arith.addf %55, %61 : vector<256x32xf32>
    %c2_59 = arith.constant 2 : index
    %c2_60 = arith.constant 2 : index
    %c0_61 = arith.constant 0 : index
    %63 = vector.load %arg7[%c2_59, %c2_60, %c0_61] : memref<18x18x32xf32, #tpu.memory_space<vmem>>, vector<16x16x32xf32>
    %64 = vector.shape_cast %63 : vector<16x16x32xf32> to vector<256x32xf32>
    %65 = arith.truncf %64 : vector<256x32xf32> to vector<256x32xbf16>
    %c8 = arith.constant 8 : index
    %c0_62 = arith.constant 0 : index
    %c0_63 = arith.constant 0 : index
    %66 = vector.load %arg2[%c8, %c0_62, %c0_63] : memref<9x32x32xbf16, #tpu.memory_space<vmem>>, vector<1x32x32xbf16>
    %67 = vector.shape_cast %66 : vector<1x32x32xbf16> to vector<32x32xbf16>
    %cst_64 = arith.constant dense<0.000000e+00> : vector<256x32xf32>
    %68 = tpu.matmul %65, %67, %cst_64 {dimension_numbers = #tpu.dot_dimension_numbers<[1], [0], [0], [1], [0, 0, 1, 1], [], []>} : vector<256x32xbf16>, vector<32x32xbf16>, vector<256x32xf32> -> vector<256x32xf32>
    %69 = arith.addf %62, %68 : vector<256x32xf32>
    %c0_65 = arith.constant 0 : index
    %c0_66 = arith.constant 0 : index
    %70 = vector.load %arg3[%c0_65, %c0_66] : memref<1x32xf32, #tpu.memory_space<vmem>>, vector<1x32xf32>
    %71 = vector.broadcast %70 : vector<1x32xf32> to vector<256x32xf32>
    %72 = arith.addf %69, %71 : vector<256x32xf32>
    %cst_67 = arith.constant 0.000000e+00 : f32
    %73 = vector.broadcast %cst_67 : f32 to vector<256x32xf32>
    %74 = arith.maximumf %72, %73 : vector<256x32xf32>
    %c0_68 = arith.constant 0 : index
    %c0_69 = arith.constant 0 : index
    %75 = vector.load %arg4[%c0_68, %c0_69] : memref<4x32xbf16, #tpu.memory_space<vmem>>, vector<4x32xbf16>
    %76 = arith.truncf %74 : vector<256x32xf32> to vector<256x32xbf16>
    %77 = tpu.transpose %76, [1, 0] : vector<256x32xbf16> -> vector<32x256xbf16>
    %cst_70 = arith.constant dense<0.000000e+00> : vector<4x256xf32>
    %78 = tpu.matmul %75, %77, %cst_70 {dimension_numbers = #tpu.dot_dimension_numbers<[1], [0], [0], [1], [0, 0, 1, 1], [], []>} : vector<4x32xbf16>, vector<32x256xbf16>, vector<4x256xf32> -> vector<4x256xf32>
    %c0_71 = arith.constant 0 : index
    %c0_72 = arith.constant 0 : index
    %79 = vector.load %arg5[%c0_71, %c0_72] : memref<4x1xf32, #tpu.memory_space<vmem>>, vector<4x1xf32>
    %80 = vector.broadcast %79 : vector<4x1xf32> to vector<4x256xf32>
    %81 = arith.addf %78, %80 : vector<4x256xf32>
    %c0_73 = arith.constant 0 : index
    %c0_74 = arith.constant 0 : index
    %c0_75 = arith.constant 0 : index
    %82 = vector.load %arg6[%c0_73, %c0_74, %c0_75] : memref<1x4x256xf32, #tpu.memory_space<vmem>>, vector<1x4x256xf32>
    %83 = vector.shape_cast %82 : vector<1x4x256xf32> to vector<4x256xf32>
    %84 = vector.shape_cast %81 : vector<4x256xf32> to vector<1x4x256xf32>
    tpu.vector_store %arg6[%c0_73, %c0_74, %c0_75], %84 {strides = array<i32>} : memref<1x4x256xf32, #tpu.memory_space<vmem>>, vector<1x4x256xf32>,
    return
  }
  func.func @transform_0(%arg0: i32) -> (i32, i32, i32, i32) {
    %c0_i32 = arith.constant 0 : i32
    %c0_i32_0 = arith.constant 0 : i32
    %c0_i32_1 = arith.constant 0 : i32
    %c0_i32_2 = arith.constant 0 : i32
    return %arg0, %c0_i32, %c0_i32_0, %c0_i32_1 : i32, i32, i32, i32
  }
  func.func @transform_1(%arg0: i32) -> (i32, i32, i32) {
    %c0_i32 = arith.constant 0 : i32
    %c0_i32_0 = arith.constant 0 : i32
    %c0_i32_1 = arith.constant 0 : i32
    %c0_i32_2 = arith.constant 0 : i32
    return %c0_i32, %c0_i32_0, %c0_i32_1 : i32, i32, i32
  }
  func.func @transform_2(%arg0: i32) -> (i32, i32) {
    %c0_i32 = arith.constant 0 : i32
    %c0_i32_0 = arith.constant 0 : i32
    %c0_i32_1 = arith.constant 0 : i32
    return %c0_i32, %c0_i32_0 : i32, i32
  }
  func.func @transform_3(%arg0: i32) -> (i32, i32) {
    %c0_i32 = arith.constant 0 : i32
    %c0_i32_0 = arith.constant 0 : i32
    %c0_i32_1 = arith.constant 0 : i32
    return %c0_i32, %c0_i32_0 : i32, i32
  }
  func.func @transform_4(%arg0: i32) -> (i32, i32) {
    %c0_i32 = arith.constant 0 : i32
    %c0_i32_0 = arith.constant 0 : i32
    %c0_i32_1 = arith.constant 0 : i32
    return %c0_i32, %c0_i32_0 : i32, i32
  }
  func.func @transform_5(%arg0: i32) -> (i32, i32, i32) {
    %c0_i32 = arith.constant 0 : i32
    %c0_i32_0 = arith.constant 0 : i32
    %c0_i32_1 = arith.constant 0 : i32
    return %arg0, %c0_i32, %c0_i32_0 : i32, i32, i32
  }
}

</mosaic_0001>

<llo_original>
// kernel: cdpn_forward.4
$region0: #{cdpn_forward.4}
  #allocation0 [shape = 'u32[]', space=smem, size = 0x4, offset = 0x4, fixed_abs, tag = 'smem constant byte address 0x4 - core index']
  #allocation1 [shape = 'u32[144,128]{1,0:T(1,128)}', space=vmem, size = 0x12000, scoped, tag = 'internal scratch']
  #allocation2 [shape = 'f32[9,9,12]{2,1,0:T(8,128)}', space=vmem, size = 0x12000, scoped, tag = 'scratch operand']
  #allocation3 [shape = 'f32[64,16]{1,0:T(8,128)}', space=vmem, size = 0x8000, scoped, tag = 'scratch operand']
  %s0 = inlined_call_operand.vmem [shape: bf16[2,8,8,12], index: 0, kind: input, shape index: {}]
  %s1 = inlined_call_operand.vmem [shape: bf16[4,12,16], index: 1, kind: input, shape index: {}]
  %s2 = inlined_call_operand.vmem [shape: f32[1,16], index: 2, kind: input, shape index: {}]
  %s3 = inlined_call_operand.vmem [shape: bf16[2,64,16], index: 3, kind: output, shape index: {}]
  %s4 = sld [smem:[#allocation0]]
  $region45: #{cdpn_forward.4} parent=0
    _
  %s6 = ssub.s32 1, %s4
  %s7 = scalar_select 0, %s6, %s4
  loop: start=0, step=1, limit=4
  $region2: #{cdpn_forward.4} parent=0 // loop_pre_header
    _
  $region3: #{cdpn_forward.4} parent=0 // loop_header
    %s9 = sphi 0, %s13
    %p10 = scmp.ge.s32.totalorder %s9, 4
    %s19 = sphi 0, %s21
    %s22 = sphi 0, %s19
    %s23 = sphi 0, %s22
    %s39 = sphi 0, %s23
    %s43 = sphi 0, %s43
    %s45 = sphi 0, %s43
    %s46 = sphi 0, %s45
    %s60 = sphi 0, %s46
    %s64 = sphi 0, %s64
    %s66 = sphi 0, %s64
    %s67 = sphi 0, %s66
    %s81 = sphi 0, %s67
    %s87 = sphi 0, %s89
    %s90 = sphi 0, %s87
    %s91 = sphi 0, %s90
    %s107 = sphi 0, %s91
  $region4: #{cdpn_forward.4} parent=0 // loop_header_branch
    %12 = sbr.rel (%p10) target = $region8
  $region5: #{cdpn_forward.4} parent=0 // loop_body
    %s14 = ssub.s32 %s9, 1
    %s15 = ssub.s32 %s9, 2
    %s16 = sadd.s32 %s9, 1
    %s17 = ssub.s32 %s9, %s16
    %p18 = scmp.eq.s32.totalorder %s17, 0
    %s20 = sadd.s32 %s19, 1
    %s21 = scalar_select %p18, %s19, %s20
    %p24 = pneg %p18
    %p25 = scmp.eq.s32.totalorder %s9, 1
    %p26 = por %p24, %p25
    %p27 = scmp.ne.s32.totalorder %s19, %s22
    %p28 = scmp.eq.s32.totalorder %s9, 0
    %p29 = por %p27, %p28
    %p30 = scmp.ne.s32.totalorder %s19, %s22
    %p31 = scmp.eq.s32.totalorder %s14, 1
    %p32 = por %p30, %p31
    %p33 = scmp.ne.s32.totalorder %s22, %s23
    %p34 = scmp.eq.s32.totalorder %s14, 0
    %p35 = por %p33, %p34
    %p36 = scmp.ne.s32.totalorder %s22, %s23
    %p37 = scmp.eq.s32.totalorder %s15, 1
    %p38 = por %p36, %p37
    %p40 = scmp.ne.s32.totalorder %s23, %s39
    %p41 = scmp.eq.s32.totalorder %s15, 0
    %p42 = por %p40, %p41
    %s44 = sadd.s32 %s43, 1
    %p47 = scmp.eq.s32.totalorder %s9, 1
    %p48 = scmp.ne.s32.totalorder %s43, %s45
    %p49 = scmp.eq.s32.totalorder %s9, 0
    %p50 = por %p48, %p49
    %p51 = scmp.ne.s32.totalorder %s43, %s45
    %p52 = scmp.eq.s32.totalorder %s14, 1
    %p53 = por %p51, %p52
    %p54 = scmp.ne.s32.totalorder %s45, %s46
    %p55 = scmp.eq.s32.totalorder %s14, 0
    %p56 = por %p54, %p55
    %p57 = scmp.ne.s32.totalorder %s45, %s46
    %p58 = scmp.eq.s32.totalorder %s15, 1
    %p59 = por %p57, %p58
    %p61 = scmp.ne.s32.totalorder %s46, %s60
    %p62 = scmp.eq.s32.totalorder %s15, 0
    %p63 = por %p61, %p62
    %s65 = sadd.s32 %s64, 1
    %p68 = scmp.eq.s32.totalorder %s9, 1
    %p69 = scmp.ne.s32.totalorder %s64, %s66
    %p70 = scmp.eq.s32.totalorder %s9, 0
    %p71 = por %p69, %p70
    %p72 = scmp.ne.s32.totalorder %s64, %s66
    %p73 = scmp.eq.s32.totalorder %s14, 1
    %p74 = por %p72, %p73
    %p75 = scmp.ne.s32.totalorder %s66, %s67
    %p76 = scmp.eq.s32.totalorder %s14, 0
    %p77 = por %p75, %p76
    %p78 = scmp.ne.s32.totalorder %s66, %s67
    %p79 = scmp.eq.s32.totalorder %s15, 1
    %p80 = por %p78, %p79
    %p82 = scmp.ne.s32.totalorder %s67, %s81
    %p83 = scmp.eq.s32.totalorder %s15, 0
    %p84 = por %p82, %p83
    %s85 = ssub.s32 %s9, %s16
    %p86 = scmp.eq.s32.totalorder %s85, 0
    %s88 = sadd.s32 %s87, 1
    %s89 = scalar_select %p86, %s87, %s88
    %p92 = pneg %p86
    %p93 = scmp.eq.s32.totalorder %s9, 1
    %p94 = por %p92, %p93
    %p95 = scmp.ne.s32.totalorder %s87, %s90
    %p96 = scmp.eq.s32.totalorder %s9, 0
    %p97 = por %p95, %p96
    %p98 = scmp.ne.s32.totalorder %s87, %s90
    %p99 = scmp.eq.s32.totalorder %s14, 1
    %p100 = por %p98, %p99
    %p101 = scmp.ne.s32.totalorder %s90, %s91
    %p102 = scmp.eq.s32.totalorder %s14, 0
    %p103 = por %p101, %p102
    %p104 = scmp.ne.s32.totalorder %s90, %s91
    %p105 = scmp.eq.s32.totalorder %s15, 1
    %p106 = por %p104, %p105
    %p108 = scmp.ne.s32.totalorder %s91, %s107
    %p109 = scmp.eq.s32.totalorder %s15, 0
    %p110 = por %p108, %p109
    %p111 = scmp.le.s32.totalorder 1, %s9
    %p112 = scmp.lt.s32.totalorder %s9, 3
    %p113 = pnand %p111, %p112
    %p114 = pneg %p113
    // Predicated region
    $region9: #{cdpn_forward.4} parent=5 // pred_check
      _
    $region10: #{cdpn_forward.4} parent=5 // pred_check_branch
      %116 = sbr.rel (%p113) target = $region12
    $region11: #{cdpn_forward.4} parent=5 // pred_region
      %s117 = ssub.s32 %s9, 1
      // Predicated region
      $region13: #{cdpn_forward.4} parent=11 // pred_check
        %p118 = pneg %p56
      $region14: #{cdpn_forward.4} parent=11 // pred_check_branch
        %120 = sbr.rel (%p118) target = $region16
      $region15: #{cdpn_forward.4} parent=11 // pred_region
        _
      $region16: #{cdpn_forward.4} parent=11 // pred_fallthru
        _
      // Predicated region
      $region17: #{cdpn_forward.4} parent=11 // pred_check
        %p121 = pneg %p77
      $region18: #{cdpn_forward.4} parent=11 // pred_check_branch
        %123 = sbr.rel (%p121) target = $region20
      $region19: #{cdpn_forward.4} parent=11 // pred_region
        _
      $region20: #{cdpn_forward.4} parent=11 // pred_fallthru
        _
    $region12: #{cdpn_forward.4} parent=5 // pred_fallthru
      _
    %p124 = scmp.lt.s32.totalorder %s9, 2
    // Predicated region
    $region21: #{cdpn_forward.4} parent=5 // pred_check
      %p125 = pneg %p124
    $region22: #{cdpn_forward.4} parent=5 // pred_check_branch
      %127 = sbr.rel (%p125) target = $region24
    $region23: #{cdpn_forward.4} parent=5 // pred_region
      // Predicated region
      $region25: #{cdpn_forward.4} parent=23 // pred_check
        %p128 = pneg %p29
      $region26: #{cdpn_forward.4} parent=23 // pred_check_branch
        %130 = sbr.rel (%p128) target = $region28
      $region27: #{cdpn_forward.4} parent=23 // pred_region
        %p131 = scmp.lt.s32.totalorder %s9, 1
        %s132 = scalar_select %p131, %s9, 1
        %s133 = smul.addr %s132, 8
        %s134 = smul.addr %s133, 4
        %s135 = scalar_lea.vmem %s0, %s134
      $region28: #{cdpn_forward.4} parent=23 // pred_fallthru
        _
    $region24: #{cdpn_forward.4} parent=5 // pred_fallthru
      _
    %p136 = scmp.le.s32.totalorder 1, %s9
    %p137 = scmp.lt.s32.totalorder %s9, 3
    %p138 = pnand %p136, %p137
    %p139 = pneg %p138
    // Predicated region
    $region29: #{cdpn_forward.4} parent=5 // pred_check
      _
    $region30: #{cdpn_forward.4} parent=5 // pred_check_branch
      %141 = sbr.rel (%p138) target = $region32
    $region31: #{cdpn_forward.4} parent=5 // pred_region
      %s142 = ssub.s32 %s9, 1
      %p143 = scmp.lt.s32.totalorder %s14, 1
      %s144 = scalar_select %p143, %s14, 1
      %s145 = smul.addr %s144, 8
      %s146 = smul.addr %s145, 4
      %s147 = scalar_lea.vmem %s0, %s146
      %p148 = pneg %p35
      %p149 = pneg %p32
      %p150 = pneg %p56
      %p151 = pneg %p53
      %p152 = pneg %p77
      %p153 = pneg %p74
      %p154 = pneg %p103
      %p155 = pneg %p100
      %p156 = scmp.lt.s32.totalorder %s14, 1
      %s157 = scalar_select %p156, %s14, 1
      %s158 = smul.addr %s157, 8
      %s159 = smul.addr %s158, 4
      %s160 = scalar_lea.vmem %s3, %s159
      %p161 = scmp.lt.s32.totalorder %s14, 1
      %s162 = scalar_select %p161, %s14, 1
      %s163 = smul.addr %s162, 8
      %s164 = smul.addr %s163, 4
      %s165 = scalar_lea.vmem %s0, %s164
      %p166 = scmp.lt.s32.totalorder %s14, 1
      %s167 = scalar_select %p166, %s14, 1
      %s168 = smul.addr %s167, 8
      %s169 = smul.addr %s168, 4
      %s170 = scalar_lea.vmem %s3, %s169
      %vm172 = vcmask 97280
      %173 = vst.msk [vmem:[#allocation2] sm:$0xff] %vm172, 0.0
      %vm174 = vcmask 90112
      %175 = vst.msk [vmem:[#allocation2 + $0x8] sm:$0x1] %vm174, 0.0
      %176 = vst.msk [vmem:[#allocation2 + $0x10] sm:$0xff] %vm172, 0.0
      %177 = vst.msk [vmem:[#allocation2 + $0x18] sm:$0x1] %vm174, 0.0
      %178 = vst.msk [vmem:[#allocation2 + $0x20] sm:$0xff] %vm172, 0.0
      %179 = vst.msk [vmem:[#allocation2 + $0x28] sm:$0x1] %vm174, 0.0
      %180 = vst.msk [vmem:[#allocation2 + $0x30] sm:$0xff] %vm172, 0.0
      %181 = vst.msk [vmem:[#allocation2 + $0x38] sm:$0x1] %vm174, 0.0
      %182 = vst.msk [vmem:[#allocation2 + $0x40] sm:$0xff] %vm172, 0.0
      %183 = vst.msk [vmem:[#allocation2 + $0x48] sm:$0x1] %vm174, 0.0
      %184 = vst.msk [vmem:[#allocation2 + $0x50] sm:$0xff] %vm172, 0.0
      %185 = vst.msk [vmem:[#allocation2 + $0x58] sm:$0x1] %vm174, 0.0
      %186 = vst.msk [vmem:[#allocation2 + $0x60] sm:$0xff] %vm172, 0.0
      %187 = vst.msk [vmem:[#allocation2 + $0x68] sm:$0x1] %vm174, 0.0
      %188 = vst.msk [vmem:[#allocation2 + $0x70] sm:$0xff] %vm172, 0.0
      %189 = vst.msk [vmem:[#allocation2 + $0x78] sm:$0x1] %vm174, 0.0
      %190 = vst.msk [vmem:[#allocation2 + $0x80] sm:$0xff] %vm172, 0.0
      %191 = vst.msk [vmem:[#allocation2 + $0x88] sm:$0x1] %vm174, 0.0
      %v192 = vld [vmem:[%s165] sm:$0xf]
      %v193 = vld [vmem:[%s165 + $0x4] sm:$0xf]
      %v194 = vld [vmem:[%s165 + $0x8] sm:$0xf]
      %v195 = vld [vmem:[%s165 + $0xc] sm:$0xf]
      %v196 = vld [vmem:[%s165 + $0x10] sm:$0xf]
      %v197 = vld [vmem:[%s165 + $0x14] sm:$0xf]
      %v198 = vld [vmem:[%s165 + $0x18] sm:$0xf]
      %v199 = vld [vmem:[%s165 + $0x1c] sm:$0xf]
      %v200 = vunpack.c.l.bf16 %v192
      %v201 = vunpack.c.l.bf16 %v193
      %v202 = vunpack.c.l.bf16 %v194
      %v203 = vunpack.c.l.bf16 %v195
      %v204 = vunpack.c.l.bf16 %v196
      %v205 = vunpack.c.l.bf16 %v197
      %v206 = vunpack.c.l.bf16 %v198
      %v207 = vunpack.c.l.bf16 %v199
      %s208 = scalar_lea.vmem [#allocation2], 16
      %209 = vst.msk [vmem:[%s208 + $0x1] sm:$0xff] %vm172, %v200
      %210 = vst.msk [vmem:[%s208 + $0x11] sm:$0xff] %vm172, %v201
      %211 = vst.msk [vmem:[%s208 + $0x21] sm:$0xff] %vm172, %v202
      %212 = vst.msk [vmem:[%s208 + $0x31] sm:$0xff] %vm172, %v203
      %213 = vst.msk [vmem:[%s208 + $0x41] sm:$0xff] %vm172, %v204
      %214 = vst.msk [vmem:[%s208 + $0x51] sm:$0xff] %vm172, %v205
      %215 = vst.msk [vmem:[%s208 + $0x61] sm:$0xff] %vm172, %v206
      %216 = vst.msk [vmem:[%s208 + $0x71] sm:$0xff] %vm172, %v207
      %v217 = vld [vmem:[#allocation2] sm:$0xff]
      %v218 = vld [vmem:[#allocation2 + $0x10] sm:$0xff]
      %v219 = vld [vmem:[#allocation2 + $0x20] sm:$0xff]
      %v220 = vld [vmem:[#allocation2 + $0x30] sm:$0xff]
      %v221 = vld [vmem:[#allocation2 + $0x40] sm:$0xff]
      %v222 = vld [vmem:[#allocation2 + $0x50] sm:$0xff]
      %v223 = vld [vmem:[#allocation2 + $0x60] sm:$0xff]
      %v224 = vld [vmem:[#allocation2 + $0x70] sm:$0xff]
      %v225 = vpack.c.bf16 %v218, %v217
      %v226 = vpack.c.bf16 %v220, %v219
      %v227 = vpack.c.bf16 %v222, %v221
      %v228 = vpack.c.bf16 %v224, %v223
      %v229 = vld [vmem:[%s1] sm:$0xf]
      %v230 = vld [vmem:[%s1 + $0x4] sm:$0x3]
      %v231 = vld [vmem:[#allocation2 + $0x1] sm:$0xff]
      %v232 = vld [vmem:[#allocation2 + $0x11] sm:$0xff]
      %v233 = vld [vmem:[#allocation2 + $0x21] sm:$0xff]
      %v234 = vld [vmem:[#allocation2 + $0x31] sm:$0xff]
      %v235 = vld [vmem:[#allocation2 + $0x41] sm:$0xff]
      %v236 = vld [vmem:[#allocation2 + $0x51] sm:$0xff]
      %v237 = vld [vmem:[#allocation2 + $0x61] sm:$0xff]
      %v238 = vld [vmem:[#allocation2 + $0x71] sm:$0xff]
      %v239 = vpack.c.bf16 %v232, %v231
      %v240 = vpack.c.bf16 %v234, %v233
      %v241 = vpack.c.bf16 %v236, %v235
      %v242 = vpack.c.bf16 %v238, %v237
      %s243 = scalar_lea.vmem %s1, 8
      %v244 = vld [vmem:[%s243] sm:$0xf]
      %v245 = vld [vmem:[%s243 + $0x4] sm:$0x3]
      %v248 = vunpack.c.l.b16 %v244
      %v249 = vunpack.c.l.b16 %v245
      %v250 = vpack.c.b16 %v249, %v248
      %v252 = vsel %vm172, %v239, 0
      %v255 = vsel %vm172, %v240, 0
      %v258 = vsel %vm172, %v241, 0
      %v261 = vsel %vm172, %v242, 0
      %vm263 = vcmask 1045504
      %v265 = vsel %vm263, %v250, 0
      %267 = vmatprep.subr.bf16.mxu0 0
      %268 = vmatpush1.bf16.msra.mxu0 0
      %269 = vmatprep.subr.bf16.mxu0 0
      %270 = vmatpush1.bf16.msra.mxu0 0
      %271 = vmatprep.subr.bf16.mxu0 0
      %272 = vmatpush1.bf16.msra.mxu0 0
      %273 = vmatprep.subr.bf16.mxu0 0
      %274 = vmatpush1.bf16.msra.mxu0 0
      %275 = vmatprep.subr.bf16.mxu0 0
      %276 = vmatpush1.bf16.msra.mxu0 0
      %277 = vmatprep.subr.bf16.mxu0 0
      %278 = vmatpush1.bf16.msra.mxu0 0
      %279 = vmatprep.subr.bf16.mxu0 0
      %280 = vmatpush1.bf16.msra.mxu0 0
      %281 = vmatprep.subr.bf16.mxu0 0
      %282 = vmatpush1.bf16.msra.mxu0 %v265
      %283 = vmatprep.subr.bf16.mxu0 0
      %284 = vmatpush2.bf16.msra.mxu0 0
      %285 = vmatprep.subr.bf16.mxu0 0
      %286 = vmatpush2.bf16.msra.mxu0 0
      %287 = vmatprep.subr.bf16.mxu0 0
      %288 = vmatpush2.bf16.msra.mxu0 0
      %289 = vmatprep.subr.bf16.mxu0 0
      %290 = vmatpush2.bf16.msra.mxu0 0
      %291 = vmatprep.subr.bf16.mxu0 0
      %292 = vmatpush2.bf16.msra.mxu0 0
      %293 = vmatprep.subr.bf16.mxu0 0
      %294 = vmatpush2.bf16.msra.mxu0 0
      %295 = vmatprep.subr.bf16.mxu0 0
      %296 = vmatpush2.bf16.msra.mxu0 0
      %297 = vmatprep.subr.bf16.mxu0 0
      %298 = vmatpush2.bf16.msra.mxu0 0
      %299 = vmatprep.mubr.bf16.mxu0 0
      %300 = vmatmul.mubr.bf16.gmra.mxu0 %v252
      %v301 = vpop.f32.mrf.mxu0
      %v302 = vadd.f32 0.0, %v301
      %v303 = vpop.f32.mrf.mxu0
      %v304 = vpop.f32.mrf.mxu0
      %v305 = vadd.f32 0.0, %v304
      %v306 = vpop.f32.mrf.mxu0
      %307 = vmatprep.mubr.bf16.mxu0 0
      %308 = vmatmul.mubr.bf16.gmra.mxu0 %v255
      %v309 = vpop.f32.mrf.mxu0
      %v310 = vadd.f32 0.0, %v309
      %v311 = vpop.f32.mrf.mxu0
      %v312 = vpop.f32.mrf.mxu0
      %v313 = vadd.f32 0.0, %v312
      %v314 = vpop.f32.mrf.mxu0
      %315 = vmatprep.mubr.bf16.mxu0 0
      %316 = vmatmul.mubr.bf16.gmra.mxu0 %v258
      %v317 = vpop.f32.mrf.mxu0
      %v318 = vadd.f32 0.0, %v317
      %v319 = vpop.f32.mrf.mxu0
      %v320 = vpop.f32.mrf.mxu0
      %v321 = vadd.f32 0.0, %v320
      %v322 = vpop.f32.mrf.mxu0
      %323 = vmatprep.mubr.bf16.mxu0 0
      %324 = vmatmul.mubr.bf16.gmra.mxu0 %v261
      %v325 = vpop.f32.mrf.mxu0
      %v326 = vadd.f32 0.0, %v325
      %v327 = vpop.f32.mrf.mxu0
      %v328 = vpop.f32.mrf.mxu0
      %v329 = vadd.f32 0.0, %v328
      %v330 = vpop.f32.mrf.mxu0
      %331 = vdwg.mxu0
      %v334 = vunpack.c.l.b16 %v229
      %v335 = vunpack.c.l.b16 %v230
      %v336 = vpack.c.b16 %v335, %v334
      %v338 = vsel %vm172, %v225, 0
      %v341 = vsel %vm172, %v226, 0
      %v344 = vsel %vm172, %v227, 0
      %v347 = vsel %vm172, %v228, 0
      %v350 = vsel %vm263, %v336, 0
      %352 = vmatprep.subr.bf16.mxu0 0
      %353 = vmatpush1.bf16.msra.mxu0 0
      %354 = vmatprep.subr.bf16.mxu0 0
      %355 = vmatpush1.bf16.msra.mxu0 0
      %356 = vmatprep.subr.bf16.mxu0 0
      %357 = vmatpush1.bf16.msra.mxu0 0
      %358 = vmatprep.subr.bf16.mxu0 0
      %359 = vmatpush1.bf16.msra.mxu0 0
      %360 = vmatprep.subr.bf16.mxu0 0
      %361 = vmatpush1.bf16.msra.mxu0 0
      %362 = vmatprep.subr.bf16.mxu0 0
      %363 = vmatpush1.bf16.msra.mxu0 0
      %364 = vmatprep.subr.bf16.mxu0 0
      %365 = vmatpush1.bf16.msra.mxu0 0
      %366 = vmatprep.subr.bf16.mxu0 0
      %367 = vmatpush1.bf16.msra.mxu0 %v350
      %368 = vmatprep.subr.bf16.mxu0 0
      %369 = vmatpush2.bf16.msra.mxu0 0
      %370 = vmatprep.subr.bf16.mxu0 0
      %371 = vmatpush2.bf16.msra.mxu0 0
      %372 = vmatprep.subr.bf16.mxu0 0
      %373 = vmatpush2.bf16.msra.mxu0 0
      %374 = vmatprep.subr.bf16.mxu0 0
      %375 = vmatpush2.bf16.msra.mxu0 0
      %376 = vmatprep.subr.bf16.mxu0 0
      %377 = vmatpush2.bf16.msra.mxu0 0
      %378 = vmatprep.subr.bf16.mxu0 0
      %379 = vmatpush2.bf16.msra.mxu0 0
      %380 = vmatprep.subr.bf16.mxu0 0
      %381 = vmatpush2.bf16.msra.mxu0 0
      %382 = vmatprep.subr.bf16.mxu0 0
      %383 = vmatpush2.bf16.msra.mxu0 0
      %384 = vmatprep.mubr.bf16.mxu0 0
      %385 = vmatmul.mubr.bf16.gmra.mxu0 %v338
      %v386 = vpop.f32.mrf.mxu0
      %v387 = vadd.f32 %v302, %v386
      %v388 = vpop.f32.mrf.mxu0
      %v389 = vpop.f32.mrf.mxu0
      %v390 = vadd.f32 %v305, %v389
      %v391 = vpop.f32.mrf.mxu0
      %392 = vmatprep.mubr.bf16.mxu0 0
      %393 = vmatmul.mubr.bf16.gmra.mxu0 %v341
      %v394 = vpop.f32.mrf.mxu0
      %v395 = vadd.f32 %v310, %v394
      %v396 = vpop.f32.mrf.mxu0
      %v397 = vpop.f32.mrf.mxu0
      %v398 = vadd.f32 %v313, %v397
      %v399 = vpop.f32.mrf.mxu0
      %400 = vmatprep.mubr.bf16.mxu0 0
      %401 = vmatmul.mubr.bf16.gmra.mxu0 %v344
      %v402 = vpop.f32.mrf.mxu0
      %v403 = vadd.f32 %v318, %v402
      %v404 = vpop.f32.mrf.mxu0
      %v405 = vpop.f32.mrf.mxu0
      %v406 = vadd.f32 %v321, %v405
      %v407 = vpop.f32.mrf.mxu0
      %408 = vmatprep.mubr.bf16.mxu0 0
      %409 = vmatmul.mubr.bf16.gmra.mxu0 %v347
      %v410 = vpop.f32.mrf.mxu0
      %v411 = vadd.f32 %v326, %v410
      %v412 = vpop.f32.mrf.mxu0
      %v413 = vpop.f32.mrf.mxu0
      %v414 = vadd.f32 %v329, %v413
      %v415 = vpop.f32.mrf.mxu0
      %416 = vdwg.mxu0
      %v417 = vld [vmem:[%s208] sm:$0xff]
      %v418 = vld [vmem:[%s208 + $0x10] sm:$0xff]
      %v419 = vld [vmem:[%s208 + $0x20] sm:$0xff]
      %v420 = vld [vmem:[%s208 + $0x30] sm:$0xff]
      %v421 = vld [vmem:[%s208 + $0x40] sm:$0xff]
      %v422 = vld [vmem:[%s208 + $0x50] sm:$0xff]
      %v423 = vld [vmem:[%s208 + $0x60] sm:$0xff]
      %v424 = vld [vmem:[%s208 + $0x70] sm:$0xff]
      %v425 = vpack.c.bf16 %v418, %v417
      %v426 = vpack.c.bf16 %v420, %v419
      %v427 = vpack.c.bf16 %v422, %v421
      %v428 = vpack.c.bf16 %v424, %v423
      %s429 = scalar_lea.vmem %s1, 16
      %v430 = vld [vmem:[%s429] sm:$0xf]
      %v431 = vld [vmem:[%s429 + $0x4] sm:$0x3]
      %v434 = vunpack.c.l.b16 %v430
      %v435 = vunpack.c.l.b16 %v431
      %v436 = vpack.c.b16 %v435, %v434
      %v438 = vsel %vm172, %v425, 0
      %v441 = vsel %vm172, %v426, 0
      %v444 = vsel %vm172, %v427, 0
      %v447 = vsel %vm172, %v428, 0
      %v450 = vsel %vm263, %v436, 0
      %452 = vmatprep.subr.bf16.mxu0 0
      %453 = vmatpush1.bf16.msra.mxu0 0
      %454 = vmatprep.subr.bf16.mxu0 0
      %455 = vmatpush1.bf16.msra.mxu0 0
      %456 = vmatprep.subr.bf16.mxu0 0
      %457 = vmatpush1.bf16.msra.mxu0 0
      %458 = vmatprep.subr.bf16.mxu0 0
      %459 = vmatpush1.bf16.msra.mxu0 0
      %460 = vmatprep.subr.bf16.mxu0 0
      %461 = vmatpush1.bf16.msra.mxu0 0
      %462 = vmatprep.subr.bf16.mxu0 0
      %463 = vmatpush1.bf16.msra.mxu0 0
      %464 = vmatprep.subr.bf16.mxu0 0
      %465 = vmatpush1.bf16.msra.mxu0 0
      %466 = vmatprep.subr.bf16.mxu0 0
      %467 = vmatpush1.bf16.msra.mxu0 %v450
      %468 = vmatprep.subr.bf16.mxu0 0
      %469 = vmatpush2.bf16.msra.mxu0 0
      %470 = vmatprep.subr.bf16.mxu0 0
      %471 = vmatpush2.bf16.msra.mxu0 0
      %472 = vmatprep.subr.bf16.mxu0 0
      %473 = vmatpush2.bf16.msra.mxu0 0
      %474 = vmatprep.subr.bf16.mxu0 0
      %475 = vmatpush2.bf16.msra.mxu0 0
      %476 = vmatprep.subr.bf16.mxu0 0
      %477 = vmatpush2.bf16.msra.mxu0 0
      %478 = vmatprep.subr.bf16.mxu0 0
      %479 = vmatpush2.bf16.msra.mxu0 0
      %480 = vmatprep.subr.bf16.mxu0 0
      %481 = vmatpush2.bf16.msra.mxu0 0
      %482 = vmatprep.subr.bf16.mxu0 0
      %483 = vmatpush2.bf16.msra.mxu0 0
      %484 = vmatprep.mubr.bf16.mxu0 0
      %485 = vmatmul.mubr.bf16.gmra.mxu0 %v438
      %v486 = vpop.f32.mrf.mxu0
      %v487 = vadd.f32 0.0, %v486
      %v488 = vpop.f32.mrf.mxu0
      %v489 = vpop.f32.mrf.mxu0
      %v490 = vadd.f32 0.0, %v489
      %v491 = vpop.f32.mrf.mxu0
      %492 = vmatprep.mubr.bf16.mxu0 0
      %493 = vmatmul.mubr.bf16.gmra.mxu0 %v441
      %v494 = vpop.f32.mrf.mxu0
      %v495 = vadd.f32 0.0, %v494
      %v496 = vpop.f32.mrf.mxu0
      %v497 = vpop.f32.mrf.mxu0
      %v498 = vadd.f32 0.0, %v497
      %v499 = vpop.f32.mrf.mxu0
      %500 = vmatprep.mubr.bf16.mxu0 0
      %501 = vmatmul.mubr.bf16.gmra.mxu0 %v444
      %v502 = vpop.f32.mrf.mxu0
      %v503 = vadd.f32 0.0, %v502
      %v504 = vpop.f32.mrf.mxu0
      %v505 = vpop.f32.mrf.mxu0
      %v506 = vadd.f32 0.0, %v505
      %v507 = vpop.f32.mrf.mxu0
      %508 = vmatprep.mubr.bf16.mxu0 0
      %509 = vmatmul.mubr.bf16.gmra.mxu0 %v447
      %v510 = vpop.f32.mrf.mxu0
      %v511 = vadd.f32 0.0, %v510
      %v512 = vpop.f32.mrf.mxu0
      %v513 = vpop.f32.mrf.mxu0
      %v514 = vadd.f32 0.0, %v513
      %v515 = vpop.f32.mrf.mxu0
      %516 = vdwg.mxu0
      %v517 = vadd.f32 %v387, %v487
      %v518 = vadd.f32 %v390, %v490
      %v519 = vadd.f32 %v395, %v495
      %v520 = vadd.f32 %v398, %v498
      %v521 = vadd.f32 %v403, %v503
      %v522 = vadd.f32 %v406, %v506
      %v523 = vadd.f32 %v411, %v511
      %v524 = vadd.f32 %v414, %v514
      %v525 = vld [vmem:[%s208 + $0x1] sm:$0xff]
      %v526 = vld [vmem:[%s208 + $0x11] sm:$0xff]
      %v527 = vld [vmem:[%s208 + $0x21] sm:$0xff]
      %v528 = vld [vmem:[%s208 + $0x31] sm:$0xff]
      %v529 = vld [vmem:[%s208 + $0x41] sm:$0xff]
      %v530 = vld [vmem:[%s208 + $0x51] sm:$0xff]
      %v531 = vld [vmem:[%s208 + $0x61] sm:$0xff]
      %v532 = vld [vmem:[%s208 + $0x71] sm:$0xff]
      %v533 = vpack.c.bf16 %v526, %v525
      %v534 = vpack.c.bf16 %v528, %v527
      %v535 = vpack.c.bf16 %v530, %v529
      %v536 = vpack.c.bf16 %v532, %v531
      %s537 = scalar_lea.vmem %s1, 24
      %v538 = vld [vmem:[%s537] sm:$0xf]
      %v539 = vld [vmem:[%s537 + $0x4] sm:$0x3]
      %v542 = vunpack.c.l.b16 %v538
      %v543 = vunpack.c.l.b16 %v539
      %v544 = vpack.c.b16 %v543, %v542
      %v546 = vsel %vm172, %v533, 0
      %v549 = vsel %vm172, %v534, 0
      %v552 = vsel %vm172, %v535, 0
      %v555 = vsel %vm172, %v536, 0
      %v558 = vsel %vm263, %v544, 0
      %560 = vmatprep.subr.bf16.mxu0 0
      %561 = vmatpush1.bf16.msra.mxu0 0
      %562 = vmatprep.subr.bf16.mxu0 0
      %563 = vmatpush1.bf16.msra.mxu0 0
      %564 = vmatprep.subr.bf16.mxu0 0
      %565 = vmatpush1.bf16.msra.mxu0 0
      %566 = vmatprep.subr.bf16.mxu0 0
      %567 = vmatpush1.bf16.msra.mxu0 0
      %568 = vmatprep.subr.bf16.mxu0 0
      %569 = vmatpush1.bf16.msra.mxu0 0
      %570 = vmatprep.subr.bf16.mxu0 0
      %571 = vmatpush1.bf16.msra.mxu0 0
      %572 = vmatprep.subr.bf16.mxu0 0
      %573 = vmatpush1.bf16.msra.mxu0 0
      %574 = vmatprep.subr.bf16.mxu0 0
      %575 = vmatpush1.bf16.msra.mxu0 %v558
      %576 = vmatprep.subr.bf16.mxu0 0
      %577 = vmatpush2.bf16.msra.mxu0 0
      %578 = vmatprep.subr.bf16.mxu0 0
      %579 = vmatpush2.bf16.msra.mxu0 0
      %580 = vmatprep.subr.bf16.mxu0 0
      %581 = vmatpush2.bf16.msra.mxu0 0
      %582 = vmatprep.subr.bf16.mxu0 0
      %583 = vmatpush2.bf16.msra.mxu0 0
      %584 = vmatprep.subr.bf16.mxu0 0
      %585 = vmatpush2.bf16.msra.mxu0 0
      %586 = vmatprep.subr.bf16.mxu0 0
      %587 = vmatpush2.bf16.msra.mxu0 0
      %588 = vmatprep.subr.bf16.mxu0 0
      %589 = vmatpush2.bf16.msra.mxu0 0
      %590 = vmatprep.subr.bf16.mxu0 0
      %591 = vmatpush2.bf16.msra.mxu0 0
      %592 = vmatprep.mubr.bf16.mxu0 0
      %593 = vmatmul.mubr.bf16.gmra.mxu0 %v546
      %v594 = vpop.f32.mrf.mxu0
      %v595 = vadd.f32 0.0, %v594
      %v596 = vpop.f32.mrf.mxu0
      %v597 = vpop.f32.mrf.mxu0
      %v598 = vadd.f32 0.0, %v597
      %v599 = vpop.f32.mrf.mxu0
      %600 = vmatprep.mubr.bf16.mxu0 0
      %601 = vmatmul.mubr.bf16.gmra.mxu0 %v549
      %v602 = vpop.f32.mrf.mxu0
      %v603 = vadd.f32 0.0, %v602
      %v604 = vpop.f32.mrf.mxu0
      %v605 = vpop.f32.mrf.mxu0
      %v606 = vadd.f32 0.0, %v605
      %v607 = vpop.f32.mrf.mxu0
      %608 = vmatprep.mubr.bf16.mxu0 0
      %609 = vmatmul.mubr.bf16.gmra.mxu0 %v552
      %v610 = vpop.f32.mrf.mxu0
      %v611 = vadd.f32 0.0, %v610
      %v612 = vpop.f32.mrf.mxu0
      %v613 = vpop.f32.mrf.mxu0
      %v614 = vadd.f32 0.0, %v613
      %v615 = vpop.f32.mrf.mxu0
      %616 = vmatprep.mubr.bf16.mxu0 0
      %617 = vmatmul.mubr.bf16.gmra.mxu0 %v555
      %v618 = vpop.f32.mrf.mxu0
      %v619 = vadd.f32 0.0, %v618
      %v620 = vpop.f32.mrf.mxu0
      %v621 = vpop.f32.mrf.mxu0
      %v622 = vadd.f32 0.0, %v621
      %v623 = vpop.f32.mrf.mxu0
      %624 = vdwg.mxu0
      %v625 = vadd.f32 %v517, %v595
      %v626 = vadd.f32 %v518, %v598
      %v627 = vadd.f32 %v519, %v603
      %v628 = vadd.f32 %v520, %v606
      %v629 = vadd.f32 %v521, %v611
      %v630 = vadd.f32 %v522, %v614
      %v631 = vadd.f32 %v523, %v619
      %v632 = vadd.f32 %v524, %v622
      %v633 = vld [vmem:[%s2] sm:$0x1]
      %v635 = vlaneseq
      %v636 = vshrl.u32 %v635, 7
      %v637 = vsub.s32 0, %v636
      %v638 = vrot.slane %v633, %v637
      %v640 = vadd.f32 %v625, %v638
      %v641 = vadd.f32 %v626, %v638
      %v642 = vadd.f32 %v627, %v638
      %v643 = vadd.f32 %v628, %v638
      %v644 = vadd.f32 %v629, %v638
      %v645 = vadd.f32 %v630, %v638
      %v646 = vadd.f32 %v631, %v638
      %v647 = vadd.f32 %v632, %v638
      %v648 = vmax.f32 %v640, 0.0
      %v649 = vmax.f32 %v641, 0.0
      %v650 = vmax.f32 %v642, 0.0
      %v651 = vmax.f32 %v643, 0.0
      %v652 = vmax.f32 %v644, 0.0
      %v653 = vmax.f32 %v645, 0.0
      %v654 = vmax.f32 %v646, 0.0
      %v655 = vmax.f32 %v647, 0.0
      %v656 = vpack.c.bf16 %v649, %v648
      %v657 = vpack.c.bf16 %v651, %v650
      %v658 = vpack.c.bf16 %v653, %v652
      %v659 = vpack.c.bf16 %v655, %v654
      %v664 = vunpack.c.l.b16 %v656
      %v665 = vunpack.c.h.b16 %v656
      %v666 = vunpack.c.l.b16 %v657
      %v667 = vunpack.c.h.b16 %v657
      %v668 = vunpack.c.l.b16 %v658
      %v669 = vunpack.c.h.b16 %v658
      %v670 = vunpack.c.l.b16 %v659
      %v671 = vunpack.c.h.b16 %v659
      %v672 = vpack.c.b16 %v664, %v664
      %v673 = vpack.c.b16 %v665, %v665
      %v674 = vpack.c.b16 %v666, %v666
      %v675 = vpack.c.b16 %v667, %v667
      %v676 = vpack.c.b16 %v668, %v668
      %v677 = vpack.c.b16 %v669, %v669
      %v678 = vpack.c.b16 %v670, %v670
      %v679 = vpack.c.b16 %v671, %v671
      %vm688 = vcmask 125952
      %689 = vst.msk [vmem:[%s170] sm:$0xf] %vm688, %v672
      %690 = vst.msk [vmem:[%s170 + $0x4] sm:$0xf] %vm688, %v673
      %691 = vst.msk [vmem:[%s170 + $0x8] sm:$0xf] %vm688, %v674
      %692 = vst.msk [vmem:[%s170 + $0xc] sm:$0xf] %vm688, %v675
      %693 = vst.msk [vmem:[%s170 + $0x10] sm:$0xf] %vm688, %v676
      %694 = vst.msk [vmem:[%s170 + $0x14] sm:$0xf] %vm688, %v677
      %695 = vst.msk [vmem:[%s170 + $0x18] sm:$0xf] %vm688, %v678
      %696 = vst.msk [vmem:[%s170 + $0x1c] sm:$0xf] %vm688, %v679
      %p697 = scmp.lt.s32.totalorder %s14, 1
      %s698 = scalar_select %p697, %s14, 1
      %s699 = smul.addr %s698, 8
      %s700 = smul.addr %s699, 4
      %s701 = scalar_lea.vmem %s3, %s700
      // Predicated region
      $region33: #{cdpn_forward.4} parent=31 // pred_check
        %p702 = pneg %p100
      $region34: #{cdpn_forward.4} parent=31 // pred_check_branch
        %704 = sbr.rel (%p702) target = $region36
      $region35: #{cdpn_forward.4} parent=31 // pred_region
        _
      $region36: #{cdpn_forward.4} parent=31 // pred_fallthru
        _
    $region32: #{cdpn_forward.4} parent=5 // pred_fallthru
      _
    %p705 = scmp.le.s32.totalorder 2, %s9
    // Predicated region
    $region37: #{cdpn_forward.4} parent=5 // pred_check
      %p706 = pneg %p705
    $region38: #{cdpn_forward.4} parent=5 // pred_check_branch
      %708 = sbr.rel (%p706) target = $region40
    $region39: #{cdpn_forward.4} parent=5 // pred_region
      %s709 = ssub.s32 %s9, 2
      // Predicated region
      $region41: #{cdpn_forward.4} parent=39 // pred_check
        %p710 = pneg %p106
      $region42: #{cdpn_forward.4} parent=39 // pred_check_branch
        %712 = sbr.rel (%p710) target = $region44
      $region43: #{cdpn_forward.4} parent=39 // pred_region
        %p713 = scmp.lt.s32.totalorder %s15, 1
        %s714 = scalar_select %p713, %s15, 1
        %s715 = smul.addr %s714, 8
        %s716 = smul.addr %s715, 4
        %s717 = scalar_lea.vmem %s3, %s716
      $region44: #{cdpn_forward.4} parent=39 // pred_fallthru
        _
    $region40: #{cdpn_forward.4} parent=5 // pred_fallthru
      _
  $region6: #{cdpn_forward.4} parent=0 // loop_footer
    %s13 = sadd.s32 1, %s9
  $region7: #{cdpn_forward.4} parent=0 // loop_footer_branch
    %8 = sbr.rel target = $region3
  $region8: #{cdpn_forward.4} parent=0 // loop_exit
    _

// kernel: cdpn_forward.5
$region0: #{cdpn_forward.5}
  #allocation0 [shape = 'u32[]', space=smem, size = 0x4, offset = 0x4, fixed_abs, tag = 'smem constant byte address 0x4 - core index']
  #allocation1 [shape = 'u32[144,128]{1,0:T(1,128)}', space=vmem, size = 0x12000, scoped, tag = 'internal scratch']
  #allocation2 [shape = 'f32[5,5,64]{2,1,0:T(8,128)}', space=vmem, size = 0x5000, scoped, tag = 'scratch operand']
  #allocation3 [shape = 'f32[16,32]{1,0:T(8,128)}', space=vmem, size = 0x2000, scoped, tag = 'scratch operand']
  %s0 = inlined_call_operand.vmem [shape: bf16[2,4,4,64], index: 0, kind: input, shape index: {}]
  %s1 = inlined_call_operand.vmem [shape: bf16[4,64,32], index: 1, kind: input, shape index: {}]
  %s2 = inlined_call_operand.vmem [shape: f32[1,32], index: 2, kind: input, shape index: {}]
  %s3 = inlined_call_operand.vmem [shape: bf16[2,16,32], index: 3, kind: output, shape index: {}]
  %s4 = sld [smem:[#allocation0]]
  $region45: #{cdpn_forward.5} parent=0
    _
  %s6 = ssub.s32 1, %s4
  %s7 = scalar_select 0, %s6, %s4
  loop: start=0, step=1, limit=4
  $region2: #{cdpn_forward.5} parent=0 // loop_pre_header
    _
  $region3: #{cdpn_forward.5} parent=0 // loop_header
    %s9 = sphi 0, %s13
    %p10 = scmp.ge.s32.totalorder %s9, 4
    %s19 = sphi 0, %s21
    %s22 = sphi 0, %s19
    %s23 = sphi 0, %s22
    %s39 = sphi 0, %s23
    %s43 = sphi 0, %s43
    %s45 = sphi 0, %s43
    %s46 = sphi 0, %s45
    %s60 = sphi 0, %s46
    %s64 = sphi 0, %s64
    %s66 = sphi 0, %s64
    %s67 = sphi 0, %s66
    %s81 = sphi 0, %s67
    %s87 = sphi 0, %s89
    %s90 = sphi 0, %s87
    %s91 = sphi 0, %s90
    %s107 = sphi 0, %s91
  $region4: #{cdpn_forward.5} parent=0 // loop_header_branch
    %12 = sbr.rel (%p10) target = $region8
  $region5: #{cdpn_forward.5} parent=0 // loop_body
    %s14 = ssub.s32 %s9, 1
    %s15 = ssub.s32 %s9, 2
    %s16 = sadd.s32 %s9, 1
    %s17 = ssub.s32 %s9, %s16
    %p18 = scmp.eq.s32.totalorder %s17, 0
    %s20 = sadd.s32 %s19, 1
    %s21 = scalar_select %p18, %s19, %s20
    %p24 = pneg %p18
    %p25 = scmp.eq.s32.totalorder %s9, 1
    %p26 = por %p24, %p25
    %p27 = scmp.ne.s32.totalorder %s19, %s22
    %p28 = scmp.eq.s32.totalorder %s9, 0
    %p29 = por %p27, %p28
    %p30 = scmp.ne.s32.totalorder %s19, %s22
    %p31 = scmp.eq.s32.totalorder %s14, 1
    %p32 = por %p30, %p31
    %p33 = scmp.ne.s32.totalorder %s22, %s23
    %p34 = scmp.eq.s32.totalorder %s14, 0
    %p35 = por %p33, %p34
    %p36 = scmp.ne.s32.totalorder %s22, %s23
    %p37 = scmp.eq.s32.totalorder %s15, 1
    %p38 = por %p36, %p37
    %p40 = scmp.ne.s32.totalorder %s23, %s39
    %p41 = scmp.eq.s32.totalorder %s15, 0
    %p42 = por %p40, %p41
    %s44 = sadd.s32 %s43, 1
    %p47 = scmp.eq.s32.totalorder %s9, 1
    %p48 = scmp.ne.s32.totalorder %s43, %s45
    %p49 = scmp.eq.s32.totalorder %s9, 0
    %p50 = por %p48, %p49
    %p51 = scmp.ne.s32.totalorder %s43, %s45
    %p52 = scmp.eq.s32.totalorder %s14, 1
    %p53 = por %p51, %p52
    %p54 = scmp.ne.s32.totalorder %s45, %s46
    %p55 = scmp.eq.s32.totalorder %s14, 0
    %p56 = por %p54, %p55
    %p57 = scmp.ne.s32.totalorder %s45, %s46
    %p58 = scmp.eq.s32.totalorder %s15, 1
    %p59 = por %p57, %p58
    %p61 = scmp.ne.s32.totalorder %s46, %s60
    %p62 = scmp.eq.s32.totalorder %s15, 0
    %p63 = por %p61, %p62
    %s65 = sadd.s32 %s64, 1
    %p68 = scmp.eq.s32.totalorder %s9, 1
    %p69 = scmp.ne.s32.totalorder %s64, %s66
    %p70 = scmp.eq.s32.totalorder %s9, 0
    %p71 = por %p69, %p70
    %p72 = scmp.ne.s32.totalorder %s64, %s66
    %p73 = scmp.eq.s32.totalorder %s14, 1
    %p74 = por %p72, %p73
    %p75 = scmp.ne.s32.totalorder %s66, %s67
    %p76 = scmp.eq.s32.totalorder %s14, 0
    %p77 = por %p75, %p76
    %p78 = scmp.ne.s32.totalorder %s66, %s67
    %p79 = scmp.eq.s32.totalorder %s15, 1
    %p80 = por %p78, %p79
    %p82 = scmp.ne.s32.totalorder %s67, %s81
    %p83 = scmp.eq.s32.totalorder %s15, 0
    %p84 = por %p82, %p83
    %s85 = ssub.s32 %s9, %s16
    %p86 = scmp.eq.s32.totalorder %s85, 0
    %s88 = sadd.s32 %s87, 1
    %s89 = scalar_select %p86, %s87, %s88
    %p92 = pneg %p86
    %p93 = scmp.eq.s32.totalorder %s9, 1
    %p94 = por %p92, %p93
    %p95 = scmp.ne.s32.totalorder %s87, %s90
    %p96 = scmp.eq.s32.totalorder %s9, 0
    %p97 = por %p95, %p96
    %p98 = scmp.ne.s32.totalorder %s87, %s90
    %p99 = scmp.eq.s32.totalorder %s14, 1
    %p100 = por %p98, %p99
    %p101 = scmp.ne.s32.totalorder %s90, %s91
    %p102 = scmp.eq.s32.totalorder %s14, 0
    %p103 = por %p101, %p102
    %p104 = scmp.ne.s32.totalorder %s90, %s91
    %p105 = scmp.eq.s32.totalorder %s15, 1
    %p106 = por %p104, %p105
    %p108 = scmp.ne.s32.totalorder %s91, %s107
    %p109 = scmp.eq.s32.totalorder %s15, 0
    %p110 = por %p108, %p109
    %p111 = scmp.le.s32.totalorder 1, %s9
    %p112 = scmp.lt.s32.totalorder %s9, 3
    %p113 = pnand %p111, %p112
    %p114 = pneg %p113
    // Predicated region
    $region9: #{cdpn_forward.5} parent=5 // pred_check
      _
    $region10: #{cdpn_forward.5} parent=5 // pred_check_branch
      %116 = sbr.rel (%p113) target = $region12
    $region11: #{cdpn_forward.5} parent=5 // pred_region
      %s117 = ssub.s32 %s9, 1
      // Predicated region
      $region13: #{cdpn_forward.5} parent=11 // pred_check
        %p118 = pneg %p56
      $region14: #{cdpn_forward.5} parent=11 // pred_check_branch
        %120 = sbr.rel (%p118) target = $region16
      $region15: #{cdpn_forward.5} parent=11 // pred_region
        _
      $region16: #{cdpn_forward.5} parent=11 // pred_fallthru
        _
      // Predicated region
      $region17: #{cdpn_forward.5} parent=11 // pred_check
        %p121 = pneg %p77
      $region18: #{cdpn_forward.5} parent=11 // pred_check_branch
        %123 = sbr.rel (%p121) target = $region20
      $region19: #{cdpn_forward.5} parent=11 // pred_region
        _
      $region20: #{cdpn_forward.5} parent=11 // pred_fallthru
        _
    $region12: #{cdpn_forward.5} parent=5 // pred_fallthru
      _
    %p124 = scmp.lt.s32.totalorder %s9, 2
    // Predicated region
    $region21: #{cdpn_forward.5} parent=5 // pred_check
      %p125 = pneg %p124
    $region22: #{cdpn_forward.5} parent=5 // pred_check_branch
      %127 = sbr.rel (%p125) target = $region24
    $region23: #{cdpn_forward.5} parent=5 // pred_region
      // Predicated region
      $region25: #{cdpn_forward.5} parent=23 // pred_check
        %p128 = pneg %p29
      $region26: #{cdpn_forward.5} parent=23 // pred_check_branch
        %130 = sbr.rel (%p128) target = $region28
      $region27: #{cdpn_forward.5} parent=23 // pred_region
        %p131 = scmp.lt.s32.totalorder %s9, 1
        %s132 = scalar_select %p131, %s9, 1
        %s133 = smul.addr %s132, 4
        %s134 = smul.addr %s133, 2
        %s135 = scalar_lea.vmem %s0, %s134
      $region28: #{cdpn_forward.5} parent=23 // pred_fallthru
        _
    $region24: #{cdpn_forward.5} parent=5 // pred_fallthru
      _
    %p136 = scmp.le.s32.totalorder 1, %s9
    %p137 = scmp.lt.s32.totalorder %s9, 3
    %p138 = pnand %p136, %p137
    %p139 = pneg %p138
    // Predicated region
    $region29: #{cdpn_forward.5} parent=5 // pred_check
      _
    $region30: #{cdpn_forward.5} parent=5 // pred_check_branch
      %141 = sbr.rel (%p138) target = $region32
    $region31: #{cdpn_forward.5} parent=5 // pred_region
      %s142 = ssub.s32 %s9, 1
      %p143 = scmp.lt.s32.totalorder %s14, 1
      %s144 = scalar_select %p143, %s14, 1
      %s145 = smul.addr %s144, 4
      %s146 = smul.addr %s145, 2
      %s147 = scalar_lea.vmem %s0, %s146
      %p148 = pneg %p35
      %p149 = pneg %p32
      %p150 = pneg %p56
      %p151 = pneg %p53
      %p152 = pneg %p77
      %p153 = pneg %p74
      %p154 = pneg %p103
      %p155 = pneg %p100
      %p156 = scmp.lt.s32.totalorder %s14, 1
      %s157 = scalar_select %p156, %s14, 1
      %s158 = smul.addr %s157, 2
      %s159 = smul.addr %s158, 4
      %s160 = scalar_lea.vmem %s3, %s159
      %p161 = scmp.lt.s32.totalorder %s14, 1
      %s162 = scalar_select %p161, %s14, 1
      %s163 = smul.addr %s162, 4
      %s164 = smul.addr %s163, 2
      %s165 = scalar_lea.vmem %s0, %s164
      %p166 = scmp.lt.s32.totalorder %s14, 1
      %s167 = scalar_select %p166, %s14, 1
      %s168 = smul.addr %s167, 2
      %s169 = smul.addr %s168, 4
      %s170 = scalar_lea.vmem %s3, %s169
      %vm172 = vcmask 520192
      %173 = vst.msk [vmem:[#allocation2] sm:$0x1f] %vm172, 0.0
      %174 = vst.msk [vmem:[#allocation2 + $0x8] sm:$0x1f] %vm172, 0.0
      %175 = vst.msk [vmem:[#allocation2 + $0x10] sm:$0x1f] %vm172, 0.0
      %176 = vst.msk [vmem:[#allocation2 + $0x18] sm:$0x1f] %vm172, 0.0
      %177 = vst.msk [vmem:[#allocation2 + $0x20] sm:$0x1f] %vm172, 0.0
      %v178 = vld [vmem:[%s165] sm:$0x3]
      %v179 = vld [vmem:[%s165 + $0x2] sm:$0x3]
      %v180 = vld [vmem:[%s165 + $0x4] sm:$0x3]
      %v181 = vld [vmem:[%s165 + $0x6] sm:$0x3]
      %v182 = vunpack.c.l.bf16 %v178
      %v183 = vunpack.c.l.bf16 %v179
      %v184 = vunpack.c.l.bf16 %v180
      %v185 = vunpack.c.l.bf16 %v181
      %s186 = scalar_lea.vmem [#allocation2], 8
      %vm187 = vcmask 519168
      %188 = vst.msk [vmem:[%s186 + $0x1] sm:$0xf] %vm187, %v182
      %189 = vst.msk [vmem:[%s186 + $0x9] sm:$0xf] %vm187, %v183
      %190 = vst.msk [vmem:[%s186 + $0x11] sm:$0xf] %vm187, %v184
      %191 = vst.msk [vmem:[%s186 + $0x19] sm:$0xf] %vm187, %v185
      %v192 = vld [vmem:[#allocation2] sm:$0xf]
      %v193 = vpack.c.bf16 %v192, %v192
      %v194 = vld [vmem:[%s1] sm:$0xf]
      %v195 = vld [vmem:[%s1 + $0x4] sm:$0xf]
      %v196 = vld [vmem:[%s1 + $0x8] sm:$0xf]
      %v197 = vld [vmem:[%s1 + $0xc] sm:$0xf]
      %v198 = vld [vmem:[%s1 + $0x10] sm:$0xf]
      %v199 = vld [vmem:[%s1 + $0x14] sm:$0xf]
      %v200 = vld [vmem:[%s1 + $0x18] sm:$0xf]
      %v201 = vld [vmem:[%s1 + $0x1c] sm:$0xf]
      %v202 = vld [vmem:[#allocation2 + $0x1] sm:$0xf]
      %v203 = vpack.c.bf16 %v202, %v202
      %s204 = scalar_lea.vmem %s1, 32
      %v205 = vld [vmem:[%s204] sm:$0xf]
      %v206 = vld [vmem:[%s204 + $0x4] sm:$0xf]
      %v207 = vld [vmem:[%s204 + $0x8] sm:$0xf]
      %v208 = vld [vmem:[%s204 + $0xc] sm:$0xf]
      %v209 = vld [vmem:[%s204 + $0x10] sm:$0xf]
      %v210 = vld [vmem:[%s204 + $0x14] sm:$0xf]
      %v211 = vld [vmem:[%s204 + $0x18] sm:$0xf]
      %v212 = vld [vmem:[%s204 + $0x1c] sm:$0xf]
      %v221 = vunpack.c.l.b16 %v205
      %v222 = vunpack.c.l.b16 %v206
      %v223 = vunpack.c.l.b16 %v207
      %v224 = vunpack.c.l.b16 %v208
      %v225 = vunpack.c.l.b16 %v209
      %v226 = vunpack.c.l.b16 %v210
      %v227 = vunpack.c.l.b16 %v211
      %v228 = vunpack.c.l.b16 %v212
      %v229 = vpack.c.b16 %v222, %v221
      %v230 = vpack.c.b16 %v224, %v223
      %v231 = vpack.c.b16 %v226, %v225
      %v232 = vpack.c.b16 %v228, %v227
      %vm237 = vcmask 523264
      %v239 = vsel %vm237, %v203, 0
      %241 = vmatprep.subr.bf16.mxu0 0
      %242 = vmatpush1.bf16.msra.mxu0 0
      %243 = vmatprep.subr.bf16.mxu0 0
      %244 = vmatpush1.bf16.msra.mxu0 0
      %245 = vmatprep.subr.bf16.mxu0 0
      %246 = vmatpush1.bf16.msra.mxu0 0
      %247 = vmatprep.subr.bf16.mxu0 0
      %248 = vmatpush1.bf16.msra.mxu0 0
      %249 = vmatprep.subr.bf16.mxu0 0
      %250 = vmatpush1.bf16.msra.mxu0 %v232
      %251 = vmatprep.subr.bf16.mxu0 0
      %252 = vmatpush1.bf16.msra.mxu0 %v231
      %253 = vmatprep.subr.bf16.mxu0 0
      %254 = vmatpush1.bf16.msra.mxu0 %v230
      %255 = vmatprep.subr.bf16.mxu0 0
      %256 = vmatpush1.bf16.msra.mxu0 %v229
      %257 = vmatprep.subr.bf16.mxu0 0
      %258 = vmatpush2.bf16.msra.mxu0 0
      %259 = vmatprep.subr.bf16.mxu0 0
      %260 = vmatpush2.bf16.msra.mxu0 0
      %261 = vmatprep.subr.bf16.mxu0 0
      %262 = vmatpush2.bf16.msra.mxu0 0
      %263 = vmatprep.subr.bf16.mxu0 0
      %264 = vmatpush2.bf16.msra.mxu0 0
      %265 = vmatprep.subr.bf16.mxu0 0
      %266 = vmatpush2.bf16.msra.mxu0 0
      %267 = vmatprep.subr.bf16.mxu0 0
      %268 = vmatpush2.bf16.msra.mxu0 0
      %269 = vmatprep.subr.bf16.mxu0 0
      %270 = vmatpush2.bf16.msra.mxu0 0
      %271 = vmatprep.subr.bf16.mxu0 0
      %272 = vmatpush2.bf16.msra.mxu0 0
      %273 = vmatprep.mubr.bf16.mxu0 0
      %274 = vmatmul.mubr.bf16.gmra.mxu0 %v239
      %v275 = vpop.f32.mrf.mxu0
      %v276 = vadd.f32 0.0, %v275
      %v277 = vpop.f32.mrf.mxu0
      %v278 = vpop.f32.mrf.mxu0
      %v279 = vpop.f32.mrf.mxu0
      %280 = vdwg.mxu0
      %v289 = vunpack.c.l.b16 %v194
      %v290 = vunpack.c.l.b16 %v195
      %v291 = vunpack.c.l.b16 %v196
      %v292 = vunpack.c.l.b16 %v197
      %v293 = vunpack.c.l.b16 %v198
      %v294 = vunpack.c.l.b16 %v199
      %v295 = vunpack.c.l.b16 %v200
      %v296 = vunpack.c.l.b16 %v201
      %v297 = vpack.c.b16 %v290, %v289
      %v298 = vpack.c.b16 %v292, %v291
      %v299 = vpack.c.b16 %v294, %v293
      %v300 = vpack.c.b16 %v296, %v295
      %v306 = vsel %vm237, %v193, 0
      %308 = vmatprep.subr.bf16.mxu0 0
      %309 = vmatpush1.bf16.msra.mxu0 0
      %310 = vmatprep.subr.bf16.mxu0 0
      %311 = vmatpush1.bf16.msra.mxu0 0
      %312 = vmatprep.subr.bf16.mxu0 0
      %313 = vmatpush1.bf16.msra.mxu0 0
      %314 = vmatprep.subr.bf16.mxu0 0
      %315 = vmatpush1.bf16.msra.mxu0 0
      %316 = vmatprep.subr.bf16.mxu0 0
      %317 = vmatpush1.bf16.msra.mxu0 %v300
      %318 = vmatprep.subr.bf16.mxu0 0
      %319 = vmatpush1.bf16.msra.mxu0 %v299
      %320 = vmatprep.subr.bf16.mxu0 0
      %321 = vmatpush1.bf16.msra.mxu0 %v298
      %322 = vmatprep.subr.bf16.mxu0 0
      %323 = vmatpush1.bf16.msra.mxu0 %v297
      %324 = vmatprep.subr.bf16.mxu0 0
      %325 = vmatpush2.bf16.msra.mxu0 0
      %326 = vmatprep.subr.bf16.mxu0 0
      %327 = vmatpush2.bf16.msra.mxu0 0
      %328 = vmatprep.subr.bf16.mxu0 0
      %329 = vmatpush2.bf16.msra.mxu0 0
      %330 = vmatprep.subr.bf16.mxu0 0
      %331 = vmatpush2.bf16.msra.mxu0 0
      %332 = vmatprep.subr.bf16.mxu0 0
      %333 = vmatpush2.bf16.msra.mxu0 0
      %334 = vmatprep.subr.bf16.mxu0 0
      %335 = vmatpush2.bf16.msra.mxu0 0
      %336 = vmatprep.subr.bf16.mxu0 0
      %337 = vmatpush2.bf16.msra.mxu0 0
      %338 = vmatprep.subr.bf16.mxu0 0
      %339 = vmatpush2.bf16.msra.mxu0 0
      %340 = vmatprep.mubr.bf16.mxu0 0
      %341 = vmatmul.mubr.bf16.gmra.mxu0 %v306
      %v342 = vpop.f32.mrf.mxu0
      %v343 = vadd.f32 %v276, %v342
      %v344 = vpop.f32.mrf.mxu0
      %v345 = vpop.f32.mrf.mxu0
      %v346 = vpop.f32.mrf.mxu0
      %347 = vdwg.mxu0
      %v348 = vld [vmem:[%s186] sm:$0xf]
      %v349 = vpack.c.bf16 %v348, %v348
      %s350 = scalar_lea.vmem %s1, 64
      %v351 = vld [vmem:[%s350] sm:$0xf]
      %v352 = vld [vmem:[%s350 + $0x4] sm:$0xf]
      %v353 = vld [vmem:[%s350 + $0x8] sm:$0xf]
      %v354 = vld [vmem:[%s350 + $0xc] sm:$0xf]
      %v355 = vld [vmem:[%s350 + $0x10] sm:$0xf]
      %v356 = vld [vmem:[%s350 + $0x14] sm:$0xf]
      %v357 = vld [vmem:[%s350 + $0x18] sm:$0xf]
      %v358 = vld [vmem:[%s350 + $0x1c] sm:$0xf]
      %v367 = vunpack.c.l.b16 %v351
      %v368 = vunpack.c.l.b16 %v352
      %v369 = vunpack.c.l.b16 %v353
      %v370 = vunpack.c.l.b16 %v354
      %v371 = vunpack.c.l.b16 %v355
      %v372 = vunpack.c.l.b16 %v356
      %v373 = vunpack.c.l.b16 %v357
      %v374 = vunpack.c.l.b16 %v358
      %v375 = vpack.c.b16 %v368, %v367
      %v376 = vpack.c.b16 %v370, %v369
      %v377 = vpack.c.b16 %v372, %v371
      %v378 = vpack.c.b16 %v374, %v373
      %v384 = vsel %vm237, %v349, 0
      %386 = vmatprep.subr.bf16.mxu0 0
      %387 = vmatpush1.bf16.msra.mxu0 0
      %388 = vmatprep.subr.bf16.mxu0 0
      %389 = vmatpush1.bf16.msra.mxu0 0
      %390 = vmatprep.subr.bf16.mxu0 0
      %391 = vmatpush1.bf16.msra.mxu0 0
      %392 = vmatprep.subr.bf16.mxu0 0
      %393 = vmatpush1.bf16.msra.mxu0 0
      %394 = vmatprep.subr.bf16.mxu0 0
      %395 = vmatpush1.bf16.msra.mxu0 %v378
      %396 = vmatprep.subr.bf16.mxu0 0
      %397 = vmatpush1.bf16.msra.mxu0 %v377
      %398 = vmatprep.subr.bf16.mxu0 0
      %399 = vmatpush1.bf16.msra.mxu0 %v376
      %400 = vmatprep.subr.bf16.mxu0 0
      %401 = vmatpush1.bf16.msra.mxu0 %v375
      %402 = vmatprep.subr.bf16.mxu0 0
      %403 = vmatpush2.bf16.msra.mxu0 0
      %404 = vmatprep.subr.bf16.mxu0 0
      %405 = vmatpush2.bf16.msra.mxu0 0
      %406 = vmatprep.subr.bf16.mxu0 0
      %407 = vmatpush2.bf16.msra.mxu0 0
      %408 = vmatprep.subr.bf16.mxu0 0
      %409 = vmatpush2.bf16.msra.mxu0 0
      %410 = vmatprep.subr.bf16.mxu0 0
      %411 = vmatpush2.bf16.msra.mxu0 0
      %412 = vmatprep.subr.bf16.mxu0 0
      %413 = vmatpush2.bf16.msra.mxu0 0
      %414 = vmatprep.subr.bf16.mxu0 0
      %415 = vmatpush2.bf16.msra.mxu0 0
      %416 = vmatprep.subr.bf16.mxu0 0
      %417 = vmatpush2.bf16.msra.mxu0 0
      %418 = vmatprep.mubr.bf16.mxu0 0
      %419 = vmatmul.mubr.bf16.gmra.mxu0 %v384
      %v420 = vpop.f32.mrf.mxu0
      %v421 = vadd.f32 0.0, %v420
      %v422 = vpop.f32.mrf.mxu0
      %v423 = vpop.f32.mrf.mxu0
      %v424 = vpop.f32.mrf.mxu0
      %425 = vdwg.mxu0
      %v426 = vadd.f32 %v343, %v421
      %v427 = vld [vmem:[%s186 + $0x1] sm:$0xf]
      %v428 = vpack.c.bf16 %v427, %v427
      %s429 = scalar_lea.vmem %s1, 96
      %v430 = vld [vmem:[%s429] sm:$0xf]
      %v431 = vld [vmem:[%s429 + $0x4] sm:$0xf]
      %v432 = vld [vmem:[%s429 + $0x8] sm:$0xf]
      %v433 = vld [vmem:[%s429 + $0xc] sm:$0xf]
      %v434 = vld [vmem:[%s429 + $0x10] sm:$0xf]
      %v435 = vld [vmem:[%s429 + $0x14] sm:$0xf]
      %v436 = vld [vmem:[%s429 + $0x18] sm:$0xf]
      %v437 = vld [vmem:[%s429 + $0x1c] sm:$0xf]
      %v446 = vunpack.c.l.b16 %v430
      %v447 = vunpack.c.l.b16 %v431
      %v448 = vunpack.c.l.b16 %v432
      %v449 = vunpack.c.l.b16 %v433
      %v450 = vunpack.c.l.b16 %v434
      %v451 = vunpack.c.l.b16 %v435
      %v452 = vunpack.c.l.b16 %v436
      %v453 = vunpack.c.l.b16 %v437
      %v454 = vpack.c.b16 %v447, %v446
      %v455 = vpack.c.b16 %v449, %v448
      %v456 = vpack.c.b16 %v451, %v450
      %v457 = vpack.c.b16 %v453, %v452
      %v463 = vsel %vm237, %v428, 0
      %465 = vmatprep.subr.bf16.mxu0 0
      %466 = vmatpush1.bf16.msra.mxu0 0
      %467 = vmatprep.subr.bf16.mxu0 0
      %468 = vmatpush1.bf16.msra.mxu0 0
      %469 = vmatprep.subr.bf16.mxu0 0
      %470 = vmatpush1.bf16.msra.mxu0 0
      %471 = vmatprep.subr.bf16.mxu0 0
      %472 = vmatpush1.bf16.msra.mxu0 0
      %473 = vmatprep.subr.bf16.mxu0 0
      %474 = vmatpush1.bf16.msra.mxu0 %v457
      %475 = vmatprep.subr.bf16.mxu0 0
      %476 = vmatpush1.bf16.msra.mxu0 %v456
      %477 = vmatprep.subr.bf16.mxu0 0
      %478 = vmatpush1.bf16.msra.mxu0 %v455
      %479 = vmatprep.subr.bf16.mxu0 0
      %480 = vmatpush1.bf16.msra.mxu0 %v454
      %481 = vmatprep.subr.bf16.mxu0 0
      %482 = vmatpush2.bf16.msra.mxu0 0
      %483 = vmatprep.subr.bf16.mxu0 0
      %484 = vmatpush2.bf16.msra.mxu0 0
      %485 = vmatprep.subr.bf16.mxu0 0
      %486 = vmatpush2.bf16.msra.mxu0 0
      %487 = vmatprep.subr.bf16.mxu0 0
      %488 = vmatpush2.bf16.msra.mxu0 0
      %489 = vmatprep.subr.bf16.mxu0 0
      %490 = vmatpush2.bf16.msra.mxu0 0
      %491 = vmatprep.subr.bf16.mxu0 0
      %492 = vmatpush2.bf16.msra.mxu0 0
      %493 = vmatprep.subr.bf16.mxu0 0
      %494 = vmatpush2.bf16.msra.mxu0 0
      %495 = vmatprep.subr.bf16.mxu0 0
      %496 = vmatpush2.bf16.msra.mxu0 0
      %497 = vmatprep.mubr.bf16.mxu0 0
      %498 = vmatmul.mubr.bf16.gmra.mxu0 %v463
      %v499 = vpop.f32.mrf.mxu0
      %v500 = vadd.f32 0.0, %v499
      %v501 = vpop.f32.mrf.mxu0
      %v502 = vpop.f32.mrf.mxu0
      %v503 = vpop.f32.mrf.mxu0
      %504 = vdwg.mxu0
      %v505 = vadd.f32 %v426, %v500
      %vm506 = vcmask 257024
      %507 = vst.msk [vmem:[#allocation3] sm:$0xf] %vm506, %v505
      %v508 = vld [vmem:[%s186] sm:$0xf]
      %v509 = vpack.c.bf16 %v508, %v508
      %v510 = vld [vmem:[%s1] sm:$0xf]
      %v511 = vld [vmem:[%s1 + $0x4] sm:$0xf]
      %v512 = vld [vmem:[%s1 + $0x8] sm:$0xf]
      %v513 = vld [vmem:[%s1 + $0xc] sm:$0xf]
      %v514 = vld [vmem:[%s1 + $0x10] sm:$0xf]
      %v515 = vld [vmem:[%s1 + $0x14] sm:$0xf]
      %v516 = vld [vmem:[%s1 + $0x18] sm:$0xf]
      %v517 = vld [vmem:[%s1 + $0x1c] sm:$0xf]
      %v518 = vld [vmem:[%s186 + $0x1] sm:$0xf]
      %v519 = vpack.c.bf16 %v518, %v518
      %v520 = vld [vmem:[%s204] sm:$0xf]
      %v521 = vld [vmem:[%s204 + $0x4] sm:$0xf]
      %v522 = vld [vmem:[%s204 + $0x8] sm:$0xf]
      %v523 = vld [vmem:[%s204 + $0xc] sm:$0xf]
      %v524 = vld [vmem:[%s204 + $0x10] sm:$0xf]
      %v525 = vld [vmem:[%s204 + $0x14] sm:$0xf]
      %v526 = vld [vmem:[%s204 + $0x18] sm:$0xf]
      %v527 = vld [vmem:[%s204 + $0x1c] sm:$0xf]
      %v536 = vunpack.c.l.b16 %v520
      %v537 = vunpack.c.l.b16 %v521
      %v538 = vunpack.c.l.b16 %v522
      %v539 = vunpack.c.l.b16 %v523
      %v540 = vunpack.c.l.b16 %v524
      %v541 = vunpack.c.l.b16 %v525
      %v542 = vunpack.c.l.b16 %v526
      %v543 = vunpack.c.l.b16 %v527
      %v544 = vpack.c.b16 %v537, %v536
      %v545 = vpack.c.b16 %v539, %v538
      %v546 = vpack.c.b16 %v541, %v540
      %v547 = vpack.c.b16 %v543, %v542
      %v553 = vsel %vm237, %v519, 0
      %555 = vmatprep.subr.bf16.mxu0 0
      %556 = vmatpush1.bf16.msra.mxu0 0
      %557 = vmatprep.subr.bf16.mxu0 0
      %558 = vmatpush1.bf16.msra.mxu0 0
      %559 = vmatprep.subr.bf16.mxu0 0
      %560 = vmatpush1.bf16.msra.mxu0 0
      %561 = vmatprep.subr.bf16.mxu0 0
      %562 = vmatpush1.bf16.msra.mxu0 0
      %563 = vmatprep.subr.bf16.mxu0 0
      %564 = vmatpush1.bf16.msra.mxu0 %v547
      %565 = vmatprep.subr.bf16.mxu0 0
      %566 = vmatpush1.bf16.msra.mxu0 %v546
      %567 = vmatprep.subr.bf16.mxu0 0
      %568 = vmatpush1.bf16.msra.mxu0 %v545
      %569 = vmatprep.subr.bf16.mxu0 0
      %570 = vmatpush1.bf16.msra.mxu0 %v544
      %571 = vmatprep.subr.bf16.mxu0 0
      %572 = vmatpush2.bf16.msra.mxu0 0
      %573 = vmatprep.subr.bf16.mxu0 0
      %574 = vmatpush2.bf16.msra.mxu0 0
      %575 = vmatprep.subr.bf16.mxu0 0
      %576 = vmatpush2.bf16.msra.mxu0 0
      %577 = vmatprep.subr.bf16.mxu0 0
      %578 = vmatpush2.bf16.msra.mxu0 0
      %579 = vmatprep.subr.bf16.mxu0 0
      %580 = vmatpush2.bf16.msra.mxu0 0
      %581 = vmatprep.subr.bf16.mxu0 0
      %582 = vmatpush2.bf16.msra.mxu0 0
      %583 = vmatprep.subr.bf16.mxu0 0
      %584 = vmatpush2.bf16.msra.mxu0 0
      %585 = vmatprep.subr.bf16.mxu0 0
      %586 = vmatpush2.bf16.msra.mxu0 0
      %587 = vmatprep.mubr.bf16.mxu0 0
      %588 = vmatmul.mubr.bf16.gmra.mxu0 %v553
      %v589 = vpop.f32.mrf.mxu0
      %v590 = vadd.f32 0.0, %v589
      %v591 = vpop.f32.mrf.mxu0
      %v592 = vpop.f32.mrf.mxu0
      %v593 = vpop.f32.mrf.mxu0
      %594 = vdwg.mxu0
      %v603 = vunpack.c.l.b16 %v510
      %v604 = vunpack.c.l.b16 %v511
      %v605 = vunpack.c.l.b16 %v512
      %v606 = vunpack.c.l.b16 %v513
      %v607 = vunpack.c.l.b16 %v514
      %v608 = vunpack.c.l.b16 %v515
      %v609 = vunpack.c.l.b16 %v516
      %v610 = vunpack.c.l.b16 %v517
      %v611 = vpack.c.b16 %v604, %v603
      %v612 = vpack.c.b16 %v606, %v605
      %v613 = vpack.c.b16 %v608, %v607
      %v614 = vpack.c.b16 %v610, %v609
      %v620 = vsel %vm237, %v509, 0
      %622 = vmatprep.subr.bf16.mxu0 0
      %623 = vmatpush1.bf16.msra.mxu0 0
      %624 = vmatprep.subr.bf16.mxu0 0
      %625 = vmatpush1.bf16.msra.mxu0 0
      %626 = vmatprep.subr.bf16.mxu0 0
      %627 = vmatpush1.bf16.msra.mxu0 0
      %628 = vmatprep.subr.bf16.mxu0 0
      %629 = vmatpush1.bf16.msra.mxu0 0
      %630 = vmatprep.subr.bf16.mxu0 0
      %631 = vmatpush1.bf16.msra.mxu0 %v614
      %632 = vmatprep.subr.bf16.mxu0 0
      %633 = vmatpush1.bf16.msra.mxu0 %v613
      %634 = vmatprep.subr.bf16.mxu0 0
      %635 = vmatpush1.bf16.msra.mxu0 %v612
      %636 = vmatprep.subr.bf16.mxu0 0
      %637 = vmatpush1.bf16.msra.mxu0 %v611
      %638 = vmatprep.subr.bf16.mxu0 0
      %639 = vmatpush2.bf16.msra.mxu0 0
      %640 = vmatprep.subr.bf16.mxu0 0
      %641 = vmatpush2.bf16.msra.mxu0 0
      %642 = vmatprep.subr.bf16.mxu0 0
      %643 = vmatpush2.bf16.msra.mxu0 0
      %644 = vmatprep.subr.bf16.mxu0 0
      %645 = vmatpush2.bf16.msra.mxu0 0
      %646 = vmatprep.subr.bf16.mxu0 0
      %647 = vmatpush2.bf16.msra.mxu0 0
      %648 = vmatprep.subr.bf16.mxu0 0
      %649 = vmatpush2.bf16.msra.mxu0 0
      %650 = vmatprep.subr.bf16.mxu0 0
      %651 = vmatpush2.bf16.msra.mxu0 0
      %652 = vmatprep.subr.bf16.mxu0 0
      %653 = vmatpush2.bf16.msra.mxu0 0
      %654 = vmatprep.mubr.bf16.mxu0 0
      %655 = vmatmul.mubr.bf16.gmra.mxu0 %v620
      %v656 = vpop.f32.mrf.mxu0
      %v657 = vadd.f32 %v590, %v656
      %v658 = vpop.f32.mrf.mxu0
      %v659 = vpop.f32.mrf.mxu0
      %v660 = vpop.f32.mrf.mxu0
      %661 = vdwg.mxu0
      %s662 = scalar_lea.vmem [#allocation2], 16
      %v663 = vld [vmem:[%s662] sm:$0xf]
      %v664 = vpack.c.bf16 %v663, %v663
      %v665 = vld [vmem:[%s350] sm:$0xf]
      %v666 = vld [vmem:[%s350 + $0x4] sm:$0xf]
      %v667 = vld [vmem:[%s350 + $0x8] sm:$0xf]
      %v668 = vld [vmem:[%s350 + $0xc] sm:$0xf]
      %v669 = vld [vmem:[%s350 + $0x10] sm:$0xf]
      %v670 = vld [vmem:[%s350 + $0x14] sm:$0xf]
      %v671 = vld [vmem:[%s350 + $0x18] sm:$0xf]
      %v672 = vld [vmem:[%s350 + $0x1c] sm:$0xf]
      %v681 = vunpack.c.l.b16 %v665
      %v682 = vunpack.c.l.b16 %v666
      %v683 = vunpack.c.l.b16 %v667
      %v684 = vunpack.c.l.b16 %v668
      %v685 = vunpack.c.l.b16 %v669
      %v686 = vunpack.c.l.b16 %v670
      %v687 = vunpack.c.l.b16 %v671
      %v688 = vunpack.c.l.b16 %v672
      %v689 = vpack.c.b16 %v682, %v681
      %v690 = vpack.c.b16 %v684, %v683
      %v691 = vpack.c.b16 %v686, %v685
      %v692 = vpack.c.b16 %v688, %v687
      %v698 = vsel %vm237, %v664, 0
      %700 = vmatprep.subr.bf16.mxu0 0
      %701 = vmatpush1.bf16.msra.mxu0 0
      %702 = vmatprep.subr.bf16.mxu0 0
      %703 = vmatpush1.bf16.msra.mxu0 0
      %704 = vmatprep.subr.bf16.mxu0 0
      %705 = vmatpush1.bf16.msra.mxu0 0
      %706 = vmatprep.subr.bf16.mxu0 0
      %707 = vmatpush1.bf16.msra.mxu0 0
      %708 = vmatprep.subr.bf16.mxu0 0
      %709 = vmatpush1.bf16.msra.mxu0 %v692
      %710 = vmatprep.subr.bf16.mxu0 0
      %711 = vmatpush1.bf16.msra.mxu0 %v691
      %712 = vmatprep.subr.bf16.mxu0 0
      %713 = vmatpush1.bf16.msra.mxu0 %v690
      %714 = vmatprep.subr.bf16.mxu0 0
      %715 = vmatpush1.bf16.msra.mxu0 %v689
      %716 = vmatprep.subr.bf16.mxu0 0
      %717 = vmatpush2.bf16.msra.mxu0 0
      %718 = vmatprep.subr.bf16.mxu0 0
      %719 = vmatpush2.bf16.msra.mxu0 0
      %720 = vmatprep.subr.bf16.mxu0 0
      %721 = vmatpush2.bf16.msra.mxu0 0
      %722 = vmatprep.subr.bf16.mxu0 0
      %723 = vmatpush2.bf16.msra.mxu0 0
      %724 = vmatprep.subr.bf16.mxu0 0
      %725 = vmatpush2.bf16.msra.mxu0 0
      %726 = vmatprep.subr.bf16.mxu0 0
      %727 = vmatpush2.bf16.msra.mxu0 0
      %728 = vmatprep.subr.bf16.mxu0 0
      %729 = vmatpush2.bf16.msra.mxu0 0
      %730 = vmatprep.subr.bf16.mxu0 0
      %731 = vmatpush2.bf16.msra.mxu0 0
      %732 = vmatprep.mubr.bf16.mxu0 0
      %733 = vmatmul.mubr.bf16.gmra.mxu0 %v698
      %v734 = vpop.f32.mrf.mxu0
      %v735 = vadd.f32 0.0, %v734
      %v736 = vpop.f32.mrf.mxu0
      %v737 = vpop.f32.mrf.mxu0
      %v738 = vpop.f32.mrf.mxu0
      %739 = vdwg.mxu0
      %v740 = vadd.f32 %v657, %v735
      %v741 = vld [vmem:[%s662 + $0x1] sm:$0xf]
      %v742 = vpack.c.bf16 %v741, %v741
      %v743 = vld [vmem:[%s429] sm:$0xf]
      %v744 = vld [vmem:[%s429 + $0x4] sm:$0xf]
      %v745 = vld [vmem:[%s429 + $0x8] sm:$0xf]
      %v746 = vld [vmem:[%s429 + $0xc] sm:$0xf]
      %v747 = vld [vmem:[%s429 + $0x10] sm:$0xf]
      %v748 = vld [vmem:[%s429 + $0x14] sm:$0xf]
      %v749 = vld [vmem:[%s429 + $0x18] sm:$0xf]
      %v750 = vld [vmem:[%s429 + $0x1c] sm:$0xf]
      %v759 = vunpack.c.l.b16 %v743
      %v760 = vunpack.c.l.b16 %v744
      %v761 = vunpack.c.l.b16 %v745
      %v762 = vunpack.c.l.b16 %v746
      %v763 = vunpack.c.l.b16 %v747
      %v764 = vunpack.c.l.b16 %v748
      %v765 = vunpack.c.l.b16 %v749
      %v766 = vunpack.c.l.b16 %v750
      %v767 = vpack.c.b16 %v760, %v759
      %v768 = vpack.c.b16 %v762, %v761
      %v769 = vpack.c.b16 %v764, %v763
      %v770 = vpack.c.b16 %v766, %v765
      %v776 = vsel %vm237, %v742, 0
      %778 = vmatprep.subr.bf16.mxu0 0
      %779 = vmatpush1.bf16.msra.mxu0 0
      %780 = vmatprep.subr.bf16.mxu0 0
      %781 = vmatpush1.bf16.msra.mxu0 0
      %782 = vmatprep.subr.bf16.mxu0 0
      %783 = vmatpush1.bf16.msra.mxu0 0
      %784 = vmatprep.subr.bf16.mxu0 0
      %785 = vmatpush1.bf16.msra.mxu0 0
      %786 = vmatprep.subr.bf16.mxu0 0
      %787 = vmatpush1.bf16.msra.mxu0 %v770
      %788 = vmatprep.subr.bf16.mxu0 0
      %789 = vmatpush1.bf16.msra.mxu0 %v769
      %790 = vmatprep.subr.bf16.mxu0 0
      %791 = vmatpush1.bf16.msra.mxu0 %v768
      %792 = vmatprep.subr.bf16.mxu0 0
      %793 = vmatpush1.bf16.msra.mxu0 %v767
      %794 = vmatprep.subr.bf16.mxu0 0
      %795 = vmatpush2.bf16.msra.mxu0 0
      %796 = vmatprep.subr.bf16.mxu0 0
      %797 = vmatpush2.bf16.msra.mxu0 0
      %798 = vmatprep.subr.bf16.mxu0 0
      %799 = vmatpush2.bf16.msra.mxu0 0
      %800 = vmatprep.subr.bf16.mxu0 0
      %801 = vmatpush2.bf16.msra.mxu0 0
      %802 = vmatprep.subr.bf16.mxu0 0
      %803 = vmatpush2.bf16.msra.mxu0 0
      %804 = vmatprep.subr.bf16.mxu0 0
      %805 = vmatpush2.bf16.msra.mxu0 0
      %806 = vmatprep.subr.bf16.mxu0 0
      %807 = vmatpush2.bf16.msra.mxu0 0
      %808 = vmatprep.subr.bf16.mxu0 0
      %809 = vmatpush2.bf16.msra.mxu0 0
      %810 = vmatprep.mubr.bf16.mxu0 0
      %811 = vmatmul.mubr.bf16.gmra.mxu0 %v776
      %v812 = vpop.f32.mrf.mxu0
      %v813 = vadd.f32 0.0, %v812
      %v814 = vpop.f32.mrf.mxu0
      %v815 = vpop.f32.mrf.mxu0
      %v816 = vpop.f32.mrf.mxu0
      %817 = vdwg.mxu0
      %v818 = vadd.f32 %v740, %v813
      %819 = vst.msk [vmem:[#allocation3 + $0x4] sm:$0xf] %vm506, %v818
      %v820 = vld [vmem:[%s662] sm:$0xf]
      %v821 = vpack.c.bf16 %v820, %v820
      %v822 = vld [vmem:[%s1] sm:$0xf]
      %v823 = vld [vmem:[%s1 + $0x4] sm:$0xf]
      %v824 = vld [vmem:[%s1 + $0x8] sm:$0xf]
      %v825 = vld [vmem:[%s1 + $0xc] sm:$0xf]
      %v826 = vld [vmem:[%s1 + $0x10] sm:$0xf]
      %v827 = vld [vmem:[%s1 + $0x14] sm:$0xf]
      %v828 = vld [vmem:[%s1 + $0x18] sm:$0xf]
      %v829 = vld [vmem:[%s1 + $0x1c] sm:$0xf]
      %v830 = vld [vmem:[%s662 + $0x1] sm:$0xf]
      %v831 = vpack.c.bf16 %v830, %v830
      %v832 = vld [vmem:[%s204] sm:$0xf]
      %v833 = vld [vmem:[%s204 + $0x4] sm:$0xf]
      %v834 = vld [vmem:[%s204 + $0x8] sm:$0xf]
      %v835 = vld [vmem:[%s204 + $0xc] sm:$0xf]
      %v836 = vld [vmem:[%s204 + $0x10] sm:$0xf]
      %v837 = vld [vmem:[%s204 + $0x14] sm:$0xf]
      %v838 = vld [vmem:[%s204 + $0x18] sm:$0xf]
      %v839 = vld [vmem:[%s204 + $0x1c] sm:$0xf]
      %v848 = vunpack.c.l.b16 %v832
      %v849 = vunpack.c.l.b16 %v833
      %v850 = vunpack.c.l.b16 %v834
      %v851 = vunpack.c.l.b16 %v835
      %v852 = vunpack.c.l.b16 %v836
      %v853 = vunpack.c.l.b16 %v837
      %v854 = vunpack.c.l.b16 %v838
      %v855 = vunpack.c.l.b16 %v839
      %v856 = vpack.c.b16 %v849, %v848
      %v857 = vpack.c.b16 %v851, %v850
      %v858 = vpack.c.b16 %v853, %v852
      %v859 = vpack.c.b16 %v855, %v854
      %v865 = vsel %vm237, %v831, 0
      %867 = vmatprep.subr.bf16.mxu0 0
      %868 = vmatpush1.bf16.msra.mxu0 0
      %869 = vmatprep.subr.bf16.mxu0 0
      %870 = vmatpush1.bf16.msra.mxu0 0
      %871 = vmatprep.subr.bf16.mxu0 0
      %872 = vmatpush1.bf16.msra.mxu0 0
      %873 = vmatprep.subr.bf16.mxu0 0
      %874 = vmatpush1.bf16.msra.mxu0 0
      %875 = vmatprep.subr.bf16.mxu0 0
      %876 = vmatpush1.bf16.msra.mxu0 %v859
      %877 = vmatprep.subr.bf16.mxu0 0
      %878 = vmatpush1.bf16.msra.mxu0 %v858
      %879 = vmatprep.subr.bf16.mxu0 0
      %880 = vmatpush1.bf16.msra.mxu0 %v857
      %881 = vmatprep.subr.bf16.mxu0 0
      %882 = vmatpush1.bf16.msra.mxu0 %v856
      %883 = vmatprep.subr.bf16.mxu0 0
      %884 = vmatpush2.bf16.msra.mxu0 0
      %885 = vmatprep.subr.bf16.mxu0 0
      %886 = vmatpush2.bf16.msra.mxu0 0
      %887 = vmatprep.subr.bf16.mxu0 0
      %888 = vmatpush2.bf16.msra.mxu0 0
      %889 = vmatprep.subr.bf16.mxu0 0
      %890 = vmatpush2.bf16.msra.mxu0 0
      %891 = vmatprep.subr.bf16.mxu0 0
      %892 = vmatpush2.bf16.msra.mxu0 0
      %893 = vmatprep.subr.bf16.mxu0 0
      %894 = vmatpush2.bf16.msra.mxu0 0
      %895 = vmatprep.subr.bf16.mxu0 0
      %896 = vmatpush2.bf16.msra.mxu0 0
      %897 = vmatprep.subr.bf16.mxu0 0
      %898 = vmatpush2.bf16.msra.mxu0 0
      %899 = vmatprep.mubr.bf16.mxu0 0
      %900 = vmatmul.mubr.bf16.gmra.mxu0 %v865
      %v901 = vpop.f32.mrf.mxu0
      %v902 = vadd.f32 0.0, %v901
      %v903 = vpop.f32.mrf.mxu0
      %v904 = vpop.f32.mrf.mxu0
      %v905 = vpop.f32.mrf.mxu0
      %906 = vdwg.mxu0
      %v915 = vunpack.c.l.b16 %v822
      %v916 = vunpack.c.l.b16 %v823
      %v917 = vunpack.c.l.b16 %v824
      %v918 = vunpack.c.l.b16 %v825
      %v919 = vunpack.c.l.b16 %v826
      %v920 = vunpack.c.l.b16 %v827
      %v921 = vunpack.c.l.b16 %v828
      %v922 = vunpack.c.l.b16 %v829
      %v923 = vpack.c.b16 %v916, %v915
      %v924 = vpack.c.b16 %v918, %v917
      %v925 = vpack.c.b16 %v920, %v919
      %v926 = vpack.c.b16 %v922, %v921
      %v932 = vsel %vm237, %v821, 0
      %934 = vmatprep.subr.bf16.mxu0 0
      %935 = vmatpush1.bf16.msra.mxu0 0
      %936 = vmatprep.subr.bf16.mxu0 0
      %937 = vmatpush1.bf16.msra.mxu0 0
      %938 = vmatprep.subr.bf16.mxu0 0
      %939 = vmatpush1.bf16.msra.mxu0 0
      %940 = vmatprep.subr.bf16.mxu0 0
      %941 = vmatpush1.bf16.msra.mxu0 0
      %942 = vmatprep.subr.bf16.mxu0 0
      %943 = vmatpush1.bf16.msra.mxu0 %v926
      %944 = vmatprep.subr.bf16.mxu0 0
      %945 = vmatpush1.bf16.msra.mxu0 %v925
      %946 = vmatprep.subr.bf16.mxu0 0
      %947 = vmatpush1.bf16.msra.mxu0 %v924
      %948 = vmatprep.subr.bf16.mxu0 0
      %949 = vmatpush1.bf16.msra.mxu0 %v923
      %950 = vmatprep.subr.bf16.mxu0 0
      %951 = vmatpush2.bf16.msra.mxu0 0
      %952 = vmatprep.subr.bf16.mxu0 0
      %953 = vmatpush2.bf16.msra.mxu0 0
      %954 = vmatprep.subr.bf16.mxu0 0
      %955 = vmatpush2.bf16.msra.mxu0 0
      %956 = vmatprep.subr.bf16.mxu0 0
      %957 = vmatpush2.bf16.msra.mxu0 0
      %958 = vmatprep.subr.bf16.mxu0 0
      %959 = vmatpush2.bf16.msra.mxu0 0
      %960 = vmatprep.subr.bf16.mxu0 0
      %961 = vmatpush2.bf16.msra.mxu0 0
      %962 = vmatprep.subr.bf16.mxu0 0
      %963 = vmatpush2.bf16.msra.mxu0 0
      %964 = vmatprep.subr.bf16.mxu0 0
      %965 = vmatpush2.bf16.msra.mxu0 0
      %966 = vmatprep.mubr.bf16.mxu0 0
      %967 = vmatmul.mubr.bf16.gmra.mxu0 %v932
      %v968 = vpop.f32.mrf.mxu0
      %v969 = vadd.f32 %v902, %v968
      %v970 = vpop.f32.mrf.mxu0
      %v971 = vpop.f32.mrf.mxu0
      %v972 = vpop.f32.mrf.mxu0
      %973 = vdwg.mxu0
      %s974 = scalar_lea.vmem [#allocation2], 24
      %v975 = vld [vmem:[%s974] sm:$0xf]
      %v976 = vpack.c.bf16 %v975, %v975
      %v977 = vld [vmem:[%s350] sm:$0xf]
      %v978 = vld [vmem:[%s350 + $0x4] sm:$0xf]
      %v979 = vld [vmem:[%s350 + $0x8] sm:$0xf]
      %v980 = vld [vmem:[%s350 + $0xc] sm:$0xf]
      %v981 = vld [vmem:[%s350 + $0x10] sm:$0xf]
      %v982 = vld [vmem:[%s350 + $0x14] sm:$0xf]
      %v983 = vld [vmem:[%s350 + $0x18] sm:$0xf]
      %v984 = vld [vmem:[%s350 + $0x1c] sm:$0xf]
      %v993 = vunpack.c.l.b16 %v977
      %v994 = vunpack.c.l.b16 %v978
      %v995 = vunpack.c.l.b16 %v979
      %v996 = vunpack.c.l.b16 %v980
      %v997 = vunpack.c.l.b16 %v981
      %v998 = vunpack.c.l.b16 %v982
      %v999 = vunpack.c.l.b16 %v983
      %v1000 = vunpack.c.l.b16 %v984
      %v1001 = vpack.c.b16 %v994, %v993
      %v1002 = vpack.c.b16 %v996, %v995
      %v1003 = vpack.c.b16 %v998, %v997
      %v1004 = vpack.c.b16 %v1000, %v999
      %v1010 = vsel %vm237, %v976, 0
      %1012 = vmatprep.subr.bf16.mxu0 0
      %1013 = vmatpush1.bf16.msra.mxu0 0
      %1014 = vmatprep.subr.bf16.mxu0 0
      %1015 = vmatpush1.bf16.msra.mxu0 0
      %1016 = vmatprep.subr.bf16.mxu0 0
      %1017 = vmatpush1.bf16.msra.mxu0 0
      %1018 = vmatprep.subr.bf16.mxu0 0
      %1019 = vmatpush1.bf16.msra.mxu0 0
      %1020 = vmatprep.subr.bf16.mxu0 0
      %1021 = vmatpush1.bf16.msra.mxu0 %v1004
      %1022 = vmatprep.subr.bf16.mxu0 0
      %1023 = vmatpush1.bf16.msra.mxu0 %v1003
      %1024 = vmatprep.subr.bf16.mxu0 0
      %1025 = vmatpush1.bf16.msra.mxu0 %v1002
      %1026 = vmatprep.subr.bf16.mxu0 0
      %1027 = vmatpush1.bf16.msra.mxu0 %v1001
      %1028 = vmatprep.subr.bf16.mxu0 0
      %1029 = vmatpush2.bf16.msra.mxu0 0
      %1030 = vmatprep.subr.bf16.mxu0 0
      %1031 = vmatpush2.bf16.msra.mxu0 0
      %1032 = vmatprep.subr.bf16.mxu0 0
      %1033 = vmatpush2.bf16.msra.mxu0 0
      %1034 = vmatprep.subr.bf16.mxu0 0
      %1035 = vmatpush2.bf16.msra.mxu0 0
      %1036 = vmatprep.subr.bf16.mxu0 0
      %1037 = vmatpush2.bf16.msra.mxu0 0
      %1038 = vmatprep.subr.bf16.mxu0 0
      %1039 = vmatpush2.bf16.msra.mxu0 0
      %1040 = vmatprep.subr.bf16.mxu0 0
      %1041 = vmatpush2.bf16.msra.mxu0 0
      %1042 = vmatprep.subr.bf16.mxu0 0
      %1043 = vmatpush2.bf16.msra.mxu0 0
      %1044 = vmatprep.mubr.bf16.mxu0 0
      %1045 = vmatmul.mubr.bf16.gmra.mxu0 %v1010
      %v1046 = vpop.f32.mrf.mxu0
      %v1047 = vadd.f32 0.0, %v1046
      %v1048 = vpop.f32.mrf.mxu0
      %v1049 = vpop.f32.mrf.mxu0
      %v1050 = vpop.f32.mrf.mxu0
      %1051 = vdwg.mxu0
      %v1052 = vadd.f32 %v969, %v1047
      %v1053 = vld [vmem:[%s974 + $0x1] sm:$0xf]
      %v1054 = vpack.c.bf16 %v1053, %v1053
      %v1055 = vld [vmem:[%s429] sm:$0xf]
      %v1056 = vld [vmem:[%s429 + $0x4] sm:$0xf]
      %v1057 = vld [vmem:[%s429 + $0x8] sm:$0xf]
      %v1058 = vld [vmem:[%s429 + $0xc] sm:$0xf]
      %v1059 = vld [vmem:[%s429 + $0x10] sm:$0xf]
      %v1060 = vld [vmem:[%s429 + $0x14] sm:$0xf]
      %v1061 = vld [vmem:[%s429 + $0x18] sm:$0xf]
      %v1062 = vld [vmem:[%s429 + $0x1c] sm:$0xf]
      %v1071 = vunpack.c.l.b16 %v1055
      %v1072 = vunpack.c.l.b16 %v1056
      %v1073 = vunpack.c.l.b16 %v1057
      %v1074 = vunpack.c.l.b16 %v1058
      %v1075 = vunpack.c.l.b16 %v1059
      %v1076 = vunpack.c.l.b16 %v1060
      %v1077 = vunpack.c.l.b16 %v1061
      %v1078 = vunpack.c.l.b16 %v1062
      %v1079 = vpack.c.b16 %v1072, %v1071
      %v1080 = vpack.c.b16 %v1074, %v1073
      %v1081 = vpack.c.b16 %v1076, %v1075
      %v1082 = vpack.c.b16 %v1078, %v1077
      %v1088 = vsel %vm237, %v1054, 0
      %1090 = vmatprep.subr.bf16.mxu0 0
      %1091 = vmatpush1.bf16.msra.mxu0 0
      %1092 = vmatprep.subr.bf16.mxu0 0
      %1093 = vmatpush1.bf16.msra.mxu0 0
      %1094 = vmatprep.subr.bf16.mxu0 0
      %1095 = vmatpush1.bf16.msra.mxu0 0
      %1096 = vmatprep.subr.bf16.mxu0 0
      %1097 = vmatpush1.bf16.msra.mxu0 0
      %1098 = vmatprep.subr.bf16.mxu0 0
      %1099 = vmatpush1.bf16.msra.mxu0 %v1082
      %1100 = vmatprep.subr.bf16.mxu0 0
      %1101 = vmatpush1.bf16.msra.mxu0 %v1081
      %1102 = vmatprep.subr.bf16.mxu0 0
      %1103 = vmatpush1.bf16.msra.mxu0 %v1080
      %1104 = vmatprep.subr.bf16.mxu0 0
      %1105 = vmatpush1.bf16.msra.mxu0 %v1079
      %1106 = vmatprep.subr.bf16.mxu0 0
      %1107 = vmatpush2.bf16.msra.mxu0 0
      %1108 = vmatprep.subr.bf16.mxu0 0
      %1109 = vmatpush2.bf16.msra.mxu0 0
      %1110 = vmatprep.subr.bf16.mxu0 0
      %1111 = vmatpush2.bf16.msra.mxu0 0
      %1112 = vmatprep.subr.bf16.mxu0 0
      %1113 = vmatpush2.bf16.msra.mxu0 0
      %1114 = vmatprep.subr.bf16.mxu0 0
      %1115 = vmatpush2.bf16.msra.mxu0 0
      %1116 = vmatprep.subr.bf16.mxu0 0
      %1117 = vmatpush2.bf16.msra.mxu0 0
      %1118 = vmatprep.subr.bf16.mxu0 0
      %1119 = vmatpush2.bf16.msra.mxu0 0
      %1120 = vmatprep.subr.bf16.mxu0 0
      %1121 = vmatpush2.bf16.msra.mxu0 0
      %1122 = vmatprep.mubr.bf16.mxu0 0
      %1123 = vmatmul.mubr.bf16.gmra.mxu0 %v1088
      %v1124 = vpop.f32.mrf.mxu0
      %v1125 = vadd.f32 0.0, %v1124
      %v1126 = vpop.f32.mrf.mxu0
      %v1127 = vpop.f32.mrf.mxu0
      %v1128 = vpop.f32.mrf.mxu0
      %1129 = vdwg.mxu0
      %v1130 = vadd.f32 %v1052, %v1125
      %1131 = vst.msk [vmem:[#allocation3 + $0x8] sm:$0xf] %vm506, %v1130
      %v1132 = vld [vmem:[%s974] sm:$0xf]
      %v1133 = vpack.c.bf16 %v1132, %v1132
      %v1134 = vld [vmem:[%s1] sm:$0xf]
      %v1135 = vld [vmem:[%s1 + $0x4] sm:$0xf]
      %v1136 = vld [vmem:[%s1 + $0x8] sm:$0xf]
      %v1137 = vld [vmem:[%s1 + $0xc] sm:$0xf]
      %v1138 = vld [vmem:[%s1 + $0x10] sm:$0xf]
      %v1139 = vld [vmem:[%s1 + $0x14] sm:$0xf]
      %v1140 = vld [vmem:[%s1 + $0x18] sm:$0xf]
      %v1141 = vld [vmem:[%s1 + $0x1c] sm:$0xf]
      %v1142 = vld [vmem:[%s974 + $0x1] sm:$0xf]
      %v1143 = vpack.c.bf16 %v1142, %v1142
      %v1144 = vld [vmem:[%s204] sm:$0xf]
      %v1145 = vld [vmem:[%s204 + $0x4] sm:$0xf]
      %v1146 = vld [vmem:[%s204 + $0x8] sm:$0xf]
      %v1147 = vld [vmem:[%s204 + $0xc] sm:$0xf]
      %v1148 = vld [vmem:[%s204 + $0x10] sm:$0xf]
      %v1149 = vld [vmem:[%s204 + $0x14] sm:$0xf]
      %v1150 = vld [vmem:[%s204 + $0x18] sm:$0xf]
      %v1151 = vld [vmem:[%s204 + $0x1c] sm:$0xf]
      %v1160 = vunpack.c.l.b16 %v1144
      %v1161 = vunpack.c.l.b16 %v1145
      %v1162 = vunpack.c.l.b16 %v1146
      %v1163 = vunpack.c.l.b16 %v1147
      %v1164 = vunpack.c.l.b16 %v1148
      %v1165 = vunpack.c.l.b16 %v1149
      %v1166 = vunpack.c.l.b16 %v1150
      %v1167 = vunpack.c.l.b16 %v1151
      %v1168 = vpack.c.b16 %v1161, %v1160
      %v1169 = vpack.c.b16 %v1163, %v1162
      %v1170 = vpack.c.b16 %v1165, %v1164
      %v1171 = vpack.c.b16 %v1167, %v1166
      %v1177 = vsel %vm237, %v1143, 0
      %1179 = vmatprep.subr.bf16.mxu0 0
      %1180 = vmatpush1.bf16.msra.mxu0 0
      %1181 = vmatprep.subr.bf16.mxu0 0
      %1182 = vmatpush1.bf16.msra.mxu0 0
      %1183 = vmatprep.subr.bf16.mxu0 0
      %1184 = vmatpush1.bf16.msra.mxu0 0
      %1185 = vmatprep.subr.bf16.mxu0 0
      %1186 = vmatpush1.bf16.msra.mxu0 0
      %1187 = vmatprep.subr.bf16.mxu0 0
      %1188 = vmatpush1.bf16.msra.mxu0 %v1171
      %1189 = vmatprep.subr.bf16.mxu0 0
      %1190 = vmatpush1.bf16.msra.mxu0 %v1170
      %1191 = vmatprep.subr.bf16.mxu0 0
      %1192 = vmatpush1.bf16.msra.mxu0 %v1169
      %1193 = vmatprep.subr.bf16.mxu0 0
      %1194 = vmatpush1.bf16.msra.mxu0 %v1168
      %1195 = vmatprep.subr.bf16.mxu0 0
      %1196 = vmatpush2.bf16.msra.mxu0 0
      %1197 = vmatprep.subr.bf16.mxu0 0
      %1198 = vmatpush2.bf16.msra.mxu0 0
      %1199 = vmatprep.subr.bf16.mxu0 0
      %1200 = vmatpush2.bf16.msra.mxu0 0
      %1201 = vmatprep.subr.bf16.mxu0 0
      %1202 = vmatpush2.bf16.msra.mxu0 0
      %1203 = vmatprep.subr.bf16.mxu0 0
      %1204 = vmatpush2.bf16.msra.mxu0 0
      %1205 = vmatprep.subr.bf16.mxu0 0
      %1206 = vmatpush2.bf16.msra.mxu0 0
      %1207 = vmatprep.subr.bf16.mxu0 0
      %1208 = vmatpush2.bf16.msra.mxu0 0
      %1209 = vmatprep.subr.bf16.mxu0 0
      %1210 = vmatpush2.bf16.msra.mxu0 0
      %1211 = vmatprep.mubr.bf16.mxu0 0
      %1212 = vmatmul.mubr.bf16.gmra.mxu0 %v1177
      %v1213 = vpop.f32.mrf.mxu0
      %v1214 = vadd.f32 0.0, %v1213
      %v1215 = vpop.f32.mrf.mxu0
      %v1216 = vpop.f32.mrf.mxu0
      %v1217 = vpop.f32.mrf.mxu0
      %1218 = vdwg.mxu0
      %v1227 = vunpack.c.l.b16 %v1134
      %v1228 = vunpack.c.l.b16 %v1135
      %v1229 = vunpack.c.l.b16 %v1136
      %v1230 = vunpack.c.l.b16 %v1137
      %v1231 = vunpack.c.l.b16 %v1138
      %v1232 = vunpack.c.l.b16 %v1139
      %v1233 = vunpack.c.l.b16 %v1140
      %v1234 = vunpack.c.l.b16 %v1141
      %v1235 = vpack.c.b16 %v1228, %v1227
      %v1236 = vpack.c.b16 %v1230, %v1229
      %v1237 = vpack.c.b16 %v1232, %v1231
      %v1238 = vpack.c.b16 %v1234, %v1233
      %v1244 = vsel %vm237, %v1133, 0
      %1246 = vmatprep.subr.bf16.mxu0 0
      %1247 = vmatpush1.bf16.msra.mxu0 0
      %1248 = vmatprep.subr.bf16.mxu0 0
      %1249 = vmatpush1.bf16.msra.mxu0 0
      %1250 = vmatprep.subr.bf16.mxu0 0
      %1251 = vmatpush1.bf16.msra.mxu0 0
      %1252 = vmatprep.subr.bf16.mxu0 0
      %1253 = vmatpush1.bf16.msra.mxu0 0
      %1254 = vmatprep.subr.bf16.mxu0 0
      %1255 = vmatpush1.bf16.msra.mxu0 %v1238
      %1256 = vmatprep.subr.bf16.mxu0 0
      %1257 = vmatpush1.bf16.msra.mxu0 %v1237
      %1258 = vmatprep.subr.bf16.mxu0 0
      %1259 = vmatpush1.bf16.msra.mxu0 %v1236
      %1260 = vmatprep.subr.bf16.mxu0 0
      %1261 = vmatpush1.bf16.msra.mxu0 %v1235
      %1262 = vmatprep.subr.bf16.mxu0 0
      %1263 = vmatpush2.bf16.msra.mxu0 0
      %1264 = vmatprep.subr.bf16.mxu0 0
      %1265 = vmatpush2.bf16.msra.mxu0 0
      %1266 = vmatprep.subr.bf16.mxu0 0
      %1267 = vmatpush2.bf16.msra.mxu0 0
      %1268 = vmatprep.subr.bf16.mxu0 0
      %1269 = vmatpush2.bf16.msra.mxu0 0
      %1270 = vmatprep.subr.bf16.mxu0 0
      %1271 = vmatpush2.bf16.msra.mxu0 0
      %1272 = vmatprep.subr.bf16.mxu0 0
      %1273 = vmatpush2.bf16.msra.mxu0 0
      %1274 = vmatprep.subr.bf16.mxu0 0
      %1275 = vmatpush2.bf16.msra.mxu0 0
      %1276 = vmatprep.subr.bf16.mxu0 0
      %1277 = vmatpush2.bf16.msra.mxu0 0
      %1278 = vmatprep.mubr.bf16.mxu0 0
      %1279 = vmatmul.mubr.bf16.gmra.mxu0 %v1244
      %v1280 = vpop.f32.mrf.mxu0
      %v1281 = vadd.f32 %v1214, %v1280
      %v1282 = vpop.f32.mrf.mxu0
      %v1283 = vpop.f32.mrf.mxu0
      %v1284 = vpop.f32.mrf.mxu0
      %1285 = vdwg.mxu0
      %s1286 = scalar_lea.vmem [#allocation2], 32
      %v1287 = vld [vmem:[%s1286] sm:$0xf]
      %v1288 = vpack.c.bf16 %v1287, %v1287
      %v1289 = vld [vmem:[%s350] sm:$0xf]
      %v1290 = vld [vmem:[%s350 + $0x4] sm:$0xf]
      %v1291 = vld [vmem:[%s350 + $0x8] sm:$0xf]
      %v1292 = vld [vmem:[%s350 + $0xc] sm:$0xf]
      %v1293 = vld [vmem:[%s350 + $0x10] sm:$0xf]
      %v1294 = vld [vmem:[%s350 + $0x14] sm:$0xf]
      %v1295 = vld [vmem:[%s350 + $0x18] sm:$0xf]
      %v1296 = vld [vmem:[%s350 + $0x1c] sm:$0xf]
      %v1305 = vunpack.c.l.b16 %v1289
      %v1306 = vunpack.c.l.b16 %v1290
      %v1307 = vunpack.c.l.b16 %v1291
      %v1308 = vunpack.c.l.b16 %v1292
      %v1309 = vunpack.c.l.b16 %v1293
      %v1310 = vunpack.c.l.b16 %v1294
      %v1311 = vunpack.c.l.b16 %v1295
      %v1312 = vunpack.c.l.b16 %v1296
      %v1313 = vpack.c.b16 %v1306, %v1305
      %v1314 = vpack.c.b16 %v1308, %v1307
      %v1315 = vpack.c.b16 %v1310, %v1309
      %v1316 = vpack.c.b16 %v1312, %v1311
      %v1322 = vsel %vm237, %v1288, 0
      %1324 = vmatprep.subr.bf16.mxu0 0
      %1325 = vmatpush1.bf16.msra.mxu0 0
      %1326 = vmatprep.subr.bf16.mxu0 0
      %1327 = vmatpush1.bf16.msra.mxu0 0
      %1328 = vmatprep.subr.bf16.mxu0 0
      %1329 = vmatpush1.bf16.msra.mxu0 0
      %1330 = vmatprep.subr.bf16.mxu0 0
      %1331 = vmatpush1.bf16.msra.mxu0 0
      %1332 = vmatprep.subr.bf16.mxu0 0
      %1333 = vmatpush1.bf16.msra.mxu0 %v1316
      %1334 = vmatprep.subr.bf16.mxu0 0
      %1335 = vmatpush1.bf16.msra.mxu0 %v1315
      %1336 = vmatprep.subr.bf16.mxu0 0
      %1337 = vmatpush1.bf16.msra.mxu0 %v1314
      %1338 = vmatprep.subr.bf16.mxu0 0
      %1339 = vmatpush1.bf16.msra.mxu0 %v1313
      %1340 = vmatprep.subr.bf16.mxu0 0
      %1341 = vmatpush2.bf16.msra.mxu0 0
      %1342 = vmatprep.subr.bf16.mxu0 0
      %1343 = vmatpush2.bf16.msra.mxu0 0
      %1344 = vmatprep.subr.bf16.mxu0 0
      %1345 = vmatpush2.bf16.msra.mxu0 0
      %1346 = vmatprep.subr.bf16.mxu0 0
      %1347 = vmatpush2.bf16.msra.mxu0 0
      %1348 = vmatprep.subr.bf16.mxu0 0
      %1349 = vmatpush2.bf16.msra.mxu0 0
      %1350 = vmatprep.subr.bf16.mxu0 0
      %1351 = vmatpush2.bf16.msra.mxu0 0
      %1352 = vmatprep.subr.bf16.mxu0 0
      %1353 = vmatpush2.bf16.msra.mxu0 0
      %1354 = vmatprep.subr.bf16.mxu0 0
      %1355 = vmatpush2.bf16.msra.mxu0 0
      %1356 = vmatprep.mubr.bf16.mxu0 0
      %1357 = vmatmul.mubr.bf16.gmra.mxu0 %v1322
      %v1358 = vpop.f32.mrf.mxu0
      %v1359 = vadd.f32 0.0, %v1358
      %v1360 = vpop.f32.mrf.mxu0
      %v1361 = vpop.f32.mrf.mxu0
      %v1362 = vpop.f32.mrf.mxu0
      %1363 = vdwg.mxu0
      %v1364 = vadd.f32 %v1281, %v1359
      %v1365 = vld [vmem:[%s1286 + $0x1] sm:$0xf]
      %v1366 = vpack.c.bf16 %v1365, %v1365
      %v1367 = vld [vmem:[%s429] sm:$0xf]
      %v1368 = vld [vmem:[%s429 + $0x4] sm:$0xf]
      %v1369 = vld [vmem:[%s429 + $0x8] sm:$0xf]
      %v1370 = vld [vmem:[%s429 + $0xc] sm:$0xf]
      %v1371 = vld [vmem:[%s429 + $0x10] sm:$0xf]
      %v1372 = vld [vmem:[%s429 + $0x14] sm:$0xf]
      %v1373 = vld [vmem:[%s429 + $0x18] sm:$0xf]
      %v1374 = vld [vmem:[%s429 + $0x1c] sm:$0xf]
      %v1383 = vunpack.c.l.b16 %v1367
      %v1384 = vunpack.c.l.b16 %v1368
      %v1385 = vunpack.c.l.b16 %v1369
      %v1386 = vunpack.c.l.b16 %v1370
      %v1387 = vunpack.c.l.b16 %v1371
      %v1388 = vunpack.c.l.b16 %v1372
      %v1389 = vunpack.c.l.b16 %v1373
      %v1390 = vunpack.c.l.b16 %v1374
      %v1391 = vpack.c.b16 %v1384, %v1383
      %v1392 = vpack.c.b16 %v1386, %v1385
      %v1393 = vpack.c.b16 %v1388, %v1387
      %v1394 = vpack.c.b16 %v1390, %v1389
      %v1400 = vsel %vm237, %v1366, 0
      %1402 = vmatprep.subr.bf16.mxu0 0
      %1403 = vmatpush1.bf16.msra.mxu0 0
      %1404 = vmatprep.subr.bf16.mxu0 0
      %1405 = vmatpush1.bf16.msra.mxu0 0
      %1406 = vmatprep.subr.bf16.mxu0 0
      %1407 = vmatpush1.bf16.msra.mxu0 0
      %1408 = vmatprep.subr.bf16.mxu0 0
      %1409 = vmatpush1.bf16.msra.mxu0 0
      %1410 = vmatprep.subr.bf16.mxu0 0
      %1411 = vmatpush1.bf16.msra.mxu0 %v1394
      %1412 = vmatprep.subr.bf16.mxu0 0
      %1413 = vmatpush1.bf16.msra.mxu0 %v1393
      %1414 = vmatprep.subr.bf16.mxu0 0
      %1415 = vmatpush1.bf16.msra.mxu0 %v1392
      %1416 = vmatprep.subr.bf16.mxu0 0
      %1417 = vmatpush1.bf16.msra.mxu0 %v1391
      %1418 = vmatprep.subr.bf16.mxu0 0
      %1419 = vmatpush2.bf16.msra.mxu0 0
      %1420 = vmatprep.subr.bf16.mxu0 0
      %1421 = vmatpush2.bf16.msra.mxu0 0
      %1422 = vmatprep.subr.bf16.mxu0 0
      %1423 = vmatpush2.bf16.msra.mxu0 0
      %1424 = vmatprep.subr.bf16.mxu0 0
      %1425 = vmatpush2.bf16.msra.mxu0 0
      %1426 = vmatprep.subr.bf16.mxu0 0
      %1427 = vmatpush2.bf16.msra.mxu0 0
      %1428 = vmatprep.subr.bf16.mxu0 0
      %1429 = vmatpush2.bf16.msra.mxu0 0
      %1430 = vmatprep.subr.bf16.mxu0 0
      %1431 = vmatpush2.bf16.msra.mxu0 0
      %1432 = vmatprep.subr.bf16.mxu0 0
      %1433 = vmatpush2.bf16.msra.mxu0 0
      %1434 = vmatprep.mubr.bf16.mxu0 0
      %1435 = vmatmul.mubr.bf16.gmra.mxu0 %v1400
      %v1436 = vpop.f32.mrf.mxu0
      %v1437 = vadd.f32 0.0, %v1436
      %v1438 = vpop.f32.mrf.mxu0
      %v1439 = vpop.f32.mrf.mxu0
      %v1440 = vpop.f32.mrf.mxu0
      %1441 = vdwg.mxu0
      %v1442 = vadd.f32 %v1364, %v1437
      %1443 = vst.msk [vmem:[#allocation3 + $0xc] sm:$0xf] %vm506, %v1442
      %v1444 = vld [vmem:[#allocation3] sm:$0xff]
      %v1445 = vld [vmem:[#allocation3 + $0x8] sm:$0xff]
      %v1446 = vld [vmem:[%s2] sm:$0x1]
      %v1448 = vlaneseq
      %v1449 = vshrl.u32 %v1448, 7
      %v1450 = vsub.s32 0, %v1449
      %v1451 = vrot.slane %v1446, %v1450
      %v1453 = vadd.f32 %v1444, %v1451
      %v1454 = vadd.f32 %v1445, %v1451
      %v1455 = vmax.f32 %v1453, 0.0
      %v1456 = vmax.f32 %v1454, 0.0
      %v1457 = vpack.c.bf16 %v1456, %v1455
      %v1459 = vunpack.c.l.b16 %v1457
      %v1460 = vunpack.c.h.b16 %v1457
      %v1461 = vpack.c.b16 %v1459, %v1459
      %v1462 = vpack.c.b16 %v1460, %v1460
      %1465 = vst.msk [vmem:[%s170] sm:$0xf] %vm506, %v1461
      %1466 = vst.msk [vmem:[%s170 + $0x4] sm:$0xf] %vm506, %v1462
      %p1467 = scmp.lt.s32.totalorder %s14, 1
      %s1468 = scalar_select %p1467, %s14, 1
      %s1469 = smul.addr %s1468, 2
      %s1470 = smul.addr %s1469, 4
      %s1471 = scalar_lea.vmem %s3, %s1470
      // Predicated region
      $region33: #{cdpn_forward.5} parent=31 // pred_check
        %p1472 = pneg %p100
      $region34: #{cdpn_forward.5} parent=31 // pred_check_branch
        %1474 = sbr.rel (%p1472) target = $region36
      $region35: #{cdpn_forward.5} parent=31 // pred_region
        _
      $region36: #{cdpn_forward.5} parent=31 // pred_fallthru
        _
    $region32: #{cdpn_forward.5} parent=5 // pred_fallthru
      _
    %p1475 = scmp.le.s32.totalorder 2, %s9
    // Predicated region
    $region37: #{cdpn_forward.5} parent=5 // pred_check
      %p1476 = pneg %p1475
    $region38: #{cdpn_forward.5} parent=5 // pred_check_branch
      %1478 = sbr.rel (%p1476) target = $region40
    $region39: #{cdpn_forward.5} parent=5 // pred_region
      %s1479 = ssub.s32 %s9, 2
      // Predicated region
      $region41: #{cdpn_forward.5} parent=39 // pred_check
        %p1480 = pneg %p106
      $region42: #{cdpn_forward.5} parent=39 // pred_check_branch
        %1482 = sbr.rel (%p1480) target = $region44
      $region43: #{cdpn_forward.5} parent=39 // pred_region
        %p1483 = scmp.lt.s32.totalorder %s15, 1
        %s1484 = scalar_select %p1483, %s15, 1
        %s1485 = smul.addr %s1484, 2
        %s1486 = smul.addr %s1485, 4
        %s1487 = scalar_lea.vmem %s3, %s1486
      $region44: #{cdpn_forward.5} parent=39 // pred_fallthru
        _
    $region40: #{cdpn_forward.5} parent=5 // pred_fallthru
      _
  $region6: #{cdpn_forward.5} parent=0 // loop_footer
    %s13 = sadd.s32 1, %s9
  $region7: #{cdpn_forward.5} parent=0 // loop_footer_branch
    %8 = sbr.rel target = $region3
  $region8: #{cdpn_forward.5} parent=0 // loop_exit
    _

// kernel: cdpn_forward.6
$region0: #{cdpn_forward.6}
  #allocation0 [shape = 'u32[]', space=smem, size = 0x4, offset = 0x4, fixed_abs, tag = 'smem constant byte address 0x4 - core index']
  #allocation1 [shape = 'u32[144,128]{1,0:T(1,128)}', space=vmem, size = 0x12000, scoped, tag = 'internal scratch']
  #allocation2 [shape = 'f32[10,10,32]{2,1,0:T(8,128)}', space=vmem, size = 0x14000, scoped, tag = 'scratch operand']
  #allocation3 [shape = 'f32[64,32]{1,0:T(8,128)}', space=vmem, size = 0x8000, scoped, tag = 'scratch operand']
  %s0 = inlined_call_operand.vmem [shape: bf16[2,8,8,32], index: 0, kind: input, shape index: {}]
  %s1 = inlined_call_operand.vmem [shape: bf16[9,32,32], index: 1, kind: input, shape index: {}]
  %s2 = inlined_call_operand.vmem [shape: f32[1,32], index: 2, kind: input, shape index: {}]
  %s3 = inlined_call_operand.vmem [shape: bf16[2,64,32], index: 3, kind: output, shape index: {}]
  %s4 = sld [smem:[#allocation0]]
  $region45: #{cdpn_forward.6} parent=0
    _
  %s6 = ssub.s32 1, %s4
  %s7 = scalar_select 0, %s6, %s4
  loop: start=0, step=1, limit=4
  $region2: #{cdpn_forward.6} parent=0 // loop_pre_header
    _
  $region3: #{cdpn_forward.6} parent=0 // loop_header
    %s9 = sphi 0, %s13
    %p10 = scmp.ge.s32.totalorder %s9, 4
    %s19 = sphi 0, %s21
    %s22 = sphi 0, %s19
    %s23 = sphi 0, %s22
    %s39 = sphi 0, %s23
    %s43 = sphi 0, %s43
    %s45 = sphi 0, %s43
    %s46 = sphi 0, %s45
    %s60 = sphi 0, %s46
    %s64 = sphi 0, %s64
    %s66 = sphi 0, %s64
    %s67 = sphi 0, %s66
    %s81 = sphi 0, %s67
    %s87 = sphi 0, %s89
    %s90 = sphi 0, %s87
    %s91 = sphi 0, %s90
    %s107 = sphi 0, %s91
  $region4: #{cdpn_forward.6} parent=0 // loop_header_branch
    %12 = sbr.rel (%p10) target = $region8
  $region5: #{cdpn_forward.6} parent=0 // loop_body
    %s14 = ssub.s32 %s9, 1
    %s15 = ssub.s32 %s9, 2
    %s16 = sadd.s32 %s9, 1
    %s17 = ssub.s32 %s9, %s16
    %p18 = scmp.eq.s32.totalorder %s17, 0
    %s20 = sadd.s32 %s19, 1
    %s21 = scalar_select %p18, %s19, %s20
    %p24 = pneg %p18
    %p25 = scmp.eq.s32.totalorder %s9, 1
    %p26 = por %p24, %p25
    %p27 = scmp.ne.s32.totalorder %s19, %s22
    %p28 = scmp.eq.s32.totalorder %s9, 0
    %p29 = por %p27, %p28
    %p30 = scmp.ne.s32.totalorder %s19, %s22
    %p31 = scmp.eq.s32.totalorder %s14, 1
    %p32 = por %p30, %p31
    %p33 = scmp.ne.s32.totalorder %s22, %s23
    %p34 = scmp.eq.s32.totalorder %s14, 0
    %p35 = por %p33, %p34
    %p36 = scmp.ne.s32.totalorder %s22, %s23
    %p37 = scmp.eq.s32.totalorder %s15, 1
    %p38 = por %p36, %p37
    %p40 = scmp.ne.s32.totalorder %s23, %s39
    %p41 = scmp.eq.s32.totalorder %s15, 0
    %p42 = por %p40, %p41
    %s44 = sadd.s32 %s43, 1
    %p47 = scmp.eq.s32.totalorder %s9, 1
    %p48 = scmp.ne.s32.totalorder %s43, %s45
    %p49 = scmp.eq.s32.totalorder %s9, 0
    %p50 = por %p48, %p49
    %p51 = scmp.ne.s32.totalorder %s43, %s45
    %p52 = scmp.eq.s32.totalorder %s14, 1
    %p53 = por %p51, %p52
    %p54 = scmp.ne.s32.totalorder %s45, %s46
    %p55 = scmp.eq.s32.totalorder %s14, 0
    %p56 = por %p54, %p55
    %p57 = scmp.ne.s32.totalorder %s45, %s46
    %p58 = scmp.eq.s32.totalorder %s15, 1
    %p59 = por %p57, %p58
    %p61 = scmp.ne.s32.totalorder %s46, %s60
    %p62 = scmp.eq.s32.totalorder %s15, 0
    %p63 = por %p61, %p62
    %s65 = sadd.s32 %s64, 1
    %p68 = scmp.eq.s32.totalorder %s9, 1
    %p69 = scmp.ne.s32.totalorder %s64, %s66
    %p70 = scmp.eq.s32.totalorder %s9, 0
    %p71 = por %p69, %p70
    %p72 = scmp.ne.s32.totalorder %s64, %s66
    %p73 = scmp.eq.s32.totalorder %s14, 1
    %p74 = por %p72, %p73
    %p75 = scmp.ne.s32.totalorder %s66, %s67
    %p76 = scmp.eq.s32.totalorder %s14, 0
    %p77 = por %p75, %p76
    %p78 = scmp.ne.s32.totalorder %s66, %s67
    %p79 = scmp.eq.s32.totalorder %s15, 1
    %p80 = por %p78, %p79
    %p82 = scmp.ne.s32.totalorder %s67, %s81
    %p83 = scmp.eq.s32.totalorder %s15, 0
    %p84 = por %p82, %p83
    %s85 = ssub.s32 %s9, %s16
    %p86 = scmp.eq.s32.totalorder %s85, 0
    %s88 = sadd.s32 %s87, 1
    %s89 = scalar_select %p86, %s87, %s88
    %p92 = pneg %p86
    %p93 = scmp.eq.s32.totalorder %s9, 1
    %p94 = por %p92, %p93
    %p95 = scmp.ne.s32.totalorder %s87, %s90
    %p96 = scmp.eq.s32.totalorder %s9, 0
    %p97 = por %p95, %p96
    %p98 = scmp.ne.s32.totalorder %s87, %s90
    %p99 = scmp.eq.s32.totalorder %s14, 1
    %p100 = por %p98, %p99
    %p101 = scmp.ne.s32.totalorder %s90, %s91
    %p102 = scmp.eq.s32.totalorder %s14, 0
    %p103 = por %p101, %p102
    %p104 = scmp.ne.s32.totalorder %s90, %s91
    %p105 = scmp.eq.s32.totalorder %s15, 1
    %p106 = por %p104, %p105
    %p108 = scmp.ne.s32.totalorder %s91, %s107
    %p109 = scmp.eq.s32.totalorder %s15, 0
    %p110 = por %p108, %p109
    %p111 = scmp.le.s32.totalorder 1, %s9
    %p112 = scmp.lt.s32.totalorder %s9, 3
    %p113 = pnand %p111, %p112
    %p114 = pneg %p113
    // Predicated region
    $region9: #{cdpn_forward.6} parent=5 // pred_check
      _
    $region10: #{cdpn_forward.6} parent=5 // pred_check_branch
      %116 = sbr.rel (%p113) target = $region12
    $region11: #{cdpn_forward.6} parent=5 // pred_region
      %s117 = ssub.s32 %s9, 1
      // Predicated region
      $region13: #{cdpn_forward.6} parent=11 // pred_check
        %p118 = pneg %p56
      $region14: #{cdpn_forward.6} parent=11 // pred_check_branch
        %120 = sbr.rel (%p118) target = $region16
      $region15: #{cdpn_forward.6} parent=11 // pred_region
        _
      $region16: #{cdpn_forward.6} parent=11 // pred_fallthru
        _
      // Predicated region
      $region17: #{cdpn_forward.6} parent=11 // pred_check
        %p121 = pneg %p77
      $region18: #{cdpn_forward.6} parent=11 // pred_check_branch
        %123 = sbr.rel (%p121) target = $region20
      $region19: #{cdpn_forward.6} parent=11 // pred_region
        _
      $region20: #{cdpn_forward.6} parent=11 // pred_fallthru
        _
    $region12: #{cdpn_forward.6} parent=5 // pred_fallthru
      _
    %p124 = scmp.lt.s32.totalorder %s9, 2
    // Predicated region
    $region21: #{cdpn_forward.6} parent=5 // pred_check
      %p125 = pneg %p124
    $region22: #{cdpn_forward.6} parent=5 // pred_check_branch
      %127 = sbr.rel (%p125) target = $region24
    $region23: #{cdpn_forward.6} parent=5 // pred_region
      // Predicated region
      $region25: #{cdpn_forward.6} parent=23 // pred_check
        %p128 = pneg %p29
      $region26: #{cdpn_forward.6} parent=23 // pred_check_branch
        %130 = sbr.rel (%p128) target = $region28
      $region27: #{cdpn_forward.6} parent=23 // pred_region
        %p131 = scmp.lt.s32.totalorder %s9, 1
        %s132 = scalar_select %p131, %s9, 1
        %s133 = smul.addr %s132, 8
        %s134 = smul.addr %s133, 4
        %s135 = scalar_lea.vmem %s0, %s134
      $region28: #{cdpn_forward.6} parent=23 // pred_fallthru
        _
    $region24: #{cdpn_forward.6} parent=5 // pred_fallthru
      _
    %p136 = scmp.le.s32.totalorder 1, %s9
    %p137 = scmp.lt.s32.totalorder %s9, 3
    %p138 = pnand %p136, %p137
    %p139 = pneg %p138
    // Predicated region
    $region29: #{cdpn_forward.6} parent=5 // pred_check
      _
    $region30: #{cdpn_forward.6} parent=5 // pred_check_branch
      %141 = sbr.rel (%p138) target = $region32
    $region31: #{cdpn_forward.6} parent=5 // pred_region
      %s142 = ssub.s32 %s9, 1
      %p143 = scmp.lt.s32.totalorder %s14, 1
      %s144 = scalar_select %p143, %s14, 1
      %s145 = smul.addr %s144, 8
      %s146 = smul.addr %s145, 4
      %s147 = scalar_lea.vmem %s0, %s146
      %p148 = pneg %p35
      %p149 = pneg %p32
      %p150 = pneg %p56
      %p151 = pneg %p53
      %p152 = pneg %p77
      %p153 = pneg %p74
      %p154 = pneg %p103
      %p155 = pneg %p100
      %p156 = scmp.lt.s32.totalorder %s14, 1
      %s157 = scalar_select %p156, %s14, 1
      %s158 = smul.addr %s157, 8
      %s159 = smul.addr %s158, 4
      %s160 = scalar_lea.vmem %s3, %s159
      %p161 = scmp.lt.s32.totalorder %s14, 1
      %s162 = scalar_select %p161, %s14, 1
      %s163 = smul.addr %s162, 8
      %s164 = smul.addr %s163, 4
      %s165 = scalar_lea.vmem %s0, %s164
      %p166 = scmp.lt.s32.totalorder %s14, 1
      %s167 = scalar_select %p166, %s14, 1
      %s168 = smul.addr %s167, 8
      %s169 = smul.addr %s168, 4
      %s170 = scalar_lea.vmem %s3, %s169
      %vm172 = vcmask 261120
      %173 = vst.msk [vmem:[#allocation2] sm:$0xff] %vm172, 0.0
      %vm174 = vcmask 254976
      %175 = vst.msk [vmem:[#allocation2 + $0x8] sm:$0x3] %vm174, 0.0
      %176 = vst.msk [vmem:[#allocation2 + $0x10] sm:$0xff] %vm172, 0.0
      %177 = vst.msk [vmem:[#allocation2 + $0x18] sm:$0x3] %vm174, 0.0
      %178 = vst.msk [vmem:[#allocation2 + $0x20] sm:$0xff] %vm172, 0.0
      %179 = vst.msk [vmem:[#allocation2 + $0x28] sm:$0x3] %vm174, 0.0
      %180 = vst.msk [vmem:[#allocation2 + $0x30] sm:$0xff] %vm172, 0.0
      %181 = vst.msk [vmem:[#allocation2 + $0x38] sm:$0x3] %vm174, 0.0
      %182 = vst.msk [vmem:[#allocation2 + $0x40] sm:$0xff] %vm172, 0.0
      %183 = vst.msk [vmem:[#allocation2 + $0x48] sm:$0x3] %vm174, 0.0
      %184 = vst.msk [vmem:[#allocation2 + $0x50] sm:$0xff] %vm172, 0.0
      %185 = vst.msk [vmem:[#allocation2 + $0x58] sm:$0x3] %vm174, 0.0
      %186 = vst.msk [vmem:[#allocation2 + $0x60] sm:$0xff] %vm172, 0.0
      %187 = vst.msk [vmem:[#allocation2 + $0x68] sm:$0x3] %vm174, 0.0
      %188 = vst.msk [vmem:[#allocation2 + $0x70] sm:$0xff] %vm172, 0.0
      %189 = vst.msk [vmem:[#allocation2 + $0x78] sm:$0x3] %vm174, 0.0
      %190 = vst.msk [vmem:[#allocation2 + $0x80] sm:$0xff] %vm172, 0.0
      %191 = vst.msk [vmem:[#allocation2 + $0x88] sm:$0x3] %vm174, 0.0
      %192 = vst.msk [vmem:[#allocation2 + $0x90] sm:$0xff] %vm172, 0.0
      %193 = vst.msk [vmem:[#allocation2 + $0x98] sm:$0x3] %vm174, 0.0
      %v194 = vld [vmem:[%s165] sm:$0xf]
      %v195 = vld [vmem:[%s165 + $0x4] sm:$0xf]
      %v196 = vld [vmem:[%s165 + $0x8] sm:$0xf]
      %v197 = vld [vmem:[%s165 + $0xc] sm:$0xf]
      %v198 = vld [vmem:[%s165 + $0x10] sm:$0xf]
      %v199 = vld [vmem:[%s165 + $0x14] sm:$0xf]
      %v200 = vld [vmem:[%s165 + $0x18] sm:$0xf]
      %v201 = vld [vmem:[%s165 + $0x1c] sm:$0xf]
      %v202 = vunpack.c.l.bf16 %v194
      %v203 = vunpack.c.l.bf16 %v195
      %v204 = vunpack.c.l.bf16 %v196
      %v205 = vunpack.c.l.bf16 %v197
      %v206 = vunpack.c.l.bf16 %v198
      %v207 = vunpack.c.l.bf16 %v199
      %v208 = vunpack.c.l.bf16 %v200
      %v209 = vunpack.c.l.bf16 %v201
      %s210 = scalar_lea.vmem [#allocation2], 16
      %211 = vst.msk [vmem:[%s210 + $0x1] sm:$0xff] %vm172, %v202
      %212 = vst.msk [vmem:[%s210 + $0x11] sm:$0xff] %vm172, %v203
      %213 = vst.msk [vmem:[%s210 + $0x21] sm:$0xff] %vm172, %v204
      %214 = vst.msk [vmem:[%s210 + $0x31] sm:$0xff] %vm172, %v205
      %215 = vst.msk [vmem:[%s210 + $0x41] sm:$0xff] %vm172, %v206
      %216 = vst.msk [vmem:[%s210 + $0x51] sm:$0xff] %vm172, %v207
      %217 = vst.msk [vmem:[%s210 + $0x61] sm:$0xff] %vm172, %v208
      %218 = vst.msk [vmem:[%s210 + $0x71] sm:$0xff] %vm172, %v209
      %v219 = vld [vmem:[#allocation2] sm:$0xff]
      %v220 = vld [vmem:[#allocation2 + $0x10] sm:$0xff]
      %v221 = vld [vmem:[#allocation2 + $0x20] sm:$0xff]
      %v222 = vld [vmem:[#allocation2 + $0x30] sm:$0xff]
      %v223 = vld [vmem:[#allocation2 + $0x40] sm:$0xff]
      %v224 = vld [vmem:[#allocation2 + $0x50] sm:$0xff]
      %v225 = vld [vmem:[#allocation2 + $0x60] sm:$0xff]
      %v226 = vld [vmem:[#allocation2 + $0x70] sm:$0xff]
      %v227 = vpack.c.bf16 %v220, %v219
      %v228 = vpack.c.bf16 %v222, %v221
      %v229 = vpack.c.bf16 %v224, %v223
      %v230 = vpack.c.bf16 %v226, %v225
      %v231 = vld [vmem:[%s1] sm:$0xf]
      %v232 = vld [vmem:[%s1 + $0x4] sm:$0xf]
      %v233 = vld [vmem:[%s1 + $0x8] sm:$0xf]
      %v234 = vld [vmem:[%s1 + $0xc] sm:$0xf]
      %v235 = vld [vmem:[#allocation2 + $0x1] sm:$0xff]
      %v236 = vld [vmem:[#allocation2 + $0x11] sm:$0xff]
      %v237 = vld [vmem:[#allocation2 + $0x21] sm:$0xff]
      %v238 = vld [vmem:[#allocation2 + $0x31] sm:$0xff]
      %v239 = vld [vmem:[#allocation2 + $0x41] sm:$0xff]
      %v240 = vld [vmem:[#allocation2 + $0x51] sm:$0xff]
      %v241 = vld [vmem:[#allocation2 + $0x61] sm:$0xff]
      %v242 = vld [vmem:[#allocation2 + $0x71] sm:$0xff]
      %v243 = vpack.c.bf16 %v236, %v235
      %v244 = vpack.c.bf16 %v238, %v237
      %v245 = vpack.c.bf16 %v240, %v239
      %v246 = vpack.c.bf16 %v242, %v241
      %s247 = scalar_lea.vmem %s1, 16
      %v248 = vld [vmem:[%s247] sm:$0xf]
      %v249 = vld [vmem:[%s247 + $0x4] sm:$0xf]
      %v250 = vld [vmem:[%s247 + $0x8] sm:$0xf]
      %v251 = vld [vmem:[%s247 + $0xc] sm:$0xf]
      %v256 = vunpack.c.l.b16 %v248
      %v257 = vunpack.c.l.b16 %v249
      %v258 = vunpack.c.l.b16 %v250
      %v259 = vunpack.c.l.b16 %v251
      %v260 = vpack.c.b16 %v257, %v256
      %v261 = vpack.c.b16 %v259, %v258
      %v265 = vsel %vm172, %v243, 0
      %v268 = vsel %vm172, %v244, 0
      %v271 = vsel %vm172, %v245, 0
      %v274 = vsel %vm172, %v246, 0
      %276 = vmatprep.subr.bf16.mxu0 0
      %277 = vmatpush1.bf16.msra.mxu0 0
      %278 = vmatprep.subr.bf16.mxu0 0
      %279 = vmatpush1.bf16.msra.mxu0 0
      %280 = vmatprep.subr.bf16.mxu0 0
      %281 = vmatpush1.bf16.msra.mxu0 0
      %282 = vmatprep.subr.bf16.mxu0 0
      %283 = vmatpush1.bf16.msra.mxu0 0
      %284 = vmatprep.subr.bf16.mxu0 0
      %285 = vmatpush1.bf16.msra.mxu0 0
      %286 = vmatprep.subr.bf16.mxu0 0
      %287 = vmatpush1.bf16.msra.mxu0 0
      %288 = vmatprep.subr.bf16.mxu0 0
      %289 = vmatpush1.bf16.msra.mxu0 %v261
      %290 = vmatprep.subr.bf16.mxu0 0
      %291 = vmatpush1.bf16.msra.mxu0 %v260
      %292 = vmatprep.subr.bf16.mxu0 0
      %293 = vmatpush2.bf16.msra.mxu0 0
      %294 = vmatprep.subr.bf16.mxu0 0
      %295 = vmatpush2.bf16.msra.mxu0 0
      %296 = vmatprep.subr.bf16.mxu0 0
      %297 = vmatpush2.bf16.msra.mxu0 0
      %298 = vmatprep.subr.bf16.mxu0 0
      %299 = vmatpush2.bf16.msra.mxu0 0
      %300 = vmatprep.subr.bf16.mxu0 0
      %301 = vmatpush2.bf16.msra.mxu0 0
      %302 = vmatprep.subr.bf16.mxu0 0
      %303 = vmatpush2.bf16.msra.mxu0 0
      %304 = vmatprep.subr.bf16.mxu0 0
      %305 = vmatpush2.bf16.msra.mxu0 0
      %306 = vmatprep.subr.bf16.mxu0 0
      %307 = vmatpush2.bf16.msra.mxu0 0
      %308 = vmatprep.mubr.bf16.mxu0 0
      %309 = vmatmul.mubr.bf16.gmra.mxu0 %v265
      %v310 = vpop.f32.mrf.mxu0
      %v311 = vadd.f32 0.0, %v310
      %v312 = vpop.f32.mrf.mxu0
      %v313 = vpop.f32.mrf.mxu0
      %v314 = vadd.f32 0.0, %v313
      %v315 = vpop.f32.mrf.mxu0
      %316 = vmatprep.mubr.bf16.mxu0 0
      %317 = vmatmul.mubr.bf16.gmra.mxu0 %v268
      %v318 = vpop.f32.mrf.mxu0
      %v319 = vadd.f32 0.0, %v318
      %v320 = vpop.f32.mrf.mxu0
      %v321 = vpop.f32.mrf.mxu0
      %v322 = vadd.f32 0.0, %v321
      %v323 = vpop.f32.mrf.mxu0
      %324 = vmatprep.mubr.bf16.mxu0 0
      %325 = vmatmul.mubr.bf16.gmra.mxu0 %v271
      %v326 = vpop.f32.mrf.mxu0
      %v327 = vadd.f32 0.0, %v326
      %v328 = vpop.f32.mrf.mxu0
      %v329 = vpop.f32.mrf.mxu0
      %v330 = vadd.f32 0.0, %v329
      %v331 = vpop.f32.mrf.mxu0
      %332 = vmatprep.mubr.bf16.mxu0 0
      %333 = vmatmul.mubr.bf16.gmra.mxu0 %v274
      %v334 = vpop.f32.mrf.mxu0
      %v335 = vadd.f32 0.0, %v334
      %v336 = vpop.f32.mrf.mxu0
      %v337 = vpop.f32.mrf.mxu0
      %v338 = vadd.f32 0.0, %v337
      %v339 = vpop.f32.mrf.mxu0
      %340 = vdwg.mxu0
      %v345 = vunpack.c.l.b16 %v231
      %v346 = vunpack.c.l.b16 %v232
      %v347 = vunpack.c.l.b16 %v233
      %v348 = vunpack.c.l.b16 %v234
      %v349 = vpack.c.b16 %v346, %v345
      %v350 = vpack.c.b16 %v348, %v347
      %v354 = vsel %vm172, %v227, 0
      %v357 = vsel %vm172, %v228, 0
      %v360 = vsel %vm172, %v229, 0
      %v363 = vsel %vm172, %v230, 0
      %365 = vmatprep.subr.bf16.mxu0 0
      %366 = vmatpush1.bf16.msra.mxu0 0
      %367 = vmatprep.subr.bf16.mxu0 0
      %368 = vmatpush1.bf16.msra.mxu0 0
      %369 = vmatprep.subr.bf16.mxu0 0
      %370 = vmatpush1.bf16.msra.mxu0 0
      %371 = vmatprep.subr.bf16.mxu0 0
      %372 = vmatpush1.bf16.msra.mxu0 0
      %373 = vmatprep.subr.bf16.mxu0 0
      %374 = vmatpush1.bf16.msra.mxu0 0
      %375 = vmatprep.subr.bf16.mxu0 0
      %376 = vmatpush1.bf16.msra.mxu0 0
      %377 = vmatprep.subr.bf16.mxu0 0
      %378 = vmatpush1.bf16.msra.mxu0 %v350
      %379 = vmatprep.subr.bf16.mxu0 0
      %380 = vmatpush1.bf16.msra.mxu0 %v349
      %381 = vmatprep.subr.bf16.mxu0 0
      %382 = vmatpush2.bf16.msra.mxu0 0
      %383 = vmatprep.subr.bf16.mxu0 0
      %384 = vmatpush2.bf16.msra.mxu0 0
      %385 = vmatprep.subr.bf16.mxu0 0
      %386 = vmatpush2.bf16.msra.mxu0 0
      %387 = vmatprep.subr.bf16.mxu0 0
      %388 = vmatpush2.bf16.msra.mxu0 0
      %389 = vmatprep.subr.bf16.mxu0 0
      %390 = vmatpush2.bf16.msra.mxu0 0
      %391 = vmatprep.subr.bf16.mxu0 0
      %392 = vmatpush2.bf16.msra.mxu0 0
      %393 = vmatprep.subr.bf16.mxu0 0
      %394 = vmatpush2.bf16.msra.mxu0 0
      %395 = vmatprep.subr.bf16.mxu0 0
      %396 = vmatpush2.bf16.msra.mxu0 0
      %397 = vmatprep.mubr.bf16.mxu0 0
      %398 = vmatmul.mubr.bf16.gmra.mxu0 %v354
      %v399 = vpop.f32.mrf.mxu0
      %v400 = vadd.f32 %v311, %v399
      %v401 = vpop.f32.mrf.mxu0
      %v402 = vpop.f32.mrf.mxu0
      %v403 = vadd.f32 %v314, %v402
      %v404 = vpop.f32.mrf.mxu0
      %405 = vmatprep.mubr.bf16.mxu0 0
      %406 = vmatmul.mubr.bf16.gmra.mxu0 %v357
      %v407 = vpop.f32.mrf.mxu0
      %v408 = vadd.f32 %v319, %v407
      %v409 = vpop.f32.mrf.mxu0
      %v410 = vpop.f32.mrf.mxu0
      %v411 = vadd.f32 %v322, %v410
      %v412 = vpop.f32.mrf.mxu0
      %413 = vmatprep.mubr.bf16.mxu0 0
      %414 = vmatmul.mubr.bf16.gmra.mxu0 %v360
      %v415 = vpop.f32.mrf.mxu0
      %v416 = vadd.f32 %v327, %v415
      %v417 = vpop.f32.mrf.mxu0
      %v418 = vpop.f32.mrf.mxu0
      %v419 = vadd.f32 %v330, %v418
      %v420 = vpop.f32.mrf.mxu0
      %421 = vmatprep.mubr.bf16.mxu0 0
      %422 = vmatmul.mubr.bf16.gmra.mxu0 %v363
      %v423 = vpop.f32.mrf.mxu0
      %v424 = vadd.f32 %v335, %v423
      %v425 = vpop.f32.mrf.mxu0
      %v426 = vpop.f32.mrf.mxu0
      %v427 = vadd.f32 %v338, %v426
      %v428 = vpop.f32.mrf.mxu0
      %429 = vdwg.mxu0
      %v430 = vld [vmem:[#allocation2 + $0x2] sm:$0xff]
      %v431 = vld [vmem:[#allocation2 + $0x12] sm:$0xff]
      %v432 = vld [vmem:[#allocation2 + $0x22] sm:$0xff]
      %v433 = vld [vmem:[#allocation2 + $0x32] sm:$0xff]
      %v434 = vld [vmem:[#allocation2 + $0x42] sm:$0xff]
      %v435 = vld [vmem:[#allocation2 + $0x52] sm:$0xff]
      %v436 = vld [vmem:[#allocation2 + $0x62] sm:$0xff]
      %v437 = vld [vmem:[#allocation2 + $0x72] sm:$0xff]
      %v438 = vpack.c.bf16 %v431, %v430
      %v439 = vpack.c.bf16 %v433, %v432
      %v440 = vpack.c.bf16 %v435, %v434
      %v441 = vpack.c.bf16 %v437, %v436
      %s442 = scalar_lea.vmem %s1, 32
      %v443 = vld [vmem:[%s442] sm:$0xf]
      %v444 = vld [vmem:[%s442 + $0x4] sm:$0xf]
      %v445 = vld [vmem:[%s442 + $0x8] sm:$0xf]
      %v446 = vld [vmem:[%s442 + $0xc] sm:$0xf]
      %v451 = vunpack.c.l.b16 %v443
      %v452 = vunpack.c.l.b16 %v444
      %v453 = vunpack.c.l.b16 %v445
      %v454 = vunpack.c.l.b16 %v446
      %v455 = vpack.c.b16 %v452, %v451
      %v456 = vpack.c.b16 %v454, %v453
      %v460 = vsel %vm172, %v438, 0
      %v463 = vsel %vm172, %v439, 0
      %v466 = vsel %vm172, %v440, 0
      %v469 = vsel %vm172, %v441, 0
      %471 = vmatprep.subr.bf16.mxu0 0
      %472 = vmatpush1.bf16.msra.mxu0 0
      %473 = vmatprep.subr.bf16.mxu0 0
      %474 = vmatpush1.bf16.msra.mxu0 0
      %475 = vmatprep.subr.bf16.mxu0 0
      %476 = vmatpush1.bf16.msra.mxu0 0
      %477 = vmatprep.subr.bf16.mxu0 0
      %478 = vmatpush1.bf16.msra.mxu0 0
      %479 = vmatprep.subr.bf16.mxu0 0
      %480 = vmatpush1.bf16.msra.mxu0 0
      %481 = vmatprep.subr.bf16.mxu0 0
      %482 = vmatpush1.bf16.msra.mxu0 0
      %483 = vmatprep.subr.bf16.mxu0 0
      %484 = vmatpush1.bf16.msra.mxu0 %v456
      %485 = vmatprep.subr.bf16.mxu0 0
      %486 = vmatpush1.bf16.msra.mxu0 %v455
      %487 = vmatprep.subr.bf16.mxu0 0
      %488 = vmatpush2.bf16.msra.mxu0 0
      %489 = vmatprep.subr.bf16.mxu0 0
      %490 = vmatpush2.bf16.msra.mxu0 0
      %491 = vmatprep.subr.bf16.mxu0 0
      %492 = vmatpush2.bf16.msra.mxu0 0
      %493 = vmatprep.subr.bf16.mxu0 0
      %494 = vmatpush2.bf16.msra.mxu0 0
      %495 = vmatprep.subr.bf16.mxu0 0
      %496 = vmatpush2.bf16.msra.mxu0 0
      %497 = vmatprep.subr.bf16.mxu0 0
      %498 = vmatpush2.bf16.msra.mxu0 0
      %499 = vmatprep.subr.bf16.mxu0 0
      %500 = vmatpush2.bf16.msra.mxu0 0
      %501 = vmatprep.subr.bf16.mxu0 0
      %502 = vmatpush2.bf16.msra.mxu0 0
      %503 = vmatprep.mubr.bf16.mxu0 0
      %504 = vmatmul.mubr.bf16.gmra.mxu0 %v460
      %v505 = vpop.f32.mrf.mxu0
      %v506 = vadd.f32 0.0, %v505
      %v507 = vpop.f32.mrf.mxu0
      %v508 = vpop.f32.mrf.mxu0
      %v509 = vadd.f32 0.0, %v508
      %v510 = vpop.f32.mrf.mxu0
      %511 = vmatprep.mubr.bf16.mxu0 0
      %512 = vmatmul.mubr.bf16.gmra.mxu0 %v463
      %v513 = vpop.f32.mrf.mxu0
      %v514 = vadd.f32 0.0, %v513
      %v515 = vpop.f32.mrf.mxu0
      %v516 = vpop.f32.mrf.mxu0
      %v517 = vadd.f32 0.0, %v516
      %v518 = vpop.f32.mrf.mxu0
      %519 = vmatprep.mubr.bf16.mxu0 0
      %520 = vmatmul.mubr.bf16.gmra.mxu0 %v466
      %v521 = vpop.f32.mrf.mxu0
      %v522 = vadd.f32 0.0, %v521
      %v523 = vpop.f32.mrf.mxu0
      %v524 = vpop.f32.mrf.mxu0
      %v525 = vadd.f32 0.0, %v524
      %v526 = vpop.f32.mrf.mxu0
      %527 = vmatprep.mubr.bf16.mxu0 0
      %528 = vmatmul.mubr.bf16.gmra.mxu0 %v469
      %v529 = vpop.f32.mrf.mxu0
      %v530 = vadd.f32 0.0, %v529
      %v531 = vpop.f32.mrf.mxu0
      %v532 = vpop.f32.mrf.mxu0
      %v533 = vadd.f32 0.0, %v532
      %v534 = vpop.f32.mrf.mxu0
      %535 = vdwg.mxu0
      %v536 = vadd.f32 %v400, %v506
      %v537 = vadd.f32 %v403, %v509
      %v538 = vadd.f32 %v408, %v514
      %v539 = vadd.f32 %v411, %v517
      %v540 = vadd.f32 %v416, %v522
      %v541 = vadd.f32 %v419, %v525
      %v542 = vadd.f32 %v424, %v530
      %v543 = vadd.f32 %v427, %v533
      %v544 = vld [vmem:[%s210] sm:$0xff]
      %v545 = vld [vmem:[%s210 + $0x10] sm:$0xff]
      %v546 = vld [vmem:[%s210 + $0x20] sm:$0xff]
      %v547 = vld [vmem:[%s210 + $0x30] sm:$0xff]
      %v548 = vld [vmem:[%s210 + $0x40] sm:$0xff]
      %v549 = vld [vmem:[%s210 + $0x50] sm:$0xff]
      %v550 = vld [vmem:[%s210 + $0x60] sm:$0xff]
      %v551 = vld [vmem:[%s210 + $0x70] sm:$0xff]
      %v552 = vpack.c.bf16 %v545, %v544
      %v553 = vpack.c.bf16 %v547, %v546
      %v554 = vpack.c.bf16 %v549, %v548
      %v555 = vpack.c.bf16 %v551, %v550
      %s556 = scalar_lea.vmem %s1, 48
      %v557 = vld [vmem:[%s556] sm:$0xf]
      %v558 = vld [vmem:[%s556 + $0x4] sm:$0xf]
      %v559 = vld [vmem:[%s556 + $0x8] sm:$0xf]
      %v560 = vld [vmem:[%s556 + $0xc] sm:$0xf]
      %v565 = vunpack.c.l.b16 %v557
      %v566 = vunpack.c.l.b16 %v558
      %v567 = vunpack.c.l.b16 %v559
      %v568 = vunpack.c.l.b16 %v560
      %v569 = vpack.c.b16 %v566, %v565
      %v570 = vpack.c.b16 %v568, %v567
      %v574 = vsel %vm172, %v552, 0
      %v577 = vsel %vm172, %v553, 0
      %v580 = vsel %vm172, %v554, 0
      %v583 = vsel %vm172, %v555, 0
      %585 = vmatprep.subr.bf16.mxu0 0
      %586 = vmatpush1.bf16.msra.mxu0 0
      %587 = vmatprep.subr.bf16.mxu0 0
      %588 = vmatpush1.bf16.msra.mxu0 0
      %589 = vmatprep.subr.bf16.mxu0 0
      %590 = vmatpush1.bf16.msra.mxu0 0
      %591 = vmatprep.subr.bf16.mxu0 0
      %592 = vmatpush1.bf16.msra.mxu0 0
      %593 = vmatprep.subr.bf16.mxu0 0
      %594 = vmatpush1.bf16.msra.mxu0 0
      %595 = vmatprep.subr.bf16.mxu0 0
      %596 = vmatpush1.bf16.msra.mxu0 0
      %597 = vmatprep.subr.bf16.mxu0 0
      %598 = vmatpush1.bf16.msra.mxu0 %v570
      %599 = vmatprep.subr.bf16.mxu0 0
      %600 = vmatpush1.bf16.msra.mxu0 %v569
      %601 = vmatprep.subr.bf16.mxu0 0
      %602 = vmatpush2.bf16.msra.mxu0 0
      %603 = vmatprep.subr.bf16.mxu0 0
      %604 = vmatpush2.bf16.msra.mxu0 0
      %605 = vmatprep.subr.bf16.mxu0 0
      %606 = vmatpush2.bf16.msra.mxu0 0
      %607 = vmatprep.subr.bf16.mxu0 0
      %608 = vmatpush2.bf16.msra.mxu0 0
      %609 = vmatprep.subr.bf16.mxu0 0
      %610 = vmatpush2.bf16.msra.mxu0 0
      %611 = vmatprep.subr.bf16.mxu0 0
      %612 = vmatpush2.bf16.msra.mxu0 0
      %613 = vmatprep.subr.bf16.mxu0 0
      %614 = vmatpush2.bf16.msra.mxu0 0
      %615 = vmatprep.subr.bf16.mxu0 0
      %616 = vmatpush2.bf16.msra.mxu0 0
      %617 = vmatprep.mubr.bf16.mxu0 0
      %618 = vmatmul.mubr.bf16.gmra.mxu0 %v574
      %v619 = vpop.f32.mrf.mxu0
      %v620 = vadd.f32 0.0, %v619
      %v621 = vpop.f32.mrf.mxu0
      %v622 = vpop.f32.mrf.mxu0
      %v623 = vadd.f32 0.0, %v622
      %v624 = vpop.f32.mrf.mxu0
      %625 = vmatprep.mubr.bf16.mxu0 0
      %626 = vmatmul.mubr.bf16.gmra.mxu0 %v577
      %v627 = vpop.f32.mrf.mxu0
      %v628 = vadd.f32 0.0, %v627
      %v629 = vpop.f32.mrf.mxu0
      %v630 = vpop.f32.mrf.mxu0
      %v631 = vadd.f32 0.0, %v630
      %v632 = vpop.f32.mrf.mxu0
      %633 = vmatprep.mubr.bf16.mxu0 0
      %634 = vmatmul.mubr.bf16.gmra.mxu0 %v580
      %v635 = vpop.f32.mrf.mxu0
      %v636 = vadd.f32 0.0, %v635
      %v637 = vpop.f32.mrf.mxu0
      %v638 = vpop.f32.mrf.mxu0
      %v639 = vadd.f32 0.0, %v638
      %v640 = vpop.f32.mrf.mxu0
      %641 = vmatprep.mubr.bf16.mxu0 0
      %642 = vmatmul.mubr.bf16.gmra.mxu0 %v583
      %v643 = vpop.f32.mrf.mxu0
      %v644 = vadd.f32 0.0, %v643
      %v645 = vpop.f32.mrf.mxu0
      %v646 = vpop.f32.mrf.mxu0
      %v647 = vadd.f32 0.0, %v646
      %v648 = vpop.f32.mrf.mxu0
      %649 = vdwg.mxu0
      %v650 = vadd.f32 %v536, %v620
      %v651 = vadd.f32 %v537, %v623
      %v652 = vadd.f32 %v538, %v628
      %v653 = vadd.f32 %v539, %v631
      %v654 = vadd.f32 %v540, %v636
      %v655 = vadd.f32 %v541, %v639
      %v656 = vadd.f32 %v542, %v644
      %v657 = vadd.f32 %v543, %v647
      %v658 = vld [vmem:[%s210 + $0x1] sm:$0xff]
      %v659 = vld [vmem:[%s210 + $0x11] sm:$0xff]
      %v660 = vld [vmem:[%s210 + $0x21] sm:$0xff]
      %v661 = vld [vmem:[%s210 + $0x31] sm:$0xff]
      %v662 = vld [vmem:[%s210 + $0x41] sm:$0xff]
      %v663 = vld [vmem:[%s210 + $0x51] sm:$0xff]
      %v664 = vld [vmem:[%s210 + $0x61] sm:$0xff]
      %v665 = vld [vmem:[%s210 + $0x71] sm:$0xff]
      %v666 = vpack.c.bf16 %v659, %v658
      %v667 = vpack.c.bf16 %v661, %v660
      %v668 = vpack.c.bf16 %v663, %v662
      %v669 = vpack.c.bf16 %v665, %v664
      %s670 = scalar_lea.vmem %s1, 64
      %v671 = vld [vmem:[%s670] sm:$0xf]
      %v672 = vld [vmem:[%s670 + $0x4] sm:$0xf]
      %v673 = vld [vmem:[%s670 + $0x8] sm:$0xf]
      %v674 = vld [vmem:[%s670 + $0xc] sm:$0xf]
      %v679 = vunpack.c.l.b16 %v671
      %v680 = vunpack.c.l.b16 %v672
      %v681 = vunpack.c.l.b16 %v673
      %v682 = vunpack.c.l.b16 %v674
      %v683 = vpack.c.b16 %v680, %v679
      %v684 = vpack.c.b16 %v682, %v681
      %v688 = vsel %vm172, %v666, 0
      %v691 = vsel %vm172, %v667, 0
      %v694 = vsel %vm172, %v668, 0
      %v697 = vsel %vm172, %v669, 0
      %699 = vmatprep.subr.bf16.mxu0 0
      %700 = vmatpush1.bf16.msra.mxu0 0
      %701 = vmatprep.subr.bf16.mxu0 0
      %702 = vmatpush1.bf16.msra.mxu0 0
      %703 = vmatprep.subr.bf16.mxu0 0
      %704 = vmatpush1.bf16.msra.mxu0 0
      %705 = vmatprep.subr.bf16.mxu0 0
      %706 = vmatpush1.bf16.msra.mxu0 0
      %707 = vmatprep.subr.bf16.mxu0 0
      %708 = vmatpush1.bf16.msra.mxu0 0
      %709 = vmatprep.subr.bf16.mxu0 0
      %710 = vmatpush1.bf16.msra.mxu0 0
      %711 = vmatprep.subr.bf16.mxu0 0
      %712 = vmatpush1.bf16.msra.mxu0 %v684
      %713 = vmatprep.subr.bf16.mxu0 0
      %714 = vmatpush1.bf16.msra.mxu0 %v683
      %715 = vmatprep.subr.bf16.mxu0 0
      %716 = vmatpush2.bf16.msra.mxu0 0
      %717 = vmatprep.subr.bf16.mxu0 0
      %718 = vmatpush2.bf16.msra.mxu0 0
      %719 = vmatprep.subr.bf16.mxu0 0
      %720 = vmatpush2.bf16.msra.mxu0 0
      %721 = vmatprep.subr.bf16.mxu0 0
      %722 = vmatpush2.bf16.msra.mxu0 0
      %723 = vmatprep.subr.bf16.mxu0 0
      %724 = vmatpush2.bf16.msra.mxu0 0
      %725 = vmatprep.subr.bf16.mxu0 0
      %726 = vmatpush2.bf16.msra.mxu0 0
      %727 = vmatprep.subr.bf16.mxu0 0
      %728 = vmatpush2.bf16.msra.mxu0 0
      %729 = vmatprep.subr.bf16.mxu0 0
      %730 = vmatpush2.bf16.msra.mxu0 0
      %731 = vmatprep.mubr.bf16.mxu0 0
      %732 = vmatmul.mubr.bf16.gmra.mxu0 %v688
      %v733 = vpop.f32.mrf.mxu0
      %v734 = vadd.f32 0.0, %v733
      %v735 = vpop.f32.mrf.mxu0
      %v736 = vpop.f32.mrf.mxu0
      %v737 = vadd.f32 0.0, %v736
      %v738 = vpop.f32.mrf.mxu0
      %739 = vmatprep.mubr.bf16.mxu0 0
      %740 = vmatmul.mubr.bf16.gmra.mxu0 %v691
      %v741 = vpop.f32.mrf.mxu0
      %v742 = vadd.f32 0.0, %v741
      %v743 = vpop.f32.mrf.mxu0
      %v744 = vpop.f32.mrf.mxu0
      %v745 = vadd.f32 0.0, %v744
      %v746 = vpop.f32.mrf.mxu0
      %747 = vmatprep.mubr.bf16.mxu0 0
      %748 = vmatmul.mubr.bf16.gmra.mxu0 %v694
      %v749 = vpop.f32.mrf.mxu0
      %v750 = vadd.f32 0.0, %v749
      %v751 = vpop.f32.mrf.mxu0
      %v752 = vpop.f32.mrf.mxu0
      %v753 = vadd.f32 0.0, %v752
      %v754 = vpop.f32.mrf.mxu0
      %755 = vmatprep.mubr.bf16.mxu0 0
      %756 = vmatmul.mubr.bf16.gmra.mxu0 %v697
      %v757 = vpop.f32.mrf.mxu0
      %v758 = vadd.f32 0.0, %v757
      %v759 = vpop.f32.mrf.mxu0
      %v760 = vpop.f32.mrf.mxu0
      %v761 = vadd.f32 0.0, %v760
      %v762 = vpop.f32.mrf.mxu0
      %763 = vdwg.mxu0
      %v764 = vadd.f32 %v650, %v734
      %v765 = vadd.f32 %v651, %v737
      %v766 = vadd.f32 %v652, %v742
      %v767 = vadd.f32 %v653, %v745
      %v768 = vadd.f32 %v654, %v750
      %v769 = vadd.f32 %v655, %v753
      %v770 = vadd.f32 %v656, %v758
      %v771 = vadd.f32 %v657, %v761
      %v772 = vld [vmem:[%s210 + $0x2] sm:$0xff]
      %v773 = vld [vmem:[%s210 + $0x12] sm:$0xff]
      %v774 = vld [vmem:[%s210 + $0x22] sm:$0xff]
      %v775 = vld [vmem:[%s210 + $0x32] sm:$0xff]
      %v776 = vld [vmem:[%s210 + $0x42] sm:$0xff]
      %v777 = vld [vmem:[%s210 + $0x52] sm:$0xff]
      %v778 = vld [vmem:[%s210 + $0x62] sm:$0xff]
      %v779 = vld [vmem:[%s210 + $0x72] sm:$0xff]
      %v780 = vpack.c.bf16 %v773, %v772
      %v781 = vpack.c.bf16 %v775, %v774
      %v782 = vpack.c.bf16 %v777, %v776
      %v783 = vpack.c.bf16 %v779, %v778
      %s784 = scalar_lea.vmem %s1, 80
      %v785 = vld [vmem:[%s784] sm:$0xf]
      %v786 = vld [vmem:[%s784 + $0x4] sm:$0xf]
      %v787 = vld [vmem:[%s784 + $0x8] sm:$0xf]
      %v788 = vld [vmem:[%s784 + $0xc] sm:$0xf]
      %v793 = vunpack.c.l.b16 %v785
      %v794 = vunpack.c.l.b16 %v786
      %v795 = vunpack.c.l.b16 %v787
      %v796 = vunpack.c.l.b16 %v788
      %v797 = vpack.c.b16 %v794, %v793
      %v798 = vpack.c.b16 %v796, %v795
      %v802 = vsel %vm172, %v780, 0
      %v805 = vsel %vm172, %v781, 0
      %v808 = vsel %vm172, %v782, 0
      %v811 = vsel %vm172, %v783, 0
      %813 = vmatprep.subr.bf16.mxu0 0
      %814 = vmatpush1.bf16.msra.mxu0 0
      %815 = vmatprep.subr.bf16.mxu0 0
      %816 = vmatpush1.bf16.msra.mxu0 0
      %817 = vmatprep.subr.bf16.mxu0 0
      %818 = vmatpush1.bf16.msra.mxu0 0
      %819 = vmatprep.subr.bf16.mxu0 0
      %820 = vmatpush1.bf16.msra.mxu0 0
      %821 = vmatprep.subr.bf16.mxu0 0
      %822 = vmatpush1.bf16.msra.mxu0 0
      %823 = vmatprep.subr.bf16.mxu0 0
      %824 = vmatpush1.bf16.msra.mxu0 0
      %825 = vmatprep.subr.bf16.mxu0 0
      %826 = vmatpush1.bf16.msra.mxu0 %v798
      %827 = vmatprep.subr.bf16.mxu0 0
      %828 = vmatpush1.bf16.msra.mxu0 %v797
      %829 = vmatprep.subr.bf16.mxu0 0
      %830 = vmatpush2.bf16.msra.mxu0 0
      %831 = vmatprep.subr.bf16.mxu0 0
      %832 = vmatpush2.bf16.msra.mxu0 0
      %833 = vmatprep.subr.bf16.mxu0 0
      %834 = vmatpush2.bf16.msra.mxu0 0
      %835 = vmatprep.subr.bf16.mxu0 0
      %836 = vmatpush2.bf16.msra.mxu0 0
      %837 = vmatprep.subr.bf16.mxu0 0
      %838 = vmatpush2.bf16.msra.mxu0 0
      %839 = vmatprep.subr.bf16.mxu0 0
      %840 = vmatpush2.bf16.msra.mxu0 0
      %841 = vmatprep.subr.bf16.mxu0 0
      %842 = vmatpush2.bf16.msra.mxu0 0
      %843 = vmatprep.subr.bf16.mxu0 0
      %844 = vmatpush2.bf16.msra.mxu0 0
      %845 = vmatprep.mubr.bf16.mxu0 0
      %846 = vmatmul.mubr.bf16.gmra.mxu0 %v802
      %v847 = vpop.f32.mrf.mxu0
      %v848 = vadd.f32 0.0, %v847
      %v849 = vpop.f32.mrf.mxu0
      %v850 = vpop.f32.mrf.mxu0
      %v851 = vadd.f32 0.0, %v850
      %v852 = vpop.f32.mrf.mxu0
      %853 = vmatprep.mubr.bf16.mxu0 0
      %854 = vmatmul.mubr.bf16.gmra.mxu0 %v805
      %v855 = vpop.f32.mrf.mxu0
      %v856 = vadd.f32 0.0, %v855
      %v857 = vpop.f32.mrf.mxu0
      %v858 = vpop.f32.mrf.mxu0
      %v859 = vadd.f32 0.0, %v858
      %v860 = vpop.f32.mrf.mxu0
      %861 = vmatprep.mubr.bf16.mxu0 0
      %862 = vmatmul.mubr.bf16.gmra.mxu0 %v808
      %v863 = vpop.f32.mrf.mxu0
      %v864 = vadd.f32 0.0, %v863
      %v865 = vpop.f32.mrf.mxu0
      %v866 = vpop.f32.mrf.mxu0
      %v867 = vadd.f32 0.0, %v866
      %v868 = vpop.f32.mrf.mxu0
      %869 = vmatprep.mubr.bf16.mxu0 0
      %870 = vmatmul.mubr.bf16.gmra.mxu0 %v811
      %v871 = vpop.f32.mrf.mxu0
      %v872 = vadd.f32 0.0, %v871
      %v873 = vpop.f32.mrf.mxu0
      %v874 = vpop.f32.mrf.mxu0
      %v875 = vadd.f32 0.0, %v874
      %v876 = vpop.f32.mrf.mxu0
      %877 = vdwg.mxu0
      %v878 = vadd.f32 %v764, %v848
      %v879 = vadd.f32 %v765, %v851
      %v880 = vadd.f32 %v766, %v856
      %v881 = vadd.f32 %v767, %v859
      %v882 = vadd.f32 %v768, %v864
      %v883 = vadd.f32 %v769, %v867
      %v884 = vadd.f32 %v770, %v872
      %v885 = vadd.f32 %v771, %v875
      %s886 = scalar_lea.vmem [#allocation2], 32
      %v887 = vld [vmem:[%s886] sm:$0xff]
      %v888 = vld [vmem:[%s886 + $0x10] sm:$0xff]
      %v889 = vld [vmem:[%s886 + $0x20] sm:$0xff]
      %v890 = vld [vmem:[%s886 + $0x30] sm:$0xff]
      %v891 = vld [vmem:[%s886 + $0x40] sm:$0xff]
      %v892 = vld [vmem:[%s886 + $0x50] sm:$0xff]
      %v893 = vld [vmem:[%s886 + $0x60] sm:$0xff]
      %v894 = vld [vmem:[%s886 + $0x70] sm:$0xff]
      %v895 = vpack.c.bf16 %v888, %v887
      %v896 = vpack.c.bf16 %v890, %v889
      %v897 = vpack.c.bf16 %v892, %v891
      %v898 = vpack.c.bf16 %v894, %v893
      %s899 = scalar_lea.vmem %s1, 96
      %v900 = vld [vmem:[%s899] sm:$0xf]
      %v901 = vld [vmem:[%s899 + $0x4] sm:$0xf]
      %v902 = vld [vmem:[%s899 + $0x8] sm:$0xf]
      %v903 = vld [vmem:[%s899 + $0xc] sm:$0xf]
      %v908 = vunpack.c.l.b16 %v900
      %v909 = vunpack.c.l.b16 %v901
      %v910 = vunpack.c.l.b16 %v902
      %v911 = vunpack.c.l.b16 %v903
      %v912 = vpack.c.b16 %v909, %v908
      %v913 = vpack.c.b16 %v911, %v910
      %v917 = vsel %vm172, %v895, 0
      %v920 = vsel %vm172, %v896, 0
      %v923 = vsel %vm172, %v897, 0
      %v926 = vsel %vm172, %v898, 0
      %928 = vmatprep.subr.bf16.mxu0 0
      %929 = vmatpush1.bf16.msra.mxu0 0
      %930 = vmatprep.subr.bf16.mxu0 0
      %931 = vmatpush1.bf16.msra.mxu0 0
      %932 = vmatprep.subr.bf16.mxu0 0
      %933 = vmatpush1.bf16.msra.mxu0 0
      %934 = vmatprep.subr.bf16.mxu0 0
      %935 = vmatpush1.bf16.msra.mxu0 0
      %936 = vmatprep.subr.bf16.mxu0 0
      %937 = vmatpush1.bf16.msra.mxu0 0
      %938 = vmatprep.subr.bf16.mxu0 0
      %939 = vmatpush1.bf16.msra.mxu0 0
      %940 = vmatprep.subr.bf16.mxu0 0
      %941 = vmatpush1.bf16.msra.mxu0 %v913
      %942 = vmatprep.subr.bf16.mxu0 0
      %943 = vmatpush1.bf16.msra.mxu0 %v912
      %944 = vmatprep.subr.bf16.mxu0 0
      %945 = vmatpush2.bf16.msra.mxu0 0
      %946 = vmatprep.subr.bf16.mxu0 0
      %947 = vmatpush2.bf16.msra.mxu0 0
      %948 = vmatprep.subr.bf16.mxu0 0
      %949 = vmatpush2.bf16.msra.mxu0 0
      %950 = vmatprep.subr.bf16.mxu0 0
      %951 = vmatpush2.bf16.msra.mxu0 0
      %952 = vmatprep.subr.bf16.mxu0 0
      %953 = vmatpush2.bf16.msra.mxu0 0
      %954 = vmatprep.subr.bf16.mxu0 0
      %955 = vmatpush2.bf16.msra.mxu0 0
      %956 = vmatprep.subr.bf16.mxu0 0
      %957 = vmatpush2.bf16.msra.mxu0 0
      %958 = vmatprep.subr.bf16.mxu0 0
      %959 = vmatpush2.bf16.msra.mxu0 0
      %960 = vmatprep.mubr.bf16.mxu0 0
      %961 = vmatmul.mubr.bf16.gmra.mxu0 %v917
      %v962 = vpop.f32.mrf.mxu0
      %v963 = vadd.f32 0.0, %v962
      %v964 = vpop.f32.mrf.mxu0
      %v965 = vpop.f32.mrf.mxu0
      %v966 = vadd.f32 0.0, %v965
      %v967 = vpop.f32.mrf.mxu0
      %968 = vmatprep.mubr.bf16.mxu0 0
      %969 = vmatmul.mubr.bf16.gmra.mxu0 %v920
      %v970 = vpop.f32.mrf.mxu0
      %v971 = vadd.f32 0.0, %v970
      %v972 = vpop.f32.mrf.mxu0
      %v973 = vpop.f32.mrf.mxu0
      %v974 = vadd.f32 0.0, %v973
      %v975 = vpop.f32.mrf.mxu0
      %976 = vmatprep.mubr.bf16.mxu0 0
      %977 = vmatmul.mubr.bf16.gmra.mxu0 %v923
      %v978 = vpop.f32.mrf.mxu0
      %v979 = vadd.f32 0.0, %v978
      %v980 = vpop.f32.mrf.mxu0
      %v981 = vpop.f32.mrf.mxu0
      %v982 = vadd.f32 0.0, %v981
      %v983 = vpop.f32.mrf.mxu0
      %984 = vmatprep.mubr.bf16.mxu0 0
      %985 = vmatmul.mubr.bf16.gmra.mxu0 %v926
      %v986 = vpop.f32.mrf.mxu0
      %v987 = vadd.f32 0.0, %v986
      %v988 = vpop.f32.mrf.mxu0
      %v989 = vpop.f32.mrf.mxu0
      %v990 = vadd.f32 0.0, %v989
      %v991 = vpop.f32.mrf.mxu0
      %992 = vdwg.mxu0
      %v993 = vadd.f32 %v878, %v963
      %v994 = vadd.f32 %v879, %v966
      %v995 = vadd.f32 %v880, %v971
      %v996 = vadd.f32 %v881, %v974
      %v997 = vadd.f32 %v882, %v979
      %v998 = vadd.f32 %v883, %v982
      %v999 = vadd.f32 %v884, %v987
      %v1000 = vadd.f32 %v885, %v990
      %v1001 = vld [vmem:[%s886 + $0x1] sm:$0xff]
      %v1002 = vld [vmem:[%s886 + $0x11] sm:$0xff]
      %v1003 = vld [vmem:[%s886 + $0x21] sm:$0xff]
      %v1004 = vld [vmem:[%s886 + $0x31] sm:$0xff]
      %v1005 = vld [vmem:[%s886 + $0x41] sm:$0xff]
      %v1006 = vld [vmem:[%s886 + $0x51] sm:$0xff]
      %v1007 = vld [vmem:[%s886 + $0x61] sm:$0xff]
      %v1008 = vld [vmem:[%s886 + $0x71] sm:$0xff]
      %v1009 = vpack.c.bf16 %v1002, %v1001
      %v1010 = vpack.c.bf16 %v1004, %v1003
      %v1011 = vpack.c.bf16 %v1006, %v1005
      %v1012 = vpack.c.bf16 %v1008, %v1007
      %s1013 = scalar_lea.vmem %s1, 112
      %v1014 = vld [vmem:[%s1013] sm:$0xf]
      %v1015 = vld [vmem:[%s1013 + $0x4] sm:$0xf]
      %v1016 = vld [vmem:[%s1013 + $0x8] sm:$0xf]
      %v1017 = vld [vmem:[%s1013 + $0xc] sm:$0xf]
      %v1022 = vunpack.c.l.b16 %v1014
      %v1023 = vunpack.c.l.b16 %v1015
      %v1024 = vunpack.c.l.b16 %v1016
      %v1025 = vunpack.c.l.b16 %v1017
      %v1026 = vpack.c.b16 %v1023, %v1022
      %v1027 = vpack.c.b16 %v1025, %v1024
      %v1031 = vsel %vm172, %v1009, 0
      %v1034 = vsel %vm172, %v1010, 0
      %v1037 = vsel %vm172, %v1011, 0
      %v1040 = vsel %vm172, %v1012, 0
      %1042 = vmatprep.subr.bf16.mxu0 0
      %1043 = vmatpush1.bf16.msra.mxu0 0
      %1044 = vmatprep.subr.bf16.mxu0 0
      %1045 = vmatpush1.bf16.msra.mxu0 0
      %1046 = vmatprep.subr.bf16.mxu0 0
      %1047 = vmatpush1.bf16.msra.mxu0 0
      %1048 = vmatprep.subr.bf16.mxu0 0
      %1049 = vmatpush1.bf16.msra.mxu0 0
      %1050 = vmatprep.subr.bf16.mxu0 0
      %1051 = vmatpush1.bf16.msra.mxu0 0
      %1052 = vmatprep.subr.bf16.mxu0 0
      %1053 = vmatpush1.bf16.msra.mxu0 0
      %1054 = vmatprep.subr.bf16.mxu0 0
      %1055 = vmatpush1.bf16.msra.mxu0 %v1027
      %1056 = vmatprep.subr.bf16.mxu0 0
      %1057 = vmatpush1.bf16.msra.mxu0 %v1026
      %1058 = vmatprep.subr.bf16.mxu0 0
      %1059 = vmatpush2.bf16.msra.mxu0 0
      %1060 = vmatprep.subr.bf16.mxu0 0
      %1061 = vmatpush2.bf16.msra.mxu0 0
      %1062 = vmatprep.subr.bf16.mxu0 0
      %1063 = vmatpush2.bf16.msra.mxu0 0
      %1064 = vmatprep.subr.bf16.mxu0 0
      %1065 = vmatpush2.bf16.msra.mxu0 0
      %1066 = vmatprep.subr.bf16.mxu0 0
      %1067 = vmatpush2.bf16.msra.mxu0 0
      %1068 = vmatprep.subr.bf16.mxu0 0
      %1069 = vmatpush2.bf16.msra.mxu0 0
      %1070 = vmatprep.subr.bf16.mxu0 0
      %1071 = vmatpush2.bf16.msra.mxu0 0
      %1072 = vmatprep.subr.bf16.mxu0 0
      %1073 = vmatpush2.bf16.msra.mxu0 0
      %1074 = vmatprep.mubr.bf16.mxu0 0
      %1075 = vmatmul.mubr.bf16.gmra.mxu0 %v1031
      %v1076 = vpop.f32.mrf.mxu0
      %v1077 = vadd.f32 0.0, %v1076
      %v1078 = vpop.f32.mrf.mxu0
      %v1079 = vpop.f32.mrf.mxu0
      %v1080 = vadd.f32 0.0, %v1079
      %v1081 = vpop.f32.mrf.mxu0
      %1082 = vmatprep.mubr.bf16.mxu0 0
      %1083 = vmatmul.mubr.bf16.gmra.mxu0 %v1034
      %v1084 = vpop.f32.mrf.mxu0
      %v1085 = vadd.f32 0.0, %v1084
      %v1086 = vpop.f32.mrf.mxu0
      %v1087 = vpop.f32.mrf.mxu0
      %v1088 = vadd.f32 0.0, %v1087
      %v1089 = vpop.f32.mrf.mxu0
      %1090 = vmatprep.mubr.bf16.mxu0 0
      %1091 = vmatmul.mubr.bf16.gmra.mxu0 %v1037
      %v1092 = vpop.f32.mrf.mxu0
      %v1093 = vadd.f32 0.0, %v1092
      %v1094 = vpop.f32.mrf.mxu0
      %v1095 = vpop.f32.mrf.mxu0
      %v1096 = vadd.f32 0.0, %v1095
      %v1097 = vpop.f32.mrf.mxu0
      %1098 = vmatprep.mubr.bf16.mxu0 0
      %1099 = vmatmul.mubr.bf16.gmra.mxu0 %v1040
      %v1100 = vpop.f32.mrf.mxu0
      %v1101 = vadd.f32 0.0, %v1100
      %v1102 = vpop.f32.mrf.mxu0
      %v1103 = vpop.f32.mrf.mxu0
      %v1104 = vadd.f32 0.0, %v1103
      %v1105 = vpop.f32.mrf.mxu0
      %1106 = vdwg.mxu0
      %v1107 = vadd.f32 %v993, %v1077
      %v1108 = vadd.f32 %v994, %v1080
      %v1109 = vadd.f32 %v995, %v1085
      %v1110 = vadd.f32 %v996, %v1088
      %v1111 = vadd.f32 %v997, %v1093
      %v1112 = vadd.f32 %v998, %v1096
      %v1113 = vadd.f32 %v999, %v1101
      %v1114 = vadd.f32 %v1000, %v1104
      %v1115 = vld [vmem:[%s886 + $0x2] sm:$0xff]
      %v1116 = vld [vmem:[%s886 + $0x12] sm:$0xff]
      %v1117 = vld [vmem:[%s886 + $0x22] sm:$0xff]
      %v1118 = vld [vmem:[%s886 + $0x32] sm:$0xff]
      %v1119 = vld [vmem:[%s886 + $0x42] sm:$0xff]
      %v1120 = vld [vmem:[%s886 + $0x52] sm:$0xff]
      %v1121 = vld [vmem:[%s886 + $0x62] sm:$0xff]
      %v1122 = vld [vmem:[%s886 + $0x72] sm:$0xff]
      %v1123 = vpack.c.bf16 %v1116, %v1115
      %v1124 = vpack.c.bf16 %v1118, %v1117
      %v1125 = vpack.c.bf16 %v1120, %v1119
      %v1126 = vpack.c.bf16 %v1122, %v1121
      %s1127 = scalar_lea.vmem %s1, 128
      %v1128 = vld [vmem:[%s1127] sm:$0xf]
      %v1129 = vld [vmem:[%s1127 + $0x4] sm:$0xf]
      %v1130 = vld [vmem:[%s1127 + $0x8] sm:$0xf]
      %v1131 = vld [vmem:[%s1127 + $0xc] sm:$0xf]
      %v1136 = vunpack.c.l.b16 %v1128
      %v1137 = vunpack.c.l.b16 %v1129
      %v1138 = vunpack.c.l.b16 %v1130
      %v1139 = vunpack.c.l.b16 %v1131
      %v1140 = vpack.c.b16 %v1137, %v1136
      %v1141 = vpack.c.b16 %v1139, %v1138
      %v1145 = vsel %vm172, %v1123, 0
      %v1148 = vsel %vm172, %v1124, 0
      %v1151 = vsel %vm172, %v1125, 0
      %v1154 = vsel %vm172, %v1126, 0
      %1156 = vmatprep.subr.bf16.mxu0 0
      %1157 = vmatpush1.bf16.msra.mxu0 0
      %1158 = vmatprep.subr.bf16.mxu0 0
      %1159 = vmatpush1.bf16.msra.mxu0 0
      %1160 = vmatprep.subr.bf16.mxu0 0
      %1161 = vmatpush1.bf16.msra.mxu0 0
      %1162 = vmatprep.subr.bf16.mxu0 0
      %1163 = vmatpush1.bf16.msra.mxu0 0
      %1164 = vmatprep.subr.bf16.mxu0 0
      %1165 = vmatpush1.bf16.msra.mxu0 0
      %1166 = vmatprep.subr.bf16.mxu0 0
      %1167 = vmatpush1.bf16.msra.mxu0 0
      %1168 = vmatprep.subr.bf16.mxu0 0
      %1169 = vmatpush1.bf16.msra.mxu0 %v1141
      %1170 = vmatprep.subr.bf16.mxu0 0
      %1171 = vmatpush1.bf16.msra.mxu0 %v1140
      %1172 = vmatprep.subr.bf16.mxu0 0
      %1173 = vmatpush2.bf16.msra.mxu0 0
      %1174 = vmatprep.subr.bf16.mxu0 0
      %1175 = vmatpush2.bf16.msra.mxu0 0
      %1176 = vmatprep.subr.bf16.mxu0 0
      %1177 = vmatpush2.bf16.msra.mxu0 0
      %1178 = vmatprep.subr.bf16.mxu0 0
      %1179 = vmatpush2.bf16.msra.mxu0 0
      %1180 = vmatprep.subr.bf16.mxu0 0
      %1181 = vmatpush2.bf16.msra.mxu0 0
      %1182 = vmatprep.subr.bf16.mxu0 0
      %1183 = vmatpush2.bf16.msra.mxu0 0
      %1184 = vmatprep.subr.bf16.mxu0 0
      %1185 = vmatpush2.bf16.msra.mxu0 0
      %1186 = vmatprep.subr.bf16.mxu0 0
      %1187 = vmatpush2.bf16.msra.mxu0 0
      %1188 = vmatprep.mubr.bf16.mxu0 0
      %1189 = vmatmul.mubr.bf16.gmra.mxu0 %v1145
      %v1190 = vpop.f32.mrf.mxu0
      %v1191 = vadd.f32 0.0, %v1190
      %v1192 = vpop.f32.mrf.mxu0
      %v1193 = vpop.f32.mrf.mxu0
      %v1194 = vadd.f32 0.0, %v1193
      %v1195 = vpop.f32.mrf.mxu0
      %1196 = vmatprep.mubr.bf16.mxu0 0
      %1197 = vmatmul.mubr.bf16.gmra.mxu0 %v1148
      %v1198 = vpop.f32.mrf.mxu0
      %v1199 = vadd.f32 0.0, %v1198
      %v1200 = vpop.f32.mrf.mxu0
      %v1201 = vpop.f32.mrf.mxu0
      %v1202 = vadd.f32 0.0, %v1201
      %v1203 = vpop.f32.mrf.mxu0
      %1204 = vmatprep.mubr.bf16.mxu0 0
      %1205 = vmatmul.mubr.bf16.gmra.mxu0 %v1151
      %v1206 = vpop.f32.mrf.mxu0
      %v1207 = vadd.f32 0.0, %v1206
      %v1208 = vpop.f32.mrf.mxu0
      %v1209 = vpop.f32.mrf.mxu0
      %v1210 = vadd.f32 0.0, %v1209
      %v1211 = vpop.f32.mrf.mxu0
      %1212 = vmatprep.mubr.bf16.mxu0 0
      %1213 = vmatmul.mubr.bf16.gmra.mxu0 %v1154
      %v1214 = vpop.f32.mrf.mxu0
      %v1215 = vadd.f32 0.0, %v1214
      %v1216 = vpop.f32.mrf.mxu0
      %v1217 = vpop.f32.mrf.mxu0
      %v1218 = vadd.f32 0.0, %v1217
      %v1219 = vpop.f32.mrf.mxu0
      %1220 = vdwg.mxu0
      %v1221 = vadd.f32 %v1107, %v1191
      %v1222 = vadd.f32 %v1108, %v1194
      %v1223 = vadd.f32 %v1109, %v1199
      %v1224 = vadd.f32 %v1110, %v1202
      %v1225 = vadd.f32 %v1111, %v1207
      %v1226 = vadd.f32 %v1112, %v1210
      %v1227 = vadd.f32 %v1113, %v1215
      %v1228 = vadd.f32 %v1114, %v1218
      %v1229 = vld [vmem:[%s2] sm:$0x1]
      %v1231 = vlaneseq
      %v1232 = vshrl.u32 %v1231, 7
      %v1233 = vsub.s32 0, %v1232
      %v1234 = vrot.slane %v1229, %v1233
      %v1236 = vadd.f32 %v1221, %v1234
      %v1237 = vadd.f32 %v1222, %v1234
      %v1238 = vadd.f32 %v1223, %v1234
      %v1239 = vadd.f32 %v1224, %v1234
      %v1240 = vadd.f32 %v1225, %v1234
      %v1241 = vadd.f32 %v1226, %v1234
      %v1242 = vadd.f32 %v1227, %v1234
      %v1243 = vadd.f32 %v1228, %v1234
      %v1244 = vmax.f32 %v1236, 0.0
      %v1245 = vmax.f32 %v1237, 0.0
      %v1246 = vmax.f32 %v1238, 0.0
      %v1247 = vmax.f32 %v1239, 0.0
      %v1248 = vmax.f32 %v1240, 0.0
      %v1249 = vmax.f32 %v1241, 0.0
      %v1250 = vmax.f32 %v1242, 0.0
      %v1251 = vmax.f32 %v1243, 0.0
      %v1252 = vpack.c.bf16 %v1245, %v1244
      %v1253 = vpack.c.bf16 %v1247, %v1246
      %v1254 = vpack.c.bf16 %v1249, %v1248
      %v1255 = vpack.c.bf16 %v1251, %v1250
      %v1260 = vunpack.c.l.b16 %v1252
      %v1261 = vunpack.c.h.b16 %v1252
      %v1262 = vunpack.c.l.b16 %v1253
      %v1263 = vunpack.c.h.b16 %v1253
      %v1264 = vunpack.c.l.b16 %v1254
      %v1265 = vunpack.c.h.b16 %v1254
      %v1266 = vunpack.c.l.b16 %v1255
      %v1267 = vunpack.c.h.b16 %v1255
      %v1268 = vpack.c.b16 %v1260, %v1260
      %v1269 = vpack.c.b16 %v1261, %v1261
      %v1270 = vpack.c.b16 %v1262, %v1262
      %v1271 = vpack.c.b16 %v1263, %v1263
      %v1272 = vpack.c.b16 %v1264, %v1264
      %v1273 = vpack.c.b16 %v1265, %v1265
      %v1274 = vpack.c.b16 %v1266, %v1266
      %v1275 = vpack.c.b16 %v1267, %v1267
      %vm1284 = vcmask 257024
      %1285 = vst.msk [vmem:[%s170] sm:$0xf] %vm1284, %v1268
      %1286 = vst.msk [vmem:[%s170 + $0x4] sm:$0xf] %vm1284, %v1269
      %1287 = vst.msk [vmem:[%s170 + $0x8] sm:$0xf] %vm1284, %v1270
      %1288 = vst.msk [vmem:[%s170 + $0xc] sm:$0xf] %vm1284, %v1271
      %1289 = vst.msk [vmem:[%s170 + $0x10] sm:$0xf] %vm1284, %v1272
      %1290 = vst.msk [vmem:[%s170 + $0x14] sm:$0xf] %vm1284, %v1273
      %1291 = vst.msk [vmem:[%s170 + $0x18] sm:$0xf] %vm1284, %v1274
      %1292 = vst.msk [vmem:[%s170 + $0x1c] sm:$0xf] %vm1284, %v1275
      %p1293 = scmp.lt.s32.totalorder %s14, 1
      %s1294 = scalar_select %p1293, %s14, 1
      %s1295 = smul.addr %s1294, 8
      %s1296 = smul.addr %s1295, 4
      %s1297 = scalar_lea.vmem %s3, %s1296
      // Predicated region
      $region33: #{cdpn_forward.6} parent=31 // pred_check
        %p1298 = pneg %p100
      $region34: #{cdpn_forward.6} parent=31 // pred_check_branch
        %1300 = sbr.rel (%p1298) target = $region36
      $region35: #{cdpn_forward.6} parent=31 // pred_region
        _
      $region36: #{cdpn_forward.6} parent=31 // pred_fallthru
        _
    $region32: #{cdpn_forward.6} parent=5 // pred_fallthru
      _
    %p1301 = scmp.le.s32.totalorder 2, %s9
    // Predicated region
    $region37: #{cdpn_forward.6} parent=5 // pred_check
      %p1302 = pneg %p1301
    $region38: #{cdpn_forward.6} parent=5 // pred_check_branch
      %1304 = sbr.rel (%p1302) target = $region40
    $region39: #{cdpn_forward.6} parent=5 // pred_region
      %s1305 = ssub.s32 %s9, 2
      // Predicated region
      $region41: #{cdpn_forward.6} parent=39 // pred_check
        %p1306 = pneg %p106
      $region42: #{cdpn_forward.6} parent=39 // pred_check_branch
        %1308 = sbr.rel (%p1306) target = $region44
      $region43: #{cdpn_forward.6} parent=39 // pred_region
        %p1309 = scmp.lt.s32.totalorder %s15, 1
        %s1310 = scalar_select %p1309, %s15, 1
        %s1311 = smul.addr %s1310, 8
        %s1312 = smul.addr %s1311, 4
        %s1313 = scalar_lea.vmem %s3, %s1312
      $region44: #{cdpn_forward.6} parent=39 // pred_fallthru
        _
    $region40: #{cdpn_forward.6} parent=5 // pred_fallthru
      _
  $region6: #{cdpn_forward.6} parent=0 // loop_footer
    %s13 = sadd.s32 1, %s9
  $region7: #{cdpn_forward.6} parent=0 // loop_footer_branch
    %8 = sbr.rel target = $region3
  $region8: #{cdpn_forward.6} parent=0 // loop_exit
    _

// kernel: cdpn_forward.7
$region0: #{cdpn_forward.7}
  #allocation0 [shape = 'u32[]', space=smem, size = 0x4, offset = 0x4, fixed_abs, tag = 'smem constant byte address 0x4 - core index']
  #allocation1 [shape = 'u32[144,128]{1,0:T(1,128)}', space=vmem, size = 0x12000, scoped, tag = 'internal scratch']
  #allocation2 [shape = 'f32[18,18,32]{2,1,0:T(8,128)}', space=vmem, size = 0x36000, scoped, tag = 'scratch operand']
  #allocation3 [shape = 'f32[256,32]{1,0:T(8,128)}', space=vmem, size = 0x20000, scoped, tag = 'scratch operand']
  %s0 = inlined_call_operand.vmem [shape: bf16[2,16,16,32], index: 0, kind: input, shape index: {}]
  %s1 = inlined_call_operand.vmem [shape: bf16[9,32,32], index: 1, kind: input, shape index: {}]
  %s2 = inlined_call_operand.vmem [shape: f32[1,32], index: 2, kind: input, shape index: {}]
  %s3 = inlined_call_operand.vmem [shape: bf16[4,32], index: 3, kind: input, shape index: {}]
  %s4 = inlined_call_operand.vmem [shape: f32[4,1], index: 4, kind: input, shape index: {}]
  %s5 = inlined_call_operand.vmem [shape: f32[2,4,256], index: 5, kind: output, shape index: {}]
  %s6 = sld [smem:[#allocation0]]
  $region53: #{cdpn_forward.7} parent=0
    _
  %s8 = ssub.s32 1, %s6
  %s9 = scalar_select 0, %s8, %s6
  loop: start=0, step=1, limit=4
  $region2: #{cdpn_forward.7} parent=0 // loop_pre_header
    _
  $region3: #{cdpn_forward.7} parent=0 // loop_header
    %s11 = sphi 0, %s15
    %p12 = scmp.ge.s32.totalorder %s11, 4
    %s21 = sphi 0, %s23
    %s24 = sphi 0, %s21
    %s25 = sphi 0, %s24
    %s41 = sphi 0, %s25
    %s45 = sphi 0, %s45
    %s47 = sphi 0, %s45
    %s48 = sphi 0, %s47
    %s62 = sphi 0, %s48
    %s66 = sphi 0, %s66
    %s68 = sphi 0, %s66
    %s69 = sphi 0, %s68
    %s83 = sphi 0, %s69
    %s87 = sphi 0, %s87
    %s89 = sphi 0, %s87
    %s90 = sphi 0, %s89
    %s104 = sphi 0, %s90
    %s108 = sphi 0, %s108
    %s110 = sphi 0, %s108
    %s111 = sphi 0, %s110
    %s125 = sphi 0, %s111
    %s131 = sphi 0, %s133
    %s134 = sphi 0, %s131
    %s135 = sphi 0, %s134
    %s151 = sphi 0, %s135
  $region4: #{cdpn_forward.7} parent=0 // loop_header_branch
    %14 = sbr.rel (%p12) target = $region8
  $region5: #{cdpn_forward.7} parent=0 // loop_body
    %s16 = ssub.s32 %s11, 1
    %s17 = ssub.s32 %s11, 2
    %s18 = sadd.s32 %s11, 1
    %s19 = ssub.s32 %s11, %s18
    %p20 = scmp.eq.s32.totalorder %s19, 0
    %s22 = sadd.s32 %s21, 1
    %s23 = scalar_select %p20, %s21, %s22
    %p26 = pneg %p20
    %p27 = scmp.eq.s32.totalorder %s11, 1
    %p28 = por %p26, %p27
    %p29 = scmp.ne.s32.totalorder %s21, %s24
    %p30 = scmp.eq.s32.totalorder %s11, 0
    %p31 = por %p29, %p30
    %p32 = scmp.ne.s32.totalorder %s21, %s24
    %p33 = scmp.eq.s32.totalorder %s16, 1
    %p34 = por %p32, %p33
    %p35 = scmp.ne.s32.totalorder %s24, %s25
    %p36 = scmp.eq.s32.totalorder %s16, 0
    %p37 = por %p35, %p36
    %p38 = scmp.ne.s32.totalorder %s24, %s25
    %p39 = scmp.eq.s32.totalorder %s17, 1
    %p40 = por %p38, %p39
    %p42 = scmp.ne.s32.totalorder %s25, %s41
    %p43 = scmp.eq.s32.totalorder %s17, 0
    %p44 = por %p42, %p43
    %s46 = sadd.s32 %s45, 1
    %p49 = scmp.eq.s32.totalorder %s11, 1
    %p50 = scmp.ne.s32.totalorder %s45, %s47
    %p51 = scmp.eq.s32.totalorder %s11, 0
    %p52 = por %p50, %p51
    %p53 = scmp.ne.s32.totalorder %s45, %s47
    %p54 = scmp.eq.s32.totalorder %s16, 1
    %p55 = por %p53, %p54
    %p56 = scmp.ne.s32.totalorder %s47, %s48
    %p57 = scmp.eq.s32.totalorder %s16, 0
    %p58 = por %p56, %p57
    %p59 = scmp.ne.s32.totalorder %s47, %s48
    %p60 = scmp.eq.s32.totalorder %s17, 1
    %p61 = por %p59, %p60
    %p63 = scmp.ne.s32.totalorder %s48, %s62
    %p64 = scmp.eq.s32.totalorder %s17, 0
    %p65 = por %p63, %p64
    %s67 = sadd.s32 %s66, 1
    %p70 = scmp.eq.s32.totalorder %s11, 1
    %p71 = scmp.ne.s32.totalorder %s66, %s68
    %p72 = scmp.eq.s32.totalorder %s11, 0
    %p73 = por %p71, %p72
    %p74 = scmp.ne.s32.totalorder %s66, %s68
    %p75 = scmp.eq.s32.totalorder %s16, 1
    %p76 = por %p74, %p75
    %p77 = scmp.ne.s32.totalorder %s68, %s69
    %p78 = scmp.eq.s32.totalorder %s16, 0
    %p79 = por %p77, %p78
    %p80 = scmp.ne.s32.totalorder %s68, %s69
    %p81 = scmp.eq.s32.totalorder %s17, 1
    %p82 = por %p80, %p81
    %p84 = scmp.ne.s32.totalorder %s69, %s83
    %p85 = scmp.eq.s32.totalorder %s17, 0
    %p86 = por %p84, %p85
    %s88 = sadd.s32 %s87, 1
    %p91 = scmp.eq.s32.totalorder %s11, 1
    %p92 = scmp.ne.s32.totalorder %s87, %s89
    %p93 = scmp.eq.s32.totalorder %s11, 0
    %p94 = por %p92, %p93
    %p95 = scmp.ne.s32.totalorder %s87, %s89
    %p96 = scmp.eq.s32.totalorder %s16, 1
    %p97 = por %p95, %p96
    %p98 = scmp.ne.s32.totalorder %s89, %s90
    %p99 = scmp.eq.s32.totalorder %s16, 0
    %p100 = por %p98, %p99
    %p101 = scmp.ne.s32.totalorder %s89, %s90
    %p102 = scmp.eq.s32.totalorder %s17, 1
    %p103 = por %p101, %p102
    %p105 = scmp.ne.s32.totalorder %s90, %s104
    %p106 = scmp.eq.s32.totalorder %s17, 0
    %p107 = por %p105, %p106
    %s109 = sadd.s32 %s108, 1
    %p112 = scmp.eq.s32.totalorder %s11, 1
    %p113 = scmp.ne.s32.totalorder %s108, %s110
    %p114 = scmp.eq.s32.totalorder %s11, 0
    %p115 = por %p113, %p114
    %p116 = scmp.ne.s32.totalorder %s108, %s110
    %p117 = scmp.eq.s32.totalorder %s16, 1
    %p118 = por %p116, %p117
    %p119 = scmp.ne.s32.totalorder %s110, %s111
    %p120 = scmp.eq.s32.totalorder %s16, 0
    %p121 = por %p119, %p120
    %p122 = scmp.ne.s32.totalorder %s110, %s111
    %p123 = scmp.eq.s32.totalorder %s17, 1
    %p124 = por %p122, %p123
    %p126 = scmp.ne.s32.totalorder %s111, %s125
    %p127 = scmp.eq.s32.totalorder %s17, 0
    %p128 = por %p126, %p127
    %s129 = ssub.s32 %s11, %s18
    %p130 = scmp.eq.s32.totalorder %s129, 0
    %s132 = sadd.s32 %s131, 1
    %s133 = scalar_select %p130, %s131, %s132
    %p136 = pneg %p130
    %p137 = scmp.eq.s32.totalorder %s11, 1
    %p138 = por %p136, %p137
    %p139 = scmp.ne.s32.totalorder %s131, %s134
    %p140 = scmp.eq.s32.totalorder %s11, 0
    %p141 = por %p139, %p140
    %p142 = scmp.ne.s32.totalorder %s131, %s134
    %p143 = scmp.eq.s32.totalorder %s16, 1
    %p144 = por %p142, %p143
    %p145 = scmp.ne.s32.totalorder %s134, %s135
    %p146 = scmp.eq.s32.totalorder %s16, 0
    %p147 = por %p145, %p146
    %p148 = scmp.ne.s32.totalorder %s134, %s135
    %p149 = scmp.eq.s32.totalorder %s17, 1
    %p150 = por %p148, %p149
    %p152 = scmp.ne.s32.totalorder %s135, %s151
    %p153 = scmp.eq.s32.totalorder %s17, 0
    %p154 = por %p152, %p153
    %p155 = scmp.le.s32.totalorder 1, %s11
    %p156 = scmp.lt.s32.totalorder %s11, 3
    %p157 = pnand %p155, %p156
    %p158 = pneg %p157
    // Predicated region
    $region9: #{cdpn_forward.7} parent=5 // pred_check
      _
    $region10: #{cdpn_forward.7} parent=5 // pred_check_branch
      %160 = sbr.rel (%p157) target = $region12
    $region11: #{cdpn_forward.7} parent=5 // pred_region
      %s161 = ssub.s32 %s11, 1
      // Predicated region
      $region13: #{cdpn_forward.7} parent=11 // pred_check
        %p162 = pneg %p58
      $region14: #{cdpn_forward.7} parent=11 // pred_check_branch
        %164 = sbr.rel (%p162) target = $region16
      $region15: #{cdpn_forward.7} parent=11 // pred_region
        _
      $region16: #{cdpn_forward.7} parent=11 // pred_fallthru
        _
      // Predicated region
      $region17: #{cdpn_forward.7} parent=11 // pred_check
        %p165 = pneg %p79
      $region18: #{cdpn_forward.7} parent=11 // pred_check_branch
        %167 = sbr.rel (%p165) target = $region20
      $region19: #{cdpn_forward.7} parent=11 // pred_region
        _
      $region20: #{cdpn_forward.7} parent=11 // pred_fallthru
        _
      // Predicated region
      $region21: #{cdpn_forward.7} parent=11 // pred_check
        %p168 = pneg %p100
      $region22: #{cdpn_forward.7} parent=11 // pred_check_branch
        %170 = sbr.rel (%p168) target = $region24
      $region23: #{cdpn_forward.7} parent=11 // pred_region
        _
      $region24: #{cdpn_forward.7} parent=11 // pred_fallthru
        _
      // Predicated region
      $region25: #{cdpn_forward.7} parent=11 // pred_check
        %p171 = pneg %p121
      $region26: #{cdpn_forward.7} parent=11 // pred_check_branch
        %173 = sbr.rel (%p171) target = $region28
      $region27: #{cdpn_forward.7} parent=11 // pred_region
        _
      $region28: #{cdpn_forward.7} parent=11 // pred_fallthru
        _
    $region12: #{cdpn_forward.7} parent=5 // pred_fallthru
      _
    %p174 = scmp.lt.s32.totalorder %s11, 2
    // Predicated region
    $region29: #{cdpn_forward.7} parent=5 // pred_check
      %p175 = pneg %p174
    $region30: #{cdpn_forward.7} parent=5 // pred_check_branch
      %177 = sbr.rel (%p175) target = $region32
    $region31: #{cdpn_forward.7} parent=5 // pred_region
      // Predicated region
      $region33: #{cdpn_forward.7} parent=31 // pred_check
        %p178 = pneg %p31
      $region34: #{cdpn_forward.7} parent=31 // pred_check_branch
        %180 = sbr.rel (%p178) target = $region36
      $region35: #{cdpn_forward.7} parent=31 // pred_region
        %p181 = scmp.lt.s32.totalorder %s11, 1
        %s182 = scalar_select %p181, %s11, 1
        %s183 = smul.addr %s182, 32
        %s184 = smul.addr %s183, 4
        %s185 = scalar_lea.vmem %s0, %s184
      $region36: #{cdpn_forward.7} parent=31 // pred_fallthru
        _
    $region32: #{cdpn_forward.7} parent=5 // pred_fallthru
      _
    %p186 = scmp.le.s32.totalorder 1, %s11
    %p187 = scmp.lt.s32.totalorder %s11, 3
    %p188 = pnand %p186, %p187
    %p189 = pneg %p188
    // Predicated region
    $region37: #{cdpn_forward.7} parent=5 // pred_check
      _
    $region38: #{cdpn_forward.7} parent=5 // pred_check_branch
      %191 = sbr.rel (%p188) target = $region40
    $region39: #{cdpn_forward.7} parent=5 // pred_region
      %s192 = ssub.s32 %s11, 1
      %p193 = scmp.lt.s32.totalorder %s16, 1
      %s194 = scalar_select %p193, %s16, 1
      %s195 = smul.addr %s194, 32
      %s196 = smul.addr %s195, 4
      %s197 = scalar_lea.vmem %s0, %s196
      %p198 = pneg %p37
      %p199 = pneg %p34
      %p200 = pneg %p58
      %p201 = pneg %p55
      %p202 = pneg %p79
      %p203 = pneg %p76
      %p204 = pneg %p100
      %p205 = pneg %p97
      %p206 = pneg %p121
      %p207 = pneg %p118
      %p208 = pneg %p147
      %p209 = pneg %p144
      %p210 = scmp.lt.s32.totalorder %s16, 1
      %s211 = scalar_select %p210, %s16, 1
      %s212 = smul.addr %s211, 2
      %s213 = smul.addr %s212, 4
      %s214 = scalar_lea.vmem %s5, %s213
      %p215 = scmp.lt.s32.totalorder %s16, 1
      %s216 = scalar_select %p215, %s16, 1
      %s217 = smul.addr %s216, 32
      %s218 = smul.addr %s217, 4
      %s219 = scalar_lea.vmem %s0, %s218
      %p220 = scmp.lt.s32.totalorder %s16, 1
      %s221 = scalar_select %p220, %s16, 1
      %s222 = smul.addr %s221, 2
      %s223 = smul.addr %s222, 4
      %s224 = scalar_lea.vmem %s5, %s223
      %vm226 = vcmask 261120
      %227 = vst.msk [vmem:[#allocation2] sm:$0xff] %vm226, 0.0
      %228 = vst.msk [vmem:[#allocation2 + $0x8] sm:$0xff] %vm226, 0.0
      %vm229 = vcmask 254976
      %230 = vst.msk [vmem:[#allocation2 + $0x10] sm:$0x3] %vm229, 0.0
      %231 = vst.msk [vmem:[#allocation2 + $0x18] sm:$0xff] %vm226, 0.0
      %232 = vst.msk [vmem:[#allocation2 + $0x20] sm:$0xff] %vm226, 0.0
      %233 = vst.msk [vmem:[#allocation2 + $0x28] sm:$0x3] %vm229, 0.0
      %234 = vst.msk [vmem:[#allocation2 + $0x30] sm:$0xff] %vm226, 0.0
      %235 = vst.msk [vmem:[#allocation2 + $0x38] sm:$0xff] %vm226, 0.0
      %236 = vst.msk [vmem:[#allocation2 + $0x40] sm:$0x3] %vm229, 0.0
      %237 = vst.msk [vmem:[#allocation2 + $0x48] sm:$0xff] %vm226, 0.0
      %238 = vst.msk [vmem:[#allocation2 + $0x50] sm:$0xff] %vm226, 0.0
      %239 = vst.msk [vmem:[#allocation2 + $0x58] sm:$0x3] %vm229, 0.0
      %240 = vst.msk [vmem:[#allocation2 + $0x60] sm:$0xff] %vm226, 0.0
      %241 = vst.msk [vmem:[#allocation2 + $0x68] sm:$0xff] %vm226, 0.0
      %242 = vst.msk [vmem:[#allocation2 + $0x70] sm:$0x3] %vm229, 0.0
      %243 = vst.msk [vmem:[#allocation2 + $0x78] sm:$0xff] %vm226, 0.0
      %244 = vst.msk [vmem:[#allocation2 + $0x80] sm:$0xff] %vm226, 0.0
      %245 = vst.msk [vmem:[#allocation2 + $0x88] sm:$0x3] %vm229, 0.0
      %246 = vst.msk [vmem:[#allocation2 + $0x90] sm:$0xff] %vm226, 0.0
      %247 = vst.msk [vmem:[#allocation2 + $0x98] sm:$0xff] %vm226, 0.0
      %248 = vst.msk [vmem:[#allocation2 + $0xa0] sm:$0x3] %vm229, 0.0
      %249 = vst.msk [vmem:[#allocation2 + $0xa8] sm:$0xff] %vm226, 0.0
      %250 = vst.msk [vmem:[#allocation2 + $0xb0] sm:$0xff] %vm226, 0.0
      %251 = vst.msk [vmem:[#allocation2 + $0xb8] sm:$0x3] %vm229, 0.0
      %252 = vst.msk [vmem:[#allocation2 + $0xc0] sm:$0xff] %vm226, 0.0
      %253 = vst.msk [vmem:[#allocation2 + $0xc8] sm:$0xff] %vm226, 0.0
      %254 = vst.msk [vmem:[#allocation2 + $0xd0] sm:$0x3] %vm229, 0.0
      %255 = vst.msk [vmem:[#allocation2 + $0xd8] sm:$0xff] %vm226, 0.0
      %256 = vst.msk [vmem:[#allocation2 + $0xe0] sm:$0xff] %vm226, 0.0
      %257 = vst.msk [vmem:[#allocation2 + $0xe8] sm:$0x3] %vm229, 0.0
      %258 = vst.msk [vmem:[#allocation2 + $0xf0] sm:$0xff] %vm226, 0.0
      %259 = vst.msk [vmem:[#allocation2 + $0xf8] sm:$0xff] %vm226, 0.0
      %260 = vst.msk [vmem:[#allocation2 + $0x100] sm:$0x3] %vm229, 0.0
      %261 = vst.msk [vmem:[#allocation2 + $0x108] sm:$0xff] %vm226, 0.0
      %262 = vst.msk [vmem:[#allocation2 + $0x110] sm:$0xff] %vm226, 0.0
      %263 = vst.msk [vmem:[#allocation2 + $0x118] sm:$0x3] %vm229, 0.0
      %264 = vst.msk [vmem:[#allocation2 + $0x120] sm:$0xff] %vm226, 0.0
      %265 = vst.msk [vmem:[#allocation2 + $0x128] sm:$0xff] %vm226, 0.0
      %266 = vst.msk [vmem:[#allocation2 + $0x130] sm:$0x3] %vm229, 0.0
      %267 = vst.msk [vmem:[#allocation2 + $0x138] sm:$0xff] %vm226, 0.0
      %268 = vst.msk [vmem:[#allocation2 + $0x140] sm:$0xff] %vm226, 0.0
      %269 = vst.msk [vmem:[#allocation2 + $0x148] sm:$0x3] %vm229, 0.0
      %270 = vst.msk [vmem:[#allocation2 + $0x150] sm:$0xff] %vm226, 0.0
      %271 = vst.msk [vmem:[#allocation2 + $0x158] sm:$0xff] %vm226, 0.0
      %272 = vst.msk [vmem:[#allocation2 + $0x160] sm:$0x3] %vm229, 0.0
      %273 = vst.msk [vmem:[#allocation2 + $0x168] sm:$0xff] %vm226, 0.0
      %274 = vst.msk [vmem:[#allocation2 + $0x170] sm:$0xff] %vm226, 0.0
      %275 = vst.msk [vmem:[#allocation2 + $0x178] sm:$0x3] %vm229, 0.0
      %276 = vst.msk [vmem:[#allocation2 + $0x180] sm:$0xff] %vm226, 0.0
      %277 = vst.msk [vmem:[#allocation2 + $0x188] sm:$0xff] %vm226, 0.0
      %278 = vst.msk [vmem:[#allocation2 + $0x190] sm:$0x3] %vm229, 0.0
      %279 = vst.msk [vmem:[#allocation2 + $0x198] sm:$0xff] %vm226, 0.0
      %280 = vst.msk [vmem:[#allocation2 + $0x1a0] sm:$0xff] %vm226, 0.0
      %281 = vst.msk [vmem:[#allocation2 + $0x1a8] sm:$0x3] %vm229, 0.0
      %v282 = vld [vmem:[%s219] sm:$0xf]
      %v283 = vld [vmem:[%s219 + $0x4] sm:$0xf]
      %v284 = vld [vmem:[%s219 + $0x8] sm:$0xf]
      %v285 = vld [vmem:[%s219 + $0xc] sm:$0xf]
      %v286 = vld [vmem:[%s219 + $0x10] sm:$0xf]
      %v287 = vld [vmem:[%s219 + $0x14] sm:$0xf]
      %v288 = vld [vmem:[%s219 + $0x18] sm:$0xf]
      %v289 = vld [vmem:[%s219 + $0x1c] sm:$0xf]
      %v290 = vld [vmem:[%s219 + $0x20] sm:$0xf]
      %v291 = vld [vmem:[%s219 + $0x24] sm:$0xf]
      %v292 = vld [vmem:[%s219 + $0x28] sm:$0xf]
      %v293 = vld [vmem:[%s219 + $0x2c] sm:$0xf]
      %v294 = vld [vmem:[%s219 + $0x30] sm:$0xf]
      %v295 = vld [vmem:[%s219 + $0x34] sm:$0xf]
      %v296 = vld [vmem:[%s219 + $0x38] sm:$0xf]
      %v297 = vld [vmem:[%s219 + $0x3c] sm:$0xf]
      %v298 = vld [vmem:[%s219 + $0x40] sm:$0xf]
      %v299 = vld [vmem:[%s219 + $0x44] sm:$0xf]
      %v300 = vld [vmem:[%s219 + $0x48] sm:$0xf]
      %v301 = vld [vmem:[%s219 + $0x4c] sm:$0xf]
      %v302 = vld [vmem:[%s219 + $0x50] sm:$0xf]
      %v303 = vld [vmem:[%s219 + $0x54] sm:$0xf]
      %v304 = vld [vmem:[%s219 + $0x58] sm:$0xf]
      %v305 = vld [vmem:[%s219 + $0x5c] sm:$0xf]
      %v306 = vld [vmem:[%s219 + $0x60] sm:$0xf]
      %v307 = vld [vmem:[%s219 + $0x64] sm:$0xf]
      %v308 = vld [vmem:[%s219 + $0x68] sm:$0xf]
      %v309 = vld [vmem:[%s219 + $0x6c] sm:$0xf]
      %v310 = vld [vmem:[%s219 + $0x70] sm:$0xf]
      %v311 = vld [vmem:[%s219 + $0x74] sm:$0xf]
      %v312 = vld [vmem:[%s219 + $0x78] sm:$0xf]
      %v313 = vld [vmem:[%s219 + $0x7c] sm:$0xf]
      %v314 = vunpack.c.l.bf16 %v282
      %v315 = vunpack.c.l.bf16 %v283
      %v316 = vunpack.c.l.bf16 %v284
      %v317 = vunpack.c.l.bf16 %v285
      %v318 = vunpack.c.l.bf16 %v286
      %v319 = vunpack.c.l.bf16 %v287
      %v320 = vunpack.c.l.bf16 %v288
      %v321 = vunpack.c.l.bf16 %v289
      %v322 = vunpack.c.l.bf16 %v290
      %v323 = vunpack.c.l.bf16 %v291
      %v324 = vunpack.c.l.bf16 %v292
      %v325 = vunpack.c.l.bf16 %v293
      %v326 = vunpack.c.l.bf16 %v294
      %v327 = vunpack.c.l.bf16 %v295
      %v328 = vunpack.c.l.bf16 %v296
      %v329 = vunpack.c.l.bf16 %v297
      %v330 = vunpack.c.l.bf16 %v298
      %v331 = vunpack.c.l.bf16 %v299
      %v332 = vunpack.c.l.bf16 %v300
      %v333 = vunpack.c.l.bf16 %v301
      %v334 = vunpack.c.l.bf16 %v302
      %v335 = vunpack.c.l.bf16 %v303
      %v336 = vunpack.c.l.bf16 %v304
      %v337 = vunpack.c.l.bf16 %v305
      %v338 = vunpack.c.l.bf16 %v306
      %v339 = vunpack.c.l.bf16 %v307
      %v340 = vunpack.c.l.bf16 %v308
      %v341 = vunpack.c.l.bf16 %v309
      %v342 = vunpack.c.l.bf16 %v310
      %v343 = vunpack.c.l.bf16 %v311
      %v344 = vunpack.c.l.bf16 %v312
      %v345 = vunpack.c.l.bf16 %v313
      %s346 = scalar_lea.vmem [#allocation2], 24
      %347 = vst.msk [vmem:[%s346 + $0x1] sm:$0xff] %vm226, %v314
      %348 = vst.msk [vmem:[%s346 + $0x9] sm:$0xff] %vm226, %v315
      %349 = vst.msk [vmem:[%s346 + $0x19] sm:$0xff] %vm226, %v316
      %350 = vst.msk [vmem:[%s346 + $0x21] sm:$0xff] %vm226, %v317
      %351 = vst.msk [vmem:[%s346 + $0x31] sm:$0xff] %vm226, %v318
      %352 = vst.msk [vmem:[%s346 + $0x39] sm:$0xff] %vm226, %v319
      %353 = vst.msk [vmem:[%s346 + $0x49] sm:$0xff] %vm226, %v320
      %354 = vst.msk [vmem:[%s346 + $0x51] sm:$0xff] %vm226, %v321
      %355 = vst.msk [vmem:[%s346 + $0x61] sm:$0xff] %vm226, %v322
      %356 = vst.msk [vmem:[%s346 + $0x69] sm:$0xff] %vm226, %v323
      %357 = vst.msk [vmem:[%s346 + $0x79] sm:$0xff] %vm226, %v324
      %358 = vst.msk [vmem:[%s346 + $0x81] sm:$0xff] %vm226, %v325
      %359 = vst.msk [vmem:[%s346 + $0x91] sm:$0xff] %vm226, %v326
      %360 = vst.msk [vmem:[%s346 + $0x99] sm:$0xff] %vm226, %v327
      %361 = vst.msk [vmem:[%s346 + $0xa9] sm:$0xff] %vm226, %v328
      %362 = vst.msk [vmem:[%s346 + $0xb1] sm:$0xff] %vm226, %v329
      %363 = vst.msk [vmem:[%s346 + $0xc1] sm:$0xff] %vm226, %v330
      %364 = vst.msk [vmem:[%s346 + $0xc9] sm:$0xff] %vm226, %v331
      %365 = vst.msk [vmem:[%s346 + $0xd9] sm:$0xff] %vm226, %v332
      %366 = vst.msk [vmem:[%s346 + $0xe1] sm:$0xff] %vm226, %v333
      %367 = vst.msk [vmem:[%s346 + $0xf1] sm:$0xff] %vm226, %v334
      %368 = vst.msk [vmem:[%s346 + $0xf9] sm:$0xff] %vm226, %v335
      %369 = vst.msk [vmem:[%s346 + $0x109] sm:$0xff] %vm226, %v336
      %370 = vst.msk [vmem:[%s346 + $0x111] sm:$0xff] %vm226, %v337
      %371 = vst.msk [vmem:[%s346 + $0x121] sm:$0xff] %vm226, %v338
      %372 = vst.msk [vmem:[%s346 + $0x129] sm:$0xff] %vm226, %v339
      %373 = vst.msk [vmem:[%s346 + $0x139] sm:$0xff] %vm226, %v340
      %374 = vst.msk [vmem:[%s346 + $0x141] sm:$0xff] %vm226, %v341
      %375 = vst.msk [vmem:[%s346 + $0x151] sm:$0xff] %vm226, %v342
      %376 = vst.msk [vmem:[%s346 + $0x159] sm:$0xff] %vm226, %v343
      %377 = vst.msk [vmem:[%s346 + $0x169] sm:$0xff] %vm226, %v344
      %378 = vst.msk [vmem:[%s346 + $0x171] sm:$0xff] %vm226, %v345
      %v379 = vld [vmem:[#allocation2] sm:$0xff]
      %v380 = vld [vmem:[#allocation2 + $0x8] sm:$0xff]
      %v381 = vld [vmem:[#allocation2 + $0x18] sm:$0xff]
      %v382 = vld [vmem:[#allocation2 + $0x20] sm:$0xff]
      %v383 = vld [vmem:[#allocation2 + $0x30] sm:$0xff]
      %v384 = vld [vmem:[#allocation2 + $0x38] sm:$0xff]
      %v385 = vld [vmem:[#allocation2 + $0x48] sm:$0xff]
      %v386 = vld [vmem:[#allocation2 + $0x50] sm:$0xff]
      %v387 = vld [vmem:[#allocation2 + $0x60] sm:$0xff]
      %v388 = vld [vmem:[#allocation2 + $0x68] sm:$0xff]
      %v389 = vld [vmem:[#allocation2 + $0x78] sm:$0xff]
      %v390 = vld [vmem:[#allocation2 + $0x80] sm:$0xff]
      %v391 = vld [vmem:[#allocation2 + $0x90] sm:$0xff]
      %v392 = vld [vmem:[#allocation2 + $0x98] sm:$0xff]
      %v393 = vld [vmem:[#allocation2 + $0xa8] sm:$0xff]
      %v394 = vld [vmem:[#allocation2 + $0xb0] sm:$0xff]
      %v395 = vld [vmem:[#allocation2 + $0xc0] sm:$0xff]
      %v396 = vld [vmem:[#allocation2 + $0xc8] sm:$0xff]
      %v397 = vld [vmem:[#allocation2 + $0xd8] sm:$0xff]
      %v398 = vld [vmem:[#allocation2 + $0xe0] sm:$0xff]
      %v399 = vld [vmem:[#allocation2 + $0xf0] sm:$0xff]
      %v400 = vld [vmem:[#allocation2 + $0xf8] sm:$0xff]
      %v401 = vld [vmem:[#allocation2 + $0x108] sm:$0xff]
      %v402 = vld [vmem:[#allocation2 + $0x110] sm:$0xff]
      %v403 = vld [vmem:[#allocation2 + $0x120] sm:$0xff]
      %v404 = vld [vmem:[#allocation2 + $0x128] sm:$0xff]
      %v405 = vld [vmem:[#allocation2 + $0x138] sm:$0xff]
      %v406 = vld [vmem:[#allocation2 + $0x140] sm:$0xff]
      %v407 = vld [vmem:[#allocation2 + $0x150] sm:$0xff]
      %v408 = vld [vmem:[#allocation2 + $0x158] sm:$0xff]
      %v409 = vld [vmem:[#allocation2 + $0x168] sm:$0xff]
      %v410 = vld [vmem:[#allocation2 + $0x170] sm:$0xff]
      %v411 = vpack.c.bf16 %v380, %v379
      %v412 = vpack.c.bf16 %v382, %v381
      %v413 = vpack.c.bf16 %v384, %v383
      %v414 = vpack.c.bf16 %v386, %v385
      %v415 = vpack.c.bf16 %v388, %v387
      %v416 = vpack.c.bf16 %v390, %v389
      %v417 = vpack.c.bf16 %v392, %v391
      %v418 = vpack.c.bf16 %v394, %v393
      %v419 = vpack.c.bf16 %v396, %v395
      %v420 = vpack.c.bf16 %v398, %v397
      %v421 = vpack.c.bf16 %v400, %v399
      %v422 = vpack.c.bf16 %v402, %v401
      %v423 = vpack.c.bf16 %v404, %v403
      %v424 = vpack.c.bf16 %v406, %v405
      %v425 = vpack.c.bf16 %v408, %v407
      %v426 = vpack.c.bf16 %v410, %v409
      %v427 = vld [vmem:[%s1] sm:$0xf]
      %v428 = vld [vmem:[%s1 + $0x4] sm:$0xf]
      %v429 = vld [vmem:[%s1 + $0x8] sm:$0xf]
      %v430 = vld [vmem:[%s1 + $0xc] sm:$0xf]
      %v431 = vld [vmem:[#allocation2 + $0x1] sm:$0xff]
      %v432 = vld [vmem:[#allocation2 + $0x9] sm:$0xff]
      %v433 = vld [vmem:[#allocation2 + $0x19] sm:$0xff]
      %v434 = vld [vmem:[#allocation2 + $0x21] sm:$0xff]
      %v435 = vld [vmem:[#allocation2 + $0x31] sm:$0xff]
      %v436 = vld [vmem:[#allocation2 + $0x39] sm:$0xff]
      %v437 = vld [vmem:[#allocation2 + $0x49] sm:$0xff]
      %v438 = vld [vmem:[#allocation2 + $0x51] sm:$0xff]
      %v439 = vld [vmem:[#allocation2 + $0x61] sm:$0xff]
      %v440 = vld [vmem:[#allocation2 + $0x69] sm:$0xff]
      %v441 = vld [vmem:[#allocation2 + $0x79] sm:$0xff]
      %v442 = vld [vmem:[#allocation2 + $0x81] sm:$0xff]
      %v443 = vld [vmem:[#allocation2 + $0x91] sm:$0xff]
      %v444 = vld [vmem:[#allocation2 + $0x99] sm:$0xff]
      %v445 = vld [vmem:[#allocation2 + $0xa9] sm:$0xff]
      %v446 = vld [vmem:[#allocation2 + $0xb1] sm:$0xff]
      %v447 = vld [vmem:[#allocation2 + $0xc1] sm:$0xff]
      %v448 = vld [vmem:[#allocation2 + $0xc9] sm:$0xff]
      %v449 = vld [vmem:[#allocation2 + $0xd9] sm:$0xff]
      %v450 = vld [vmem:[#allocation2 + $0xe1] sm:$0xff]
      %v451 = vld [vmem:[#allocation2 + $0xf1] sm:$0xff]
      %v452 = vld [vmem:[#allocation2 + $0xf9] sm:$0xff]
      %v453 = vld [vmem:[#allocation2 + $0x109] sm:$0xff]
      %v454 = vld [vmem:[#allocation2 + $0x111] sm:$0xff]
      %v455 = vld [vmem:[#allocation2 + $0x121] sm:$0xff]
      %v456 = vld [vmem:[#allocation2 + $0x129] sm:$0xff]
      %v457 = vld [vmem:[#allocation2 + $0x139] sm:$0xff]
      %v458 = vld [vmem:[#allocation2 + $0x141] sm:$0xff]
      %v459 = vld [vmem:[#allocation2 + $0x151] sm:$0xff]
      %v460 = vld [vmem:[#allocation2 + $0x159] sm:$0xff]
      %v461 = vld [vmem:[#allocation2 + $0x169] sm:$0xff]
      %v462 = vld [vmem:[#allocation2 + $0x171] sm:$0xff]
      %v463 = vpack.c.bf16 %v432, %v431
      %v464 = vpack.c.bf16 %v434, %v433
      %v465 = vpack.c.bf16 %v436, %v435
      %v466 = vpack.c.bf16 %v438, %v437
      %v467 = vpack.c.bf16 %v440, %v439
      %v468 = vpack.c.bf16 %v442, %v441
      %v469 = vpack.c.bf16 %v444, %v443
      %v470 = vpack.c.bf16 %v446, %v445
      %v471 = vpack.c.bf16 %v448, %v447
      %v472 = vpack.c.bf16 %v450, %v449
      %v473 = vpack.c.bf16 %v452, %v451
      %v474 = vpack.c.bf16 %v454, %v453
      %v475 = vpack.c.bf16 %v456, %v455
      %v476 = vpack.c.bf16 %v458, %v457
      %v477 = vpack.c.bf16 %v460, %v459
      %v478 = vpack.c.bf16 %v462, %v461
      %s479 = scalar_lea.vmem %s1, 16
      %v480 = vld [vmem:[%s479] sm:$0xf]
      %v481 = vld [vmem:[%s479 + $0x4] sm:$0xf]
      %v482 = vld [vmem:[%s479 + $0x8] sm:$0xf]
      %v483 = vld [vmem:[%s479 + $0xc] sm:$0xf]
      %v488 = vunpack.c.l.b16 %v480
      %v489 = vunpack.c.l.b16 %v481
      %v490 = vunpack.c.l.b16 %v482
      %v491 = vunpack.c.l.b16 %v483
      %v492 = vpack.c.b16 %v489, %v488
      %v493 = vpack.c.b16 %v491, %v490
      %v497 = vsel %vm226, %v463, 0
      %v500 = vsel %vm226, %v464, 0
      %v503 = vsel %vm226, %v465, 0
      %v506 = vsel %vm226, %v466, 0
      %v509 = vsel %vm226, %v467, 0
      %v512 = vsel %vm226, %v468, 0
      %v515 = vsel %vm226, %v469, 0
      %v518 = vsel %vm226, %v470, 0
      %v521 = vsel %vm226, %v471, 0
      %v524 = vsel %vm226, %v472, 0
      %v527 = vsel %vm226, %v473, 0
      %v530 = vsel %vm226, %v474, 0
      %v533 = vsel %vm226, %v475, 0
      %v536 = vsel %vm226, %v476, 0
      %v539 = vsel %vm226, %v477, 0
      %v542 = vsel %vm226, %v478, 0
      %544 = vmatprep.subr.bf16.mxu0 0
      %545 = vmatpush1.bf16.msra.mxu0 0
      %546 = vmatprep.subr.bf16.mxu0 0
      %547 = vmatpush1.bf16.msra.mxu0 0
      %548 = vmatprep.subr.bf16.mxu0 0
      %549 = vmatpush1.bf16.msra.mxu0 0
      %550 = vmatprep.subr.bf16.mxu0 0
      %551 = vmatpush1.bf16.msra.mxu0 0
      %552 = vmatprep.subr.bf16.mxu0 0
      %553 = vmatpush1.bf16.msra.mxu0 0
      %554 = vmatprep.subr.bf16.mxu0 0
      %555 = vmatpush1.bf16.msra.mxu0 0
      %556 = vmatprep.subr.bf16.mxu0 0
      %557 = vmatpush1.bf16.msra.mxu0 %v493
      %558 = vmatprep.subr.bf16.mxu0 0
      %559 = vmatpush1.bf16.msra.mxu0 %v492
      %560 = vmatprep.subr.bf16.mxu0 0
      %561 = vmatpush2.bf16.msra.mxu0 0
      %562 = vmatprep.subr.bf16.mxu0 0
      %563 = vmatpush2.bf16.msra.mxu0 0
      %564 = vmatprep.subr.bf16.mxu0 0
      %565 = vmatpush2.bf16.msra.mxu0 0
      %566 = vmatprep.subr.bf16.mxu0 0
      %567 = vmatpush2.bf16.msra.mxu0 0
      %568 = vmatprep.subr.bf16.mxu0 0
      %569 = vmatpush2.bf16.msra.mxu0 0
      %570 = vmatprep.subr.bf16.mxu0 0
      %571 = vmatpush2.bf16.msra.mxu0 0
      %572 = vmatprep.subr.bf16.mxu0 0
      %573 = vmatpush2.bf16.msra.mxu0 0
      %574 = vmatprep.subr.bf16.mxu0 0
      %575 = vmatpush2.bf16.msra.mxu0 0
      %576 = vmatprep.mubr.bf16.mxu0 0
      %577 = vmatmul.mubr.bf16.gmra.mxu0 %v497
      %v578 = vpop.f32.mrf.mxu0
      %v579 = vadd.f32 0.0, %v578
      %v580 = vpop.f32.mrf.mxu0
      %v581 = vpop.f32.mrf.mxu0
      %v582 = vadd.f32 0.0, %v581
      %v583 = vpop.f32.mrf.mxu0
      %584 = vmatprep.mubr.bf16.mxu0 0
      %585 = vmatmul.mubr.bf16.gmra.mxu0 %v500
      %v586 = vpop.f32.mrf.mxu0
      %v587 = vadd.f32 0.0, %v586
      %v588 = vpop.f32.mrf.mxu0
      %v589 = vpop.f32.mrf.mxu0
      %v590 = vadd.f32 0.0, %v589
      %v591 = vpop.f32.mrf.mxu0
      %592 = vmatprep.mubr.bf16.mxu0 0
      %593 = vmatmul.mubr.bf16.gmra.mxu0 %v503
      %v594 = vpop.f32.mrf.mxu0
      %v595 = vadd.f32 0.0, %v594
      %v596 = vpop.f32.mrf.mxu0
      %v597 = vpop.f32.mrf.mxu0
      %v598 = vadd.f32 0.0, %v597
      %v599 = vpop.f32.mrf.mxu0
      %600 = vmatprep.mubr.bf16.mxu0 0
      %601 = vmatmul.mubr.bf16.gmra.mxu0 %v506
      %v602 = vpop.f32.mrf.mxu0
      %v603 = vadd.f32 0.0, %v602
      %v604 = vpop.f32.mrf.mxu0
      %v605 = vpop.f32.mrf.mxu0
      %v606 = vadd.f32 0.0, %v605
      %v607 = vpop.f32.mrf.mxu0
      %608 = vmatprep.mubr.bf16.mxu0 0
      %609 = vmatmul.mubr.bf16.gmra.mxu0 %v509
      %v610 = vpop.f32.mrf.mxu0
      %v611 = vadd.f32 0.0, %v610
      %v612 = vpop.f32.mrf.mxu0
      %v613 = vpop.f32.mrf.mxu0
      %v614 = vadd.f32 0.0, %v613
      %v615 = vpop.f32.mrf.mxu0
      %616 = vmatprep.mubr.bf16.mxu0 0
      %617 = vmatmul.mubr.bf16.gmra.mxu0 %v512
      %v618 = vpop.f32.mrf.mxu0
      %v619 = vadd.f32 0.0, %v618
      %v620 = vpop.f32.mrf.mxu0
      %v621 = vpop.f32.mrf.mxu0
      %v622 = vadd.f32 0.0, %v621
      %v623 = vpop.f32.mrf.mxu0
      %624 = vmatprep.mubr.bf16.mxu0 0
      %625 = vmatmul.mubr.bf16.gmra.mxu0 %v515
      %v626 = vpop.f32.mrf.mxu0
      %v627 = vadd.f32 0.0, %v626
      %v628 = vpop.f32.mrf.mxu0
      %v629 = vpop.f32.mrf.mxu0
      %v630 = vadd.f32 0.0, %v629
      %v631 = vpop.f32.mrf.mxu0
      %632 = vmatprep.mubr.bf16.mxu0 0
      %633 = vmatmul.mubr.bf16.gmra.mxu0 %v518
      %v634 = vpop.f32.mrf.mxu0
      %v635 = vadd.f32 0.0, %v634
      %v636 = vpop.f32.mrf.mxu0
      %v637 = vpop.f32.mrf.mxu0
      %v638 = vadd.f32 0.0, %v637
      %v639 = vpop.f32.mrf.mxu0
      %640 = vmatprep.mubr.bf16.mxu0 0
      %641 = vmatmul.mubr.bf16.gmra.mxu0 %v521
      %v642 = vpop.f32.mrf.mxu0
      %v643 = vadd.f32 0.0, %v642
      %v644 = vpop.f32.mrf.mxu0
      %v645 = vpop.f32.mrf.mxu0
      %v646 = vadd.f32 0.0, %v645
      %v647 = vpop.f32.mrf.mxu0
      %648 = vmatprep.mubr.bf16.mxu0 0
      %649 = vmatmul.mubr.bf16.gmra.mxu0 %v524
      %v650 = vpop.f32.mrf.mxu0
      %v651 = vadd.f32 0.0, %v650
      %v652 = vpop.f32.mrf.mxu0
      %v653 = vpop.f32.mrf.mxu0
      %v654 = vadd.f32 0.0, %v653
      %v655 = vpop.f32.mrf.mxu0
      %656 = vmatprep.mubr.bf16.mxu0 0
      %657 = vmatmul.mubr.bf16.gmra.mxu0 %v527
      %v658 = vpop.f32.mrf.mxu0
      %v659 = vadd.f32 0.0, %v658
      %v660 = vpop.f32.mrf.mxu0
      %v661 = vpop.f32.mrf.mxu0
      %v662 = vadd.f32 0.0, %v661
      %v663 = vpop.f32.mrf.mxu0
      %664 = vmatprep.mubr.bf16.mxu0 0
      %665 = vmatmul.mubr.bf16.gmra.mxu0 %v530
      %v666 = vpop.f32.mrf.mxu0
      %v667 = vadd.f32 0.0, %v666
      %v668 = vpop.f32.mrf.mxu0
      %v669 = vpop.f32.mrf.mxu0
      %v670 = vadd.f32 0.0, %v669
      %v671 = vpop.f32.mrf.mxu0
      %672 = vmatprep.mubr.bf16.mxu0 0
      %673 = vmatmul.mubr.bf16.gmra.mxu0 %v533
      %v674 = vpop.f32.mrf.mxu0
      %v675 = vadd.f32 0.0, %v674
      %v676 = vpop.f32.mrf.mxu0
      %v677 = vpop.f32.mrf.mxu0
      %v678 = vadd.f32 0.0, %v677
      %v679 = vpop.f32.mrf.mxu0
      %680 = vmatprep.mubr.bf16.mxu0 0
      %681 = vmatmul.mubr.bf16.gmra.mxu0 %v536
      %v682 = vpop.f32.mrf.mxu0
      %v683 = vadd.f32 0.0, %v682
      %v684 = vpop.f32.mrf.mxu0
      %v685 = vpop.f32.mrf.mxu0
      %v686 = vadd.f32 0.0, %v685
      %v687 = vpop.f32.mrf.mxu0
      %688 = vmatprep.mubr.bf16.mxu0 0
      %689 = vmatmul.mubr.bf16.gmra.mxu0 %v539
      %v690 = vpop.f32.mrf.mxu0
      %v691 = vadd.f32 0.0, %v690
      %v692 = vpop.f32.mrf.mxu0
      %v693 = vpop.f32.mrf.mxu0
      %v694 = vadd.f32 0.0, %v693
      %v695 = vpop.f32.mrf.mxu0
      %696 = vmatprep.mubr.bf16.mxu0 0
      %697 = vmatmul.mubr.bf16.gmra.mxu0 %v542
      %v698 = vpop.f32.mrf.mxu0
      %v699 = vadd.f32 0.0, %v698
      %v700 = vpop.f32.mrf.mxu0
      %v701 = vpop.f32.mrf.mxu0
      %v702 = vadd.f32 0.0, %v701
      %v703 = vpop.f32.mrf.mxu0
      %704 = vdwg.mxu0
      %v709 = vunpack.c.l.b16 %v427
      %v710 = vunpack.c.l.b16 %v428
      %v711 = vunpack.c.l.b16 %v429
      %v712 = vunpack.c.l.b16 %v430
      %v713 = vpack.c.b16 %v710, %v709
      %v714 = vpack.c.b16 %v712, %v711
      %v718 = vsel %vm226, %v411, 0
      %v721 = vsel %vm226, %v412, 0
      %v724 = vsel %vm226, %v413, 0
      %v727 = vsel %vm226, %v414, 0
      %v730 = vsel %vm226, %v415, 0
      %v733 = vsel %vm226, %v416, 0
      %v736 = vsel %vm226, %v417, 0
      %v739 = vsel %vm226, %v418, 0
      %v742 = vsel %vm226, %v419, 0
      %v745 = vsel %vm226, %v420, 0
      %v748 = vsel %vm226, %v421, 0
      %v751 = vsel %vm226, %v422, 0
      %v754 = vsel %vm226, %v423, 0
      %v757 = vsel %vm226, %v424, 0
      %v760 = vsel %vm226, %v425, 0
      %v763 = vsel %vm226, %v426, 0
      %765 = vmatprep.subr.bf16.mxu0 0
      %766 = vmatpush1.bf16.msra.mxu0 0
      %767 = vmatprep.subr.bf16.mxu0 0
      %768 = vmatpush1.bf16.msra.mxu0 0
      %769 = vmatprep.subr.bf16.mxu0 0
      %770 = vmatpush1.bf16.msra.mxu0 0
      %771 = vmatprep.subr.bf16.mxu0 0
      %772 = vmatpush1.bf16.msra.mxu0 0
      %773 = vmatprep.subr.bf16.mxu0 0
      %774 = vmatpush1.bf16.msra.mxu0 0
      %775 = vmatprep.subr.bf16.mxu0 0
      %776 = vmatpush1.bf16.msra.mxu0 0
      %777 = vmatprep.subr.bf16.mxu0 0
      %778 = vmatpush1.bf16.msra.mxu0 %v714
      %779 = vmatprep.subr.bf16.mxu0 0
      %780 = vmatpush1.bf16.msra.mxu0 %v713
      %781 = vmatprep.subr.bf16.mxu0 0
      %782 = vmatpush2.bf16.msra.mxu0 0
      %783 = vmatprep.subr.bf16.mxu0 0
      %784 = vmatpush2.bf16.msra.mxu0 0
      %785 = vmatprep.subr.bf16.mxu0 0
      %786 = vmatpush2.bf16.msra.mxu0 0
      %787 = vmatprep.subr.bf16.mxu0 0
      %788 = vmatpush2.bf16.msra.mxu0 0
      %789 = vmatprep.subr.bf16.mxu0 0
      %790 = vmatpush2.bf16.msra.mxu0 0
      %791 = vmatprep.subr.bf16.mxu0 0
      %792 = vmatpush2.bf16.msra.mxu0 0
      %793 = vmatprep.subr.bf16.mxu0 0
      %794 = vmatpush2.bf16.msra.mxu0 0
      %795 = vmatprep.subr.bf16.mxu0 0
      %796 = vmatpush2.bf16.msra.mxu0 0
      %797 = vmatprep.mubr.bf16.mxu0 0
      %798 = vmatmul.mubr.bf16.gmra.mxu0 %v718
      %v799 = vpop.f32.mrf.mxu0
      %v800 = vadd.f32 %v579, %v799
      %v801 = vpop.f32.mrf.mxu0
      %v802 = vpop.f32.mrf.mxu0
      %v803 = vadd.f32 %v582, %v802
      %v804 = vpop.f32.mrf.mxu0
      %805 = vmatprep.mubr.bf16.mxu0 0
      %806 = vmatmul.mubr.bf16.gmra.mxu0 %v721
      %v807 = vpop.f32.mrf.mxu0
      %v808 = vadd.f32 %v587, %v807
      %v809 = vpop.f32.mrf.mxu0
      %v810 = vpop.f32.mrf.mxu0
      %v811 = vadd.f32 %v590, %v810
      %v812 = vpop.f32.mrf.mxu0
      %813 = vmatprep.mubr.bf16.mxu0 0
      %814 = vmatmul.mubr.bf16.gmra.mxu0 %v724
      %v815 = vpop.f32.mrf.mxu0
      %v816 = vadd.f32 %v595, %v815
      %v817 = vpop.f32.mrf.mxu0
      %v818 = vpop.f32.mrf.mxu0
      %v819 = vadd.f32 %v598, %v818
      %v820 = vpop.f32.mrf.mxu0
      %821 = vmatprep.mubr.bf16.mxu0 0
      %822 = vmatmul.mubr.bf16.gmra.mxu0 %v727
      %v823 = vpop.f32.mrf.mxu0
      %v824 = vadd.f32 %v603, %v823
      %v825 = vpop.f32.mrf.mxu0
      %v826 = vpop.f32.mrf.mxu0
      %v827 = vadd.f32 %v606, %v826
      %v828 = vpop.f32.mrf.mxu0
      %829 = vmatprep.mubr.bf16.mxu0 0
      %830 = vmatmul.mubr.bf16.gmra.mxu0 %v730
      %v831 = vpop.f32.mrf.mxu0
      %v832 = vadd.f32 %v611, %v831
      %v833 = vpop.f32.mrf.mxu0
      %v834 = vpop.f32.mrf.mxu0
      %v835 = vadd.f32 %v614, %v834
      %v836 = vpop.f32.mrf.mxu0
      %837 = vmatprep.mubr.bf16.mxu0 0
      %838 = vmatmul.mubr.bf16.gmra.mxu0 %v733
      %v839 = vpop.f32.mrf.mxu0
      %v840 = vadd.f32 %v619, %v839
      %v841 = vpop.f32.mrf.mxu0
      %v842 = vpop.f32.mrf.mxu0
      %v843 = vadd.f32 %v622, %v842
      %v844 = vpop.f32.mrf.mxu0
      %845 = vmatprep.mubr.bf16.mxu0 0
      %846 = vmatmul.mubr.bf16.gmra.mxu0 %v736
      %v847 = vpop.f32.mrf.mxu0
      %v848 = vadd.f32 %v627, %v847
      %v849 = vpop.f32.mrf.mxu0
      %v850 = vpop.f32.mrf.mxu0
      %v851 = vadd.f32 %v630, %v850
      %v852 = vpop.f32.mrf.mxu0
      %853 = vmatprep.mubr.bf16.mxu0 0
      %854 = vmatmul.mubr.bf16.gmra.mxu0 %v739
      %v855 = vpop.f32.mrf.mxu0
      %v856 = vadd.f32 %v635, %v855
      %v857 = vpop.f32.mrf.mxu0
      %v858 = vpop.f32.mrf.mxu0
      %v859 = vadd.f32 %v638, %v858
      %v860 = vpop.f32.mrf.mxu0
      %861 = vmatprep.mubr.bf16.mxu0 0
      %862 = vmatmul.mubr.bf16.gmra.mxu0 %v742
      %v863 = vpop.f32.mrf.mxu0
      %v864 = vadd.f32 %v643, %v863
      %v865 = vpop.f32.mrf.mxu0
      %v866 = vpop.f32.mrf.mxu0
      %v867 = vadd.f32 %v646, %v866
      %v868 = vpop.f32.mrf.mxu0
      %869 = vmatprep.mubr.bf16.mxu0 0
      %870 = vmatmul.mubr.bf16.gmra.mxu0 %v745
      %v871 = vpop.f32.mrf.mxu0
      %v872 = vadd.f32 %v651, %v871
      %v873 = vpop.f32.mrf.mxu0
      %v874 = vpop.f32.mrf.mxu0
      %v875 = vadd.f32 %v654, %v874
      %v876 = vpop.f32.mrf.mxu0
      %877 = vmatprep.mubr.bf16.mxu0 0
      %878 = vmatmul.mubr.bf16.gmra.mxu0 %v748
      %v879 = vpop.f32.mrf.mxu0
      %v880 = vadd.f32 %v659, %v879
      %v881 = vpop.f32.mrf.mxu0
      %v882 = vpop.f32.mrf.mxu0
      %v883 = vadd.f32 %v662, %v882
      %v884 = vpop.f32.mrf.mxu0
      %885 = vmatprep.mubr.bf16.mxu0 0
      %886 = vmatmul.mubr.bf16.gmra.mxu0 %v751
      %v887 = vpop.f32.mrf.mxu0
      %v888 = vadd.f32 %v667, %v887
      %v889 = vpop.f32.mrf.mxu0
      %v890 = vpop.f32.mrf.mxu0
      %v891 = vadd.f32 %v670, %v890
      %v892 = vpop.f32.mrf.mxu0
      %893 = vmatprep.mubr.bf16.mxu0 0
      %894 = vmatmul.mubr.bf16.gmra.mxu0 %v754
      %v895 = vpop.f32.mrf.mxu0
      %v896 = vadd.f32 %v675, %v895
      %v897 = vpop.f32.mrf.mxu0
      %v898 = vpop.f32.mrf.mxu0
      %v899 = vadd.f32 %v678, %v898
      %v900 = vpop.f32.mrf.mxu0
      %901 = vmatprep.mubr.bf16.mxu0 0
      %902 = vmatmul.mubr.bf16.gmra.mxu0 %v757
      %v903 = vpop.f32.mrf.mxu0
      %v904 = vadd.f32 %v683, %v903
      %v905 = vpop.f32.mrf.mxu0
      %v906 = vpop.f32.mrf.mxu0
      %v907 = vadd.f32 %v686, %v906
      %v908 = vpop.f32.mrf.mxu0
      %909 = vmatprep.mubr.bf16.mxu0 0
      %910 = vmatmul.mubr.bf16.gmra.mxu0 %v760
      %v911 = vpop.f32.mrf.mxu0
      %v912 = vadd.f32 %v691, %v911
      %v913 = vpop.f32.mrf.mxu0
      %v914 = vpop.f32.mrf.mxu0
      %v915 = vadd.f32 %v694, %v914
      %v916 = vpop.f32.mrf.mxu0
      %917 = vmatprep.mubr.bf16.mxu0 0
      %918 = vmatmul.mubr.bf16.gmra.mxu0 %v763
      %v919 = vpop.f32.mrf.mxu0
      %v920 = vadd.f32 %v699, %v919
      %v921 = vpop.f32.mrf.mxu0
      %v922 = vpop.f32.mrf.mxu0
      %v923 = vadd.f32 %v702, %v922
      %v924 = vpop.f32.mrf.mxu0
      %925 = vdwg.mxu0
      %v926 = vld [vmem:[#allocation2 + $0x2] sm:$0xff]
      %v927 = vld [vmem:[#allocation2 + $0xa] sm:$0xff]
      %v928 = vld [vmem:[#allocation2 + $0x1a] sm:$0xff]
      %v929 = vld [vmem:[#allocation2 + $0x22] sm:$0xff]
      %v930 = vld [vmem:[#allocation2 + $0x32] sm:$0xff]
      %v931 = vld [vmem:[#allocation2 + $0x3a] sm:$0xff]
      %v932 = vld [vmem:[#allocation2 + $0x4a] sm:$0xff]
      %v933 = vld [vmem:[#allocation2 + $0x52] sm:$0xff]
      %v934 = vld [vmem:[#allocation2 + $0x62] sm:$0xff]
      %v935 = vld [vmem:[#allocation2 + $0x6a] sm:$0xff]
      %v936 = vld [vmem:[#allocation2 + $0x7a] sm:$0xff]
      %v937 = vld [vmem:[#allocation2 + $0x82] sm:$0xff]
      %v938 = vld [vmem:[#allocation2 + $0x92] sm:$0xff]
      %v939 = vld [vmem:[#allocation2 + $0x9a] sm:$0xff]
      %v940 = vld [vmem:[#allocation2 + $0xaa] sm:$0xff]
      %v941 = vld [vmem:[#allocation2 + $0xb2] sm:$0xff]
      %v942 = vld [vmem:[#allocation2 + $0xc2] sm:$0xff]
      %v943 = vld [vmem:[#allocation2 + $0xca] sm:$0xff]
      %v944 = vld [vmem:[#allocation2 + $0xda] sm:$0xff]
      %v945 = vld [vmem:[#allocation2 + $0xe2] sm:$0xff]
      %v946 = vld [vmem:[#allocation2 + $0xf2] sm:$0xff]
      %v947 = vld [vmem:[#allocation2 + $0xfa] sm:$0xff]
      %v948 = vld [vmem:[#allocation2 + $0x10a] sm:$0xff]
      %v949 = vld [vmem:[#allocation2 + $0x112] sm:$0xff]
      %v950 = vld [vmem:[#allocation2 + $0x122] sm:$0xff]
      %v951 = vld [vmem:[#allocation2 + $0x12a] sm:$0xff]
      %v952 = vld [vmem:[#allocation2 + $0x13a] sm:$0xff]
      %v953 = vld [vmem:[#allocation2 + $0x142] sm:$0xff]
      %v954 = vld [vmem:[#allocation2 + $0x152] sm:$0xff]
      %v955 = vld [vmem:[#allocation2 + $0x15a] sm:$0xff]
      %v956 = vld [vmem:[#allocation2 + $0x16a] sm:$0xff]
      %v957 = vld [vmem:[#allocation2 + $0x172] sm:$0xff]
      %v958 = vpack.c.bf16 %v927, %v926
      %v959 = vpack.c.bf16 %v929, %v928
      %v960 = vpack.c.bf16 %v931, %v930
      %v961 = vpack.c.bf16 %v933, %v932
      %v962 = vpack.c.bf16 %v935, %v934
      %v963 = vpack.c.bf16 %v937, %v936
      %v964 = vpack.c.bf16 %v939, %v938
      %v965 = vpack.c.bf16 %v941, %v940
      %v966 = vpack.c.bf16 %v943, %v942
      %v967 = vpack.c.bf16 %v945, %v944
      %v968 = vpack.c.bf16 %v947, %v946
      %v969 = vpack.c.bf16 %v949, %v948
      %v970 = vpack.c.bf16 %v951, %v950
      %v971 = vpack.c.bf16 %v953, %v952
      %v972 = vpack.c.bf16 %v955, %v954
      %v973 = vpack.c.bf16 %v957, %v956
      %s974 = scalar_lea.vmem %s1, 32
      %v975 = vld [vmem:[%s974] sm:$0xf]
      %v976 = vld [vmem:[%s974 + $0x4] sm:$0xf]
      %v977 = vld [vmem:[%s974 + $0x8] sm:$0xf]
      %v978 = vld [vmem:[%s974 + $0xc] sm:$0xf]
      %v983 = vunpack.c.l.b16 %v975
      %v984 = vunpack.c.l.b16 %v976
      %v985 = vunpack.c.l.b16 %v977
      %v986 = vunpack.c.l.b16 %v978
      %v987 = vpack.c.b16 %v984, %v983
      %v988 = vpack.c.b16 %v986, %v985
      %v992 = vsel %vm226, %v958, 0
      %v995 = vsel %vm226, %v959, 0
      %v998 = vsel %vm226, %v960, 0
      %v1001 = vsel %vm226, %v961, 0
      %v1004 = vsel %vm226, %v962, 0
      %v1007 = vsel %vm226, %v963, 0
      %v1010 = vsel %vm226, %v964, 0
      %v1013 = vsel %vm226, %v965, 0
      %v1016 = vsel %vm226, %v966, 0
      %v1019 = vsel %vm226, %v967, 0
      %v1022 = vsel %vm226, %v968, 0
      %v1025 = vsel %vm226, %v969, 0
      %v1028 = vsel %vm226, %v970, 0
      %v1031 = vsel %vm226, %v971, 0
      %v1034 = vsel %vm226, %v972, 0
      %v1037 = vsel %vm226, %v973, 0
      %1039 = vmatprep.subr.bf16.mxu0 0
      %1040 = vmatpush1.bf16.msra.mxu0 0
      %1041 = vmatprep.subr.bf16.mxu0 0
      %1042 = vmatpush1.bf16.msra.mxu0 0
      %1043 = vmatprep.subr.bf16.mxu0 0
      %1044 = vmatpush1.bf16.msra.mxu0 0
      %1045 = vmatprep.subr.bf16.mxu0 0
      %1046 = vmatpush1.bf16.msra.mxu0 0
      %1047 = vmatprep.subr.bf16.mxu0 0
      %1048 = vmatpush1.bf16.msra.mxu0 0
      %1049 = vmatprep.subr.bf16.mxu0 0
      %1050 = vmatpush1.bf16.msra.mxu0 0
      %1051 = vmatprep.subr.bf16.mxu0 0
      %1052 = vmatpush1.bf16.msra.mxu0 %v988
      %1053 = vmatprep.subr.bf16.mxu0 0
      %1054 = vmatpush1.bf16.msra.mxu0 %v987
      %1055 = vmatprep.subr.bf16.mxu0 0
      %1056 = vmatpush2.bf16.msra.mxu0 0
      %1057 = vmatprep.subr.bf16.mxu0 0
      %1058 = vmatpush2.bf16.msra.mxu0 0
      %1059 = vmatprep.subr.bf16.mxu0 0
      %1060 = vmatpush2.bf16.msra.mxu0 0
      %1061 = vmatprep.subr.bf16.mxu0 0
      %1062 = vmatpush2.bf16.msra.mxu0 0
      %1063 = vmatprep.subr.bf16.mxu0 0
      %1064 = vmatpush2.bf16.msra.mxu0 0
      %1065 = vmatprep.subr.bf16.mxu0 0
      %1066 = vmatpush2.bf16.msra.mxu0 0
      %1067 = vmatprep.subr.bf16.mxu0 0
      %1068 = vmatpush2.bf16.msra.mxu0 0
      %1069 = vmatprep.subr.bf16.mxu0 0
      %1070 = vmatpush2.bf16.msra.mxu0 0
      %1071 = vmatprep.mubr.bf16.mxu0 0
      %1072 = vmatmul.mubr.bf16.gmra.mxu0 %v992
      %v1073 = vpop.f32.mrf.mxu0
      %v1074 = vadd.f32 0.0, %v1073
      %v1075 = vpop.f32.mrf.mxu0
      %v1076 = vpop.f32.mrf.mxu0
      %v1077 = vadd.f32 0.0, %v1076
      %v1078 = vpop.f32.mrf.mxu0
      %1079 = vmatprep.mubr.bf16.mxu0 0
      %1080 = vmatmul.mubr.bf16.gmra.mxu0 %v995
      %v1081 = vpop.f32.mrf.mxu0
      %v1082 = vadd.f32 0.0, %v1081
      %v1083 = vpop.f32.mrf.mxu0
      %v1084 = vpop.f32.mrf.mxu0
      %v1085 = vadd.f32 0.0, %v1084
      %v1086 = vpop.f32.mrf.mxu0
      %1087 = vmatprep.mubr.bf16.mxu0 0
      %1088 = vmatmul.mubr.bf16.gmra.mxu0 %v998
      %v1089 = vpop.f32.mrf.mxu0
      %v1090 = vadd.f32 0.0, %v1089
      %v1091 = vpop.f32.mrf.mxu0
      %v1092 = vpop.f32.mrf.mxu0
      %v1093 = vadd.f32 0.0, %v1092
      %v1094 = vpop.f32.mrf.mxu0
      %1095 = vmatprep.mubr.bf16.mxu0 0
      %1096 = vmatmul.mubr.bf16.gmra.mxu0 %v1001
      %v1097 = vpop.f32.mrf.mxu0
      %v1098 = vadd.f32 0.0, %v1097
      %v1099 = vpop.f32.mrf.mxu0
      %v1100 = vpop.f32.mrf.mxu0
      %v1101 = vadd.f32 0.0, %v1100
      %v1102 = vpop.f32.mrf.mxu0
      %1103 = vmatprep.mubr.bf16.mxu0 0
      %1104 = vmatmul.mubr.bf16.gmra.mxu0 %v1004
      %v1105 = vpop.f32.mrf.mxu0
      %v1106 = vadd.f32 0.0, %v1105
      %v1107 = vpop.f32.mrf.mxu0
      %v1108 = vpop.f32.mrf.mxu0
      %v1109 = vadd.f32 0.0, %v1108
      %v1110 = vpop.f32.mrf.mxu0
      %1111 = vmatprep.mubr.bf16.mxu0 0
      %1112 = vmatmul.mubr.bf16.gmra.mxu0 %v1007
      %v1113 = vpop.f32.mrf.mxu0
      %v1114 = vadd.f32 0.0, %v1113
      %v1115 = vpop.f32.mrf.mxu0
      %v1116 = vpop.f32.mrf.mxu0
      %v1117 = vadd.f32 0.0, %v1116
      %v1118 = vpop.f32.mrf.mxu0
      %1119 = vmatprep.mubr.bf16.mxu0 0
      %1120 = vmatmul.mubr.bf16.gmra.mxu0 %v1010
      %v1121 = vpop.f32.mrf.mxu0
      %v1122 = vadd.f32 0.0, %v1121
      %v1123 = vpop.f32.mrf.mxu0
      %v1124 = vpop.f32.mrf.mxu0
      %v1125 = vadd.f32 0.0, %v1124
      %v1126 = vpop.f32.mrf.mxu0
      %1127 = vmatprep.mubr.bf16.mxu0 0
      %1128 = vmatmul.mubr.bf16.gmra.mxu0 %v1013
      %v1129 = vpop.f32.mrf.mxu0
      %v1130 = vadd.f32 0.0, %v1129
      %v1131 = vpop.f32.mrf.mxu0
      %v1132 = vpop.f32.mrf.mxu0
      %v1133 = vadd.f32 0.0, %v1132
      %v1134 = vpop.f32.mrf.mxu0
      %1135 = vmatprep.mubr.bf16.mxu0 0
      %1136 = vmatmul.mubr.bf16.gmra.mxu0 %v1016
      %v1137 = vpop.f32.mrf.mxu0
      %v1138 = vadd.f32 0.0, %v1137
      %v1139 = vpop.f32.mrf.mxu0
      %v1140 = vpop.f32.mrf.mxu0
      %v1141 = vadd.f32 0.0, %v1140
      %v1142 = vpop.f32.mrf.mxu0
      %1143 = vmatprep.mubr.bf16.mxu0 0
      %1144 = vmatmul.mubr.bf16.gmra.mxu0 %v1019
      %v1145 = vpop.f32.mrf.mxu0
      %v1146 = vadd.f32 0.0, %v1145
      %v1147 = vpop.f32.mrf.mxu0
      %v1148 = vpop.f32.mrf.mxu0
      %v1149 = vadd.f32 0.0, %v1148
      %v1150 = vpop.f32.mrf.mxu0
      %1151 = vmatprep.mubr.bf16.mxu0 0
      %1152 = vmatmul.mubr.bf16.gmra.mxu0 %v1022
      %v1153 = vpop.f32.mrf.mxu0
      %v1154 = vadd.f32 0.0, %v1153
      %v1155 = vpop.f32.mrf.mxu0
      %v1156 = vpop.f32.mrf.mxu0
      %v1157 = vadd.f32 0.0, %v1156
      %v1158 = vpop.f32.mrf.mxu0
      %1159 = vmatprep.mubr.bf16.mxu0 0
      %1160 = vmatmul.mubr.bf16.gmra.mxu0 %v1025
      %v1161 = vpop.f32.mrf.mxu0
      %v1162 = vadd.f32 0.0, %v1161
      %v1163 = vpop.f32.mrf.mxu0
      %v1164 = vpop.f32.mrf.mxu0
      %v1165 = vadd.f32 0.0, %v1164
      %v1166 = vpop.f32.mrf.mxu0
      %1167 = vmatprep.mubr.bf16.mxu0 0
      %1168 = vmatmul.mubr.bf16.gmra.mxu0 %v1028
      %v1169 = vpop.f32.mrf.mxu0
      %v1170 = vadd.f32 0.0, %v1169
      %v1171 = vpop.f32.mrf.mxu0
      %v1172 = vpop.f32.mrf.mxu0
      %v1173 = vadd.f32 0.0, %v1172
      %v1174 = vpop.f32.mrf.mxu0
      %1175 = vmatprep.mubr.bf16.mxu0 0
      %1176 = vmatmul.mubr.bf16.gmra.mxu0 %v1031
      %v1177 = vpop.f32.mrf.mxu0
      %v1178 = vadd.f32 0.0, %v1177
      %v1179 = vpop.f32.mrf.mxu0
      %v1180 = vpop.f32.mrf.mxu0
      %v1181 = vadd.f32 0.0, %v1180
      %v1182 = vpop.f32.mrf.mxu0
      %1183 = vmatprep.mubr.bf16.mxu0 0
      %1184 = vmatmul.mubr.bf16.gmra.mxu0 %v1034
      %v1185 = vpop.f32.mrf.mxu0
      %v1186 = vadd.f32 0.0, %v1185
      %v1187 = vpop.f32.mrf.mxu0
      %v1188 = vpop.f32.mrf.mxu0
      %v1189 = vadd.f32 0.0, %v1188
      %v1190 = vpop.f32.mrf.mxu0
      %1191 = vmatprep.mubr.bf16.mxu0 0
      %1192 = vmatmul.mubr.bf16.gmra.mxu0 %v1037
      %v1193 = vpop.f32.mrf.mxu0
      %v1194 = vadd.f32 0.0, %v1193
      %v1195 = vpop.f32.mrf.mxu0
      %v1196 = vpop.f32.mrf.mxu0
      %v1197 = vadd.f32 0.0, %v1196
      %v1198 = vpop.f32.mrf.mxu0
      %1199 = vdwg.mxu0
      %v1200 = vadd.f32 %v800, %v1074
      %v1201 = vadd.f32 %v803, %v1077
      %v1202 = vadd.f32 %v808, %v1082
      %v1203 = vadd.f32 %v811, %v1085
      %v1204 = vadd.f32 %v816, %v1090
      %v1205 = vadd.f32 %v819, %v1093
      %v1206 = vadd.f32 %v824, %v1098
      %v1207 = vadd.f32 %v827, %v1101
      %v1208 = vadd.f32 %v832, %v1106
      %v1209 = vadd.f32 %v835, %v1109
      %v1210 = vadd.f32 %v840, %v1114
      %v1211 = vadd.f32 %v843, %v1117
      %v1212 = vadd.f32 %v848, %v1122
      %v1213 = vadd.f32 %v851, %v1125
      %v1214 = vadd.f32 %v856, %v1130
      %v1215 = vadd.f32 %v859, %v1133
      %v1216 = vadd.f32 %v864, %v1138
      %v1217 = vadd.f32 %v867, %v1141
      %v1218 = vadd.f32 %v872, %v1146
      %v1219 = vadd.f32 %v875, %v1149
      %v1220 = vadd.f32 %v880, %v1154
      %v1221 = vadd.f32 %v883, %v1157
      %v1222 = vadd.f32 %v888, %v1162
      %v1223 = vadd.f32 %v891, %v1165
      %v1224 = vadd.f32 %v896, %v1170
      %v1225 = vadd.f32 %v899, %v1173
      %v1226 = vadd.f32 %v904, %v1178
      %v1227 = vadd.f32 %v907, %v1181
      %v1228 = vadd.f32 %v912, %v1186
      %v1229 = vadd.f32 %v915, %v1189
      %v1230 = vadd.f32 %v920, %v1194
      %v1231 = vadd.f32 %v923, %v1197
      %v1232 = vld [vmem:[%s346] sm:$0xff]
      %v1233 = vld [vmem:[%s346 + $0x8] sm:$0xff]
      %v1234 = vld [vmem:[%s346 + $0x18] sm:$0xff]
      %v1235 = vld [vmem:[%s346 + $0x20] sm:$0xff]
      %v1236 = vld [vmem:[%s346 + $0x30] sm:$0xff]
      %v1237 = vld [vmem:[%s346 + $0x38] sm:$0xff]
      %v1238 = vld [vmem:[%s346 + $0x48] sm:$0xff]
      %v1239 = vld [vmem:[%s346 + $0x50] sm:$0xff]
      %v1240 = vld [vmem:[%s346 + $0x60] sm:$0xff]
      %v1241 = vld [vmem:[%s346 + $0x68] sm:$0xff]
      %v1242 = vld [vmem:[%s346 + $0x78] sm:$0xff]
      %v1243 = vld [vmem:[%s346 + $0x80] sm:$0xff]
      %v1244 = vld [vmem:[%s346 + $0x90] sm:$0xff]
      %v1245 = vld [vmem:[%s346 + $0x98] sm:$0xff]
      %v1246 = vld [vmem:[%s346 + $0xa8] sm:$0xff]
      %v1247 = vld [vmem:[%s346 + $0xb0] sm:$0xff]
      %v1248 = vld [vmem:[%s346 + $0xc0] sm:$0xff]
      %v1249 = vld [vmem:[%s346 + $0xc8] sm:$0xff]
      %v1250 = vld [vmem:[%s346 + $0xd8] sm:$0xff]
      %v1251 = vld [vmem:[%s346 + $0xe0] sm:$0xff]
      %v1252 = vld [vmem:[%s346 + $0xf0] sm:$0xff]
      %v1253 = vld [vmem:[%s346 + $0xf8] sm:$0xff]
      %v1254 = vld [vmem:[%s346 + $0x108] sm:$0xff]
      %v1255 = vld [vmem:[%s346 + $0x110] sm:$0xff]
      %v1256 = vld [vmem:[%s346 + $0x120] sm:$0xff]
      %v1257 = vld [vmem:[%s346 + $0x128] sm:$0xff]
      %v1258 = vld [vmem:[%s346 + $0x138] sm:$0xff]
      %v1259 = vld [vmem:[%s346 + $0x140] sm:$0xff]
      %v1260 = vld [vmem:[%s346 + $0x150] sm:$0xff]
      %v1261 = vld [vmem:[%s346 + $0x158] sm:$0xff]
      %v1262 = vld [vmem:[%s346 + $0x168] sm:$0xff]
      %v1263 = vld [vmem:[%s346 + $0x170] sm:$0xff]
      %v1264 = vpack.c.bf16 %v1233, %v1232
      %v1265 = vpack.c.bf16 %v1235, %v1234
      %v1266 = vpack.c.bf16 %v1237, %v1236
      %v1267 = vpack.c.bf16 %v1239, %v1238
      %v1268 = vpack.c.bf16 %v1241, %v1240
      %v1269 = vpack.c.bf16 %v1243, %v1242
      %v1270 = vpack.c.bf16 %v1245, %v1244
      %v1271 = vpack.c.bf16 %v1247, %v1246
      %v1272 = vpack.c.bf16 %v1249, %v1248
      %v1273 = vpack.c.bf16 %v1251, %v1250
      %v1274 = vpack.c.bf16 %v1253, %v1252
      %v1275 = vpack.c.bf16 %v1255, %v1254
      %v1276 = vpack.c.bf16 %v1257, %v1256
      %v1277 = vpack.c.bf16 %v1259, %v1258
      %v1278 = vpack.c.bf16 %v1261, %v1260
      %v1279 = vpack.c.bf16 %v1263, %v1262
      %s1280 = scalar_lea.vmem %s1, 48
      %v1281 = vld [vmem:[%s1280] sm:$0xf]
      %v1282 = vld [vmem:[%s1280 + $0x4] sm:$0xf]
      %v1283 = vld [vmem:[%s1280 + $0x8] sm:$0xf]
      %v1284 = vld [vmem:[%s1280 + $0xc] sm:$0xf]
      %v1289 = vunpack.c.l.b16 %v1281
      %v1290 = vunpack.c.l.b16 %v1282
      %v1291 = vunpack.c.l.b16 %v1283
      %v1292 = vunpack.c.l.b16 %v1284
      %v1293 = vpack.c.b16 %v1290, %v1289
      %v1294 = vpack.c.b16 %v1292, %v1291
      %v1298 = vsel %vm226, %v1264, 0
      %v1301 = vsel %vm226, %v1265, 0
      %v1304 = vsel %vm226, %v1266, 0
      %v1307 = vsel %vm226, %v1267, 0
      %v1310 = vsel %vm226, %v1268, 0
      %v1313 = vsel %vm226, %v1269, 0
      %v1316 = vsel %vm226, %v1270, 0
      %v1319 = vsel %vm226, %v1271, 0
      %v1322 = vsel %vm226, %v1272, 0
      %v1325 = vsel %vm226, %v1273, 0
      %v1328 = vsel %vm226, %v1274, 0
      %v1331 = vsel %vm226, %v1275, 0
      %v1334 = vsel %vm226, %v1276, 0
      %v1337 = vsel %vm226, %v1277, 0
      %v1340 = vsel %vm226, %v1278, 0
      %v1343 = vsel %vm226, %v1279, 0
      %1345 = vmatprep.subr.bf16.mxu0 0
      %1346 = vmatpush1.bf16.msra.mxu0 0
      %1347 = vmatprep.subr.bf16.mxu0 0
      %1348 = vmatpush1.bf16.msra.mxu0 0
      %1349 = vmatprep.subr.bf16.mxu0 0
      %1350 = vmatpush1.bf16.msra.mxu0 0
      %1351 = vmatprep.subr.bf16.mxu0 0
      %1352 = vmatpush1.bf16.msra.mxu0 0
      %1353 = vmatprep.subr.bf16.mxu0 0
      %1354 = vmatpush1.bf16.msra.mxu0 0
      %1355 = vmatprep.subr.bf16.mxu0 0
      %1356 = vmatpush1.bf16.msra.mxu0 0
      %1357 = vmatprep.subr.bf16.mxu0 0
      %1358 = vmatpush1.bf16.msra.mxu0 %v1294
      %1359 = vmatprep.subr.bf16.mxu0 0
      %1360 = vmatpush1.bf16.msra.mxu0 %v1293
      %1361 = vmatprep.subr.bf16.mxu0 0
      %1362 = vmatpush2.bf16.msra.mxu0 0
      %1363 = vmatprep.subr.bf16.mxu0 0
      %1364 = vmatpush2.bf16.msra.mxu0 0
      %1365 = vmatprep.subr.bf16.mxu0 0
      %1366 = vmatpush2.bf16.msra.mxu0 0
      %1367 = vmatprep.subr.bf16.mxu0 0
      %1368 = vmatpush2.bf16.msra.mxu0 0
      %1369 = vmatprep.subr.bf16.mxu0 0
      %1370 = vmatpush2.bf16.msra.mxu0 0
      %1371 = vmatprep.subr.bf16.mxu0 0
      %1372 = vmatpush2.bf16.msra.mxu0 0
      %1373 = vmatprep.subr.bf16.mxu0 0
      %1374 = vmatpush2.bf16.msra.mxu0 0
      %1375 = vmatprep.subr.bf16.mxu0 0
      %1376 = vmatpush2.bf16.msra.mxu0 0
      %1377 = vmatprep.mubr.bf16.mxu0 0
      %1378 = vmatmul.mubr.bf16.gmra.mxu0 %v1298
      %v1379 = vpop.f32.mrf.mxu0
      %v1380 = vadd.f32 0.0, %v1379
      %v1381 = vpop.f32.mrf.mxu0
      %v1382 = vpop.f32.mrf.mxu0
      %v1383 = vadd.f32 0.0, %v1382
      %v1384 = vpop.f32.mrf.mxu0
      %1385 = vmatprep.mubr.bf16.mxu0 0
      %1386 = vmatmul.mubr.bf16.gmra.mxu0 %v1301
      %v1387 = vpop.f32.mrf.mxu0
      %v1388 = vadd.f32 0.0, %v1387
      %v1389 = vpop.f32.mrf.mxu0
      %v1390 = vpop.f32.mrf.mxu0
      %v1391 = vadd.f32 0.0, %v1390
      %v1392 = vpop.f32.mrf.mxu0
      %1393 = vmatprep.mubr.bf16.mxu0 0
      %1394 = vmatmul.mubr.bf16.gmra.mxu0 %v1304
      %v1395 = vpop.f32.mrf.mxu0
      %v1396 = vadd.f32 0.0, %v1395
      %v1397 = vpop.f32.mrf.mxu0
      %v1398 = vpop.f32.mrf.mxu0
      %v1399 = vadd.f32 0.0, %v1398
      %v1400 = vpop.f32.mrf.mxu0
      %1401 = vmatprep.mubr.bf16.mxu0 0
      %1402 = vmatmul.mubr.bf16.gmra.mxu0 %v1307
      %v1403 = vpop.f32.mrf.mxu0
      %v1404 = vadd.f32 0.0, %v1403
      %v1405 = vpop.f32.mrf.mxu0
      %v1406 = vpop.f32.mrf.mxu0
      %v1407 = vadd.f32 0.0, %v1406
      %v1408 = vpop.f32.mrf.mxu0
      %1409 = vmatprep.mubr.bf16.mxu0 0
      %1410 = vmatmul.mubr.bf16.gmra.mxu0 %v1310
      %v1411 = vpop.f32.mrf.mxu0
      %v1412 = vadd.f32 0.0, %v1411
      %v1413 = vpop.f32.mrf.mxu0
      %v1414 = vpop.f32.mrf.mxu0
      %v1415 = vadd.f32 0.0, %v1414
      %v1416 = vpop.f32.mrf.mxu0
      %1417 = vmatprep.mubr.bf16.mxu0 0
      %1418 = vmatmul.mubr.bf16.gmra.mxu0 %v1313
      %v1419 = vpop.f32.mrf.mxu0
      %v1420 = vadd.f32 0.0, %v1419
      %v1421 = vpop.f32.mrf.mxu0
      %v1422 = vpop.f32.mrf.mxu0
      %v1423 = vadd.f32 0.0, %v1422
      %v1424 = vpop.f32.mrf.mxu0
      %1425 = vmatprep.mubr.bf16.mxu0 0
      %1426 = vmatmul.mubr.bf16.gmra.mxu0 %v1316
      %v1427 = vpop.f32.mrf.mxu0
      %v1428 = vadd.f32 0.0, %v1427
      %v1429 = vpop.f32.mrf.mxu0
      %v1430 = vpop.f32.mrf.mxu0
      %v1431 = vadd.f32 0.0, %v1430
      %v1432 = vpop.f32.mrf.mxu0
      %1433 = vmatprep.mubr.bf16.mxu0 0
      %1434 = vmatmul.mubr.bf16.gmra.mxu0 %v1319
      %v1435 = vpop.f32.mrf.mxu0
      %v1436 = vadd.f32 0.0, %v1435
      %v1437 = vpop.f32.mrf.mxu0
      %v1438 = vpop.f32.mrf.mxu0
      %v1439 = vadd.f32 0.0, %v1438
      %v1440 = vpop.f32.mrf.mxu0
      %1441 = vmatprep.mubr.bf16.mxu0 0
      %1442 = vmatmul.mubr.bf16.gmra.mxu0 %v1322
      %v1443 = vpop.f32.mrf.mxu0
      %v1444 = vadd.f32 0.0, %v1443
      %v1445 = vpop.f32.mrf.mxu0
      %v1446 = vpop.f32.mrf.mxu0
      %v1447 = vadd.f32 0.0, %v1446
      %v1448 = vpop.f32.mrf.mxu0
      %1449 = vmatprep.mubr.bf16.mxu0 0
      %1450 = vmatmul.mubr.bf16.gmra.mxu0 %v1325
      %v1451 = vpop.f32.mrf.mxu0
      %v1452 = vadd.f32 0.0, %v1451
      %v1453 = vpop.f32.mrf.mxu0
      %v1454 = vpop.f32.mrf.mxu0
      %v1455 = vadd.f32 0.0, %v1454
      %v1456 = vpop.f32.mrf.mxu0
      %1457 = vmatprep.mubr.bf16.mxu0 0
      %1458 = vmatmul.mubr.bf16.gmra.mxu0 %v1328
      %v1459 = vpop.f32.mrf.mxu0
      %v1460 = vadd.f32 0.0, %v1459
      %v1461 = vpop.f32.mrf.mxu0
      %v1462 = vpop.f32.mrf.mxu0
      %v1463 = vadd.f32 0.0, %v1462
      %v1464 = vpop.f32.mrf.mxu0
      %1465 = vmatprep.mubr.bf16.mxu0 0
      %1466 = vmatmul.mubr.bf16.gmra.mxu0 %v1331
      %v1467 = vpop.f32.mrf.mxu0
      %v1468 = vadd.f32 0.0, %v1467
      %v1469 = vpop.f32.mrf.mxu0
      %v1470 = vpop.f32.mrf.mxu0
      %v1471 = vadd.f32 0.0, %v1470
      %v1472 = vpop.f32.mrf.mxu0
      %1473 = vmatprep.mubr.bf16.mxu0 0
      %1474 = vmatmul.mubr.bf16.gmra.mxu0 %v1334
      %v1475 = vpop.f32.mrf.mxu0
      %v1476 = vadd.f32 0.0, %v1475
      %v1477 = vpop.f32.mrf.mxu0
      %v1478 = vpop.f32.mrf.mxu0
      %v1479 = vadd.f32 0.0, %v1478
      %v1480 = vpop.f32.mrf.mxu0
      %1481 = vmatprep.mubr.bf16.mxu0 0
      %1482 = vmatmul.mubr.bf16.gmra.mxu0 %v1337
      %v1483 = vpop.f32.mrf.mxu0
      %v1484 = vadd.f32 0.0, %v1483
      %v1485 = vpop.f32.mrf.mxu0
      %v1486 = vpop.f32.mrf.mxu0
      %v1487 = vadd.f32 0.0, %v1486
      %v1488 = vpop.f32.mrf.mxu0
      %1489 = vmatprep.mubr.bf16.mxu0 0
      %1490 = vmatmul.mubr.bf16.gmra.mxu0 %v1340
      %v1491 = vpop.f32.mrf.mxu0
      %v1492 = vadd.f32 0.0, %v1491
      %v1493 = vpop.f32.mrf.mxu0
      %v1494 = vpop.f32.mrf.mxu0
      %v1495 = vadd.f32 0.0, %v1494
      %v1496 = vpop.f32.mrf.mxu0
      %1497 = vmatprep.mubr.bf16.mxu0 0
      %1498 = vmatmul.mubr.bf16.gmra.mxu0 %v1343
      %v1499 = vpop.f32.mrf.mxu0
      %v1500 = vadd.f32 0.0, %v1499
      %v1501 = vpop.f32.mrf.mxu0
      %v1502 = vpop.f32.mrf.mxu0
      %v1503 = vadd.f32 0.0, %v1502
      %v1504 = vpop.f32.mrf.mxu0
      %1505 = vdwg.mxu0
      %v1506 = vadd.f32 %v1200, %v1380
      %v1507 = vadd.f32 %v1201, %v1383
      %v1508 = vadd.f32 %v1202, %v1388
      %v1509 = vadd.f32 %v1203, %v1391
      %v1510 = vadd.f32 %v1204, %v1396
      %v1511 = vadd.f32 %v1205, %v1399
      %v1512 = vadd.f32 %v1206, %v1404
      %v1513 = vadd.f32 %v1207, %v1407
      %v1514 = vadd.f32 %v1208, %v1412
      %v1515 = vadd.f32 %v1209, %v1415
      %v1516 = vadd.f32 %v1210, %v1420
      %v1517 = vadd.f32 %v1211, %v1423
      %v1518 = vadd.f32 %v1212, %v1428
      %v1519 = vadd.f32 %v1213, %v1431
      %v1520 = vadd.f32 %v1214, %v1436
      %v1521 = vadd.f32 %v1215, %v1439
      %v1522 = vadd.f32 %v1216, %v1444
      %v1523 = vadd.f32 %v1217, %v1447
      %v1524 = vadd.f32 %v1218, %v1452
      %v1525 = vadd.f32 %v1219, %v1455
      %v1526 = vadd.f32 %v1220, %v1460
      %v1527 = vadd.f32 %v1221, %v1463
      %v1528 = vadd.f32 %v1222, %v1468
      %v1529 = vadd.f32 %v1223, %v1471
      %v1530 = vadd.f32 %v1224, %v1476
      %v1531 = vadd.f32 %v1225, %v1479
      %v1532 = vadd.f32 %v1226, %v1484
      %v1533 = vadd.f32 %v1227, %v1487
      %v1534 = vadd.f32 %v1228, %v1492
      %v1535 = vadd.f32 %v1229, %v1495
      %v1536 = vadd.f32 %v1230, %v1500
      %v1537 = vadd.f32 %v1231, %v1503
      %v1538 = vld [vmem:[%s346 + $0x1] sm:$0xff]
      %v1539 = vld [vmem:[%s346 + $0x9] sm:$0xff]
      %v1540 = vld [vmem:[%s346 + $0x19] sm:$0xff]
      %v1541 = vld [vmem:[%s346 + $0x21] sm:$0xff]
      %v1542 = vld [vmem:[%s346 + $0x31] sm:$0xff]
      %v1543 = vld [vmem:[%s346 + $0x39] sm:$0xff]
      %v1544 = vld [vmem:[%s346 + $0x49] sm:$0xff]
      %v1545 = vld [vmem:[%s346 + $0x51] sm:$0xff]
      %v1546 = vld [vmem:[%s346 + $0x61] sm:$0xff]
      %v1547 = vld [vmem:[%s346 + $0x69] sm:$0xff]
      %v1548 = vld [vmem:[%s346 + $0x79] sm:$0xff]
      %v1549 = vld [vmem:[%s346 + $0x81] sm:$0xff]
      %v1550 = vld [vmem:[%s346 + $0x91] sm:$0xff]
      %v1551 = vld [vmem:[%s346 + $0x99] sm:$0xff]
      %v1552 = vld [vmem:[%s346 + $0xa9] sm:$0xff]
      %v1553 = vld [vmem:[%s346 + $0xb1] sm:$0xff]
      %v1554 = vld [vmem:[%s346 + $0xc1] sm:$0xff]
      %v1555 = vld [vmem:[%s346 + $0xc9] sm:$0xff]
      %v1556 = vld [vmem:[%s346 + $0xd9] sm:$0xff]
      %v1557 = vld [vmem:[%s346 + $0xe1] sm:$0xff]
      %v1558 = vld [vmem:[%s346 + $0xf1] sm:$0xff]
      %v1559 = vld [vmem:[%s346 + $0xf9] sm:$0xff]
      %v1560 = vld [vmem:[%s346 + $0x109] sm:$0xff]
      %v1561 = vld [vmem:[%s346 + $0x111] sm:$0xff]
      %v1562 = vld [vmem:[%s346 + $0x121] sm:$0xff]
      %v1563 = vld [vmem:[%s346 + $0x129] sm:$0xff]
      %v1564 = vld [vmem:[%s346 + $0x139] sm:$0xff]
      %v1565 = vld [vmem:[%s346 + $0x141] sm:$0xff]
      %v1566 = vld [vmem:[%s346 + $0x151] sm:$0xff]
      %v1567 = vld [vmem:[%s346 + $0x159] sm:$0xff]
      %v1568 = vld [vmem:[%s346 + $0x169] sm:$0xff]
      %v1569 = vld [vmem:[%s346 + $0x171] sm:$0xff]
      %v1570 = vpack.c.bf16 %v1539, %v1538
      %v1571 = vpack.c.bf16 %v1541, %v1540
      %v1572 = vpack.c.bf16 %v1543, %v1542
      %v1573 = vpack.c.bf16 %v1545, %v1544
      %v1574 = vpack.c.bf16 %v1547, %v1546
      %v1575 = vpack.c.bf16 %v1549, %v1548
      %v1576 = vpack.c.bf16 %v1551, %v1550
      %v1577 = vpack.c.bf16 %v1553, %v1552
      %v1578 = vpack.c.bf16 %v1555, %v1554
      %v1579 = vpack.c.bf16 %v1557, %v1556
      %v1580 = vpack.c.bf16 %v1559, %v1558
      %v1581 = vpack.c.bf16 %v1561, %v1560
      %v1582 = vpack.c.bf16 %v1563, %v1562
      %v1583 = vpack.c.bf16 %v1565, %v1564
      %v1584 = vpack.c.bf16 %v1567, %v1566
      %v1585 = vpack.c.bf16 %v1569, %v1568
      %s1586 = scalar_lea.vmem %s1, 64
      %v1587 = vld [vmem:[%s1586] sm:$0xf]
      %v1588 = vld [vmem:[%s1586 + $0x4] sm:$0xf]
      %v1589 = vld [vmem:[%s1586 + $0x8] sm:$0xf]
      %v1590 = vld [vmem:[%s1586 + $0xc] sm:$0xf]
      %v1595 = vunpack.c.l.b16 %v1587
      %v1596 = vunpack.c.l.b16 %v1588
      %v1597 = vunpack.c.l.b16 %v1589
      %v1598 = vunpack.c.l.b16 %v1590
      %v1599 = vpack.c.b16 %v1596, %v1595
      %v1600 = vpack.c.b16 %v1598, %v1597
      %v1604 = vsel %vm226, %v1570, 0
      %v1607 = vsel %vm226, %v1571, 0
      %v1610 = vsel %vm226, %v1572, 0
      %v1613 = vsel %vm226, %v1573, 0
      %v1616 = vsel %vm226, %v1574, 0
      %v1619 = vsel %vm226, %v1575, 0
      %v1622 = vsel %vm226, %v1576, 0
      %v1625 = vsel %vm226, %v1577, 0
      %v1628 = vsel %vm226, %v1578, 0
      %v1631 = vsel %vm226, %v1579, 0
      %v1634 = vsel %vm226, %v1580, 0
      %v1637 = vsel %vm226, %v1581, 0
      %v1640 = vsel %vm226, %v1582, 0
      %v1643 = vsel %vm226, %v1583, 0
      %v1646 = vsel %vm226, %v1584, 0
      %v1649 = vsel %vm226, %v1585, 0
      %1651 = vmatprep.subr.bf16.mxu0 0
      %1652 = vmatpush1.bf16.msra.mxu0 0
      %1653 = vmatprep.subr.bf16.mxu0 0
      %1654 = vmatpush1.bf16.msra.mxu0 0
      %1655 = vmatprep.subr.bf16.mxu0 0
      %1656 = vmatpush1.bf16.msra.mxu0 0
      %1657 = vmatprep.subr.bf16.mxu0 0
      %1658 = vmatpush1.bf16.msra.mxu0 0
      %1659 = vmatprep.subr.bf16.mxu0 0
      %1660 = vmatpush1.bf16.msra.mxu0 0
      %1661 = vmatprep.subr.bf16.mxu0 0
      %1662 = vmatpush1.bf16.msra.mxu0 0
      %1663 = vmatprep.subr.bf16.mxu0 0
      %1664 = vmatpush1.bf16.msra.mxu0 %v1600
      %1665 = vmatprep.subr.bf16.mxu0 0
      %1666 = vmatpush1.bf16.msra.mxu0 %v1599
      %1667 = vmatprep.subr.bf16.mxu0 0
      %1668 = vmatpush2.bf16.msra.mxu0 0
      %1669 = vmatprep.subr.bf16.mxu0 0
      %1670 = vmatpush2.bf16.msra.mxu0 0
      %1671 = vmatprep.subr.bf16.mxu0 0
      %1672 = vmatpush2.bf16.msra.mxu0 0
      %1673 = vmatprep.subr.bf16.mxu0 0
      %1674 = vmatpush2.bf16.msra.mxu0 0
      %1675 = vmatprep.subr.bf16.mxu0 0
      %1676 = vmatpush2.bf16.msra.mxu0 0
      %1677 = vmatprep.subr.bf16.mxu0 0
      %1678 = vmatpush2.bf16.msra.mxu0 0
      %1679 = vmatprep.subr.bf16.mxu0 0
      %1680 = vmatpush2.bf16.msra.mxu0 0
      %1681 = vmatprep.subr.bf16.mxu0 0
      %1682 = vmatpush2.bf16.msra.mxu0 0
      %1683 = vmatprep.mubr.bf16.mxu0 0
      %1684 = vmatmul.mubr.bf16.gmra.mxu0 %v1604
      %v1685 = vpop.f32.mrf.mxu0
      %v1686 = vadd.f32 0.0, %v1685
      %v1687 = vpop.f32.mrf.mxu0
      %v1688 = vpop.f32.mrf.mxu0
      %v1689 = vadd.f32 0.0, %v1688
      %v1690 = vpop.f32.mrf.mxu0
      %1691 = vmatprep.mubr.bf16.mxu0 0
      %1692 = vmatmul.mubr.bf16.gmra.mxu0 %v1607
      %v1693 = vpop.f32.mrf.mxu0
      %v1694 = vadd.f32 0.0, %v1693
      %v1695 = vpop.f32.mrf.mxu0
      %v1696 = vpop.f32.mrf.mxu0
      %v1697 = vadd.f32 0.0, %v1696
      %v1698 = vpop.f32.mrf.mxu0
      %1699 = vmatprep.mubr.bf16.mxu0 0
      %1700 = vmatmul.mubr.bf16.gmra.mxu0 %v1610
      %v1701 = vpop.f32.mrf.mxu0
      %v1702 = vadd.f32 0.0, %v1701
      %v1703 = vpop.f32.mrf.mxu0
      %v1704 = vpop.f32.mrf.mxu0
      %v1705 = vadd.f32 0.0, %v1704
      %v1706 = vpop.f32.mrf.mxu0
      %1707 = vmatprep.mubr.bf16.mxu0 0
      %1708 = vmatmul.mubr.bf16.gmra.mxu0 %v1613
      %v1709 = vpop.f32.mrf.mxu0
      %v1710 = vadd.f32 0.0, %v1709
      %v1711 = vpop.f32.mrf.mxu0
      %v1712 = vpop.f32.mrf.mxu0
      %v1713 = vadd.f32 0.0, %v1712
      %v1714 = vpop.f32.mrf.mxu0
      %1715 = vmatprep.mubr.bf16.mxu0 0
      %1716 = vmatmul.mubr.bf16.gmra.mxu0 %v1616
      %v1717 = vpop.f32.mrf.mxu0
      %v1718 = vadd.f32 0.0, %v1717
      %v1719 = vpop.f32.mrf.mxu0
      %v1720 = vpop.f32.mrf.mxu0
      %v1721 = vadd.f32 0.0, %v1720
      %v1722 = vpop.f32.mrf.mxu0
      %1723 = vmatprep.mubr.bf16.mxu0 0
      %1724 = vmatmul.mubr.bf16.gmra.mxu0 %v1619
      %v1725 = vpop.f32.mrf.mxu0
      %v1726 = vadd.f32 0.0, %v1725
      %v1727 = vpop.f32.mrf.mxu0
      %v1728 = vpop.f32.mrf.mxu0
      %v1729 = vadd.f32 0.0, %v1728
      %v1730 = vpop.f32.mrf.mxu0
      %1731 = vmatprep.mubr.bf16.mxu0 0
      %1732 = vmatmul.mubr.bf16.gmra.mxu0 %v1622
      %v1733 = vpop.f32.mrf.mxu0
      %v1734 = vadd.f32 0.0, %v1733
      %v1735 = vpop.f32.mrf.mxu0
      %v1736 = vpop.f32.mrf.mxu0
      %v1737 = vadd.f32 0.0, %v1736
      %v1738 = vpop.f32.mrf.mxu0
      %1739 = vmatprep.mubr.bf16.mxu0 0
      %1740 = vmatmul.mubr.bf16.gmra.mxu0 %v1625
      %v1741 = vpop.f32.mrf.mxu0
      %v1742 = vadd.f32 0.0, %v1741
      %v1743 = vpop.f32.mrf.mxu0
      %v1744 = vpop.f32.mrf.mxu0
      %v1745 = vadd.f32 0.0, %v1744
      %v1746 = vpop.f32.mrf.mxu0
      %1747 = vmatprep.mubr.bf16.mxu0 0
      %1748 = vmatmul.mubr.bf16.gmra.mxu0 %v1628
      %v1749 = vpop.f32.mrf.mxu0
      %v1750 = vadd.f32 0.0, %v1749
      %v1751 = vpop.f32.mrf.mxu0
      %v1752 = vpop.f32.mrf.mxu0
      %v1753 = vadd.f32 0.0, %v1752
      %v1754 = vpop.f32.mrf.mxu0
      %1755 = vmatprep.mubr.bf16.mxu0 0
      %1756 = vmatmul.mubr.bf16.gmra.mxu0 %v1631
      %v1757 = vpop.f32.mrf.mxu0
      %v1758 = vadd.f32 0.0, %v1757
      %v1759 = vpop.f32.mrf.mxu0
      %v1760 = vpop.f32.mrf.mxu0
      %v1761 = vadd.f32 0.0, %v1760
      %v1762 = vpop.f32.mrf.mxu0
      %1763 = vmatprep.mubr.bf16.mxu0 0
      %1764 = vmatmul.mubr.bf16.gmra.mxu0 %v1634
      %v1765 = vpop.f32.mrf.mxu0
      %v1766 = vadd.f32 0.0, %v1765
      %v1767 = vpop.f32.mrf.mxu0
      %v1768 = vpop.f32.mrf.mxu0
      %v1769 = vadd.f32 0.0, %v1768
      %v1770 = vpop.f32.mrf.mxu0
      %1771 = vmatprep.mubr.bf16.mxu0 0
      %1772 = vmatmul.mubr.bf16.gmra.mxu0 %v1637
      %v1773 = vpop.f32.mrf.mxu0
      %v1774 = vadd.f32 0.0, %v1773
      %v1775 = vpop.f32.mrf.mxu0
      %v1776 = vpop.f32.mrf.mxu0
      %v1777 = vadd.f32 0.0, %v1776
      %v1778 = vpop.f32.mrf.mxu0
      %1779 = vmatprep.mubr.bf16.mxu0 0
      %1780 = vmatmul.mubr.bf16.gmra.mxu0 %v1640
      %v1781 = vpop.f32.mrf.mxu0
      %v1782 = vadd.f32 0.0, %v1781
      %v1783 = vpop.f32.mrf.mxu0
      %v1784 = vpop.f32.mrf.mxu0
      %v1785 = vadd.f32 0.0, %v1784
      %v1786 = vpop.f32.mrf.mxu0
      %1787 = vmatprep.mubr.bf16.mxu0 0
      %1788 = vmatmul.mubr.bf16.gmra.mxu0 %v1643
      %v1789 = vpop.f32.mrf.mxu0
      %v1790 = vadd.f32 0.0, %v1789
      %v1791 = vpop.f32.mrf.mxu0
      %v1792 = vpop.f32.mrf.mxu0
      %v1793 = vadd.f32 0.0, %v1792
      %v1794 = vpop.f32.mrf.mxu0
      %1795 = vmatprep.mubr.bf16.mxu0 0
      %1796 = vmatmul.mubr.bf16.gmra.mxu0 %v1646
      %v1797 = vpop.f32.mrf.mxu0
      %v1798 = vadd.f32 0.0, %v1797
      %v1799 = vpop.f32.mrf.mxu0
      %v1800 = vpop.f32.mrf.mxu0
      %v1801 = vadd.f32 0.0, %v1800
      %v1802 = vpop.f32.mrf.mxu0
      %1803 = vmatprep.mubr.bf16.mxu0 0
      %1804 = vmatmul.mubr.bf16.gmra.mxu0 %v1649
      %v1805 = vpop.f32.mrf.mxu0
      %v1806 = vadd.f32 0.0, %v1805
      %v1807 = vpop.f32.mrf.mxu0
      %v1808 = vpop.f32.mrf.mxu0
      %v1809 = vadd.f32 0.0, %v1808
      %v1810 = vpop.f32.mrf.mxu0
      %1811 = vdwg.mxu0
      %v1812 = vadd.f32 %v1506, %v1686
      %v1813 = vadd.f32 %v1507, %v1689
      %v1814 = vadd.f32 %v1508, %v1694
      %v1815 = vadd.f32 %v1509, %v1697
      %v1816 = vadd.f32 %v1510, %v1702
      %v1817 = vadd.f32 %v1511, %v1705
      %v1818 = vadd.f32 %v1512, %v1710
      %v1819 = vadd.f32 %v1513, %v1713
      %v1820 = vadd.f32 %v1514, %v1718
      %v1821 = vadd.f32 %v1515, %v1721
      %v1822 = vadd.f32 %v1516, %v1726
      %v1823 = vadd.f32 %v1517, %v1729
      %v1824 = vadd.f32 %v1518, %v1734
      %v1825 = vadd.f32 %v1519, %v1737
      %v1826 = vadd.f32 %v1520, %v1742
      %v1827 = vadd.f32 %v1521, %v1745
      %v1828 = vadd.f32 %v1522, %v1750
      %v1829 = vadd.f32 %v1523, %v1753
      %v1830 = vadd.f32 %v1524, %v1758
      %v1831 = vadd.f32 %v1525, %v1761
      %v1832 = vadd.f32 %v1526, %v1766
      %v1833 = vadd.f32 %v1527, %v1769
      %v1834 = vadd.f32 %v1528, %v1774
      %v1835 = vadd.f32 %v1529, %v1777
      %v1836 = vadd.f32 %v1530, %v1782
      %v1837 = vadd.f32 %v1531, %v1785
      %v1838 = vadd.f32 %v1532, %v1790
      %v1839 = vadd.f32 %v1533, %v1793
      %v1840 = vadd.f32 %v1534, %v1798
      %v1841 = vadd.f32 %v1535, %v1801
      %v1842 = vadd.f32 %v1536, %v1806
      %v1843 = vadd.f32 %v1537, %v1809
      %v1844 = vld [vmem:[%s346 + $0x2] sm:$0xff]
      %v1845 = vld [vmem:[%s346 + $0xa] sm:$0xff]
      %v1846 = vld [vmem:[%s346 + $0x1a] sm:$0xff]
      %v1847 = vld [vmem:[%s346 + $0x22] sm:$0xff]
      %v1848 = vld [vmem:[%s346 + $0x32] sm:$0xff]
      %v1849 = vld [vmem:[%s346 + $0x3a] sm:$0xff]
      %v1850 = vld [vmem:[%s346 + $0x4a] sm:$0xff]
      %v1851 = vld [vmem:[%s346 + $0x52] sm:$0xff]
      %v1852 = vld [vmem:[%s346 + $0x62] sm:$0xff]
      %v1853 = vld [vmem:[%s346 + $0x6a] sm:$0xff]
      %v1854 = vld [vmem:[%s346 + $0x7a] sm:$0xff]
      %v1855 = vld [vmem:[%s346 + $0x82] sm:$0xff]
      %v1856 = vld [vmem:[%s346 + $0x92] sm:$0xff]
      %v1857 = vld [vmem:[%s346 + $0x9a] sm:$0xff]
      %v1858 = vld [vmem:[%s346 + $0xaa] sm:$0xff]
      %v1859 = vld [vmem:[%s346 + $0xb2] sm:$0xff]
      %v1860 = vld [vmem:[%s346 + $0xc2] sm:$0xff]
      %v1861 = vld [vmem:[%s346 + $0xca] sm:$0xff]
      %v1862 = vld [vmem:[%s346 + $0xda] sm:$0xff]
      %v1863 = vld [vmem:[%s346 + $0xe2] sm:$0xff]
      %v1864 = vld [vmem:[%s346 + $0xf2] sm:$0xff]
      %v1865 = vld [vmem:[%s346 + $0xfa] sm:$0xff]
      %v1866 = vld [vmem:[%s346 + $0x10a] sm:$0xff]
      %v1867 = vld [vmem:[%s346 + $0x112] sm:$0xff]
      %v1868 = vld [vmem:[%s346 + $0x122] sm:$0xff]
      %v1869 = vld [vmem:[%s346 + $0x12a] sm:$0xff]
      %v1870 = vld [vmem:[%s346 + $0x13a] sm:$0xff]
      %v1871 = vld [vmem:[%s346 + $0x142] sm:$0xff]
      %v1872 = vld [vmem:[%s346 + $0x152] sm:$0xff]
      %v1873 = vld [vmem:[%s346 + $0x15a] sm:$0xff]
      %v1874 = vld [vmem:[%s346 + $0x16a] sm:$0xff]
      %v1875 = vld [vmem:[%s346 + $0x172] sm:$0xff]
      %v1876 = vpack.c.bf16 %v1845, %v1844
      %v1877 = vpack.c.bf16 %v1847, %v1846
      %v1878 = vpack.c.bf16 %v1849, %v1848
      %v1879 = vpack.c.bf16 %v1851, %v1850
      %v1880 = vpack.c.bf16 %v1853, %v1852
      %v1881 = vpack.c.bf16 %v1855, %v1854
      %v1882 = vpack.c.bf16 %v1857, %v1856
      %v1883 = vpack.c.bf16 %v1859, %v1858
      %v1884 = vpack.c.bf16 %v1861, %v1860
      %v1885 = vpack.c.bf16 %v1863, %v1862
      %v1886 = vpack.c.bf16 %v1865, %v1864
      %v1887 = vpack.c.bf16 %v1867, %v1866
      %v1888 = vpack.c.bf16 %v1869, %v1868
      %v1889 = vpack.c.bf16 %v1871, %v1870
      %v1890 = vpack.c.bf16 %v1873, %v1872
      %v1891 = vpack.c.bf16 %v1875, %v1874
      %s1892 = scalar_lea.vmem %s1, 80
      %v1893 = vld [vmem:[%s1892] sm:$0xf]
      %v1894 = vld [vmem:[%s1892 + $0x4] sm:$0xf]
      %v1895 = vld [vmem:[%s1892 + $0x8] sm:$0xf]
      %v1896 = vld [vmem:[%s1892 + $0xc] sm:$0xf]
      %v1901 = vunpack.c.l.b16 %v1893
      %v1902 = vunpack.c.l.b16 %v1894
      %v1903 = vunpack.c.l.b16 %v1895
      %v1904 = vunpack.c.l.b16 %v1896
      %v1905 = vpack.c.b16 %v1902, %v1901
      %v1906 = vpack.c.b16 %v1904, %v1903
      %v1910 = vsel %vm226, %v1876, 0
      %v1913 = vsel %vm226, %v1877, 0
      %v1916 = vsel %vm226, %v1878, 0
      %v1919 = vsel %vm226, %v1879, 0
      %v1922 = vsel %vm226, %v1880, 0
      %v1925 = vsel %vm226, %v1881, 0
      %v1928 = vsel %vm226, %v1882, 0
      %v1931 = vsel %vm226, %v1883, 0
      %v1934 = vsel %vm226, %v1884, 0
      %v1937 = vsel %vm226, %v1885, 0
      %v1940 = vsel %vm226, %v1886, 0
      %v1943 = vsel %vm226, %v1887, 0
      %v1946 = vsel %vm226, %v1888, 0
      %v1949 = vsel %vm226, %v1889, 0
      %v1952 = vsel %vm226, %v1890, 0
      %v1955 = vsel %vm226, %v1891, 0
      %1957 = vmatprep.subr.bf16.mxu0 0
      %1958 = vmatpush1.bf16.msra.mxu0 0
      %1959 = vmatprep.subr.bf16.mxu0 0
      %1960 = vmatpush1.bf16.msra.mxu0 0
      %1961 = vmatprep.subr.bf16.mxu0 0
      %1962 = vmatpush1.bf16.msra.mxu0 0
      %1963 = vmatprep.subr.bf16.mxu0 0
      %1964 = vmatpush1.bf16.msra.mxu0 0
      %1965 = vmatprep.subr.bf16.mxu0 0
      %1966 = vmatpush1.bf16.msra.mxu0 0
      %1967 = vmatprep.subr.bf16.mxu0 0
      %1968 = vmatpush1.bf16.msra.mxu0 0
      %1969 = vmatprep.subr.bf16.mxu0 0
      %1970 = vmatpush1.bf16.msra.mxu0 %v1906
      %1971 = vmatprep.subr.bf16.mxu0 0
      %1972 = vmatpush1.bf16.msra.mxu0 %v1905
      %1973 = vmatprep.subr.bf16.mxu0 0
      %1974 = vmatpush2.bf16.msra.mxu0 0
      %1975 = vmatprep.subr.bf16.mxu0 0
      %1976 = vmatpush2.bf16.msra.mxu0 0
      %1977 = vmatprep.subr.bf16.mxu0 0
      %1978 = vmatpush2.bf16.msra.mxu0 0
      %1979 = vmatprep.subr.bf16.mxu0 0
      %1980 = vmatpush2.bf16.msra.mxu0 0
      %1981 = vmatprep.subr.bf16.mxu0 0
      %1982 = vmatpush2.bf16.msra.mxu0 0
      %1983 = vmatprep.subr.bf16.mxu0 0
      %1984 = vmatpush2.bf16.msra.mxu0 0
      %1985 = vmatprep.subr.bf16.mxu0 0
      %1986 = vmatpush2.bf16.msra.mxu0 0
      %1987 = vmatprep.subr.bf16.mxu0 0
      %1988 = vmatpush2.bf16.msra.mxu0 0
      %1989 = vmatprep.mubr.bf16.mxu0 0
      %1990 = vmatmul.mubr.bf16.gmra.mxu0 %v1910
      %v1991 = vpop.f32.mrf.mxu0
      %v1992 = vadd.f32 0.0, %v1991
      %v1993 = vpop.f32.mrf.mxu0
      %v1994 = vpop.f32.mrf.mxu0
      %v1995 = vadd.f32 0.0, %v1994
      %v1996 = vpop.f32.mrf.mxu0
      %1997 = vmatprep.mubr.bf16.mxu0 0
      %1998 = vmatmul.mubr.bf16.gmra.mxu0 %v1913
      %v1999 = vpop.f32.mrf.mxu0
      %v2000 = vadd.f32 0.0, %v1999
      %v2001 = vpop.f32.mrf.mxu0
      %v2002 = vpop.f32.mrf.mxu0
      %v2003 = vadd.f32 0.0, %v2002
      %v2004 = vpop.f32.mrf.mxu0
      %2005 = vmatprep.mubr.bf16.mxu0 0
      %2006 = vmatmul.mubr.bf16.gmra.mxu0 %v1916
      %v2007 = vpop.f32.mrf.mxu0
      %v2008 = vadd.f32 0.0, %v2007
      %v2009 = vpop.f32.mrf.mxu0
      %v2010 = vpop.f32.mrf.mxu0
      %v2011 = vadd.f32 0.0, %v2010
      %v2012 = vpop.f32.mrf.mxu0
      %2013 = vmatprep.mubr.bf16.mxu0 0
      %2014 = vmatmul.mubr.bf16.gmra.mxu0 %v1919
      %v2015 = vpop.f32.mrf.mxu0
      %v2016 = vadd.f32 0.0, %v2015
      %v2017 = vpop.f32.mrf.mxu0
      %v2018 = vpop.f32.mrf.mxu0
      %v2019 = vadd.f32 0.0, %v2018
      %v2020 = vpop.f32.mrf.mxu0
      %2021 = vmatprep.mubr.bf16.mxu0 0
      %2022 = vmatmul.mubr.bf16.gmra.mxu0 %v1922
      %v2023 = vpop.f32.mrf.mxu0
      %v2024 = vadd.f32 0.0, %v2023
      %v2025 = vpop.f32.mrf.mxu0
      %v2026 = vpop.f32.mrf.mxu0
      %v2027 = vadd.f32 0.0, %v2026
      %v2028 = vpop.f32.mrf.mxu0
      %2029 = vmatprep.mubr.bf16.mxu0 0
      %2030 = vmatmul.mubr.bf16.gmra.mxu0 %v1925
      %v2031 = vpop.f32.mrf.mxu0
      %v2032 = vadd.f32 0.0, %v2031
      %v2033 = vpop.f32.mrf.mxu0
      %v2034 = vpop.f32.mrf.mxu0
      %v2035 = vadd.f32 0.0, %v2034
      %v2036 = vpop.f32.mrf.mxu0
      %2037 = vmatprep.mubr.bf16.mxu0 0
      %2038 = vmatmul.mubr.bf16.gmra.mxu0 %v1928
      %v2039 = vpop.f32.mrf.mxu0
      %v2040 = vadd.f32 0.0, %v2039
      %v2041 = vpop.f32.mrf.mxu0
      %v2042 = vpop.f32.mrf.mxu0
      %v2043 = vadd.f32 0.0, %v2042
      %v2044 = vpop.f32.mrf.mxu0
      %2045 = vmatprep.mubr.bf16.mxu0 0
      %2046 = vmatmul.mubr.bf16.gmra.mxu0 %v1931
      %v2047 = vpop.f32.mrf.mxu0
      %v2048 = vadd.f32 0.0, %v2047
      %v2049 = vpop.f32.mrf.mxu0
      %v2050 = vpop.f32.mrf.mxu0
      %v2051 = vadd.f32 0.0, %v2050
      %v2052 = vpop.f32.mrf.mxu0
      %2053 = vmatprep.mubr.bf16.mxu0 0
      %2054 = vmatmul.mubr.bf16.gmra.mxu0 %v1934
      %v2055 = vpop.f32.mrf.mxu0
      %v2056 = vadd.f32 0.0, %v2055
      %v2057 = vpop.f32.mrf.mxu0
      %v2058 = vpop.f32.mrf.mxu0
      %v2059 = vadd.f32 0.0, %v2058
      %v2060 = vpop.f32.mrf.mxu0
      %2061 = vmatprep.mubr.bf16.mxu0 0
      %2062 = vmatmul.mubr.bf16.gmra.mxu0 %v1937
      %v2063 = vpop.f32.mrf.mxu0
      %v2064 = vadd.f32 0.0, %v2063
      %v2065 = vpop.f32.mrf.mxu0
      %v2066 = vpop.f32.mrf.mxu0
      %v2067 = vadd.f32 0.0, %v2066
      %v2068 = vpop.f32.mrf.mxu0
      %2069 = vmatprep.mubr.bf16.mxu0 0
      %2070 = vmatmul.mubr.bf16.gmra.mxu0 %v1940
      %v2071 = vpop.f32.mrf.mxu0
      %v2072 = vadd.f32 0.0, %v2071
      %v2073 = vpop.f32.mrf.mxu0
      %v2074 = vpop.f32.mrf.mxu0
      %v2075 = vadd.f32 0.0, %v2074
      %v2076 = vpop.f32.mrf.mxu0
      %2077 = vmatprep.mubr.bf16.mxu0 0
      %2078 = vmatmul.mubr.bf16.gmra.mxu0 %v1943
      %v2079 = vpop.f32.mrf.mxu0
      %v2080 = vadd.f32 0.0, %v2079
      %v2081 = vpop.f32.mrf.mxu0
      %v2082 = vpop.f32.mrf.mxu0
      %v2083 = vadd.f32 0.0, %v2082
      %v2084 = vpop.f32.mrf.mxu0
      %2085 = vmatprep.mubr.bf16.mxu0 0
      %2086 = vmatmul.mubr.bf16.gmra.mxu0 %v1946
      %v2087 = vpop.f32.mrf.mxu0
      %v2088 = vadd.f32 0.0, %v2087
      %v2089 = vpop.f32.mrf.mxu0
      %v2090 = vpop.f32.mrf.mxu0
      %v2091 = vadd.f32 0.0, %v2090
      %v2092 = vpop.f32.mrf.mxu0
      %2093 = vmatprep.mubr.bf16.mxu0 0
      %2094 = vmatmul.mubr.bf16.gmra.mxu0 %v1949
      %v2095 = vpop.f32.mrf.mxu0
      %v2096 = vadd.f32 0.0, %v2095
      %v2097 = vpop.f32.mrf.mxu0
      %v2098 = vpop.f32.mrf.mxu0
      %v2099 = vadd.f32 0.0, %v2098
      %v2100 = vpop.f32.mrf.mxu0
      %2101 = vmatprep.mubr.bf16.mxu0 0
      %2102 = vmatmul.mubr.bf16.gmra.mxu0 %v1952
      %v2103 = vpop.f32.mrf.mxu0
      %v2104 = vadd.f32 0.0, %v2103
      %v2105 = vpop.f32.mrf.mxu0
      %v2106 = vpop.f32.mrf.mxu0
      %v2107 = vadd.f32 0.0, %v2106
      %v2108 = vpop.f32.mrf.mxu0
      %2109 = vmatprep.mubr.bf16.mxu0 0
      %2110 = vmatmul.mubr.bf16.gmra.mxu0 %v1955
      %v2111 = vpop.f32.mrf.mxu0
      %v2112 = vadd.f32 0.0, %v2111
      %v2113 = vpop.f32.mrf.mxu0
      %v2114 = vpop.f32.mrf.mxu0
      %v2115 = vadd.f32 0.0, %v2114
      %v2116 = vpop.f32.mrf.mxu0
      %2117 = vdwg.mxu0
      %v2118 = vadd.f32 %v1812, %v1992
      %v2119 = vadd.f32 %v1813, %v1995
      %v2120 = vadd.f32 %v1814, %v2000
      %v2121 = vadd.f32 %v1815, %v2003
      %v2122 = vadd.f32 %v1816, %v2008
      %v2123 = vadd.f32 %v1817, %v2011
      %v2124 = vadd.f32 %v1818, %v2016
      %v2125 = vadd.f32 %v1819, %v2019
      %v2126 = vadd.f32 %v1820, %v2024
      %v2127 = vadd.f32 %v1821, %v2027
      %v2128 = vadd.f32 %v1822, %v2032
      %v2129 = vadd.f32 %v1823, %v2035
      %v2130 = vadd.f32 %v1824, %v2040
      %v2131 = vadd.f32 %v1825, %v2043
      %v2132 = vadd.f32 %v1826, %v2048
      %v2133 = vadd.f32 %v1827, %v2051
      %v2134 = vadd.f32 %v1828, %v2056
      %v2135 = vadd.f32 %v1829, %v2059
      %v2136 = vadd.f32 %v1830, %v2064
      %v2137 = vadd.f32 %v1831, %v2067
      %v2138 = vadd.f32 %v1832, %v2072
      %v2139 = vadd.f32 %v1833, %v2075
      %v2140 = vadd.f32 %v1834, %v2080
      %v2141 = vadd.f32 %v1835, %v2083
      %v2142 = vadd.f32 %v1836, %v2088
      %v2143 = vadd.f32 %v1837, %v2091
      %v2144 = vadd.f32 %v1838, %v2096
      %v2145 = vadd.f32 %v1839, %v2099
      %v2146 = vadd.f32 %v1840, %v2104
      %v2147 = vadd.f32 %v1841, %v2107
      %v2148 = vadd.f32 %v1842, %v2112
      %v2149 = vadd.f32 %v1843, %v2115
      %s2150 = scalar_lea.vmem [#allocation2], 48
      %v2151 = vld [vmem:[%s2150] sm:$0xff]
      %v2152 = vld [vmem:[%s2150 + $0x8] sm:$0xff]
      %v2153 = vld [vmem:[%s2150 + $0x18] sm:$0xff]
      %v2154 = vld [vmem:[%s2150 + $0x20] sm:$0xff]
      %v2155 = vld [vmem:[%s2150 + $0x30] sm:$0xff]
      %v2156 = vld [vmem:[%s2150 + $0x38] sm:$0xff]
      %v2157 = vld [vmem:[%s2150 + $0x48] sm:$0xff]
      %v2158 = vld [vmem:[%s2150 + $0x50] sm:$0xff]
      %v2159 = vld [vmem:[%s2150 + $0x60] sm:$0xff]
      %v2160 = vld [vmem:[%s2150 + $0x68] sm:$0xff]
      %v2161 = vld [vmem:[%s2150 + $0x78] sm:$0xff]
      %v2162 = vld [vmem:[%s2150 + $0x80] sm:$0xff]
      %v2163 = vld [vmem:[%s2150 + $0x90] sm:$0xff]
      %v2164 = vld [vmem:[%s2150 + $0x98] sm:$0xff]
      %v2165 = vld [vmem:[%s2150 + $0xa8] sm:$0xff]
      %v2166 = vld [vmem:[%s2150 + $0xb0] sm:$0xff]
      %v2167 = vld [vmem:[%s2150 + $0xc0] sm:$0xff]
      %v2168 = vld [vmem:[%s2150 + $0xc8] sm:$0xff]
      %v2169 = vld [vmem:[%s2150 + $0xd8] sm:$0xff]
      %v2170 = vld [vmem:[%s2150 + $0xe0] sm:$0xff]
      %v2171 = vld [vmem:[%s2150 + $0xf0] sm:$0xff]
      %v2172 = vld [vmem:[%s2150 + $0xf8] sm:$0xff]
      %v2173 = vld [vmem:[%s2150 + $0x108] sm:$0xff]
      %v2174 = vld [vmem:[%s2150 + $0x110] sm:$0xff]
      %v2175 = vld [vmem:[%s2150 + $0x120] sm:$0xff]
      %v2176 = vld [vmem:[%s2150 + $0x128] sm:$0xff]
      %v2177 = vld [vmem:[%s2150 + $0x138] sm:$0xff]
      %v2178 = vld [vmem:[%s2150 + $0x140] sm:$0xff]
      %v2179 = vld [vmem:[%s2150 + $0x150] sm:$0xff]
      %v2180 = vld [vmem:[%s2150 + $0x158] sm:$0xff]
      %v2181 = vld [vmem:[%s2150 + $0x168] sm:$0xff]
      %v2182 = vld [vmem:[%s2150 + $0x170] sm:$0xff]
      %v2183 = vpack.c.bf16 %v2152, %v2151
      %v2184 = vpack.c.bf16 %v2154, %v2153
      %v2185 = vpack.c.bf16 %v2156, %v2155
      %v2186 = vpack.c.bf16 %v2158, %v2157
      %v2187 = vpack.c.bf16 %v2160, %v2159
      %v2188 = vpack.c.bf16 %v2162, %v2161
      %v2189 = vpack.c.bf16 %v2164, %v2163
      %v2190 = vpack.c.bf16 %v2166, %v2165
      %v2191 = vpack.c.bf16 %v2168, %v2167
      %v2192 = vpack.c.bf16 %v2170, %v2169
      %v2193 = vpack.c.bf16 %v2172, %v2171
      %v2194 = vpack.c.bf16 %v2174, %v2173
      %v2195 = vpack.c.bf16 %v2176, %v2175
      %v2196 = vpack.c.bf16 %v2178, %v2177
      %v2197 = vpack.c.bf16 %v2180, %v2179
      %v2198 = vpack.c.bf16 %v2182, %v2181
      %s2199 = scalar_lea.vmem %s1, 96
      %v2200 = vld [vmem:[%s2199] sm:$0xf]
      %v2201 = vld [vmem:[%s2199 + $0x4] sm:$0xf]
      %v2202 = vld [vmem:[%s2199 + $0x8] sm:$0xf]
      %v2203 = vld [vmem:[%s2199 + $0xc] sm:$0xf]
      %v2208 = vunpack.c.l.b16 %v2200
      %v2209 = vunpack.c.l.b16 %v2201
      %v2210 = vunpack.c.l.b16 %v2202
      %v2211 = vunpack.c.l.b16 %v2203
      %v2212 = vpack.c.b16 %v2209, %v2208
      %v2213 = vpack.c.b16 %v2211, %v2210
      %v2217 = vsel %vm226, %v2183, 0
      %v2220 = vsel %vm226, %v2184, 0
      %v2223 = vsel %vm226, %v2185, 0
      %v2226 = vsel %vm226, %v2186, 0
      %v2229 = vsel %vm226, %v2187, 0
      %v2232 = vsel %vm226, %v2188, 0
      %v2235 = vsel %vm226, %v2189, 0
      %v2238 = vsel %vm226, %v2190, 0
      %v2241 = vsel %vm226, %v2191, 0
      %v2244 = vsel %vm226, %v2192, 0
      %v2247 = vsel %vm226, %v2193, 0
      %v2250 = vsel %vm226, %v2194, 0
      %v2253 = vsel %vm226, %v2195, 0
      %v2256 = vsel %vm226, %v2196, 0
      %v2259 = vsel %vm226, %v2197, 0
      %v2262 = vsel %vm226, %v2198, 0
      %2264 = vmatprep.subr.bf16.mxu0 0
      %2265 = vmatpush1.bf16.msra.mxu0 0
      %2266 = vmatprep.subr.bf16.mxu0 0
      %2267 = vmatpush1.bf16.msra.mxu0 0
      %2268 = vmatprep.subr.bf16.mxu0 0
      %2269 = vmatpush1.bf16.msra.mxu0 0
      %2270 = vmatprep.subr.bf16.mxu0 0
      %2271 = vmatpush1.bf16.msra.mxu0 0
      %2272 = vmatprep.subr.bf16.mxu0 0
      %2273 = vmatpush1.bf16.msra.mxu0 0
      %2274 = vmatprep.subr.bf16.mxu0 0
      %2275 = vmatpush1.bf16.msra.mxu0 0
      %2276 = vmatprep.subr.bf16.mxu0 0
      %2277 = vmatpush1.bf16.msra.mxu0 %v2213
      %2278 = vmatprep.subr.bf16.mxu0 0
      %2279 = vmatpush1.bf16.msra.mxu0 %v2212
      %2280 = vmatprep.subr.bf16.mxu0 0
      %2281 = vmatpush2.bf16.msra.mxu0 0
      %2282 = vmatprep.subr.bf16.mxu0 0
      %2283 = vmatpush2.bf16.msra.mxu0 0
      %2284 = vmatprep.subr.bf16.mxu0 0
      %2285 = vmatpush2.bf16.msra.mxu0 0
      %2286 = vmatprep.subr.bf16.mxu0 0
      %2287 = vmatpush2.bf16.msra.mxu0 0
      %2288 = vmatprep.subr.bf16.mxu0 0
      %2289 = vmatpush2.bf16.msra.mxu0 0
      %2290 = vmatprep.subr.bf16.mxu0 0
      %2291 = vmatpush2.bf16.msra.mxu0 0
      %2292 = vmatprep.subr.bf16.mxu0 0
      %2293 = vmatpush2.bf16.msra.mxu0 0
      %2294 = vmatprep.subr.bf16.mxu0 0
      %2295 = vmatpush2.bf16.msra.mxu0 0
      %2296 = vmatprep.mubr.bf16.mxu0 0
      %2297 = vmatmul.mubr.bf16.gmra.mxu0 %v2217
      %v2298 = vpop.f32.mrf.mxu0
      %v2299 = vadd.f32 0.0, %v2298
      %v2300 = vpop.f32.mrf.mxu0
      %v2301 = vpop.f32.mrf.mxu0
      %v2302 = vadd.f32 0.0, %v2301
      %v2303 = vpop.f32.mrf.mxu0
      %2304 = vmatprep.mubr.bf16.mxu0 0
      %2305 = vmatmul.mubr.bf16.gmra.mxu0 %v2220
      %v2306 = vpop.f32.mrf.mxu0
      %v2307 = vadd.f32 0.0, %v2306
      %v2308 = vpop.f32.mrf.mxu0
      %v2309 = vpop.f32.mrf.mxu0
      %v2310 = vadd.f32 0.0, %v2309
      %v2311 = vpop.f32.mrf.mxu0
      %2312 = vmatprep.mubr.bf16.mxu0 0
      %2313 = vmatmul.mubr.bf16.gmra.mxu0 %v2223
      %v2314 = vpop.f32.mrf.mxu0
      %v2315 = vadd.f32 0.0, %v2314
      %v2316 = vpop.f32.mrf.mxu0
      %v2317 = vpop.f32.mrf.mxu0
      %v2318 = vadd.f32 0.0, %v2317
      %v2319 = vpop.f32.mrf.mxu0
      %2320 = vmatprep.mubr.bf16.mxu0 0
      %2321 = vmatmul.mubr.bf16.gmra.mxu0 %v2226
      %v2322 = vpop.f32.mrf.mxu0
      %v2323 = vadd.f32 0.0, %v2322
      %v2324 = vpop.f32.mrf.mxu0
      %v2325 = vpop.f32.mrf.mxu0
      %v2326 = vadd.f32 0.0, %v2325
      %v2327 = vpop.f32.mrf.mxu0
      %2328 = vmatprep.mubr.bf16.mxu0 0
      %2329 = vmatmul.mubr.bf16.gmra.mxu0 %v2229
      %v2330 = vpop.f32.mrf.mxu0
      %v2331 = vadd.f32 0.0, %v2330
      %v2332 = vpop.f32.mrf.mxu0
      %v2333 = vpop.f32.mrf.mxu0
      %v2334 = vadd.f32 0.0, %v2333
      %v2335 = vpop.f32.mrf.mxu0
      %2336 = vmatprep.mubr.bf16.mxu0 0
      %2337 = vmatmul.mubr.bf16.gmra.mxu0 %v2232
      %v2338 = vpop.f32.mrf.mxu0
      %v2339 = vadd.f32 0.0, %v2338
      %v2340 = vpop.f32.mrf.mxu0
      %v2341 = vpop.f32.mrf.mxu0
      %v2342 = vadd.f32 0.0, %v2341
      %v2343 = vpop.f32.mrf.mxu0
      %2344 = vmatprep.mubr.bf16.mxu0 0
      %2345 = vmatmul.mubr.bf16.gmra.mxu0 %v2235
      %v2346 = vpop.f32.mrf.mxu0
      %v2347 = vadd.f32 0.0, %v2346
      %v2348 = vpop.f32.mrf.mxu0
      %v2349 = vpop.f32.mrf.mxu0
      %v2350 = vadd.f32 0.0, %v2349
      %v2351 = vpop.f32.mrf.mxu0
      %2352 = vmatprep.mubr.bf16.mxu0 0
      %2353 = vmatmul.mubr.bf16.gmra.mxu0 %v2238
      %v2354 = vpop.f32.mrf.mxu0
      %v2355 = vadd.f32 0.0, %v2354
      %v2356 = vpop.f32.mrf.mxu0
      %v2357 = vpop.f32.mrf.mxu0
      %v2358 = vadd.f32 0.0, %v2357
      %v2359 = vpop.f32.mrf.mxu0
      %2360 = vmatprep.mubr.bf16.mxu0 0
      %2361 = vmatmul.mubr.bf16.gmra.mxu0 %v2241
      %v2362 = vpop.f32.mrf.mxu0
      %v2363 = vadd.f32 0.0, %v2362
      %v2364 = vpop.f32.mrf.mxu0
      %v2365 = vpop.f32.mrf.mxu0
      %v2366 = vadd.f32 0.0, %v2365
      %v2367 = vpop.f32.mrf.mxu0
      %2368 = vmatprep.mubr.bf16.mxu0 0
      %2369 = vmatmul.mubr.bf16.gmra.mxu0 %v2244
      %v2370 = vpop.f32.mrf.mxu0
      %v2371 = vadd.f32 0.0, %v2370
      %v2372 = vpop.f32.mrf.mxu0
      %v2373 = vpop.f32.mrf.mxu0
      %v2374 = vadd.f32 0.0, %v2373
      %v2375 = vpop.f32.mrf.mxu0
      %2376 = vmatprep.mubr.bf16.mxu0 0
      %2377 = vmatmul.mubr.bf16.gmra.mxu0 %v2247
      %v2378 = vpop.f32.mrf.mxu0
      %v2379 = vadd.f32 0.0, %v2378
      %v2380 = vpop.f32.mrf.mxu0
      %v2381 = vpop.f32.mrf.mxu0
      %v2382 = vadd.f32 0.0, %v2381
      %v2383 = vpop.f32.mrf.mxu0
      %2384 = vmatprep.mubr.bf16.mxu0 0
      %2385 = vmatmul.mubr.bf16.gmra.mxu0 %v2250
      %v2386 = vpop.f32.mrf.mxu0
      %v2387 = vadd.f32 0.0, %v2386
      %v2388 = vpop.f32.mrf.mxu0
      %v2389 = vpop.f32.mrf.mxu0
      %v2390 = vadd.f32 0.0, %v2389
      %v2391 = vpop.f32.mrf.mxu0
      %2392 = vmatprep.mubr.bf16.mxu0 0
      %2393 = vmatmul.mubr.bf16.gmra.mxu0 %v2253
      %v2394 = vpop.f32.mrf.mxu0
      %v2395 = vadd.f32 0.0, %v2394
      %v2396 = vpop.f32.mrf.mxu0
      %v2397 = vpop.f32.mrf.mxu0
      %v2398 = vadd.f32 0.0, %v2397
      %v2399 = vpop.f32.mrf.mxu0
      %2400 = vmatprep.mubr.bf16.mxu0 0
      %2401 = vmatmul.mubr.bf16.gmra.mxu0 %v2256
      %v2402 = vpop.f32.mrf.mxu0
      %v2403 = vadd.f32 0.0, %v2402
      %v2404 = vpop.f32.mrf.mxu0
      %v2405 = vpop.f32.mrf.mxu0
      %v2406 = vadd.f32 0.0, %v2405
      %v2407 = vpop.f32.mrf.mxu0
      %2408 = vmatprep.mubr.bf16.mxu0 0
      %2409 = vmatmul.mubr.bf16.gmra.mxu0 %v2259
      %v2410 = vpop.f32.mrf.mxu0
      %v2411 = vadd.f32 0.0, %v2410
      %v2412 = vpop.f32.mrf.mxu0
      %v2413 = vpop.f32.mrf.mxu0
      %v2414 = vadd.f32 0.0, %v2413
      %v2415 = vpop.f32.mrf.mxu0
      %2416 = vmatprep.mubr.bf16.mxu0 0
      %2417 = vmatmul.mubr.bf16.gmra.mxu0 %v2262
      %v2418 = vpop.f32.mrf.mxu0
      %v2419 = vadd.f32 0.0, %v2418
      %v2420 = vpop.f32.mrf.mxu0
      %v2421 = vpop.f32.mrf.mxu0
      %v2422 = vadd.f32 0.0, %v2421
      %v2423 = vpop.f32.mrf.mxu0
      %2424 = vdwg.mxu0
      %v2425 = vadd.f32 %v2118, %v2299
      %v2426 = vadd.f32 %v2119, %v2302
      %v2427 = vadd.f32 %v2120, %v2307
      %v2428 = vadd.f32 %v2121, %v2310
      %v2429 = vadd.f32 %v2122, %v2315
      %v2430 = vadd.f32 %v2123, %v2318
      %v2431 = vadd.f32 %v2124, %v2323
      %v2432 = vadd.f32 %v2125, %v2326
      %v2433 = vadd.f32 %v2126, %v2331
      %v2434 = vadd.f32 %v2127, %v2334
      %v2435 = vadd.f32 %v2128, %v2339
      %v2436 = vadd.f32 %v2129, %v2342
      %v2437 = vadd.f32 %v2130, %v2347
      %v2438 = vadd.f32 %v2131, %v2350
      %v2439 = vadd.f32 %v2132, %v2355
      %v2440 = vadd.f32 %v2133, %v2358
      %v2441 = vadd.f32 %v2134, %v2363
      %v2442 = vadd.f32 %v2135, %v2366
      %v2443 = vadd.f32 %v2136, %v2371
      %v2444 = vadd.f32 %v2137, %v2374
      %v2445 = vadd.f32 %v2138, %v2379
      %v2446 = vadd.f32 %v2139, %v2382
      %v2447 = vadd.f32 %v2140, %v2387
      %v2448 = vadd.f32 %v2141, %v2390
      %v2449 = vadd.f32 %v2142, %v2395
      %v2450 = vadd.f32 %v2143, %v2398
      %v2451 = vadd.f32 %v2144, %v2403
      %v2452 = vadd.f32 %v2145, %v2406
      %v2453 = vadd.f32 %v2146, %v2411
      %v2454 = vadd.f32 %v2147, %v2414
      %v2455 = vadd.f32 %v2148, %v2419
      %v2456 = vadd.f32 %v2149, %v2422
      %v2457 = vld [vmem:[%s2150 + $0x1] sm:$0xff]
      %v2458 = vld [vmem:[%s2150 + $0x9] sm:$0xff]
      %v2459 = vld [vmem:[%s2150 + $0x19] sm:$0xff]
      %v2460 = vld [vmem:[%s2150 + $0x21] sm:$0xff]
      %v2461 = vld [vmem:[%s2150 + $0x31] sm:$0xff]
      %v2462 = vld [vmem:[%s2150 + $0x39] sm:$0xff]
      %v2463 = vld [vmem:[%s2150 + $0x49] sm:$0xff]
      %v2464 = vld [vmem:[%s2150 + $0x51] sm:$0xff]
      %v2465 = vld [vmem:[%s2150 + $0x61] sm:$0xff]
      %v2466 = vld [vmem:[%s2150 + $0x69] sm:$0xff]
      %v2467 = vld [vmem:[%s2150 + $0x79] sm:$0xff]
      %v2468 = vld [vmem:[%s2150 + $0x81] sm:$0xff]
      %v2469 = vld [vmem:[%s2150 + $0x91] sm:$0xff]
      %v2470 = vld [vmem:[%s2150 + $0x99] sm:$0xff]
      %v2471 = vld [vmem:[%s2150 + $0xa9] sm:$0xff]
      %v2472 = vld [vmem:[%s2150 + $0xb1] sm:$0xff]
      %v2473 = vld [vmem:[%s2150 + $0xc1] sm:$0xff]
      %v2474 = vld [vmem:[%s2150 + $0xc9] sm:$0xff]
      %v2475 = vld [vmem:[%s2150 + $0xd9] sm:$0xff]
      %v2476 = vld [vmem:[%s2150 + $0xe1] sm:$0xff]
      %v2477 = vld [vmem:[%s2150 + $0xf1] sm:$0xff]
      %v2478 = vld [vmem:[%s2150 + $0xf9] sm:$0xff]
      %v2479 = vld [vmem:[%s2150 + $0x109] sm:$0xff]
      %v2480 = vld [vmem:[%s2150 + $0x111] sm:$0xff]
      %v2481 = vld [vmem:[%s2150 + $0x121] sm:$0xff]
      %v2482 = vld [vmem:[%s2150 + $0x129] sm:$0xff]
      %v2483 = vld [vmem:[%s2150 + $0x139] sm:$0xff]
      %v2484 = vld [vmem:[%s2150 + $0x141] sm:$0xff]
      %v2485 = vld [vmem:[%s2150 + $0x151] sm:$0xff]
      %v2486 = vld [vmem:[%s2150 + $0x159] sm:$0xff]
      %v2487 = vld [vmem:[%s2150 + $0x169] sm:$0xff]
      %v2488 = vld [vmem:[%s2150 + $0x171] sm:$0xff]
      %v2489 = vpack.c.bf16 %v2458, %v2457
      %v2490 = vpack.c.bf16 %v2460, %v2459
      %v2491 = vpack.c.bf16 %v2462, %v2461
      %v2492 = vpack.c.bf16 %v2464, %v2463
      %v2493 = vpack.c.bf16 %v2466, %v2465
      %v2494 = vpack.c.bf16 %v2468, %v2467
      %v2495 = vpack.c.bf16 %v2470, %v2469
      %v2496 = vpack.c.bf16 %v2472, %v2471
      %v2497 = vpack.c.bf16 %v2474, %v2473
      %v2498 = vpack.c.bf16 %v2476, %v2475
      %v2499 = vpack.c.bf16 %v2478, %v2477
      %v2500 = vpack.c.bf16 %v2480, %v2479
      %v2501 = vpack.c.bf16 %v2482, %v2481
      %v2502 = vpack.c.bf16 %v2484, %v2483
      %v2503 = vpack.c.bf16 %v2486, %v2485
      %v2504 = vpack.c.bf16 %v2488, %v2487
      %s2505 = scalar_lea.vmem %s1, 112
      %v2506 = vld [vmem:[%s2505] sm:$0xf]
      %v2507 = vld [vmem:[%s2505 + $0x4] sm:$0xf]
      %v2508 = vld [vmem:[%s2505 + $0x8] sm:$0xf]
      %v2509 = vld [vmem:[%s2505 + $0xc] sm:$0xf]
      %v2514 = vunpack.c.l.b16 %v2506
      %v2515 = vunpack.c.l.b16 %v2507
      %v2516 = vunpack.c.l.b16 %v2508
      %v2517 = vunpack.c.l.b16 %v2509
      %v2518 = vpack.c.b16 %v2515, %v2514
      %v2519 = vpack.c.b16 %v2517, %v2516
      %v2523 = vsel %vm226, %v2489, 0
      %v2526 = vsel %vm226, %v2490, 0
      %v2529 = vsel %vm226, %v2491, 0
      %v2532 = vsel %vm226, %v2492, 0
      %v2535 = vsel %vm226, %v2493, 0
      %v2538 = vsel %vm226, %v2494, 0
      %v2541 = vsel %vm226, %v2495, 0
      %v2544 = vsel %vm226, %v2496, 0
      %v2547 = vsel %vm226, %v2497, 0
      %v2550 = vsel %vm226, %v2498, 0
      %v2553 = vsel %vm226, %v2499, 0
      %v2556 = vsel %vm226, %v2500, 0
      %v2559 = vsel %vm226, %v2501, 0
      %v2562 = vsel %vm226, %v2502, 0
      %v2565 = vsel %vm226, %v2503, 0
      %v2568 = vsel %vm226, %v2504, 0
      %2570 = vmatprep.subr.bf16.mxu0 0
      %2571 = vmatpush1.bf16.msra.mxu0 0
      %2572 = vmatprep.subr.bf16.mxu0 0
      %2573 = vmatpush1.bf16.msra.mxu0 0
      %2574 = vmatprep.subr.bf16.mxu0 0
      %2575 = vmatpush1.bf16.msra.mxu0 0
      %2576 = vmatprep.subr.bf16.mxu0 0
      %2577 = vmatpush1.bf16.msra.mxu0 0
      %2578 = vmatprep.subr.bf16.mxu0 0
      %2579 = vmatpush1.bf16.msra.mxu0 0
      %2580 = vmatprep.subr.bf16.mxu0 0
      %2581 = vmatpush1.bf16.msra.mxu0 0
      %2582 = vmatprep.subr.bf16.mxu0 0
      %2583 = vmatpush1.bf16.msra.mxu0 %v2519
      %2584 = vmatprep.subr.bf16.mxu0 0
      %2585 = vmatpush1.bf16.msra.mxu0 %v2518
      %2586 = vmatprep.subr.bf16.mxu0 0
      %2587 = vmatpush2.bf16.msra.mxu0 0
      %2588 = vmatprep.subr.bf16.mxu0 0
      %2589 = vmatpush2.bf16.msra.mxu0 0
      %2590 = vmatprep.subr.bf16.mxu0 0
      %2591 = vmatpush2.bf16.msra.mxu0 0
      %2592 = vmatprep.subr.bf16.mxu0 0
      %2593 = vmatpush2.bf16.msra.mxu0 0
      %2594 = vmatprep.subr.bf16.mxu0 0
      %2595 = vmatpush2.bf16.msra.mxu0 0
      %2596 = vmatprep.subr.bf16.mxu0 0
      %2597 = vmatpush2.bf16.msra.mxu0 0
      %2598 = vmatprep.subr.bf16.mxu0 0
      %2599 = vmatpush2.bf16.msra.mxu0 0
      %2600 = vmatprep.subr.bf16.mxu0 0
      %2601 = vmatpush2.bf16.msra.mxu0 0
      %2602 = vmatprep.mubr.bf16.mxu0 0
      %2603 = vmatmul.mubr.bf16.gmra.mxu0 %v2523
      %v2604 = vpop.f32.mrf.mxu0
      %v2605 = vadd.f32 0.0, %v2604
      %v2606 = vpop.f32.mrf.mxu0
      %v2607 = vpop.f32.mrf.mxu0
      %v2608 = vadd.f32 0.0, %v2607
      %v2609 = vpop.f32.mrf.mxu0
      %2610 = vmatprep.mubr.bf16.mxu0 0
      %2611 = vmatmul.mubr.bf16.gmra.mxu0 %v2526
      %v2612 = vpop.f32.mrf.mxu0
      %v2613 = vadd.f32 0.0, %v2612
      %v2614 = vpop.f32.mrf.mxu0
      %v2615 = vpop.f32.mrf.mxu0
      %v2616 = vadd.f32 0.0, %v2615
      %v2617 = vpop.f32.mrf.mxu0
      %2618 = vmatprep.mubr.bf16.mxu0 0
      %2619 = vmatmul.mubr.bf16.gmra.mxu0 %v2529
      %v2620 = vpop.f32.mrf.mxu0
      %v2621 = vadd.f32 0.0, %v2620
      %v2622 = vpop.f32.mrf.mxu0
      %v2623 = vpop.f32.mrf.mxu0
      %v2624 = vadd.f32 0.0, %v2623
      %v2625 = vpop.f32.mrf.mxu0
      %2626 = vmatprep.mubr.bf16.mxu0 0
      %2627 = vmatmul.mubr.bf16.gmra.mxu0 %v2532
      %v2628 = vpop.f32.mrf.mxu0
      %v2629 = vadd.f32 0.0, %v2628
      %v2630 = vpop.f32.mrf.mxu0
      %v2631 = vpop.f32.mrf.mxu0
      %v2632 = vadd.f32 0.0, %v2631
      %v2633 = vpop.f32.mrf.mxu0
      %2634 = vmatprep.mubr.bf16.mxu0 0
      %2635 = vmatmul.mubr.bf16.gmra.mxu0 %v2535
      %v2636 = vpop.f32.mrf.mxu0
      %v2637 = vadd.f32 0.0, %v2636
      %v2638 = vpop.f32.mrf.mxu0
      %v2639 = vpop.f32.mrf.mxu0
      %v2640 = vadd.f32 0.0, %v2639
      %v2641 = vpop.f32.mrf.mxu0
      %2642 = vmatprep.mubr.bf16.mxu0 0
      %2643 = vmatmul.mubr.bf16.gmra.mxu0 %v2538
      %v2644 = vpop.f32.mrf.mxu0
      %v2645 = vadd.f32 0.0, %v2644
      %v2646 = vpop.f32.mrf.mxu0
      %v2647 = vpop.f32.mrf.mxu0
      %v2648 = vadd.f32 0.0, %v2647
      %v2649 = vpop.f32.mrf.mxu0
      %2650 = vmatprep.mubr.bf16.mxu0 0
      %2651 = vmatmul.mubr.bf16.gmra.mxu0 %v2541
      %v2652 = vpop.f32.mrf.mxu0
      %v2653 = vadd.f32 0.0, %v2652
      %v2654 = vpop.f32.mrf.mxu0
      %v2655 = vpop.f32.mrf.mxu0
      %v2656 = vadd.f32 0.0, %v2655
      %v2657 = vpop.f32.mrf.mxu0
      %2658 = vmatprep.mubr.bf16.mxu0 0
      %2659 = vmatmul.mubr.bf16.gmra.mxu0 %v2544
      %v2660 = vpop.f32.mrf.mxu0
      %v2661 = vadd.f32 0.0, %v2660
      %v2662 = vpop.f32.mrf.mxu0
      %v2663 = vpop.f32.mrf.mxu0
      %v2664 = vadd.f32 0.0, %v2663
      %v2665 = vpop.f32.mrf.mxu0
      %2666 = vmatprep.mubr.bf16.mxu0 0
      %2667 = vmatmul.mubr.bf16.gmra.mxu0 %v2547
      %v2668 = vpop.f32.mrf.mxu0
      %v2669 = vadd.f32 0.0, %v2668
      %v2670 = vpop.f32.mrf.mxu0
      %v2671 = vpop.f32.mrf.mxu0
      %v2672 = vadd.f32 0.0, %v2671
      %v2673 = vpop.f32.mrf.mxu0
      %2674 = vmatprep.mubr.bf16.mxu0 0
      %2675 = vmatmul.mubr.bf16.gmra.mxu0 %v2550
      %v2676 = vpop.f32.mrf.mxu0
      %v2677 = vadd.f32 0.0, %v2676
      %v2678 = vpop.f32.mrf.mxu0
      %v2679 = vpop.f32.mrf.mxu0
      %v2680 = vadd.f32 0.0, %v2679
      %v2681 = vpop.f32.mrf.mxu0
      %2682 = vmatprep.mubr.bf16.mxu0 0
      %2683 = vmatmul.mubr.bf16.gmra.mxu0 %v2553
      %v2684 = vpop.f32.mrf.mxu0
      %v2685 = vadd.f32 0.0, %v2684
      %v2686 = vpop.f32.mrf.mxu0
      %v2687 = vpop.f32.mrf.mxu0
      %v2688 = vadd.f32 0.0, %v2687
      %v2689 = vpop.f32.mrf.mxu0
      %2690 = vmatprep.mubr.bf16.mxu0 0
      %2691 = vmatmul.mubr.bf16.gmra.mxu0 %v2556
      %v2692 = vpop.f32.mrf.mxu0
      %v2693 = vadd.f32 0.0, %v2692
      %v2694 = vpop.f32.mrf.mxu0
      %v2695 = vpop.f32.mrf.mxu0
      %v2696 = vadd.f32 0.0, %v2695
      %v2697 = vpop.f32.mrf.mxu0
      %2698 = vmatprep.mubr.bf16.mxu0 0
      %2699 = vmatmul.mubr.bf16.gmra.mxu0 %v2559
      %v2700 = vpop.f32.mrf.mxu0
      %v2701 = vadd.f32 0.0, %v2700
      %v2702 = vpop.f32.mrf.mxu0
      %v2703 = vpop.f32.mrf.mxu0
      %v2704 = vadd.f32 0.0, %v2703
      %v2705 = vpop.f32.mrf.mxu0
      %2706 = vmatprep.mubr.bf16.mxu0 0
      %2707 = vmatmul.mubr.bf16.gmra.mxu0 %v2562
      %v2708 = vpop.f32.mrf.mxu0
      %v2709 = vadd.f32 0.0, %v2708
      %v2710 = vpop.f32.mrf.mxu0
      %v2711 = vpop.f32.mrf.mxu0
      %v2712 = vadd.f32 0.0, %v2711
      %v2713 = vpop.f32.mrf.mxu0
      %2714 = vmatprep.mubr.bf16.mxu0 0
      %2715 = vmatmul.mubr.bf16.gmra.mxu0 %v2565
      %v2716 = vpop.f32.mrf.mxu0
      %v2717 = vadd.f32 0.0, %v2716
      %v2718 = vpop.f32.mrf.mxu0
      %v2719 = vpop.f32.mrf.mxu0
      %v2720 = vadd.f32 0.0, %v2719
      %v2721 = vpop.f32.mrf.mxu0
      %2722 = vmatprep.mubr.bf16.mxu0 0
      %2723 = vmatmul.mubr.bf16.gmra.mxu0 %v2568
      %v2724 = vpop.f32.mrf.mxu0
      %v2725 = vadd.f32 0.0, %v2724
      %v2726 = vpop.f32.mrf.mxu0
      %v2727 = vpop.f32.mrf.mxu0
      %v2728 = vadd.f32 0.0, %v2727
      %v2729 = vpop.f32.mrf.mxu0
      %2730 = vdwg.mxu0
      %v2731 = vadd.f32 %v2425, %v2605
      %v2732 = vadd.f32 %v2426, %v2608
      %v2733 = vadd.f32 %v2427, %v2613
      %v2734 = vadd.f32 %v2428, %v2616
      %v2735 = vadd.f32 %v2429, %v2621
      %v2736 = vadd.f32 %v2430, %v2624
      %v2737 = vadd.f32 %v2431, %v2629
      %v2738 = vadd.f32 %v2432, %v2632
      %v2739 = vadd.f32 %v2433, %v2637
      %v2740 = vadd.f32 %v2434, %v2640
      %v2741 = vadd.f32 %v2435, %v2645
      %v2742 = vadd.f32 %v2436, %v2648
      %v2743 = vadd.f32 %v2437, %v2653
      %v2744 = vadd.f32 %v2438, %v2656
      %v2745 = vadd.f32 %v2439, %v2661
      %v2746 = vadd.f32 %v2440, %v2664
      %v2747 = vadd.f32 %v2441, %v2669
      %v2748 = vadd.f32 %v2442, %v2672
      %v2749 = vadd.f32 %v2443, %v2677
      %v2750 = vadd.f32 %v2444, %v2680
      %v2751 = vadd.f32 %v2445, %v2685
      %v2752 = vadd.f32 %v2446, %v2688
      %v2753 = vadd.f32 %v2447, %v2693
      %v2754 = vadd.f32 %v2448, %v2696
      %v2755 = vadd.f32 %v2449, %v2701
      %v2756 = vadd.f32 %v2450, %v2704
      %v2757 = vadd.f32 %v2451, %v2709
      %v2758 = vadd.f32 %v2452, %v2712
      %v2759 = vadd.f32 %v2453, %v2717
      %v2760 = vadd.f32 %v2454, %v2720
      %v2761 = vadd.f32 %v2455, %v2725
      %v2762 = vadd.f32 %v2456, %v2728
      %v2763 = vld [vmem:[%s2150 + $0x2] sm:$0xff]
      %v2764 = vld [vmem:[%s2150 + $0xa] sm:$0xff]
      %v2765 = vld [vmem:[%s2150 + $0x1a] sm:$0xff]
      %v2766 = vld [vmem:[%s2150 + $0x22] sm:$0xff]
      %v2767 = vld [vmem:[%s2150 + $0x32] sm:$0xff]
      %v2768 = vld [vmem:[%s2150 + $0x3a] sm:$0xff]
      %v2769 = vld [vmem:[%s2150 + $0x4a] sm:$0xff]
      %v2770 = vld [vmem:[%s2150 + $0x52] sm:$0xff]
      %v2771 = vld [vmem:[%s2150 + $0x62] sm:$0xff]
      %v2772 = vld [vmem:[%s2150 + $0x6a] sm:$0xff]
      %v2773 = vld [vmem:[%s2150 + $0x7a] sm:$0xff]
      %v2774 = vld [vmem:[%s2150 + $0x82] sm:$0xff]
      %v2775 = vld [vmem:[%s2150 + $0x92] sm:$0xff]
      %v2776 = vld [vmem:[%s2150 + $0x9a] sm:$0xff]
      %v2777 = vld [vmem:[%s2150 + $0xaa] sm:$0xff]
      %v2778 = vld [vmem:[%s2150 + $0xb2] sm:$0xff]
      %v2779 = vld [vmem:[%s2150 + $0xc2] sm:$0xff]
      %v2780 = vld [vmem:[%s2150 + $0xca] sm:$0xff]
      %v2781 = vld [vmem:[%s2150 + $0xda] sm:$0xff]
      %v2782 = vld [vmem:[%s2150 + $0xe2] sm:$0xff]
      %v2783 = vld [vmem:[%s2150 + $0xf2] sm:$0xff]
      %v2784 = vld [vmem:[%s2150 + $0xfa] sm:$0xff]
      %v2785 = vld [vmem:[%s2150 + $0x10a] sm:$0xff]
      %v2786 = vld [vmem:[%s2150 + $0x112] sm:$0xff]
      %v2787 = vld [vmem:[%s2150 + $0x122] sm:$0xff]
      %v2788 = vld [vmem:[%s2150 + $0x12a] sm:$0xff]
      %v2789 = vld [vmem:[%s2150 + $0x13a] sm:$0xff]
      %v2790 = vld [vmem:[%s2150 + $0x142] sm:$0xff]
      %v2791 = vld [vmem:[%s2150 + $0x152] sm:$0xff]
      %v2792 = vld [vmem:[%s2150 + $0x15a] sm:$0xff]
      %v2793 = vld [vmem:[%s2150 + $0x16a] sm:$0xff]
      %v2794 = vld [vmem:[%s2150 + $0x172] sm:$0xff]
      %v2795 = vpack.c.bf16 %v2764, %v2763
      %v2796 = vpack.c.bf16 %v2766, %v2765
      %v2797 = vpack.c.bf16 %v2768, %v2767
      %v2798 = vpack.c.bf16 %v2770, %v2769
      %v2799 = vpack.c.bf16 %v2772, %v2771
      %v2800 = vpack.c.bf16 %v2774, %v2773
      %v2801 = vpack.c.bf16 %v2776, %v2775
      %v2802 = vpack.c.bf16 %v2778, %v2777
      %v2803 = vpack.c.bf16 %v2780, %v2779
      %v2804 = vpack.c.bf16 %v2782, %v2781
      %v2805 = vpack.c.bf16 %v2784, %v2783
      %v2806 = vpack.c.bf16 %v2786, %v2785
      %v2807 = vpack.c.bf16 %v2788, %v2787
      %v2808 = vpack.c.bf16 %v2790, %v2789
      %v2809 = vpack.c.bf16 %v2792, %v2791
      %v2810 = vpack.c.bf16 %v2794, %v2793
      %s2811 = scalar_lea.vmem %s1, 128
      %v2812 = vld [vmem:[%s2811] sm:$0xf]
      %v2813 = vld [vmem:[%s2811 + $0x4] sm:$0xf]
      %v2814 = vld [vmem:[%s2811 + $0x8] sm:$0xf]
      %v2815 = vld [vmem:[%s2811 + $0xc] sm:$0xf]
      %v2820 = vunpack.c.l.b16 %v2812
      %v2821 = vunpack.c.l.b16 %v2813
      %v2822 = vunpack.c.l.b16 %v2814
      %v2823 = vunpack.c.l.b16 %v2815
      %v2824 = vpack.c.b16 %v2821, %v2820
      %v2825 = vpack.c.b16 %v2823, %v2822
      %v2829 = vsel %vm226, %v2795, 0
      %v2832 = vsel %vm226, %v2796, 0
      %v2835 = vsel %vm226, %v2797, 0
      %v2838 = vsel %vm226, %v2798, 0
      %v2841 = vsel %vm226, %v2799, 0
      %v2844 = vsel %vm226, %v2800, 0
      %v2847 = vsel %vm226, %v2801, 0
      %v2850 = vsel %vm226, %v2802, 0
      %v2853 = vsel %vm226, %v2803, 0
      %v2856 = vsel %vm226, %v2804, 0
      %v2859 = vsel %vm226, %v2805, 0
      %v2862 = vsel %vm226, %v2806, 0
      %v2865 = vsel %vm226, %v2807, 0
      %v2868 = vsel %vm226, %v2808, 0
      %v2871 = vsel %vm226, %v2809, 0
      %v2874 = vsel %vm226, %v2810, 0
      %2876 = vmatprep.subr.bf16.mxu0 0
      %2877 = vmatpush1.bf16.msra.mxu0 0
      %2878 = vmatprep.subr.bf16.mxu0 0
      %2879 = vmatpush1.bf16.msra.mxu0 0
      %2880 = vmatprep.subr.bf16.mxu0 0
      %2881 = vmatpush1.bf16.msra.mxu0 0
      %2882 = vmatprep.subr.bf16.mxu0 0
      %2883 = vmatpush1.bf16.msra.mxu0 0
      %2884 = vmatprep.subr.bf16.mxu0 0
      %2885 = vmatpush1.bf16.msra.mxu0 0
      %2886 = vmatprep.subr.bf16.mxu0 0
      %2887 = vmatpush1.bf16.msra.mxu0 0
      %2888 = vmatprep.subr.bf16.mxu0 0
      %2889 = vmatpush1.bf16.msra.mxu0 %v2825
      %2890 = vmatprep.subr.bf16.mxu0 0
      %2891 = vmatpush1.bf16.msra.mxu0 %v2824
      %2892 = vmatprep.subr.bf16.mxu0 0
      %2893 = vmatpush2.bf16.msra.mxu0 0
      %2894 = vmatprep.subr.bf16.mxu0 0
      %2895 = vmatpush2.bf16.msra.mxu0 0
      %2896 = vmatprep.subr.bf16.mxu0 0
      %2897 = vmatpush2.bf16.msra.mxu0 0
      %2898 = vmatprep.subr.bf16.mxu0 0
      %2899 = vmatpush2.bf16.msra.mxu0 0
      %2900 = vmatprep.subr.bf16.mxu0 0
      %2901 = vmatpush2.bf16.msra.mxu0 0
      %2902 = vmatprep.subr.bf16.mxu0 0
      %2903 = vmatpush2.bf16.msra.mxu0 0
      %2904 = vmatprep.subr.bf16.mxu0 0
      %2905 = vmatpush2.bf16.msra.mxu0 0
      %2906 = vmatprep.subr.bf16.mxu0 0
      %2907 = vmatpush2.bf16.msra.mxu0 0
      %2908 = vmatprep.mubr.bf16.mxu0 0
      %2909 = vmatmul.mubr.bf16.gmra.mxu0 %v2829
      %v2910 = vpop.f32.mrf.mxu0
      %v2911 = vadd.f32 0.0, %v2910
      %v2912 = vpop.f32.mrf.mxu0
      %v2913 = vpop.f32.mrf.mxu0
      %v2914 = vadd.f32 0.0, %v2913
      %v2915 = vpop.f32.mrf.mxu0
      %2916 = vmatprep.mubr.bf16.mxu0 0
      %2917 = vmatmul.mubr.bf16.gmra.mxu0 %v2832
      %v2918 = vpop.f32.mrf.mxu0
      %v2919 = vadd.f32 0.0, %v2918
      %v2920 = vpop.f32.mrf.mxu0
      %v2921 = vpop.f32.mrf.mxu0
      %v2922 = vadd.f32 0.0, %v2921
      %v2923 = vpop.f32.mrf.mxu0
      %2924 = vmatprep.mubr.bf16.mxu0 0
      %2925 = vmatmul.mubr.bf16.gmra.mxu0 %v2835
      %v2926 = vpop.f32.mrf.mxu0
      %v2927 = vadd.f32 0.0, %v2926
      %v2928 = vpop.f32.mrf.mxu0
      %v2929 = vpop.f32.mrf.mxu0
      %v2930 = vadd.f32 0.0, %v2929
      %v2931 = vpop.f32.mrf.mxu0
      %2932 = vmatprep.mubr.bf16.mxu0 0
      %2933 = vmatmul.mubr.bf16.gmra.mxu0 %v2838
      %v2934 = vpop.f32.mrf.mxu0
      %v2935 = vadd.f32 0.0, %v2934
      %v2936 = vpop.f32.mrf.mxu0
      %v2937 = vpop.f32.mrf.mxu0
      %v2938 = vadd.f32 0.0, %v2937
      %v2939 = vpop.f32.mrf.mxu0
      %2940 = vmatprep.mubr.bf16.mxu0 0
      %2941 = vmatmul.mubr.bf16.gmra.mxu0 %v2841
      %v2942 = vpop.f32.mrf.mxu0
      %v2943 = vadd.f32 0.0, %v2942
      %v2944 = vpop.f32.mrf.mxu0
      %v2945 = vpop.f32.mrf.mxu0
      %v2946 = vadd.f32 0.0, %v2945
      %v2947 = vpop.f32.mrf.mxu0
      %2948 = vmatprep.mubr.bf16.mxu0 0
      %2949 = vmatmul.mubr.bf16.gmra.mxu0 %v2844
      %v2950 = vpop.f32.mrf.mxu0
      %v2951 = vadd.f32 0.0, %v2950
      %v2952 = vpop.f32.mrf.mxu0
      %v2953 = vpop.f32.mrf.mxu0
      %v2954 = vadd.f32 0.0, %v2953
      %v2955 = vpop.f32.mrf.mxu0
      %2956 = vmatprep.mubr.bf16.mxu0 0
      %2957 = vmatmul.mubr.bf16.gmra.mxu0 %v2847
      %v2958 = vpop.f32.mrf.mxu0
      %v2959 = vadd.f32 0.0, %v2958
      %v2960 = vpop.f32.mrf.mxu0
      %v2961 = vpop.f32.mrf.mxu0
      %v2962 = vadd.f32 0.0, %v2961
      %v2963 = vpop.f32.mrf.mxu0
      %2964 = vmatprep.mubr.bf16.mxu0 0
      %2965 = vmatmul.mubr.bf16.gmra.mxu0 %v2850
      %v2966 = vpop.f32.mrf.mxu0
      %v2967 = vadd.f32 0.0, %v2966
      %v2968 = vpop.f32.mrf.mxu0
      %v2969 = vpop.f32.mrf.mxu0
      %v2970 = vadd.f32 0.0, %v2969
      %v2971 = vpop.f32.mrf.mxu0
      %2972 = vmatprep.mubr.bf16.mxu0 0
      %2973 = vmatmul.mubr.bf16.gmra.mxu0 %v2853
      %v2974 = vpop.f32.mrf.mxu0
      %v2975 = vadd.f32 0.0, %v2974
      %v2976 = vpop.f32.mrf.mxu0
      %v2977 = vpop.f32.mrf.mxu0
      %v2978 = vadd.f32 0.0, %v2977
      %v2979 = vpop.f32.mrf.mxu0
      %2980 = vmatprep.mubr.bf16.mxu0 0
      %2981 = vmatmul.mubr.bf16.gmra.mxu0 %v2856
      %v2982 = vpop.f32.mrf.mxu0
      %v2983 = vadd.f32 0.0, %v2982
      %v2984 = vpop.f32.mrf.mxu0
      %v2985 = vpop.f32.mrf.mxu0
      %v2986 = vadd.f32 0.0, %v2985
      %v2987 = vpop.f32.mrf.mxu0
      %2988 = vmatprep.mubr.bf16.mxu0 0
      %2989 = vmatmul.mubr.bf16.gmra.mxu0 %v2859
      %v2990 = vpop.f32.mrf.mxu0
      %v2991 = vadd.f32 0.0, %v2990
      %v2992 = vpop.f32.mrf.mxu0
      %v2993 = vpop.f32.mrf.mxu0
      %v2994 = vadd.f32 0.0, %v2993
      %v2995 = vpop.f32.mrf.mxu0
      %2996 = vmatprep.mubr.bf16.mxu0 0
      %2997 = vmatmul.mubr.bf16.gmra.mxu0 %v2862
      %v2998 = vpop.f32.mrf.mxu0
      %v2999 = vadd.f32 0.0, %v2998
      %v3000 = vpop.f32.mrf.mxu0
      %v3001 = vpop.f32.mrf.mxu0
      %v3002 = vadd.f32 0.0, %v3001
      %v3003 = vpop.f32.mrf.mxu0
      %3004 = vmatprep.mubr.bf16.mxu0 0
      %3005 = vmatmul.mubr.bf16.gmra.mxu0 %v2865
      %v3006 = vpop.f32.mrf.mxu0
      %v3007 = vadd.f32 0.0, %v3006
      %v3008 = vpop.f32.mrf.mxu0
      %v3009 = vpop.f32.mrf.mxu0
      %v3010 = vadd.f32 0.0, %v3009
      %v3011 = vpop.f32.mrf.mxu0
      %3012 = vmatprep.mubr.bf16.mxu0 0
      %3013 = vmatmul.mubr.bf16.gmra.mxu0 %v2868
      %v3014 = vpop.f32.mrf.mxu0
      %v3015 = vadd.f32 0.0, %v3014
      %v3016 = vpop.f32.mrf.mxu0
      %v3017 = vpop.f32.mrf.mxu0
      %v3018 = vadd.f32 0.0, %v3017
      %v3019 = vpop.f32.mrf.mxu0
      %3020 = vmatprep.mubr.bf16.mxu0 0
      %3021 = vmatmul.mubr.bf16.gmra.mxu0 %v2871
      %v3022 = vpop.f32.mrf.mxu0
      %v3023 = vadd.f32 0.0, %v3022
      %v3024 = vpop.f32.mrf.mxu0
      %v3025 = vpop.f32.mrf.mxu0
      %v3026 = vadd.f32 0.0, %v3025
      %v3027 = vpop.f32.mrf.mxu0
      %3028 = vmatprep.mubr.bf16.mxu0 0
      %3029 = vmatmul.mubr.bf16.gmra.mxu0 %v2874
      %v3030 = vpop.f32.mrf.mxu0
      %v3031 = vadd.f32 0.0, %v3030
      %v3032 = vpop.f32.mrf.mxu0
      %v3033 = vpop.f32.mrf.mxu0
      %v3034 = vadd.f32 0.0, %v3033
      %v3035 = vpop.f32.mrf.mxu0
      %3036 = vdwg.mxu0
      %v3037 = vadd.f32 %v2731, %v2911
      %v3038 = vadd.f32 %v2732, %v2914
      %v3039 = vadd.f32 %v2733, %v2919
      %v3040 = vadd.f32 %v2734, %v2922
      %v3041 = vadd.f32 %v2735, %v2927
      %v3042 = vadd.f32 %v2736, %v2930
      %v3043 = vadd.f32 %v2737, %v2935
      %v3044 = vadd.f32 %v2738, %v2938
      %v3045 = vadd.f32 %v2739, %v2943
      %v3046 = vadd.f32 %v2740, %v2946
      %v3047 = vadd.f32 %v2741, %v2951
      %v3048 = vadd.f32 %v2742, %v2954
      %v3049 = vadd.f32 %v2743, %v2959
      %v3050 = vadd.f32 %v2744, %v2962
      %v3051 = vadd.f32 %v2745, %v2967
      %v3052 = vadd.f32 %v2746, %v2970
      %v3053 = vadd.f32 %v2747, %v2975
      %v3054 = vadd.f32 %v2748, %v2978
      %v3055 = vadd.f32 %v2749, %v2983
      %v3056 = vadd.f32 %v2750, %v2986
      %v3057 = vadd.f32 %v2751, %v2991
      %v3058 = vadd.f32 %v2752, %v2994
      %v3059 = vadd.f32 %v2753, %v2999
      %v3060 = vadd.f32 %v2754, %v3002
      %v3061 = vadd.f32 %v2755, %v3007
      %v3062 = vadd.f32 %v2756, %v3010
      %v3063 = vadd.f32 %v2757, %v3015
      %v3064 = vadd.f32 %v2758, %v3018
      %v3065 = vadd.f32 %v2759, %v3023
      %v3066 = vadd.f32 %v2760, %v3026
      %v3067 = vadd.f32 %v2761, %v3031
      %v3068 = vadd.f32 %v2762, %v3034
      %v3069 = vld [vmem:[%s2] sm:$0x1]
      %v3071 = vlaneseq
      %v3072 = vshrl.u32 %v3071, 7
      %v3073 = vsub.s32 0, %v3072
      %v3074 = vrot.slane %v3069, %v3073
      %v3076 = vadd.f32 %v3037, %v3074
      %v3077 = vadd.f32 %v3038, %v3074
      %v3078 = vadd.f32 %v3039, %v3074
      %v3079 = vadd.f32 %v3040, %v3074
      %v3080 = vadd.f32 %v3041, %v3074
      %v3081 = vadd.f32 %v3042, %v3074
      %v3082 = vadd.f32 %v3043, %v3074
      %v3083 = vadd.f32 %v3044, %v3074
      %v3084 = vadd.f32 %v3045, %v3074
      %v3085 = vadd.f32 %v3046, %v3074
      %v3086 = vadd.f32 %v3047, %v3074
      %v3087 = vadd.f32 %v3048, %v3074
      %v3088 = vadd.f32 %v3049, %v3074
      %v3089 = vadd.f32 %v3050, %v3074
      %v3090 = vadd.f32 %v3051, %v3074
      %v3091 = vadd.f32 %v3052, %v3074
      %v3092 = vadd.f32 %v3053, %v3074
      %v3093 = vadd.f32 %v3054, %v3074
      %v3094 = vadd.f32 %v3055, %v3074
      %v3095 = vadd.f32 %v3056, %v3074
      %v3096 = vadd.f32 %v3057, %v3074
      %v3097 = vadd.f32 %v3058, %v3074
      %v3098 = vadd.f32 %v3059, %v3074
      %v3099 = vadd.f32 %v3060, %v3074
      %v3100 = vadd.f32 %v3061, %v3074
      %v3101 = vadd.f32 %v3062, %v3074
      %v3102 = vadd.f32 %v3063, %v3074
      %v3103 = vadd.f32 %v3064, %v3074
      %v3104 = vadd.f32 %v3065, %v3074
      %v3105 = vadd.f32 %v3066, %v3074
      %v3106 = vadd.f32 %v3067, %v3074
      %v3107 = vadd.f32 %v3068, %v3074
      %v3108 = vmax.f32 %v3076, 0.0
      %v3109 = vmax.f32 %v3077, 0.0
      %v3110 = vmax.f32 %v3078, 0.0
      %v3111 = vmax.f32 %v3079, 0.0
      %v3112 = vmax.f32 %v3080, 0.0
      %v3113 = vmax.f32 %v3081, 0.0
      %v3114 = vmax.f32 %v3082, 0.0
      %v3115 = vmax.f32 %v3083, 0.0
      %v3116 = vmax.f32 %v3084, 0.0
      %v3117 = vmax.f32 %v3085, 0.0
      %v3118 = vmax.f32 %v3086, 0.0
      %v3119 = vmax.f32 %v3087, 0.0
      %v3120 = vmax.f32 %v3088, 0.0
      %v3121 = vmax.f32 %v3089, 0.0
      %v3122 = vmax.f32 %v3090, 0.0
      %v3123 = vmax.f32 %v3091, 0.0
      %v3124 = vmax.f32 %v3092, 0.0
      %v3125 = vmax.f32 %v3093, 0.0
      %v3126 = vmax.f32 %v3094, 0.0
      %v3127 = vmax.f32 %v3095, 0.0
      %v3128 = vmax.f32 %v3096, 0.0
      %v3129 = vmax.f32 %v3097, 0.0
      %v3130 = vmax.f32 %v3098, 0.0
      %v3131 = vmax.f32 %v3099, 0.0
      %v3132 = vmax.f32 %v3100, 0.0
      %v3133 = vmax.f32 %v3101, 0.0
      %v3134 = vmax.f32 %v3102, 0.0
      %v3135 = vmax.f32 %v3103, 0.0
      %v3136 = vmax.f32 %v3104, 0.0
      %v3137 = vmax.f32 %v3105, 0.0
      %v3138 = vmax.f32 %v3106, 0.0
      %v3139 = vmax.f32 %v3107, 0.0
      %v3140 = vld [vmem:[%s3] sm:$0x3]
      %v3141 = vpack.c.bf16 %v3109, %v3108
      %v3142 = vpack.c.bf16 %v3111, %v3110
      %v3143 = vpack.c.bf16 %v3113, %v3112
      %v3144 = vpack.c.bf16 %v3115, %v3114
      %v3145 = vpack.c.bf16 %v3117, %v3116
      %v3146 = vpack.c.bf16 %v3119, %v3118
      %v3147 = vpack.c.bf16 %v3121, %v3120
      %v3148 = vpack.c.bf16 %v3123, %v3122
      %v3149 = vpack.c.bf16 %v3125, %v3124
      %v3150 = vpack.c.bf16 %v3127, %v3126
      %v3151 = vpack.c.bf16 %v3129, %v3128
      %v3152 = vpack.c.bf16 %v3131, %v3130
      %v3153 = vpack.c.bf16 %v3133, %v3132
      %v3154 = vpack.c.bf16 %v3135, %v3134
      %v3155 = vpack.c.bf16 %v3137, %v3136
      %v3156 = vpack.c.bf16 %v3139, %v3138
      %v3157 = vld [vmem:[%s4] sm:$0xf]
      %3159 = vset.pattern.permute.xlu0 0
      %3160 = vperm.xlu0 %3159, %v3157
      %v3161 = vpop.permute.xlu0 %3160
      %v3164 = vsel %vm226, %v3140, 0
      %v3167 = vsel %vm226, %v3141, 0
      %v3170 = vsel %vm226, %v3142, 0
      %v3173 = vsel %vm226, %v3143, 0
      %v3176 = vsel %vm226, %v3144, 0
      %v3179 = vsel %vm226, %v3145, 0
      %v3182 = vsel %vm226, %v3146, 0
      %v3185 = vsel %vm226, %v3147, 0
      %v3188 = vsel %vm226, %v3148, 0
      %v3191 = vsel %vm226, %v3149, 0
      %v3194 = vsel %vm226, %v3150, 0
      %v3197 = vsel %vm226, %v3151, 0
      %v3200 = vsel %vm226, %v3152, 0
      %v3203 = vsel %vm226, %v3153, 0
      %v3206 = vsel %vm226, %v3154, 0
      %v3209 = vsel %vm226, %v3155, 0
      %v3212 = vsel %vm226, %v3156, 0
      %3214 = vmatprep.subr.bf16.mxu0 0
      %3215 = vmatpush1.bf16.xpose.msra.mxu0 %v3188
      %3216 = vmatprep.subr.bf16.mxu0 0
      %3217 = vmatpush1.bf16.xpose.msra.mxu0 %v3185
      %3218 = vmatprep.subr.bf16.mxu0 0
      %3219 = vmatpush1.bf16.xpose.msra.mxu0 %v3182
      %3220 = vmatprep.subr.bf16.mxu0 0
      %3221 = vmatpush1.bf16.xpose.msra.mxu0 %v3179
      %3222 = vmatprep.subr.bf16.mxu0 0
      %3223 = vmatpush1.bf16.xpose.msra.mxu0 %v3176
      %3224 = vmatprep.subr.bf16.mxu0 0
      %3225 = vmatpush1.bf16.xpose.msra.mxu0 %v3173
      %3226 = vmatprep.subr.bf16.mxu0 0
      %3227 = vmatpush1.bf16.xpose.msra.mxu0 %v3170
      %3228 = vmatprep.subr.bf16.mxu0 0
      %3229 = vmatpush1.bf16.xpose.msra.mxu0 %v3167
      %3230 = vmatprep.subr.bf16.mxu0 0
      %3231 = vmatpush2.bf16.xpose.msra.mxu0 %v3212
      %3232 = vmatprep.subr.bf16.mxu0 0
      %3233 = vmatpush2.bf16.xpose.msra.mxu0 %v3209
      %3234 = vmatprep.subr.bf16.mxu0 0
      %3235 = vmatpush2.bf16.xpose.msra.mxu0 %v3206
      %3236 = vmatprep.subr.bf16.mxu0 0
      %3237 = vmatpush2.bf16.xpose.msra.mxu0 %v3203
      %3238 = vmatprep.subr.bf16.mxu0 0
      %3239 = vmatpush2.bf16.xpose.msra.mxu0 %v3200
      %3240 = vmatprep.subr.bf16.mxu0 0
      %3241 = vmatpush2.bf16.xpose.msra.mxu0 %v3197
      %3242 = vmatprep.subr.bf16.mxu0 0
      %3243 = vmatpush2.bf16.xpose.msra.mxu0 %v3194
      %3244 = vmatprep.subr.bf16.mxu0 0
      %3245 = vmatpush2.bf16.xpose.msra.mxu0 %v3191
      %3246 = vmatprep.mubr.bf16.mxu0 0
      %3247 = vmatmul.mubr.bf16.gmra.mxu0 %v3164
      %v3248 = vpop.f32.mrf.mxu0
      %v3249 = vadd.f32 %v3161, %v3248
      %v3250 = vpop.f32.mrf.mxu0
      %v3251 = vadd.f32 %v3161, %v3250
      %v3252 = vpop.f32.mrf.mxu0
      %v3253 = vpop.f32.mrf.mxu0
      %3254 = vdwg.mxu0
      %v3257 = vcombine.low %v3249, %v3251
      %3259 = vst [vmem:[%s224] sm:$0xff] %v3257
      %p3260 = scmp.lt.s32.totalorder %s16, 1
      %s3261 = scalar_select %p3260, %s16, 1
      %s3262 = smul.addr %s3261, 2
      %s3263 = smul.addr %s3262, 4
      %s3264 = scalar_lea.vmem %s5, %s3263
      // Predicated region
      $region41: #{cdpn_forward.7} parent=39 // pred_check
        %p3265 = pneg %p144
      $region42: #{cdpn_forward.7} parent=39 // pred_check_branch
        %3267 = sbr.rel (%p3265) target = $region44
      $region43: #{cdpn_forward.7} parent=39 // pred_region
        _
      $region44: #{cdpn_forward.7} parent=39 // pred_fallthru
        _
    $region40: #{cdpn_forward.7} parent=5 // pred_fallthru
      _
    %p3268 = scmp.le.s32.totalorder 2, %s11
    // Predicated region
    $region45: #{cdpn_forward.7} parent=5 // pred_check
      %p3269 = pneg %p3268
    $region46: #{cdpn_forward.7} parent=5 // pred_check_branch
      %3271 = sbr.rel (%p3269) target = $region48
    $region47: #{cdpn_forward.7} parent=5 // pred_region
      %s3272 = ssub.s32 %s11, 2
      // Predicated region
      $region49: #{cdpn_forward.7} parent=47 // pred_check
        %p3273 = pneg %p150
      $region50: #{cdpn_forward.7} parent=47 // pred_check_branch
        %3275 = sbr.rel (%p3273) target = $region52
      $region51: #{cdpn_forward.7} parent=47 // pred_region
        %p3276 = scmp.lt.s32.totalorder %s17, 1
        %s3277 = scalar_select %p3276, %s17, 1
        %s3278 = smul.addr %s3277, 2
        %s3279 = smul.addr %s3278, 4
        %s3280 = scalar_lea.vmem %s5, %s3279
      $region52: #{cdpn_forward.7} parent=47 // pred_fallthru
        _
    $region48: #{cdpn_forward.7} parent=5 // pred_fallthru
      _
  $region6: #{cdpn_forward.7} parent=0 // loop_footer
    %s15 = sadd.s32 1, %s11
  $region7: #{cdpn_forward.7} parent=0 // loop_footer_branch
    %10 = sbr.rel target = $region3
  $region8: #{cdpn_forward.7} parent=0 // loop_exit
    _

</llo_original>
